<compile_context>
chip_gen: v7x
topology: tpu7x:2x2x1
jax: 0.10.0
libtpu: 0.0.40
codegen_flags: <defaults>
</compile_context>

<pallas_src>
import jax
import jax.numpy as jnp
from jax.experimental import pallas as pl
from jax.experimental.pallas import tpu as pltpu

LATENT_PAD = 128  # lane-dense latent width used inside the kernel


def _round_up(n, m):
    return ((n + m - 1) // m) * m


# ----------------------------------------------------------------------------
# Fused Pallas kernel: enc_mu + enc_var + reparameterization + dec_mu
# ----------------------------------------------------------------------------
def _vae_fused_kernel(
        x_ref, eps_ref,
        wm1, bm1, wm2, bm2, wm3, bm3,     # enc_mu  (784->512->256->LATENT_PAD)
        wv1, bv1, wv2, bv2, wv3, bv3,     # enc_var (784->512->256->LATENT_PAD)
        wd1, bd1, wd2, bd2, wd3, bd3,     # dec_mu  (LATENT_PAD->256->512->784)
        xmu_ref, zmu_ref, zvar_ref):

    def dense(a_f32, w_ref, b_ref):
        # bf16 MXU matmul with f32 accumulation; activations stay f32 otherwise.
        return jnp.dot(a_f32.astype(jnp.bfloat16), w_ref[...],
                       preferred_element_type=jnp.float32) + b_ref[...]

    x = x_ref[...]                                      # (TB, 784) f32

    # encoder mean
    h = jnp.maximum(dense(x, wm1, bm1), 0.0)
    h = jnp.maximum(dense(h, wm2, bm2), 0.0)
    z_mu = dense(h, wm3, bm3)                           # (TB, LATENT_PAD) f32

    # encoder variance (Softplus, numerically stable)
    g = jnp.maximum(dense(x, wv1, bv1), 0.0)
    g = jnp.maximum(dense(g, wv2, bv2), 0.0)
    z_var = jnp.logaddexp(dense(g, wv3, bv3), 0.0)      # (TB, LATENT_PAD) f32

    # reparameterization: z = z_mu + eps * sqrt(z_var).
    # Padded latent lanes carry eps*sqrt(softplus(0)) but hit zero rows of wd1,
    # so their contribution to the decoder is exactly zero.
    z = z_mu + eps_ref[...] * jnp.sqrt(z_var)

    # decoder
    d = jnp.maximum(dense(z, wd1, bd1), 0.0)
    d = jnp.maximum(dense(d, wd2, bd2), 0.0)
    x_mu = jax.nn.sigmoid(dense(d, wd3, bd3))

    xmu_ref[...] = x_mu.astype(xmu_ref.dtype)
    zmu_ref[...] = z_mu.astype(zmu_ref.dtype)
    zvar_ref[...] = z_var.astype(zvar_ref.dtype)


# ----------------------------------------------------------------------------
# Wrapper: batch-tiled grid, weights resident in VMEM via constant index_map
# ----------------------------------------------------------------------------
def vae_bernoulli_forward(params, x, noise_key, *, latent_size, batch_tile=256):
    b = x.shape[0]
    x_flat = x.reshape(b, -1).astype(jnp.float32)       # x.view(x.shape[0], -1)
    in_dim = x_flat.shape[1]

    tb = min(batch_tile, _round_up(b, 8))               # sublane-aligned tile
    b_pad = _round_up(b, tb)
    if b_pad != b:
        x_flat = jnp.pad(x_flat, ((0, b_pad - b), (0, 0)))
    n_tiles = b_pad // tb

    # eps is generated lane-dense (B, LATENT_PAD); padded lanes are inert.
    eps = jax.random.normal(noise_key, (b_pad, LATENT_PAD), jnp.float32)

    def row_spec(cols):
        return pl.BlockSpec((tb, cols), lambda i: (i, 0))

    def const_spec(shape):
        return pl.BlockSpec(shape, lambda i: (0, 0))

    weights = []
    weight_specs = []
    for name in ("enc_mu", "enc_var", "dec_mu"):
        for arr in params[name]:
            weights.append(arr)
            weight_specs.append(const_spec(arr.shape))

    out_shapes = (
        jax.ShapeDtypeStruct((b_pad, in_dim), jnp.float32),      # x_mu
        jax.ShapeDtypeStruct((b_pad, LATENT_PAD), jnp.float32),  # z_mu (padded)
        jax.ShapeDtypeStruct((b_pad, LATENT_PAD), jnp.float32),  # z_var (padded)
    )
    out_specs = (row_spec(in_dim), row_spec(LATENT_PAD), row_spec(LATENT_PAD))

    x_mu_p, z_mu_p, z_var_p = pl.pallas_call(
        _vae_fused_kernel,
        out_shape=out_shapes,
        grid=(n_tiles,),
        in_specs=[row_spec(in_dim), row_spec(LATENT_PAD)] + weight_specs,
        out_specs=out_specs,
        compiler_params=pltpu.CompilerParams(
            dimension_semantics=("parallel",),
            vmem_limit_bytes=64 * 1024 * 1024),
    )(x_flat, eps, *weights)

    return (x_mu_p[:b],
            z_mu_p[:b, :latent_size],
            z_var_p[:b, :latent_size])


# ----------------------------------------------------------------------------
# Parameter construction (mimics nn.Linear's U(-1/sqrt(fan_in)); weights bf16,
# zero-padded so the latent path is 128 lanes wide inside the kernel)
# ----------------------------------------------------------------------------
def _init_linear(key, fan_in, fan_out, *, pad_in=None, pad_out=None):
    pad_in = fan_in if pad_in is None else pad_in
    pad_out = fan_out if pad_out is None else pad_out
    kw, kb = jax.random.split(key)
    bound = 1.0 / jnp.sqrt(jnp.float32(fan_in))
    w = jax.random.uniform(kw, (fan_in, fan_out), jnp.float32, -bound, bound)
    b = jax.random.uniform(kb, (1, fan_out), jnp.float32, -bound, bound)
    w = jnp.pad(w, ((0, pad_in - fan_in), (0, pad_out - fan_out)))
    b = jnp.pad(b, ((0, 0), (0, pad_out - fan_out)))
    return w.astype(jnp.bfloat16), b.astype(jnp.float32)


def init_vae_params(key, latent_size, in_dim=784):
    assert latent_size <= LATENT_PAD
    ks = jax.random.split(key, 9)
    enc_mu = (*_init_linear(ks[0], in_dim, 512),
              *_init_linear(ks[1], 512, 256),
              *_init_linear(ks[2], 256, latent_size, pad_out=LATENT_PAD))
    enc_var = (*_init_linear(ks[3], in_dim, 512),
               *_init_linear(ks[4], 512, 256),
               *_init_linear(ks[5], 256, latent_size, pad_out=LATENT_PAD))
    dec_mu = (*_init_linear(ks[6], latent_size, 256, pad_in=LATENT_PAD),
              *_init_linear(ks[7], 256, 512),
              *_init_linear(ks[8], 512, in_dim))
    return {"enc_mu": enc_mu, "enc_var": enc_var, "dec_mu": dec_mu}


# ----------------------------------------------------------------------------
if __name__ == "__main__":
    latent_size = 8
    batch = 8
    image_dim = (1, 28, 28)   # NCHW, flattened to 784 inside forward

    key = jax.random.PRNGKey(0)
    k_params, k_x, k_noise = jax.random.split(key, 3)

    params = init_vae_params(k_params, latent_size)
    x = jax.random.uniform(k_x, (batch, *image_dim), jnp.float32)

    x_mu, z_mu, z_var = vae_bernoulli_forward(
        params, x, k_noise, latent_size=latent_size)
    jax.block_until_ready((x_mu, z_mu, z_var))

    assert x_mu.shape == (batch, 784)
    assert z_mu.shape == (batch, latent_size)
    assert z_var.shape == (batch, latent_size)
    assert bool(jnp.all(z_var >= 0.0))                    # softplus output
    assert bool(jnp.all((x_mu >= 0.0) & (x_mu <= 1.0)))   # sigmoid output
    assert bool(jnp.all(jnp.isfinite(x_mu)))

    print("KERNEL_OK")
</pallas_src>

<mosaic_0001>
module attributes {stable_mosaic.version = 11 : i64} {
  func.func @_vae_fused_kernel(%arg0: i32, %arg1: memref<8x784xf32, #tpu.memory_space<vmem>>, %arg2: memref<8x128xf32, #tpu.memory_space<vmem>>, %arg3: memref<784x512xbf16, #tpu.memory_space<vmem>>, %arg4: memref<1x512xf32, #tpu.memory_space<vmem>>, %arg5: memref<512x256xbf16, #tpu.memory_space<vmem>>, %arg6: memref<1x256xf32, #tpu.memory_space<vmem>>, %arg7: memref<256x128xbf16, #tpu.memory_space<vmem>>, %arg8: memref<1x128xf32, #tpu.memory_space<vmem>>, %arg9: memref<784x512xbf16, #tpu.memory_space<vmem>>, %arg10: memref<1x512xf32, #tpu.memory_space<vmem>>, %arg11: memref<512x256xbf16, #tpu.memory_space<vmem>>, %arg12: memref<1x256xf32, #tpu.memory_space<vmem>>, %arg13: memref<256x128xbf16, #tpu.memory_space<vmem>>, %arg14: memref<1x128xf32, #tpu.memory_space<vmem>>, %arg15: memref<128x256xbf16, #tpu.memory_space<vmem>>, %arg16: memref<1x256xf32, #tpu.memory_space<vmem>>, %arg17: memref<256x512xbf16, #tpu.memory_space<vmem>>, %arg18: memref<1x512xf32, #tpu.memory_space<vmem>>, %arg19: memref<512x784xbf16, #tpu.memory_space<vmem>>, %arg20: memref<1x784xf32, #tpu.memory_space<vmem>>, %arg21: memref<8x784xf32, #tpu.memory_space<vmem>>, %arg22: memref<8x128xf32, #tpu.memory_space<vmem>>, %arg23: memref<8x128xf32, #tpu.memory_space<vmem>>) attributes {dimension_semantics = [#tpu.dimension_semantics<parallel>], iteration_bounds = array<i64: 1>, scalar_prefetch = 0 : i64, scratch_operands = 0 : i64, tpu.core_type = #tpu.core_type<tc>, window_params = [{transform_indices = @transform_0, window_bounds = array<i64: 8, 784>}, {transform_indices = @transform_1, window_bounds = array<i64: 8, 128>}, {pipeline_mode = #tpu.pipeline_mode<synchronous>, transform_indices = @transform_2, window_bounds = array<i64: 784, 512>}, {pipeline_mode = #tpu.pipeline_mode<synchronous>, transform_indices = @transform_3, window_bounds = array<i64: 1, 512>}, {pipeline_mode = #tpu.pipeline_mode<synchronous>, transform_indices = @transform_4, window_bounds = array<i64: 512, 256>}, {pipeline_mode = #tpu.pipeline_mode<synchronous>, transform_indices = @transform_5, window_bounds = array<i64: 1, 256>}, {pipeline_mode = #tpu.pipeline_mode<synchronous>, transform_indices = @transform_6, window_bounds = array<i64: 256, 128>}, {pipeline_mode = #tpu.pipeline_mode<synchronous>, transform_indices = @transform_7, window_bounds = array<i64: 1, 128>}, {pipeline_mode = #tpu.pipeline_mode<synchronous>, transform_indices = @transform_8, window_bounds = array<i64: 784, 512>}, {pipeline_mode = #tpu.pipeline_mode<synchronous>, transform_indices = @transform_9, window_bounds = array<i64: 1, 512>}, {pipeline_mode = #tpu.pipeline_mode<synchronous>, transform_indices = @transform_10, window_bounds = array<i64: 512, 256>}, {pipeline_mode = #tpu.pipeline_mode<synchronous>, transform_indices = @transform_11, window_bounds = array<i64: 1, 256>}, {pipeline_mode = #tpu.pipeline_mode<synchronous>, transform_indices = @transform_12, window_bounds = array<i64: 256, 128>}, {pipeline_mode = #tpu.pipeline_mode<synchronous>, transform_indices = @transform_13, window_bounds = array<i64: 1, 128>}, {pipeline_mode = #tpu.pipeline_mode<synchronous>, transform_indices = @transform_14, window_bounds = array<i64: 128, 256>}, {pipeline_mode = #tpu.pipeline_mode<synchronous>, transform_indices = @transform_15, window_bounds = array<i64: 1, 256>}, {pipeline_mode = #tpu.pipeline_mode<synchronous>, transform_indices = @transform_16, window_bounds = array<i64: 256, 512>}, {pipeline_mode = #tpu.pipeline_mode<synchronous>, transform_indices = @transform_17, window_bounds = array<i64: 1, 512>}, {pipeline_mode = #tpu.pipeline_mode<synchronous>, transform_indices = @transform_18, window_bounds = array<i64: 512, 784>}, {pipeline_mode = #tpu.pipeline_mode<synchronous>, transform_indices = @transform_19, window_bounds = array<i64: 1, 784>}, {transform_indices = @transform_20, window_bounds = array<i64: 8, 784>}, {transform_indices = @transform_21, window_bounds = array<i64: 8, 128>}, {transform_indices = @transform_22, window_bounds = array<i64: 8, 128>}]} {
    %c0 = arith.constant 0 : index
    %c0_0 = arith.constant 0 : index
    %0 = vector.load %arg1[%c0, %c0_0] : memref<8x784xf32, #tpu.memory_space<vmem>>, vector<8x784xf32>
    %1 = arith.truncf %0 : vector<8x784xf32> to vector<8x784xbf16>
    %c0_1 = arith.constant 0 : index
    %c0_2 = arith.constant 0 : index
    %2 = vector.load %arg3[%c0_1, %c0_2] : memref<784x512xbf16, #tpu.memory_space<vmem>>, vector<784x512xbf16>
    %cst = arith.constant dense<0.000000e+00> : vector<8x512xf32>
    %3 = tpu.matmul %1, %2, %cst {dimension_numbers = #tpu.dot_dimension_numbers<[1], [0], [0], [1], [0, 0, 1, 1], [], []>} : vector<8x784xbf16>, vector<784x512xbf16>, vector<8x512xf32> -> vector<8x512xf32>
    %c0_3 = arith.constant 0 : index
    %c0_4 = arith.constant 0 : index
    %4 = vector.load %arg4[%c0_3, %c0_4] : memref<1x512xf32, #tpu.memory_space<vmem>>, vector<1x512xf32>
    %5 = vector.broadcast %4 : vector<1x512xf32> to vector<8x512xf32>
    %6 = arith.addf %3, %5 : vector<8x512xf32>
    %cst_5 = arith.constant 0.000000e+00 : f32
    %7 = vector.broadcast %cst_5 : f32 to vector<8x512xf32>
    %8 = arith.maximumf %6, %7 : vector<8x512xf32>
    %9 = arith.truncf %8 : vector<8x512xf32> to vector<8x512xbf16>
    %c0_6 = arith.constant 0 : index
    %c0_7 = arith.constant 0 : index
    %10 = vector.load %arg5[%c0_6, %c0_7] : memref<512x256xbf16, #tpu.memory_space<vmem>>, vector<512x256xbf16>
    %cst_8 = arith.constant dense<0.000000e+00> : vector<8x256xf32>
    %11 = tpu.matmul %9, %10, %cst_8 {dimension_numbers = #tpu.dot_dimension_numbers<[1], [0], [0], [1], [0, 0, 1, 1], [], []>} : vector<8x512xbf16>, vector<512x256xbf16>, vector<8x256xf32> -> vector<8x256xf32>
    %c0_9 = arith.constant 0 : index
    %c0_10 = arith.constant 0 : index
    %12 = vector.load %arg6[%c0_9, %c0_10] : memref<1x256xf32, #tpu.memory_space<vmem>>, vector<1x256xf32>
    %13 = vector.broadcast %12 : vector<1x256xf32> to vector<8x256xf32>
    %14 = arith.addf %11, %13 : vector<8x256xf32>
    %cst_11 = arith.constant 0.000000e+00 : f32
    %15 = vector.broadcast %cst_11 : f32 to vector<8x256xf32>
    %16 = arith.maximumf %14, %15 : vector<8x256xf32>
    %17 = arith.truncf %16 : vector<8x256xf32> to vector<8x256xbf16>
    %c0_12 = arith.constant 0 : index
    %c0_13 = arith.constant 0 : index
    %18 = vector.load %arg7[%c0_12, %c0_13] : memref<256x128xbf16, #tpu.memory_space<vmem>>, vector<256x128xbf16>
    %cst_14 = arith.constant dense<0.000000e+00> : vector<8x128xf32>
    %19 = tpu.matmul %17, %18, %cst_14 {dimension_numbers = #tpu.dot_dimension_numbers<[1], [0], [0], [1], [0, 0, 1, 1], [], []>} : vector<8x256xbf16>, vector<256x128xbf16>, vector<8x128xf32> -> vector<8x128xf32>
    %c0_15 = arith.constant 0 : index
    %c0_16 = arith.constant 0 : index
    %20 = vector.load %arg8[%c0_15, %c0_16] : memref<1x128xf32, #tpu.memory_space<vmem>>, vector<1x128xf32>
    %21 = vector.broadcast %20 : vector<1x128xf32> to vector<8x128xf32>
    %22 = arith.addf %19, %21 : vector<8x128xf32>
    %23 = arith.truncf %0 : vector<8x784xf32> to vector<8x784xbf16>
    %c0_17 = arith.constant 0 : index
    %c0_18 = arith.constant 0 : index
    %24 = vector.load %arg9[%c0_17, %c0_18] : memref<784x512xbf16, #tpu.memory_space<vmem>>, vector<784x512xbf16>
    %cst_19 = arith.constant dense<0.000000e+00> : vector<8x512xf32>
    %25 = tpu.matmul %23, %24, %cst_19 {dimension_numbers = #tpu.dot_dimension_numbers<[1], [0], [0], [1], [0, 0, 1, 1], [], []>} : vector<8x784xbf16>, vector<784x512xbf16>, vector<8x512xf32> -> vector<8x512xf32>
    %c0_20 = arith.constant 0 : index
    %c0_21 = arith.constant 0 : index
    %26 = vector.load %arg10[%c0_20, %c0_21] : memref<1x512xf32, #tpu.memory_space<vmem>>, vector<1x512xf32>
    %27 = vector.broadcast %26 : vector<1x512xf32> to vector<8x512xf32>
    %28 = arith.addf %25, %27 : vector<8x512xf32>
    %cst_22 = arith.constant 0.000000e+00 : f32
    %29 = vector.broadcast %cst_22 : f32 to vector<8x512xf32>
    %30 = arith.maximumf %28, %29 : vector<8x512xf32>
    %31 = arith.truncf %30 : vector<8x512xf32> to vector<8x512xbf16>
    %c0_23 = arith.constant 0 : index
    %c0_24 = arith.constant 0 : index
    %32 = vector.load %arg11[%c0_23, %c0_24] : memref<512x256xbf16, #tpu.memory_space<vmem>>, vector<512x256xbf16>
    %cst_25 = arith.constant dense<0.000000e+00> : vector<8x256xf32>
    %33 = tpu.matmul %31, %32, %cst_25 {dimension_numbers = #tpu.dot_dimension_numbers<[1], [0], [0], [1], [0, 0, 1, 1], [], []>} : vector<8x512xbf16>, vector<512x256xbf16>, vector<8x256xf32> -> vector<8x256xf32>
    %c0_26 = arith.constant 0 : index
    %c0_27 = arith.constant 0 : index
    %34 = vector.load %arg12[%c0_26, %c0_27] : memref<1x256xf32, #tpu.memory_space<vmem>>, vector<1x256xf32>
    %35 = vector.broadcast %34 : vector<1x256xf32> to vector<8x256xf32>
    %36 = arith.addf %33, %35 : vector<8x256xf32>
    %cst_28 = arith.constant 0.000000e+00 : f32
    %37 = vector.broadcast %cst_28 : f32 to vector<8x256xf32>
    %38 = arith.maximumf %36, %37 : vector<8x256xf32>
    %39 = arith.truncf %38 : vector<8x256xf32> to vector<8x256xbf16>
    %c0_29 = arith.constant 0 : index
    %c0_30 = arith.constant 0 : index
    %40 = vector.load %arg13[%c0_29, %c0_30] : memref<256x128xbf16, #tpu.memory_space<vmem>>, vector<256x128xbf16>
    %cst_31 = arith.constant dense<0.000000e+00> : vector<8x128xf32>
    %41 = tpu.matmul %39, %40, %cst_31 {dimension_numbers = #tpu.dot_dimension_numbers<[1], [0], [0], [1], [0, 0, 1, 1], [], []>} : vector<8x256xbf16>, vector<256x128xbf16>, vector<8x128xf32> -> vector<8x128xf32>
    %c0_32 = arith.constant 0 : index
    %c0_33 = arith.constant 0 : index
    %42 = vector.load %arg14[%c0_32, %c0_33] : memref<1x128xf32, #tpu.memory_space<vmem>>, vector<1x128xf32>
    %43 = vector.broadcast %42 : vector<1x128xf32> to vector<8x128xf32>
    %44 = arith.addf %41, %43 : vector<8x128xf32>
    %cst_34 = arith.constant 0.000000e+00 : f32
    %45 = vector.broadcast %cst_34 : f32 to vector<8x128xf32>
    %46 = arith.maximumf %44, %45 : vector<8x128xf32>
    %47 = vector.broadcast %cst_34 : f32 to vector<8x128xf32>
    %48 = arith.subf %44, %47 : vector<8x128xf32>
    %49 = arith.cmpf one, %48, %48 : vector<8x128xf32>
    %50 = vector.broadcast %cst_34 : f32 to vector<8x128xf32>
    %51 = arith.addf %44, %50 : vector<8x128xf32>
    %52 = math.absf %48 : vector<8x128xf32>
    %cst_35 = arith.constant 0.000000e+00 : f32
    %53 = vector.broadcast %cst_35 : f32 to vector<8x128xf32>
    %54 = arith.subf %53, %52 : vector<8x128xf32>
    %55 = math.exp %54 : vector<8x128xf32>
    %56 = math.log1p %55 : vector<8x128xf32>
    %57 = arith.addf %46, %56 : vector<8x128xf32>
    %58 = arith.select %49, %51, %57 : vector<8x128xi1>, vector<8x128xf32>
    %c0_36 = arith.constant 0 : index
    %c0_37 = arith.constant 0 : index
    %59 = vector.load %arg2[%c0_36, %c0_37] : memref<8x128xf32, #tpu.memory_space<vmem>>, vector<8x128xf32>
    %60 = math.sqrt %58 : vector<8x128xf32>
    %61 = arith.mulf %59, %60 : vector<8x128xf32>
    %62 = arith.addf %22, %61 : vector<8x128xf32>
    %63 = arith.truncf %62 : vector<8x128xf32> to vector<8x128xbf16>
    %c0_38 = arith.constant 0 : index
    %c0_39 = arith.constant 0 : index
    %64 = vector.load %arg15[%c0_38, %c0_39] : memref<128x256xbf16, #tpu.memory_space<vmem>>, vector<128x256xbf16>
    %cst_40 = arith.constant dense<0.000000e+00> : vector<8x256xf32>
    %65 = tpu.matmul %63, %64, %cst_40 {dimension_numbers = #tpu.dot_dimension_numbers<[1], [0], [0], [1], [0, 0, 1, 1], [], []>} : vector<8x128xbf16>, vector<128x256xbf16>, vector<8x256xf32> -> vector<8x256xf32>
    %c0_41 = arith.constant 0 : index
    %c0_42 = arith.constant 0 : index
    %66 = vector.load %arg16[%c0_41, %c0_42] : memref<1x256xf32, #tpu.memory_space<vmem>>, vector<1x256xf32>
    %67 = vector.broadcast %66 : vector<1x256xf32> to vector<8x256xf32>
    %68 = arith.addf %65, %67 : vector<8x256xf32>
    %cst_43 = arith.constant 0.000000e+00 : f32
    %69 = vector.broadcast %cst_43 : f32 to vector<8x256xf32>
    %70 = arith.maximumf %68, %69 : vector<8x256xf32>
    %71 = arith.truncf %70 : vector<8x256xf32> to vector<8x256xbf16>
    %c0_44 = arith.constant 0 : index
    %c0_45 = arith.constant 0 : index
    %72 = vector.load %arg17[%c0_44, %c0_45] : memref<256x512xbf16, #tpu.memory_space<vmem>>, vector<256x512xbf16>
    %cst_46 = arith.constant dense<0.000000e+00> : vector<8x512xf32>
    %73 = tpu.matmul %71, %72, %cst_46 {dimension_numbers = #tpu.dot_dimension_numbers<[1], [0], [0], [1], [0, 0, 1, 1], [], []>} : vector<8x256xbf16>, vector<256x512xbf16>, vector<8x512xf32> -> vector<8x512xf32>
    %c0_47 = arith.constant 0 : index
    %c0_48 = arith.constant 0 : index
    %74 = vector.load %arg18[%c0_47, %c0_48] : memref<1x512xf32, #tpu.memory_space<vmem>>, vector<1x512xf32>
    %75 = vector.broadcast %74 : vector<1x512xf32> to vector<8x512xf32>
    %76 = arith.addf %73, %75 : vector<8x512xf32>
    %cst_49 = arith.constant 0.000000e+00 : f32
    %77 = vector.broadcast %cst_49 : f32 to vector<8x512xf32>
    %78 = arith.maximumf %76, %77 : vector<8x512xf32>
    %79 = arith.truncf %78 : vector<8x512xf32> to vector<8x512xbf16>
    %c0_50 = arith.constant 0 : index
    %c0_51 = arith.constant 0 : index
    %80 = vector.load %arg19[%c0_50, %c0_51] : memref<512x784xbf16, #tpu.memory_space<vmem>>, vector<512x784xbf16>
    %cst_52 = arith.constant dense<0.000000e+00> : vector<8x784xf32>
    %81 = tpu.matmul %79, %80, %cst_52 {dimension_numbers = #tpu.dot_dimension_numbers<[1], [0], [0], [1], [0, 0, 1, 1], [], []>} : vector<8x512xbf16>, vector<512x784xbf16>, vector<8x784xf32> -> vector<8x784xf32>
    %c0_53 = arith.constant 0 : index
    %c0_54 = arith.constant 0 : index
    %82 = vector.load %arg20[%c0_53, %c0_54] : memref<1x784xf32, #tpu.memory_space<vmem>>, vector<1x784xf32>
    %83 = vector.broadcast %82 : vector<1x784xf32> to vector<8x784xf32>
    %84 = arith.addf %81, %83 : vector<8x784xf32>
    %85 = arith.negf %84 : vector<8x784xf32>
    %86 = math.exp %85 : vector<8x784xf32>
    %cst_55 = arith.constant 1.000000e+00 : f32
    %87 = vector.broadcast %cst_55 : f32 to vector<8x784xf32>
    %88 = arith.addf %87, %86 : vector<8x784xf32>
    %89 = arith.divf %87, %88 : vector<8x784xf32>
    %c0_56 = arith.constant 0 : index
    %c0_57 = arith.constant 0 : index
    %90 = vector.load %arg21[%c0_56, %c0_57] : memref<8x784xf32, #tpu.memory_space<vmem>>, vector<8x784xf32>
    tpu.vector_store %arg21[%c0_56, %c0_57], %89 {strides = array<i32>} : memref<8x784xf32, #tpu.memory_space<vmem>>, vector<8x784xf32>,
    %c0_58 = arith.constant 0 : index
    %c0_59 = arith.constant 0 : index
    %91 = vector.load %arg22[%c0_58, %c0_59] : memref<8x128xf32, #tpu.memory_space<vmem>>, vector<8x128xf32>
    tpu.vector_store %arg22[%c0_58, %c0_59], %22 {strides = array<i32>} : memref<8x128xf32, #tpu.memory_space<vmem>>, vector<8x128xf32>,
    %c0_60 = arith.constant 0 : index
    %c0_61 = arith.constant 0 : index
    %92 = vector.load %arg23[%c0_60, %c0_61] : memref<8x128xf32, #tpu.memory_space<vmem>>, vector<8x128xf32>
    tpu.vector_store %arg23[%c0_60, %c0_61], %58 {strides = array<i32>} : memref<8x128xf32, #tpu.memory_space<vmem>>, vector<8x128xf32>,
    return
  }
  func.func @transform_0(%arg0: i32) -> (i32, i32) {
    %c0_i32 = arith.constant 0 : i32
    %c0_i32_0 = arith.constant 0 : i32
    return %arg0, %c0_i32 : i32, i32
  }
  func.func @transform_1(%arg0: i32) -> (i32, i32) {
    %c0_i32 = arith.constant 0 : i32
    %c0_i32_0 = arith.constant 0 : i32
    return %arg0, %c0_i32 : i32, i32
  }
  func.func @transform_2(%arg0: i32) -> (i32, i32) {
    %c0_i32 = arith.constant 0 : i32
    %c0_i32_0 = arith.constant 0 : i32
    %c0_i32_1 = arith.constant 0 : i32
    return %c0_i32, %c0_i32_0 : i32, i32
  }
  func.func @transform_3(%arg0: i32) -> (i32, i32) {
    %c0_i32 = arith.constant 0 : i32
    %c0_i32_0 = arith.constant 0 : i32
    %c0_i32_1 = arith.constant 0 : i32
    return %c0_i32, %c0_i32_0 : i32, i32
  }
  func.func @transform_4(%arg0: i32) -> (i32, i32) {
    %c0_i32 = arith.constant 0 : i32
    %c0_i32_0 = arith.constant 0 : i32
    %c0_i32_1 = arith.constant 0 : i32
    return %c0_i32, %c0_i32_0 : i32, i32
  }
  func.func @transform_5(%arg0: i32) -> (i32, i32) {
    %c0_i32 = arith.constant 0 : i32
    %c0_i32_0 = arith.constant 0 : i32
    %c0_i32_1 = arith.constant 0 : i32
    return %c0_i32, %c0_i32_0 : i32, i32
  }
  func.func @transform_6(%arg0: i32) -> (i32, i32) {
    %c0_i32 = arith.constant 0 : i32
    %c0_i32_0 = arith.constant 0 : i32
    %c0_i32_1 = arith.constant 0 : i32
    return %c0_i32, %c0_i32_0 : i32, i32
  }
  func.func @transform_7(%arg0: i32) -> (i32, i32) {
    %c0_i32 = arith.constant 0 : i32
    %c0_i32_0 = arith.constant 0 : i32
    %c0_i32_1 = arith.constant 0 : i32
    return %c0_i32, %c0_i32_0 : i32, i32
  }
  func.func @transform_8(%arg0: i32) -> (i32, i32) {
    %c0_i32 = arith.constant 0 : i32
    %c0_i32_0 = arith.constant 0 : i32
    %c0_i32_1 = arith.constant 0 : i32
    return %c0_i32, %c0_i32_0 : i32, i32
  }
  func.func @transform_9(%arg0: i32) -> (i32, i32) {
    %c0_i32 = arith.constant 0 : i32
    %c0_i32_0 = arith.constant 0 : i32
    %c0_i32_1 = arith.constant 0 : i32
    return %c0_i32, %c0_i32_0 : i32, i32
  }
  func.func @transform_10(%arg0: i32) -> (i32, i32) {
    %c0_i32 = arith.constant 0 : i32
    %c0_i32_0 = arith.constant 0 : i32
    %c0_i32_1 = arith.constant 0 : i32
    return %c0_i32, %c0_i32_0 : i32, i32
  }
  func.func @transform_11(%arg0: i32) -> (i32, i32) {
    %c0_i32 = arith.constant 0 : i32
    %c0_i32_0 = arith.constant 0 : i32
    %c0_i32_1 = arith.constant 0 : i32
    return %c0_i32, %c0_i32_0 : i32, i32
  }
  func.func @transform_12(%arg0: i32) -> (i32, i32) {
    %c0_i32 = arith.constant 0 : i32
    %c0_i32_0 = arith.constant 0 : i32
    %c0_i32_1 = arith.constant 0 : i32
    return %c0_i32, %c0_i32_0 : i32, i32
  }
  func.func @transform_13(%arg0: i32) -> (i32, i32) {
    %c0_i32 = arith.constant 0 : i32
    %c0_i32_0 = arith.constant 0 : i32
    %c0_i32_1 = arith.constant 0 : i32
    return %c0_i32, %c0_i32_0 : i32, i32
  }
  func.func @transform_14(%arg0: i32) -> (i32, i32) {
    %c0_i32 = arith.constant 0 : i32
    %c0_i32_0 = arith.constant 0 : i32
    %c0_i32_1 = arith.constant 0 : i32
    return %c0_i32, %c0_i32_0 : i32, i32
  }
  func.func @transform_15(%arg0: i32) -> (i32, i32) {
    %c0_i32 = arith.constant 0 : i32
    %c0_i32_0 = arith.constant 0 : i32
    %c0_i32_1 = arith.constant 0 : i32
    return %c0_i32, %c0_i32_0 : i32, i32
  }
  func.func @transform_16(%arg0: i32) -> (i32, i32) {
    %c0_i32 = arith.constant 0 : i32
    %c0_i32_0 = arith.constant 0 : i32
    %c0_i32_1 = arith.constant 0 : i32
    return %c0_i32, %c0_i32_0 : i32, i32
  }
  func.func @transform_17(%arg0: i32) -> (i32, i32) {
    %c0_i32 = arith.constant 0 : i32
    %c0_i32_0 = arith.constant 0 : i32
    %c0_i32_1 = arith.constant 0 : i32
    return %c0_i32, %c0_i32_0 : i32, i32
  }
  func.func @transform_18(%arg0: i32) -> (i32, i32) {
    %c0_i32 = arith.constant 0 : i32
    %c0_i32_0 = arith.constant 0 : i32
    %c0_i32_1 = arith.constant 0 : i32
    return %c0_i32, %c0_i32_0 : i32, i32
  }
  func.func @transform_19(%arg0: i32) -> (i32, i32) {
    %c0_i32 = arith.constant 0 : i32
    %c0_i32_0 = arith.constant 0 : i32
    %c0_i32_1 = arith.constant 0 : i32
    return %c0_i32, %c0_i32_0 : i32, i32
  }
  func.func @transform_20(%arg0: i32) -> (i32, i32) {
    %c0_i32 = arith.constant 0 : i32
    %c0_i32_0 = arith.constant 0 : i32
    return %arg0, %c0_i32 : i32, i32
  }
  func.func @transform_21(%arg0: i32) -> (i32, i32) {
    %c0_i32 = arith.constant 0 : i32
    %c0_i32_0 = arith.constant 0 : i32
    return %arg0, %c0_i32 : i32, i32
  }
  func.func @transform_22(%arg0: i32) -> (i32, i32) {
    %c0_i32 = arith.constant 0 : i32
    %c0_i32_0 = arith.constant 0 : i32
    return %arg0, %c0_i32 : i32, i32
  }
}

</mosaic_0001>

<llo_original>
// kernel: tpu_custom_call.1
$region0: #{tpu_custom_call.1}
  #allocation0 [shape = 'u32[]', space=smem, size = 0x4, offset = 0x4, fixed_abs, tag = 'smem constant byte address 0x4 - core index']
  #allocation1 [shape = 'u32[144,128]{1,0:T(1,128)}', space=vmem, size = 0x12000, scoped, tag = 'internal scratch']
  %s0 = inlined_call_operand.hbm [shape: f32[8,784], index: 0, kind: input, shape index: {}]
  %s1 = inlined_call_operand.hbm [shape: f32[8,128], index: 1, kind: input, shape index: {}]
  %s2 = inlined_call_operand.hbm [shape: bf16[784,512], index: 2, kind: input, shape index: {}]
  %s3 = inlined_call_operand.hbm [shape: f32[1,512], index: 3, kind: input, shape index: {}]
  %s4 = inlined_call_operand.hbm [shape: bf16[512,256], index: 4, kind: input, shape index: {}]
  %s5 = inlined_call_operand.hbm [shape: f32[1,256], index: 5, kind: input, shape index: {}]
  %s6 = inlined_call_operand.hbm [shape: bf16[256,128], index: 6, kind: input, shape index: {}]
  %s7 = inlined_call_operand.hbm [shape: f32[1,128], index: 7, kind: input, shape index: {}]
  %s8 = inlined_call_operand.hbm [shape: bf16[784,512], index: 8, kind: input, shape index: {}]
  %s9 = inlined_call_operand.hbm [shape: f32[1,512], index: 9, kind: input, shape index: {}]
  %s10 = inlined_call_operand.hbm [shape: bf16[512,256], index: 10, kind: input, shape index: {}]
  %s11 = inlined_call_operand.hbm [shape: f32[1,256], index: 11, kind: input, shape index: {}]
  %s12 = inlined_call_operand.hbm [shape: bf16[256,128], index: 12, kind: input, shape index: {}]
  %s13 = inlined_call_operand.hbm [shape: f32[1,128], index: 13, kind: input, shape index: {}]
  %s14 = inlined_call_operand.hbm [shape: bf16[128,256], index: 14, kind: input, shape index: {}]
  %s15 = inlined_call_operand.hbm [shape: f32[1,256], index: 15, kind: input, shape index: {}]
  %s16 = inlined_call_operand.hbm [shape: bf16[256,512], index: 16, kind: input, shape index: {}]
  %s17 = inlined_call_operand.hbm [shape: f32[1,512], index: 17, kind: input, shape index: {}]
  %s18 = inlined_call_operand.hbm [shape: bf16[512,784], index: 18, kind: input, shape index: {}]
  %s19 = inlined_call_operand.hbm [shape: f32[1,784], index: 19, kind: input, shape index: {}]
  %s20 = inlined_call_operand.hbm [shape: f32[8,784], index: 20, kind: output, shape index: {0}]
  %s21 = inlined_call_operand.hbm [shape: f32[8,128], index: 21, kind: output, shape index: {1}]
  %s22 = inlined_call_operand.hbm [shape: f32[8,128], index: 22, kind: output, shape index: {2}]
  %23 = xla_tuple %s20, %s21, %s22
  %s24 = sld [smem:[#allocation0]]
  $region186: #{tpu_custom_call.1} parent=0
    _
  %s26 = ssub.s32 1, %s24
  %s27 = scalar_select 0, %s26, %s24
  $region1: #{tpu_custom_call.1} parent=0
    #allocation2 [shape = 'u8[28672]{0}', space=vmem, size = 0x7000, scoped, tag = 'input window, operand 0, single buffered']
    #allocation3 [shape = 's32[1]{0}', space=sflag, size = 0x4, scoped, tag = 'scoped memory for tpu_custom_call.1']
    #allocation4 [shape = 's32[1]{0}', space=sflag, size = 0x4, scoped, tag = 'scoped memory for tpu_custom_call.1']
    #allocation5 [shape = 'u8[4096]{0}', space=vmem, size = 0x1000, scoped, tag = 'input window, operand 1, single buffered']
    #allocation6 [shape = 's32[1]{0}', space=sflag, size = 0x4, scoped, tag = 'scoped memory for tpu_custom_call.1']
    #allocation7 [shape = 'u8[802816]{0}', space=vmem, size = 0xc4000, scoped, tag = 'input window, operand 2, single buffered']
    #allocation8 [shape = 'u8[2048]{0}', space=vmem, size = 0x800, scoped, tag = 'input window, operand 3, single buffered']
    #allocation9 [shape = 's32[1]{0}', space=sflag, size = 0x4, scoped, tag = 'scoped memory for tpu_custom_call.1']
    #allocation10 [shape = 'u8[262144]{0}', space=vmem, size = 0x40000, scoped, tag = 'input window, operand 4, single buffered']
    #allocation11 [shape = 'u8[1024]{0}', space=vmem, size = 0x400, scoped, tag = 'input window, operand 5, single buffered']
    #allocation12 [shape = 's32[1]{0}', space=sflag, size = 0x4, scoped, tag = 'scoped memory for tpu_custom_call.1']
    #allocation13 [shape = 'u8[65536]{0}', space=vmem, size = 0x10000, scoped, tag = 'input window, operand 6, single buffered']
    #allocation14 [shape = 'u8[512]{0}', space=vmem, size = 0x400, scoped, tag = 'input window, operand 7, single buffered']
    #allocation15 [shape = 's32[1]{0}', space=sflag, size = 0x4, scoped, tag = 'scoped memory for tpu_custom_call.1']
    #allocation16 [shape = 'u8[802816]{0}', space=vmem, size = 0xc4000, scoped, tag = 'input window, operand 8, single buffered']
    #allocation17 [shape = 'u8[2048]{0}', space=vmem, size = 0x800, scoped, tag = 'input window, operand 9, single buffered']
    #allocation18 [shape = 's32[1]{0}', space=sflag, size = 0x4, scoped, tag = 'scoped memory for tpu_custom_call.1']
    #allocation19 [shape = 'u8[262144]{0}', space=vmem, size = 0x40000, scoped, tag = 'input window, operand 10, single buffered']
    #allocation20 [shape = 'u8[1024]{0}', space=vmem, size = 0x400, scoped, tag = 'input window, operand 11, single buffered']
    #allocation21 [shape = 's32[1]{0}', space=sflag, size = 0x4, scoped, tag = 'scoped memory for tpu_custom_call.1']
    #allocation22 [shape = 'u8[65536]{0}', space=vmem, size = 0x10000, scoped, tag = 'input window, operand 12, single buffered']
    #allocation23 [shape = 'u8[512]{0}', space=vmem, size = 0x400, scoped, tag = 'input window, operand 13, single buffered']
    #allocation24 [shape = 's32[1]{0}', space=sflag, size = 0x4, scoped, tag = 'scoped memory for tpu_custom_call.1']
    #allocation25 [shape = 'u8[65536]{0}', space=vmem, size = 0x10000, scoped, tag = 'input window, operand 14, single buffered']
    #allocation26 [shape = 'u8[1024]{0}', space=vmem, size = 0x400, scoped, tag = 'input window, operand 15, single buffered']
    #allocation27 [shape = 's32[1]{0}', space=sflag, size = 0x4, scoped, tag = 'scoped memory for tpu_custom_call.1']
    #allocation28 [shape = 'u8[262144]{0}', space=vmem, size = 0x40000, scoped, tag = 'input window, operand 16, single buffered']
    #allocation29 [shape = 'u8[2048]{0}', space=vmem, size = 0x800, scoped, tag = 'input window, operand 17, single buffered']
    #allocation30 [shape = 's32[1]{0}', space=sflag, size = 0x4, scoped, tag = 'scoped memory for tpu_custom_call.1']
    #allocation31 [shape = 'u8[917504]{0}', space=vmem, size = 0xe0000, scoped, tag = 'input window, operand 18, single buffered']
    #allocation32 [shape = 'u8[3584]{0}', space=vmem, size = 0x1000, scoped, tag = 'input window, operand 19, single buffered']
    #allocation33 [shape = 's32[1]{0}', space=sflag, size = 0x4, scoped, tag = 'scoped memory for tpu_custom_call.1']
    #allocation34 [shape = 'u8[28672]{0}', space=vmem, size = 0x7000, scoped, tag = 'output window, operand 0, single buffered']
    #allocation35 [shape = 'u8[4096]{0}', space=vmem, size = 0x1000, scoped, tag = 'output window, operand 1, single buffered']
    #allocation36 [shape = 's32[1]{0}', space=sflag, size = 0x4, scoped, tag = 'scoped memory for tpu_custom_call.1']
    #allocation37 [shape = 'u8[4096]{0}', space=vmem, size = 0x1000, scoped, tag = 'output window, operand 2, single buffered']
    %28 = vsyncpa [#allocation3], 0
    %29 = vsyncpa [#allocation6], 0
    %30 = vsyncpa [#allocation9], 0
    %31 = vsyncpa [#allocation12], 0
    %32 = vsyncpa [#allocation15], 0
    %33 = vsyncpa [#allocation18], 0
    %34 = vsyncpa [#allocation21], 0
    %35 = vsyncpa [#allocation24], 0
    %36 = vsyncpa [#allocation27], 0
    %37 = vsyncpa [#allocation30], 0
    %38 = vsyncpa [#allocation33], 0
    %39 = vsyncpa [#allocation4], 0
    %40 = vsyncpa [#allocation36], 0
    // Predicated region
    $region2: #{tpu_custom_call.1} parent=1 // pred_check
      _
    $region3: #{tpu_custom_call.1} parent=1 // pred_check_branch
      %42 = sbr.rel (0) target = $region5
    $region4: #{tpu_custom_call.1} parent=1 // pred_region
      %s44 = ssub.s32 896, 896
      %45 = vsyncadd [#allocation3], %s44
      %s47 = sshll.u32 [#allocation2], 4
      %s48 = int_to_ptr.vmem [resolvable:$true] %s47
      %50 = dma.hbm_to_vmem [thread:$0]  %s0, 896, %s48, [#allocation3]
    $region5: #{tpu_custom_call.1} parent=1 // pred_fallthru
      _
    // Predicated region
    $region6: #{tpu_custom_call.1} parent=1 // pred_check
      _
    $region7: #{tpu_custom_call.1} parent=1 // pred_check_branch
      %52 = sbr.rel (0) target = $region9
    $region8: #{tpu_custom_call.1} parent=1 // pred_region
      %s54 = ssub.s32 128, 128
      %55 = vsyncadd [#allocation6], %s54
      %s57 = sshll.u32 [#allocation5], 4
      %s58 = int_to_ptr.vmem [resolvable:$true] %s57
      %60 = dma.hbm_to_vmem [thread:$0]  %s1, 128, %s58, [#allocation6]
    $region9: #{tpu_custom_call.1} parent=1 // pred_fallthru
      _
    // Predicated region
    $region10: #{tpu_custom_call.1} parent=1 // pred_check
      _
    $region11: #{tpu_custom_call.1} parent=1 // pred_check_branch
      %62 = sbr.rel (0) target = $region13
    $region12: #{tpu_custom_call.1} parent=1 // pred_region
      %s64 = ssub.s32 25088, 25088
      %65 = vsyncadd [#allocation6], %s64
      %s66 = sshll.u32 [#allocation7], 4
      %s67 = int_to_ptr.vmem [resolvable:$true] %s66
      %72 = dma.hbm_to_vmem [thread:$0]  %s2, 25088, %s67, [#allocation6], 256, 256, 16
    $region13: #{tpu_custom_call.1} parent=1 // pred_fallthru
      _
    // Predicated region
    $region14: #{tpu_custom_call.1} parent=1 // pred_check
      _
    $region15: #{tpu_custom_call.1} parent=1 // pred_check_branch
      %74 = sbr.rel (0) target = $region17
    $region16: #{tpu_custom_call.1} parent=1 // pred_region
      %s76 = ssub.s32 64, 64
      %77 = vsyncadd [#allocation9], %s76
      %s79 = sshll.u32 [#allocation8], 4
      %s80 = int_to_ptr.vmem [resolvable:$true] %s79
      %82 = dma.hbm_to_vmem [thread:$0]  %s3, 64, %s80, [#allocation9]
    $region17: #{tpu_custom_call.1} parent=1 // pred_fallthru
      _
    // Predicated region
    $region18: #{tpu_custom_call.1} parent=1 // pred_check
      _
    $region19: #{tpu_custom_call.1} parent=1 // pred_check_branch
      %84 = sbr.rel (0) target = $region21
    $region20: #{tpu_custom_call.1} parent=1 // pred_region
      %s86 = ssub.s32 8192, 8192
      %87 = vsyncadd [#allocation9], %s86
      %s88 = sshll.u32 [#allocation10], 4
      %s89 = int_to_ptr.vmem [resolvable:$true] %s88
      %94 = dma.hbm_to_vmem [thread:$0]  %s4, 8192, %s89, [#allocation9], 128, 128, 8
    $region21: #{tpu_custom_call.1} parent=1 // pred_fallthru
      _
    // Predicated region
    $region22: #{tpu_custom_call.1} parent=1 // pred_check
      _
    $region23: #{tpu_custom_call.1} parent=1 // pred_check_branch
      %96 = sbr.rel (0) target = $region25
    $region24: #{tpu_custom_call.1} parent=1 // pred_region
      %s98 = ssub.s32 32, 32
      %99 = vsyncadd [#allocation12], %s98
      %s101 = sshll.u32 [#allocation11], 4
      %s102 = int_to_ptr.vmem [resolvable:$true] %s101
      %104 = dma.hbm_to_vmem [thread:$0]  %s5, 32, %s102, [#allocation12]
    $region25: #{tpu_custom_call.1} parent=1 // pred_fallthru
      _
    // Predicated region
    $region26: #{tpu_custom_call.1} parent=1 // pred_check
      _
    $region27: #{tpu_custom_call.1} parent=1 // pred_check_branch
      %106 = sbr.rel (0) target = $region29
    $region28: #{tpu_custom_call.1} parent=1 // pred_region
      %s108 = ssub.s32 2048, 2048
      %109 = vsyncadd [#allocation12], %s108
      %s110 = sshll.u32 [#allocation13], 4
      %s111 = int_to_ptr.vmem [resolvable:$true] %s110
      %116 = dma.hbm_to_vmem [thread:$0]  %s6, 2048, %s111, [#allocation12], 64, 64, 4
    $region29: #{tpu_custom_call.1} parent=1 // pred_fallthru
      _
    // Predicated region
    $region30: #{tpu_custom_call.1} parent=1 // pred_check
      _
    $region31: #{tpu_custom_call.1} parent=1 // pred_check_branch
      %118 = sbr.rel (0) target = $region33
    $region32: #{tpu_custom_call.1} parent=1 // pred_region
      %s120 = ssub.s32 16, 16
      %121 = vsyncadd [#allocation15], %s120
      %s123 = sshll.u32 [#allocation14], 4
      %s124 = int_to_ptr.vmem [resolvable:$true] %s123
      %126 = dma.hbm_to_vmem [thread:$0]  %s7, 16, %s124, [#allocation15]
    $region33: #{tpu_custom_call.1} parent=1 // pred_fallthru
      _
    // Predicated region
    $region34: #{tpu_custom_call.1} parent=1 // pred_check
      _
    $region35: #{tpu_custom_call.1} parent=1 // pred_check_branch
      %128 = sbr.rel (0) target = $region37
    $region36: #{tpu_custom_call.1} parent=1 // pred_region
      %s130 = ssub.s32 25088, 25088
      %131 = vsyncadd [#allocation15], %s130
      %s132 = sshll.u32 [#allocation16], 4
      %s133 = int_to_ptr.vmem [resolvable:$true] %s132
      %138 = dma.hbm_to_vmem [thread:$0]  %s8, 25088, %s133, [#allocation15], 256, 256, 16
    $region37: #{tpu_custom_call.1} parent=1 // pred_fallthru
      _
    // Predicated region
    $region38: #{tpu_custom_call.1} parent=1 // pred_check
      _
    $region39: #{tpu_custom_call.1} parent=1 // pred_check_branch
      %140 = sbr.rel (0) target = $region41
    $region40: #{tpu_custom_call.1} parent=1 // pred_region
      %s142 = ssub.s32 64, 64
      %143 = vsyncadd [#allocation18], %s142
      %s145 = sshll.u32 [#allocation17], 4
      %s146 = int_to_ptr.vmem [resolvable:$true] %s145
      %148 = dma.hbm_to_vmem [thread:$0]  %s9, 64, %s146, [#allocation18]
    $region41: #{tpu_custom_call.1} parent=1 // pred_fallthru
      _
    // Predicated region
    $region42: #{tpu_custom_call.1} parent=1 // pred_check
      _
    $region43: #{tpu_custom_call.1} parent=1 // pred_check_branch
      %150 = sbr.rel (0) target = $region45
    $region44: #{tpu_custom_call.1} parent=1 // pred_region
      %s152 = ssub.s32 8192, 8192
      %153 = vsyncadd [#allocation18], %s152
      %s154 = sshll.u32 [#allocation19], 4
      %s155 = int_to_ptr.vmem [resolvable:$true] %s154
      %160 = dma.hbm_to_vmem [thread:$0]  %s10, 8192, %s155, [#allocation18], 128, 128, 8
    $region45: #{tpu_custom_call.1} parent=1 // pred_fallthru
      _
    // Predicated region
    $region46: #{tpu_custom_call.1} parent=1 // pred_check
      _
    $region47: #{tpu_custom_call.1} parent=1 // pred_check_branch
      %162 = sbr.rel (0) target = $region49
    $region48: #{tpu_custom_call.1} parent=1 // pred_region
      %s164 = ssub.s32 32, 32
      %165 = vsyncadd [#allocation21], %s164
      %s167 = sshll.u32 [#allocation20], 4
      %s168 = int_to_ptr.vmem [resolvable:$true] %s167
      %170 = dma.hbm_to_vmem [thread:$0]  %s11, 32, %s168, [#allocation21]
    $region49: #{tpu_custom_call.1} parent=1 // pred_fallthru
      _
    // Predicated region
    $region50: #{tpu_custom_call.1} parent=1 // pred_check
      _
    $region51: #{tpu_custom_call.1} parent=1 // pred_check_branch
      %172 = sbr.rel (0) target = $region53
    $region52: #{tpu_custom_call.1} parent=1 // pred_region
      %s174 = ssub.s32 2048, 2048
      %175 = vsyncadd [#allocation21], %s174
      %s176 = sshll.u32 [#allocation22], 4
      %s177 = int_to_ptr.vmem [resolvable:$true] %s176
      %182 = dma.hbm_to_vmem [thread:$0]  %s12, 2048, %s177, [#allocation21], 64, 64, 4
    $region53: #{tpu_custom_call.1} parent=1 // pred_fallthru
      _
    // Predicated region
    $region54: #{tpu_custom_call.1} parent=1 // pred_check
      _
    $region55: #{tpu_custom_call.1} parent=1 // pred_check_branch
      %184 = sbr.rel (0) target = $region57
    $region56: #{tpu_custom_call.1} parent=1 // pred_region
      %s186 = ssub.s32 16, 16
      %187 = vsyncadd [#allocation24], %s186
      %s189 = sshll.u32 [#allocation23], 4
      %s190 = int_to_ptr.vmem [resolvable:$true] %s189
      %192 = dma.hbm_to_vmem [thread:$0]  %s13, 16, %s190, [#allocation24]
    $region57: #{tpu_custom_call.1} parent=1 // pred_fallthru
      _
    // Predicated region
    $region58: #{tpu_custom_call.1} parent=1 // pred_check
      _
    $region59: #{tpu_custom_call.1} parent=1 // pred_check_branch
      %194 = sbr.rel (0) target = $region61
    $region60: #{tpu_custom_call.1} parent=1 // pred_region
      %s196 = ssub.s32 2048, 2048
      %197 = vsyncadd [#allocation24], %s196
      %s198 = sshll.u32 [#allocation25], 4
      %s199 = int_to_ptr.vmem [resolvable:$true] %s198
      %204 = dma.hbm_to_vmem [thread:$0]  %s14, 2048, %s199, [#allocation24], 128, 128, 8
    $region61: #{tpu_custom_call.1} parent=1 // pred_fallthru
      _
    // Predicated region
    $region62: #{tpu_custom_call.1} parent=1 // pred_check
      _
    $region63: #{tpu_custom_call.1} parent=1 // pred_check_branch
      %206 = sbr.rel (0) target = $region65
    $region64: #{tpu_custom_call.1} parent=1 // pred_region
      %s208 = ssub.s32 32, 32
      %209 = vsyncadd [#allocation27], %s208
      %s211 = sshll.u32 [#allocation26], 4
      %s212 = int_to_ptr.vmem [resolvable:$true] %s211
      %214 = dma.hbm_to_vmem [thread:$0]  %s15, 32, %s212, [#allocation27]
    $region65: #{tpu_custom_call.1} parent=1 // pred_fallthru
      _
    // Predicated region
    $region66: #{tpu_custom_call.1} parent=1 // pred_check
      _
    $region67: #{tpu_custom_call.1} parent=1 // pred_check_branch
      %216 = sbr.rel (0) target = $region69
    $region68: #{tpu_custom_call.1} parent=1 // pred_region
      %s218 = ssub.s32 8192, 8192
      %219 = vsyncadd [#allocation27], %s218
      %s220 = sshll.u32 [#allocation28], 4
      %s221 = int_to_ptr.vmem [resolvable:$true] %s220
      %226 = dma.hbm_to_vmem [thread:$0]  %s16, 8192, %s221, [#allocation27], 256, 256, 16
    $region69: #{tpu_custom_call.1} parent=1 // pred_fallthru
      _
    // Predicated region
    $region70: #{tpu_custom_call.1} parent=1 // pred_check
      _
    $region71: #{tpu_custom_call.1} parent=1 // pred_check_branch
      %228 = sbr.rel (0) target = $region73
    $region72: #{tpu_custom_call.1} parent=1 // pred_region
      %s230 = ssub.s32 64, 64
      %231 = vsyncadd [#allocation30], %s230
      %s233 = sshll.u32 [#allocation29], 4
      %s234 = int_to_ptr.vmem [resolvable:$true] %s233
      %236 = dma.hbm_to_vmem [thread:$0]  %s17, 64, %s234, [#allocation30]
    $region73: #{tpu_custom_call.1} parent=1 // pred_fallthru
      _
    // Predicated region
    $region74: #{tpu_custom_call.1} parent=1 // pred_check
      _
    $region75: #{tpu_custom_call.1} parent=1 // pred_check_branch
      %238 = sbr.rel (0) target = $region77
    $region76: #{tpu_custom_call.1} parent=1 // pred_region
      %s240 = ssub.s32 28672, 28672
      %241 = vsyncadd [#allocation30], %s240
      %s242 = sshll.u32 [#allocation31], 4
      %s243 = int_to_ptr.vmem [resolvable:$true] %s242
      %248 = dma.hbm_to_vmem [thread:$0]  %s18, 28672, %s243, [#allocation30], 448, 448, 28
    $region77: #{tpu_custom_call.1} parent=1 // pred_fallthru
      _
    // Predicated region
    $region78: #{tpu_custom_call.1} parent=1 // pred_check
      _
    $region79: #{tpu_custom_call.1} parent=1 // pred_check_branch
      %250 = sbr.rel (0) target = $region81
    $region80: #{tpu_custom_call.1} parent=1 // pred_region
      %s252 = ssub.s32 112, 112
      %253 = vsyncadd [#allocation33], %s252
      %s255 = sshll.u32 [#allocation32], 4
      %s256 = int_to_ptr.vmem [resolvable:$true] %s255
      %258 = dma.hbm_to_vmem [thread:$0]  %s19, 112, %s256, [#allocation33]
    $region81: #{tpu_custom_call.1} parent=1 // pred_fallthru
      _
    // Predicated region
    $region82: #{tpu_custom_call.1} parent=1 // pred_check
      _
    $region83: #{tpu_custom_call.1} parent=1 // pred_check_branch
      %260 = sbr.rel (0) target = $region85
    $region84: #{tpu_custom_call.1} parent=1 // pred_region
      %261 = dma.done [#allocation3], 896
    $region85: #{tpu_custom_call.1} parent=1 // pred_fallthru
      _
    // Predicated region
    $region86: #{tpu_custom_call.1} parent=1 // pred_check
      _
    $region87: #{tpu_custom_call.1} parent=1 // pred_check_branch
      %263 = sbr.rel (0) target = $region89
    $region88: #{tpu_custom_call.1} parent=1 // pred_region
      %264 = dma.done [#allocation6], 128
    $region89: #{tpu_custom_call.1} parent=1 // pred_fallthru
      _
    // Predicated region
    $region90: #{tpu_custom_call.1} parent=1 // pred_check
      _
    $region91: #{tpu_custom_call.1} parent=1 // pred_check_branch
      %266 = sbr.rel (0) target = $region93
    $region92: #{tpu_custom_call.1} parent=1 // pred_region
      %267 = dma.done [#allocation6], 25088
    $region93: #{tpu_custom_call.1} parent=1 // pred_fallthru
      _
    // Predicated region
    $region94: #{tpu_custom_call.1} parent=1 // pred_check
      _
    $region95: #{tpu_custom_call.1} parent=1 // pred_check_branch
      %269 = sbr.rel (0) target = $region97
    $region96: #{tpu_custom_call.1} parent=1 // pred_region
      %270 = dma.done [#allocation9], 64
    $region97: #{tpu_custom_call.1} parent=1 // pred_fallthru
      _
    // Predicated region
    $region98: #{tpu_custom_call.1} parent=1 // pred_check
      _
    $region99: #{tpu_custom_call.1} parent=1 // pred_check_branch
      %272 = sbr.rel (0) target = $region101
    $region100: #{tpu_custom_call.1} parent=1 // pred_region
      %273 = dma.done [#allocation9], 8192
    $region101: #{tpu_custom_call.1} parent=1 // pred_fallthru
      _
    // Predicated region
    $region102: #{tpu_custom_call.1} parent=1 // pred_check
      _
    $region103: #{tpu_custom_call.1} parent=1 // pred_check_branch
      %275 = sbr.rel (0) target = $region105
    $region104: #{tpu_custom_call.1} parent=1 // pred_region
      %276 = dma.done [#allocation12], 32
    $region105: #{tpu_custom_call.1} parent=1 // pred_fallthru
      _
    // Predicated region
    $region106: #{tpu_custom_call.1} parent=1 // pred_check
      _
    $region107: #{tpu_custom_call.1} parent=1 // pred_check_branch
      %278 = sbr.rel (0) target = $region109
    $region108: #{tpu_custom_call.1} parent=1 // pred_region
      %279 = dma.done [#allocation12], 2048
    $region109: #{tpu_custom_call.1} parent=1 // pred_fallthru
      _
    // Predicated region
    $region110: #{tpu_custom_call.1} parent=1 // pred_check
      _
    $region111: #{tpu_custom_call.1} parent=1 // pred_check_branch
      %281 = sbr.rel (0) target = $region113
    $region112: #{tpu_custom_call.1} parent=1 // pred_region
      %282 = dma.done [#allocation15], 16
    $region113: #{tpu_custom_call.1} parent=1 // pred_fallthru
      _
    // Predicated region
    $region114: #{tpu_custom_call.1} parent=1 // pred_check
      _
    $region115: #{tpu_custom_call.1} parent=1 // pred_check_branch
      %284 = sbr.rel (0) target = $region117
    $region116: #{tpu_custom_call.1} parent=1 // pred_region
      %285 = dma.done [#allocation15], 25088
    $region117: #{tpu_custom_call.1} parent=1 // pred_fallthru
      _
    // Predicated region
    $region118: #{tpu_custom_call.1} parent=1 // pred_check
      _
    $region119: #{tpu_custom_call.1} parent=1 // pred_check_branch
      %287 = sbr.rel (0) target = $region121
    $region120: #{tpu_custom_call.1} parent=1 // pred_region
      %288 = dma.done [#allocation18], 64
    $region121: #{tpu_custom_call.1} parent=1 // pred_fallthru
      _
    // Predicated region
    $region122: #{tpu_custom_call.1} parent=1 // pred_check
      _
    $region123: #{tpu_custom_call.1} parent=1 // pred_check_branch
      %290 = sbr.rel (0) target = $region125
    $region124: #{tpu_custom_call.1} parent=1 // pred_region
      %291 = dma.done [#allocation18], 8192
    $region125: #{tpu_custom_call.1} parent=1 // pred_fallthru
      _
    // Predicated region
    $region126: #{tpu_custom_call.1} parent=1 // pred_check
      _
    $region127: #{tpu_custom_call.1} parent=1 // pred_check_branch
      %293 = sbr.rel (0) target = $region129
    $region128: #{tpu_custom_call.1} parent=1 // pred_region
      %294 = dma.done [#allocation21], 32
    $region129: #{tpu_custom_call.1} parent=1 // pred_fallthru
      _
    // Predicated region
    $region130: #{tpu_custom_call.1} parent=1 // pred_check
      _
    $region131: #{tpu_custom_call.1} parent=1 // pred_check_branch
      %296 = sbr.rel (0) target = $region133
    $region132: #{tpu_custom_call.1} parent=1 // pred_region
      %297 = dma.done [#allocation21], 2048
    $region133: #{tpu_custom_call.1} parent=1 // pred_fallthru
      _
    // Predicated region
    $region134: #{tpu_custom_call.1} parent=1 // pred_check
      _
    $region135: #{tpu_custom_call.1} parent=1 // pred_check_branch
      %299 = sbr.rel (0) target = $region137
    $region136: #{tpu_custom_call.1} parent=1 // pred_region
      %300 = dma.done [#allocation24], 16
    $region137: #{tpu_custom_call.1} parent=1 // pred_fallthru
      _
    // Predicated region
    $region138: #{tpu_custom_call.1} parent=1 // pred_check
      _
    $region139: #{tpu_custom_call.1} parent=1 // pred_check_branch
      %302 = sbr.rel (0) target = $region141
    $region140: #{tpu_custom_call.1} parent=1 // pred_region
      %303 = dma.done [#allocation24], 2048
    $region141: #{tpu_custom_call.1} parent=1 // pred_fallthru
      _
    // Predicated region
    $region142: #{tpu_custom_call.1} parent=1 // pred_check
      _
    $region143: #{tpu_custom_call.1} parent=1 // pred_check_branch
      %305 = sbr.rel (0) target = $region145
    $region144: #{tpu_custom_call.1} parent=1 // pred_region
      %306 = dma.done [#allocation27], 32
    $region145: #{tpu_custom_call.1} parent=1 // pred_fallthru
      _
    // Predicated region
    $region146: #{tpu_custom_call.1} parent=1 // pred_check
      _
    $region147: #{tpu_custom_call.1} parent=1 // pred_check_branch
      %308 = sbr.rel (0) target = $region149
    $region148: #{tpu_custom_call.1} parent=1 // pred_region
      %309 = dma.done [#allocation27], 8192
    $region149: #{tpu_custom_call.1} parent=1 // pred_fallthru
      _
    // Predicated region
    $region150: #{tpu_custom_call.1} parent=1 // pred_check
      _
    $region151: #{tpu_custom_call.1} parent=1 // pred_check_branch
      %311 = sbr.rel (0) target = $region153
    $region152: #{tpu_custom_call.1} parent=1 // pred_region
      %312 = dma.done [#allocation30], 64
    $region153: #{tpu_custom_call.1} parent=1 // pred_fallthru
      _
    // Predicated region
    $region154: #{tpu_custom_call.1} parent=1 // pred_check
      _
    $region155: #{tpu_custom_call.1} parent=1 // pred_check_branch
      %314 = sbr.rel (0) target = $region157
    $region156: #{tpu_custom_call.1} parent=1 // pred_region
      %315 = dma.done [#allocation30], 28672
    $region157: #{tpu_custom_call.1} parent=1 // pred_fallthru
      _
    // Predicated region
    $region158: #{tpu_custom_call.1} parent=1 // pred_check
      _
    $region159: #{tpu_custom_call.1} parent=1 // pred_check_branch
      %317 = sbr.rel (0) target = $region161
    $region160: #{tpu_custom_call.1} parent=1 // pred_region
      %318 = dma.done [#allocation33], 112
    $region161: #{tpu_custom_call.1} parent=1 // pred_fallthru
      _
    %v320 = vld [vmem:[#allocation2] sm:$0xff]
    %v321 = vld [vmem:[#allocation2 + $0x8] sm:$0xff]
    %v322 = vld [vmem:[#allocation2 + $0x10] sm:$0xff]
    %v323 = vld [vmem:[#allocation2 + $0x18] sm:$0xff]
    %v324 = vld [vmem:[#allocation2 + $0x20] sm:$0xff]
    %v325 = vld [vmem:[#allocation2 + $0x28] sm:$0xff]
    %v326 = vld [vmem:[#allocation2 + $0x30] sm:$0xff]
    %v327 = vpack.c.bf16 %v320, %v320
    %v328 = vpack.c.bf16 %v321, %v321
    %v329 = vpack.c.bf16 %v322, %v322
    %v330 = vpack.c.bf16 %v323, %v323
    %v331 = vpack.c.bf16 %v324, %v324
    %v332 = vpack.c.bf16 %v325, %v325
    %v333 = vpack.c.bf16 %v326, %v326
    %v334 = vld [vmem:[#allocation7] sm:$0xff]
    %v335 = vld [vmem:[#allocation7 + $0x8] sm:$0xff]
    %v336 = vld [vmem:[#allocation7 + $0x10] sm:$0xff]
    %v337 = vld [vmem:[#allocation7 + $0x18] sm:$0xff]
    %v338 = vld [vmem:[#allocation7 + $0x20] sm:$0xff]
    %v339 = vld [vmem:[#allocation7 + $0x28] sm:$0xff]
    %v340 = vld [vmem:[#allocation7 + $0x30] sm:$0xff]
    %v341 = vld [vmem:[#allocation7 + $0x38] sm:$0xff]
    %v342 = vld [vmem:[#allocation7 + $0x40] sm:$0xff]
    %v343 = vld [vmem:[#allocation7 + $0x48] sm:$0xff]
    %v344 = vld [vmem:[#allocation7 + $0x50] sm:$0xff]
    %v345 = vld [vmem:[#allocation7 + $0x58] sm:$0xff]
    %v346 = vld [vmem:[#allocation7 + $0x60] sm:$0xff]
    %v347 = vld [vmem:[#allocation7 + $0x68] sm:$0xff]
    %v348 = vld [vmem:[#allocation7 + $0x70] sm:$0xff]
    %v349 = vld [vmem:[#allocation7 + $0x78] sm:$0xff]
    %v350 = vld [vmem:[#allocation7 + $0x80] sm:$0xff]
    %v351 = vld [vmem:[#allocation7 + $0x88] sm:$0xff]
    %v352 = vld [vmem:[#allocation7 + $0x90] sm:$0xff]
    %v353 = vld [vmem:[#allocation7 + $0x98] sm:$0xff]
    %v354 = vld [vmem:[#allocation7 + $0xa0] sm:$0xff]
    %v355 = vld [vmem:[#allocation7 + $0xa8] sm:$0xff]
    %v356 = vld [vmem:[#allocation7 + $0xb0] sm:$0xff]
    %v357 = vld [vmem:[#allocation7 + $0xb8] sm:$0xff]
    %v358 = vld [vmem:[#allocation7 + $0xc0] sm:$0xff]
    %v359 = vld [vmem:[#allocation7 + $0xc8] sm:$0xff]
    %v360 = vld [vmem:[#allocation7 + $0xd0] sm:$0xff]
    %v361 = vld [vmem:[#allocation7 + $0xd8] sm:$0xff]
    %v362 = vld [vmem:[#allocation7 + $0xe0] sm:$0xff]
    %v363 = vld [vmem:[#allocation7 + $0xe8] sm:$0xff]
    %v364 = vld [vmem:[#allocation7 + $0xf0] sm:$0xff]
    %v365 = vld [vmem:[#allocation7 + $0xf8] sm:$0xff]
    %v366 = vld [vmem:[#allocation7 + $0x100] sm:$0xff]
    %v367 = vld [vmem:[#allocation7 + $0x108] sm:$0xff]
    %v368 = vld [vmem:[#allocation7 + $0x110] sm:$0xff]
    %v369 = vld [vmem:[#allocation7 + $0x118] sm:$0xff]
    %v370 = vld [vmem:[#allocation7 + $0x120] sm:$0xff]
    %v371 = vld [vmem:[#allocation7 + $0x128] sm:$0xff]
    %v372 = vld [vmem:[#allocation7 + $0x130] sm:$0xff]
    %v373 = vld [vmem:[#allocation7 + $0x138] sm:$0xff]
    %v374 = vld [vmem:[#allocation7 + $0x140] sm:$0xff]
    %v375 = vld [vmem:[#allocation7 + $0x148] sm:$0xff]
    %v376 = vld [vmem:[#allocation7 + $0x150] sm:$0xff]
    %v377 = vld [vmem:[#allocation7 + $0x158] sm:$0xff]
    %v378 = vld [vmem:[#allocation7 + $0x160] sm:$0xff]
    %v379 = vld [vmem:[#allocation7 + $0x168] sm:$0xff]
    %v380 = vld [vmem:[#allocation7 + $0x170] sm:$0xff]
    %v381 = vld [vmem:[#allocation7 + $0x178] sm:$0xff]
    %v382 = vld [vmem:[#allocation7 + $0x180] sm:$0xff]
    %v383 = vld [vmem:[#allocation7 + $0x188] sm:$0xff]
    %v384 = vld [vmem:[#allocation7 + $0x190] sm:$0xff]
    %v385 = vld [vmem:[#allocation7 + $0x198] sm:$0xff]
    %v386 = vld [vmem:[#allocation7 + $0x1a0] sm:$0xff]
    %v387 = vld [vmem:[#allocation7 + $0x1a8] sm:$0xff]
    %v388 = vld [vmem:[#allocation7 + $0x1b0] sm:$0xff]
    %v389 = vld [vmem:[#allocation7 + $0x1b8] sm:$0xff]
    %v390 = vld [vmem:[#allocation7 + $0x1c0] sm:$0xff]
    %v391 = vld [vmem:[#allocation7 + $0x1c8] sm:$0xff]
    %v392 = vld [vmem:[#allocation7 + $0x1d0] sm:$0xff]
    %v393 = vld [vmem:[#allocation7 + $0x1d8] sm:$0xff]
    %v394 = vld [vmem:[#allocation7 + $0x1e0] sm:$0xff]
    %v395 = vld [vmem:[#allocation7 + $0x1e8] sm:$0xff]
    %v396 = vld [vmem:[#allocation7 + $0x1f0] sm:$0xff]
    %v397 = vld [vmem:[#allocation7 + $0x1f8] sm:$0xff]
    %v398 = vld [vmem:[#allocation7 + $0x200] sm:$0xff]
    %v399 = vld [vmem:[#allocation7 + $0x208] sm:$0xff]
    %v400 = vld [vmem:[#allocation7 + $0x210] sm:$0xff]
    %v401 = vld [vmem:[#allocation7 + $0x218] sm:$0xff]
    %v402 = vld [vmem:[#allocation7 + $0x220] sm:$0xff]
    %v403 = vld [vmem:[#allocation7 + $0x228] sm:$0xff]
    %v404 = vld [vmem:[#allocation7 + $0x230] sm:$0xff]
    %v405 = vld [vmem:[#allocation7 + $0x238] sm:$0xff]
    %v406 = vld [vmem:[#allocation7 + $0x240] sm:$0xff]
    %v407 = vld [vmem:[#allocation7 + $0x248] sm:$0xff]
    %v408 = vld [vmem:[#allocation7 + $0x250] sm:$0xff]
    %v409 = vld [vmem:[#allocation7 + $0x258] sm:$0xff]
    %v410 = vld [vmem:[#allocation7 + $0x260] sm:$0xff]
    %v411 = vld [vmem:[#allocation7 + $0x268] sm:$0xff]
    %v412 = vld [vmem:[#allocation7 + $0x270] sm:$0xff]
    %v413 = vld [vmem:[#allocation7 + $0x278] sm:$0xff]
    %v414 = vld [vmem:[#allocation7 + $0x280] sm:$0xff]
    %v415 = vld [vmem:[#allocation7 + $0x288] sm:$0xff]
    %v416 = vld [vmem:[#allocation7 + $0x290] sm:$0xff]
    %v417 = vld [vmem:[#allocation7 + $0x298] sm:$0xff]
    %v418 = vld [vmem:[#allocation7 + $0x2a0] sm:$0xff]
    %v419 = vld [vmem:[#allocation7 + $0x2a8] sm:$0xff]
    %v420 = vld [vmem:[#allocation7 + $0x2b0] sm:$0xff]
    %v421 = vld [vmem:[#allocation7 + $0x2b8] sm:$0xff]
    %v422 = vld [vmem:[#allocation7 + $0x2c0] sm:$0xff]
    %v423 = vld [vmem:[#allocation7 + $0x2c8] sm:$0xff]
    %v424 = vld [vmem:[#allocation7 + $0x2d0] sm:$0xff]
    %v425 = vld [vmem:[#allocation7 + $0x2d8] sm:$0xff]
    %v426 = vld [vmem:[#allocation7 + $0x2e0] sm:$0xff]
    %v427 = vld [vmem:[#allocation7 + $0x2e8] sm:$0xff]
    %v428 = vld [vmem:[#allocation7 + $0x2f0] sm:$0xff]
    %v429 = vld [vmem:[#allocation7 + $0x2f8] sm:$0xff]
    %v430 = vld [vmem:[#allocation7 + $0x300] sm:$0xff]
    %v431 = vld [vmem:[#allocation7 + $0x308] sm:$0xff]
    %v432 = vld [vmem:[#allocation7 + $0x310] sm:$0xff]
    %v433 = vld [vmem:[#allocation7 + $0x318] sm:$0xff]
    %v434 = vld [vmem:[#allocation7 + $0x320] sm:$0xff]
    %v435 = vld [vmem:[#allocation7 + $0x328] sm:$0xff]
    %v436 = vld [vmem:[#allocation7 + $0x330] sm:$0xff]
    %v437 = vld [vmem:[#allocation7 + $0x338] sm:$0xff]
    %v438 = vld [vmem:[#allocation7 + $0x340] sm:$0xff]
    %v439 = vld [vmem:[#allocation7 + $0x348] sm:$0xff]
    %v440 = vld [vmem:[#allocation7 + $0x350] sm:$0xff]
    %v441 = vld [vmem:[#allocation7 + $0x358] sm:$0xff]
    %v442 = vld [vmem:[#allocation7 + $0x360] sm:$0xff]
    %v443 = vld [vmem:[#allocation7 + $0x368] sm:$0xff]
    %v444 = vld [vmem:[#allocation7 + $0x370] sm:$0xff]
    %v445 = vld [vmem:[#allocation7 + $0x378] sm:$0xff]
    %v446 = vld [vmem:[#allocation7 + $0x380] sm:$0xff]
    %v447 = vld [vmem:[#allocation7 + $0x388] sm:$0xff]
    %v448 = vld [vmem:[#allocation7 + $0x390] sm:$0xff]
    %v449 = vld [vmem:[#allocation7 + $0x398] sm:$0xff]
    %v450 = vld [vmem:[#allocation7 + $0x3a0] sm:$0xff]
    %v451 = vld [vmem:[#allocation7 + $0x3a8] sm:$0xff]
    %v452 = vld [vmem:[#allocation7 + $0x3b0] sm:$0xff]
    %v453 = vld [vmem:[#allocation7 + $0x3b8] sm:$0xff]
    %v454 = vld [vmem:[#allocation7 + $0x3c0] sm:$0xff]
    %v455 = vld [vmem:[#allocation7 + $0x3c8] sm:$0xff]
    %v456 = vld [vmem:[#allocation7 + $0x3d0] sm:$0xff]
    %v457 = vld [vmem:[#allocation7 + $0x3d8] sm:$0xff]
    %v458 = vld [vmem:[#allocation7 + $0x3e0] sm:$0xff]
    %v459 = vld [vmem:[#allocation7 + $0x3e8] sm:$0xff]
    %v460 = vld [vmem:[#allocation7 + $0x3f0] sm:$0xff]
    %v461 = vld [vmem:[#allocation7 + $0x3f8] sm:$0xff]
    %v462 = vld [vmem:[#allocation7 + $0x400] sm:$0xff]
    %v463 = vld [vmem:[#allocation7 + $0x408] sm:$0xff]
    %v464 = vld [vmem:[#allocation7 + $0x410] sm:$0xff]
    %v465 = vld [vmem:[#allocation7 + $0x418] sm:$0xff]
    %v466 = vld [vmem:[#allocation7 + $0x420] sm:$0xff]
    %v467 = vld [vmem:[#allocation7 + $0x428] sm:$0xff]
    %v468 = vld [vmem:[#allocation7 + $0x430] sm:$0xff]
    %v469 = vld [vmem:[#allocation7 + $0x438] sm:$0xff]
    %v470 = vld [vmem:[#allocation7 + $0x440] sm:$0xff]
    %v471 = vld [vmem:[#allocation7 + $0x448] sm:$0xff]
    %v472 = vld [vmem:[#allocation7 + $0x450] sm:$0xff]
    %v473 = vld [vmem:[#allocation7 + $0x458] sm:$0xff]
    %v474 = vld [vmem:[#allocation7 + $0x460] sm:$0xff]
    %v475 = vld [vmem:[#allocation7 + $0x468] sm:$0xff]
    %v476 = vld [vmem:[#allocation7 + $0x470] sm:$0xff]
    %v477 = vld [vmem:[#allocation7 + $0x478] sm:$0xff]
    %v478 = vld [vmem:[#allocation7 + $0x480] sm:$0xff]
    %v479 = vld [vmem:[#allocation7 + $0x488] sm:$0xff]
    %v480 = vld [vmem:[#allocation7 + $0x490] sm:$0xff]
    %v481 = vld [vmem:[#allocation7 + $0x498] sm:$0xff]
    %v482 = vld [vmem:[#allocation7 + $0x4a0] sm:$0xff]
    %v483 = vld [vmem:[#allocation7 + $0x4a8] sm:$0xff]
    %v484 = vld [vmem:[#allocation7 + $0x4b0] sm:$0xff]
    %v485 = vld [vmem:[#allocation7 + $0x4b8] sm:$0xff]
    %v486 = vld [vmem:[#allocation7 + $0x4c0] sm:$0xff]
    %v487 = vld [vmem:[#allocation7 + $0x4c8] sm:$0xff]
    %v488 = vld [vmem:[#allocation7 + $0x4d0] sm:$0xff]
    %v489 = vld [vmem:[#allocation7 + $0x4d8] sm:$0xff]
    %v490 = vld [vmem:[#allocation7 + $0x4e0] sm:$0xff]
    %v491 = vld [vmem:[#allocation7 + $0x4e8] sm:$0xff]
    %v492 = vld [vmem:[#allocation7 + $0x4f0] sm:$0xff]
    %v493 = vld [vmem:[#allocation7 + $0x4f8] sm:$0xff]
    %v494 = vld [vmem:[#allocation7 + $0x500] sm:$0xff]
    %v495 = vld [vmem:[#allocation7 + $0x508] sm:$0xff]
    %v496 = vld [vmem:[#allocation7 + $0x510] sm:$0xff]
    %v497 = vld [vmem:[#allocation7 + $0x518] sm:$0xff]
    %v498 = vld [vmem:[#allocation7 + $0x520] sm:$0xff]
    %v499 = vld [vmem:[#allocation7 + $0x528] sm:$0xff]
    %v500 = vld [vmem:[#allocation7 + $0x530] sm:$0xff]
    %v501 = vld [vmem:[#allocation7 + $0x538] sm:$0xff]
    %v502 = vld [vmem:[#allocation7 + $0x540] sm:$0xff]
    %v503 = vld [vmem:[#allocation7 + $0x548] sm:$0xff]
    %v504 = vld [vmem:[#allocation7 + $0x550] sm:$0xff]
    %v505 = vld [vmem:[#allocation7 + $0x558] sm:$0xff]
    %v506 = vld [vmem:[#allocation7 + $0x560] sm:$0xff]
    %v507 = vld [vmem:[#allocation7 + $0x568] sm:$0xff]
    %v508 = vld [vmem:[#allocation7 + $0x570] sm:$0xff]
    %v509 = vld [vmem:[#allocation7 + $0x578] sm:$0xff]
    %v510 = vld [vmem:[#allocation7 + $0x580] sm:$0xff]
    %v511 = vld [vmem:[#allocation7 + $0x588] sm:$0xff]
    %v512 = vld [vmem:[#allocation7 + $0x590] sm:$0xff]
    %v513 = vld [vmem:[#allocation7 + $0x598] sm:$0xff]
    %v514 = vld [vmem:[#allocation7 + $0x5a0] sm:$0xff]
    %v515 = vld [vmem:[#allocation7 + $0x5a8] sm:$0xff]
    %v516 = vld [vmem:[#allocation7 + $0x5b0] sm:$0xff]
    %v517 = vld [vmem:[#allocation7 + $0x5b8] sm:$0xff]
    %v518 = vld [vmem:[#allocation7 + $0x5c0] sm:$0xff]
    %v519 = vld [vmem:[#allocation7 + $0x5c8] sm:$0xff]
    %v520 = vld [vmem:[#allocation7 + $0x5d0] sm:$0xff]
    %v521 = vld [vmem:[#allocation7 + $0x5d8] sm:$0xff]
    %v522 = vld [vmem:[#allocation7 + $0x5e0] sm:$0xff]
    %v523 = vld [vmem:[#allocation7 + $0x5e8] sm:$0xff]
    %v524 = vld [vmem:[#allocation7 + $0x5f0] sm:$0xff]
    %v525 = vld [vmem:[#allocation7 + $0x5f8] sm:$0xff]
    %v526 = vld [vmem:[#allocation7 + $0x600] sm:$0xff]
    %v527 = vld [vmem:[#allocation7 + $0x608] sm:$0xff]
    %v528 = vld [vmem:[#allocation7 + $0x610] sm:$0xff]
    %v529 = vld [vmem:[#allocation7 + $0x618] sm:$0xff]
    %v530 = vld [vmem:[#allocation8] sm:$0xf]
    %v532 = vlaneseq
    %v533 = vshrl.u32 %v532, 7
    %v534 = vsub.s32 0, %v533
    %v535 = vrot.slane %v530, %v534
    %v536 = vlaneseq
    %v537 = vshrl.u32 %v536, 7
    %v538 = vsub.s32 1, %v537
    %v539 = vrot.slane %v530, %v538
    %v540 = vlaneseq
    %v541 = vshrl.u32 %v540, 7
    %v542 = vsub.s32 2, %v541
    %v543 = vrot.slane %v530, %v542
    %v544 = vlaneseq
    %v545 = vshrl.u32 %v544, 7
    %v546 = vsub.s32 3, %v545
    %v547 = vrot.slane %v530, %v546
    %v748 = vunpack.c.l.b16 %v334
    %v749 = vunpack.c.h.b16 %v334
    %v750 = vunpack.c.l.b16 %v335
    %v751 = vunpack.c.h.b16 %v335
    %v752 = vunpack.c.l.b16 %v336
    %v753 = vunpack.c.h.b16 %v336
    %v754 = vunpack.c.l.b16 %v337
    %v755 = vunpack.c.h.b16 %v337
    %v756 = vunpack.c.l.b16 %v338
    %v757 = vunpack.c.h.b16 %v338
    %v758 = vunpack.c.l.b16 %v339
    %v759 = vunpack.c.h.b16 %v339
    %v760 = vunpack.c.l.b16 %v340
    %v761 = vunpack.c.h.b16 %v340
    %v762 = vunpack.c.l.b16 %v341
    %v763 = vunpack.c.h.b16 %v341
    %v764 = vunpack.c.l.b16 %v342
    %v765 = vunpack.c.h.b16 %v342
    %v766 = vunpack.c.l.b16 %v343
    %v767 = vunpack.c.h.b16 %v343
    %v768 = vunpack.c.l.b16 %v344
    %v769 = vunpack.c.h.b16 %v344
    %v770 = vunpack.c.l.b16 %v345
    %v771 = vunpack.c.h.b16 %v345
    %v772 = vunpack.c.l.b16 %v346
    %v773 = vunpack.c.h.b16 %v346
    %v774 = vunpack.c.l.b16 %v347
    %v775 = vunpack.c.h.b16 %v347
    %v776 = vunpack.c.l.b16 %v348
    %v777 = vunpack.c.h.b16 %v348
    %v778 = vunpack.c.l.b16 %v349
    %v779 = vunpack.c.h.b16 %v349
    %v780 = vunpack.c.l.b16 %v350
    %v781 = vunpack.c.h.b16 %v350
    %v782 = vunpack.c.l.b16 %v351
    %v783 = vunpack.c.h.b16 %v351
    %v784 = vunpack.c.l.b16 %v352
    %v785 = vunpack.c.h.b16 %v352
    %v786 = vunpack.c.l.b16 %v353
    %v787 = vunpack.c.h.b16 %v353
    %v788 = vunpack.c.l.b16 %v354
    %v789 = vunpack.c.h.b16 %v354
    %v790 = vunpack.c.l.b16 %v355
    %v791 = vunpack.c.h.b16 %v355
    %v792 = vunpack.c.l.b16 %v356
    %v793 = vunpack.c.h.b16 %v356
    %v794 = vunpack.c.l.b16 %v357
    %v795 = vunpack.c.h.b16 %v357
    %v796 = vunpack.c.l.b16 %v358
    %v797 = vunpack.c.h.b16 %v358
    %v798 = vunpack.c.l.b16 %v359
    %v799 = vunpack.c.h.b16 %v359
    %v800 = vunpack.c.l.b16 %v360
    %v801 = vunpack.c.h.b16 %v360
    %v802 = vunpack.c.l.b16 %v361
    %v803 = vunpack.c.h.b16 %v361
    %v804 = vunpack.c.l.b16 %v362
    %v805 = vunpack.c.h.b16 %v362
    %v806 = vunpack.c.l.b16 %v363
    %v807 = vunpack.c.h.b16 %v363
    %v808 = vunpack.c.l.b16 %v364
    %v809 = vunpack.c.h.b16 %v364
    %v810 = vunpack.c.l.b16 %v365
    %v811 = vunpack.c.h.b16 %v365
    %v812 = vunpack.c.l.b16 %v366
    %v813 = vunpack.c.h.b16 %v366
    %v814 = vunpack.c.l.b16 %v367
    %v815 = vunpack.c.h.b16 %v367
    %v816 = vunpack.c.l.b16 %v368
    %v817 = vunpack.c.h.b16 %v368
    %v818 = vunpack.c.l.b16 %v369
    %v819 = vunpack.c.h.b16 %v369
    %v820 = vunpack.c.l.b16 %v370
    %v821 = vunpack.c.h.b16 %v370
    %v822 = vunpack.c.l.b16 %v371
    %v823 = vunpack.c.h.b16 %v371
    %v824 = vunpack.c.l.b16 %v372
    %v825 = vunpack.c.h.b16 %v372
    %v826 = vunpack.c.l.b16 %v373
    %v827 = vunpack.c.h.b16 %v373
    %v828 = vunpack.c.l.b16 %v374
    %v829 = vunpack.c.h.b16 %v374
    %v830 = vunpack.c.l.b16 %v375
    %v831 = vunpack.c.h.b16 %v375
    %v832 = vunpack.c.l.b16 %v376
    %v833 = vunpack.c.h.b16 %v376
    %v834 = vunpack.c.l.b16 %v377
    %v835 = vunpack.c.h.b16 %v377
    %v836 = vunpack.c.l.b16 %v378
    %v837 = vunpack.c.h.b16 %v378
    %v838 = vunpack.c.l.b16 %v379
    %v839 = vunpack.c.h.b16 %v379
    %v840 = vunpack.c.l.b16 %v380
    %v841 = vunpack.c.h.b16 %v380
    %v842 = vunpack.c.l.b16 %v381
    %v843 = vunpack.c.h.b16 %v381
    %v844 = vunpack.c.l.b16 %v382
    %v845 = vunpack.c.h.b16 %v382
    %v846 = vunpack.c.l.b16 %v383
    %v847 = vunpack.c.h.b16 %v383
    %v848 = vunpack.c.l.b16 %v384
    %v849 = vunpack.c.h.b16 %v384
    %v850 = vunpack.c.l.b16 %v385
    %v851 = vunpack.c.h.b16 %v385
    %v852 = vunpack.c.l.b16 %v386
    %v853 = vunpack.c.h.b16 %v386
    %v854 = vunpack.c.l.b16 %v387
    %v855 = vunpack.c.h.b16 %v387
    %v856 = vunpack.c.l.b16 %v388
    %v857 = vunpack.c.h.b16 %v388
    %v858 = vunpack.c.l.b16 %v389
    %v859 = vunpack.c.h.b16 %v389
    %v860 = vunpack.c.l.b16 %v390
    %v861 = vunpack.c.h.b16 %v390
    %v862 = vunpack.c.l.b16 %v391
    %v863 = vunpack.c.h.b16 %v391
    %v864 = vunpack.c.l.b16 %v392
    %v865 = vunpack.c.h.b16 %v392
    %v866 = vunpack.c.l.b16 %v393
    %v867 = vunpack.c.h.b16 %v393
    %v868 = vunpack.c.l.b16 %v394
    %v869 = vunpack.c.h.b16 %v394
    %v870 = vunpack.c.l.b16 %v395
    %v871 = vunpack.c.h.b16 %v395
    %v872 = vunpack.c.l.b16 %v396
    %v873 = vunpack.c.h.b16 %v396
    %v874 = vunpack.c.l.b16 %v397
    %v875 = vunpack.c.h.b16 %v397
    %v876 = vunpack.c.l.b16 %v398
    %v877 = vunpack.c.h.b16 %v398
    %v878 = vunpack.c.l.b16 %v399
    %v879 = vunpack.c.h.b16 %v399
    %v880 = vunpack.c.l.b16 %v400
    %v881 = vunpack.c.h.b16 %v400
    %v882 = vunpack.c.l.b16 %v401
    %v883 = vunpack.c.h.b16 %v401
    %v884 = vunpack.c.l.b16 %v402
    %v885 = vunpack.c.h.b16 %v402
    %v886 = vunpack.c.l.b16 %v403
    %v887 = vunpack.c.h.b16 %v403
    %v888 = vunpack.c.l.b16 %v404
    %v889 = vunpack.c.h.b16 %v404
    %v890 = vunpack.c.l.b16 %v405
    %v891 = vunpack.c.h.b16 %v405
    %v892 = vunpack.c.l.b16 %v406
    %v893 = vunpack.c.h.b16 %v406
    %v894 = vunpack.c.l.b16 %v407
    %v895 = vunpack.c.h.b16 %v407
    %v896 = vunpack.c.l.b16 %v408
    %v897 = vunpack.c.h.b16 %v408
    %v898 = vunpack.c.l.b16 %v409
    %v899 = vunpack.c.h.b16 %v409
    %v900 = vunpack.c.l.b16 %v410
    %v901 = vunpack.c.h.b16 %v410
    %v902 = vunpack.c.l.b16 %v411
    %v903 = vunpack.c.h.b16 %v411
    %v904 = vunpack.c.l.b16 %v412
    %v905 = vunpack.c.h.b16 %v412
    %v906 = vunpack.c.l.b16 %v413
    %v907 = vunpack.c.h.b16 %v413
    %v908 = vunpack.c.l.b16 %v414
    %v909 = vunpack.c.h.b16 %v414
    %v910 = vunpack.c.l.b16 %v415
    %v911 = vunpack.c.h.b16 %v415
    %v912 = vunpack.c.l.b16 %v416
    %v913 = vunpack.c.h.b16 %v416
    %v914 = vunpack.c.l.b16 %v417
    %v915 = vunpack.c.h.b16 %v417
    %v916 = vunpack.c.l.b16 %v418
    %v917 = vunpack.c.h.b16 %v418
    %v918 = vunpack.c.l.b16 %v419
    %v919 = vunpack.c.h.b16 %v419
    %v920 = vunpack.c.l.b16 %v420
    %v921 = vunpack.c.h.b16 %v420
    %v922 = vunpack.c.l.b16 %v421
    %v923 = vunpack.c.h.b16 %v421
    %v924 = vunpack.c.l.b16 %v422
    %v925 = vunpack.c.h.b16 %v422
    %v926 = vunpack.c.l.b16 %v423
    %v927 = vunpack.c.h.b16 %v423
    %v928 = vunpack.c.l.b16 %v424
    %v929 = vunpack.c.h.b16 %v424
    %v930 = vunpack.c.l.b16 %v425
    %v931 = vunpack.c.h.b16 %v425
    %v932 = vunpack.c.l.b16 %v426
    %v933 = vunpack.c.h.b16 %v426
    %v934 = vunpack.c.l.b16 %v427
    %v935 = vunpack.c.h.b16 %v427
    %v936 = vunpack.c.l.b16 %v428
    %v937 = vunpack.c.h.b16 %v428
    %v938 = vunpack.c.l.b16 %v429
    %v939 = vunpack.c.h.b16 %v429
    %v940 = vunpack.c.l.b16 %v430
    %v941 = vunpack.c.h.b16 %v430
    %v942 = vunpack.c.l.b16 %v431
    %v943 = vunpack.c.h.b16 %v431
    %v944 = vunpack.c.l.b16 %v432
    %v945 = vunpack.c.h.b16 %v432
    %v946 = vunpack.c.l.b16 %v433
    %v947 = vunpack.c.h.b16 %v433
    %v948 = vunpack.c.l.b16 %v434
    %v949 = vunpack.c.h.b16 %v434
    %v950 = vunpack.c.l.b16 %v435
    %v951 = vunpack.c.h.b16 %v435
    %v952 = vunpack.c.l.b16 %v436
    %v953 = vunpack.c.h.b16 %v436
    %v954 = vunpack.c.l.b16 %v437
    %v955 = vunpack.c.h.b16 %v437
    %v956 = vunpack.c.l.b16 %v438
    %v957 = vunpack.c.h.b16 %v438
    %v958 = vunpack.c.l.b16 %v439
    %v959 = vunpack.c.h.b16 %v439
    %v960 = vunpack.c.l.b16 %v440
    %v961 = vunpack.c.h.b16 %v440
    %v962 = vunpack.c.l.b16 %v441
    %v963 = vunpack.c.h.b16 %v441
    %v964 = vunpack.c.l.b16 %v442
    %v965 = vunpack.c.h.b16 %v442
    %v966 = vunpack.c.l.b16 %v443
    %v967 = vunpack.c.h.b16 %v443
    %v968 = vunpack.c.l.b16 %v444
    %v969 = vunpack.c.h.b16 %v444
    %v970 = vunpack.c.l.b16 %v445
    %v971 = vunpack.c.h.b16 %v445
    %v972 = vunpack.c.l.b16 %v446
    %v973 = vunpack.c.h.b16 %v446
    %v974 = vunpack.c.l.b16 %v447
    %v975 = vunpack.c.h.b16 %v447
    %v976 = vunpack.c.l.b16 %v448
    %v977 = vunpack.c.h.b16 %v448
    %v978 = vunpack.c.l.b16 %v449
    %v979 = vunpack.c.h.b16 %v449
    %v980 = vunpack.c.l.b16 %v450
    %v981 = vunpack.c.h.b16 %v450
    %v982 = vunpack.c.l.b16 %v451
    %v983 = vunpack.c.h.b16 %v451
    %v984 = vunpack.c.l.b16 %v452
    %v985 = vunpack.c.h.b16 %v452
    %v986 = vunpack.c.l.b16 %v453
    %v987 = vunpack.c.h.b16 %v453
    %v988 = vunpack.c.l.b16 %v454
    %v989 = vunpack.c.h.b16 %v454
    %v990 = vunpack.c.l.b16 %v455
    %v991 = vunpack.c.h.b16 %v455
    %v992 = vunpack.c.l.b16 %v456
    %v993 = vunpack.c.h.b16 %v456
    %v994 = vunpack.c.l.b16 %v457
    %v995 = vunpack.c.h.b16 %v457
    %v996 = vunpack.c.l.b16 %v458
    %v997 = vunpack.c.h.b16 %v458
    %v998 = vunpack.c.l.b16 %v459
    %v999 = vunpack.c.h.b16 %v459
    %v1000 = vunpack.c.l.b16 %v460
    %v1001 = vunpack.c.h.b16 %v460
    %v1002 = vunpack.c.l.b16 %v461
    %v1003 = vunpack.c.h.b16 %v461
    %v1004 = vunpack.c.l.b16 %v462
    %v1005 = vunpack.c.h.b16 %v462
    %v1006 = vunpack.c.l.b16 %v463
    %v1007 = vunpack.c.h.b16 %v463
    %v1008 = vunpack.c.l.b16 %v464
    %v1009 = vunpack.c.h.b16 %v464
    %v1010 = vunpack.c.l.b16 %v465
    %v1011 = vunpack.c.h.b16 %v465
    %v1012 = vunpack.c.l.b16 %v466
    %v1013 = vunpack.c.h.b16 %v466
    %v1014 = vunpack.c.l.b16 %v467
    %v1015 = vunpack.c.h.b16 %v467
    %v1016 = vunpack.c.l.b16 %v468
    %v1017 = vunpack.c.h.b16 %v468
    %v1018 = vunpack.c.l.b16 %v469
    %v1019 = vunpack.c.h.b16 %v469
    %v1020 = vunpack.c.l.b16 %v470
    %v1021 = vunpack.c.h.b16 %v470
    %v1022 = vunpack.c.l.b16 %v471
    %v1023 = vunpack.c.h.b16 %v471
    %v1024 = vunpack.c.l.b16 %v472
    %v1025 = vunpack.c.h.b16 %v472
    %v1026 = vunpack.c.l.b16 %v473
    %v1027 = vunpack.c.h.b16 %v473
    %v1028 = vunpack.c.l.b16 %v474
    %v1029 = vunpack.c.h.b16 %v474
    %v1030 = vunpack.c.l.b16 %v475
    %v1031 = vunpack.c.h.b16 %v475
    %v1032 = vunpack.c.l.b16 %v476
    %v1033 = vunpack.c.h.b16 %v476
    %v1034 = vunpack.c.l.b16 %v477
    %v1035 = vunpack.c.h.b16 %v477
    %v1036 = vunpack.c.l.b16 %v478
    %v1037 = vunpack.c.h.b16 %v478
    %v1038 = vunpack.c.l.b16 %v479
    %v1039 = vunpack.c.h.b16 %v479
    %v1040 = vunpack.c.l.b16 %v480
    %v1041 = vunpack.c.h.b16 %v480
    %v1042 = vunpack.c.l.b16 %v481
    %v1043 = vunpack.c.h.b16 %v481
    %v1044 = vunpack.c.l.b16 %v482
    %v1045 = vunpack.c.h.b16 %v482
    %v1046 = vunpack.c.l.b16 %v483
    %v1047 = vunpack.c.h.b16 %v483
    %v1048 = vunpack.c.l.b16 %v484
    %v1049 = vunpack.c.h.b16 %v484
    %v1050 = vunpack.c.l.b16 %v485
    %v1051 = vunpack.c.h.b16 %v485
    %v1052 = vunpack.c.l.b16 %v486
    %v1053 = vunpack.c.h.b16 %v486
    %v1054 = vunpack.c.l.b16 %v487
    %v1055 = vunpack.c.h.b16 %v487
    %v1056 = vunpack.c.l.b16 %v488
    %v1057 = vunpack.c.h.b16 %v488
    %v1058 = vunpack.c.l.b16 %v489
    %v1059 = vunpack.c.h.b16 %v489
    %v1060 = vunpack.c.l.b16 %v490
    %v1061 = vunpack.c.h.b16 %v490
    %v1062 = vunpack.c.l.b16 %v491
    %v1063 = vunpack.c.h.b16 %v491
    %v1064 = vunpack.c.l.b16 %v492
    %v1065 = vunpack.c.h.b16 %v492
    %v1066 = vunpack.c.l.b16 %v493
    %v1067 = vunpack.c.h.b16 %v493
    %v1068 = vunpack.c.l.b16 %v494
    %v1069 = vunpack.c.h.b16 %v494
    %v1070 = vunpack.c.l.b16 %v495
    %v1071 = vunpack.c.h.b16 %v495
    %v1072 = vunpack.c.l.b16 %v496
    %v1073 = vunpack.c.h.b16 %v496
    %v1074 = vunpack.c.l.b16 %v497
    %v1075 = vunpack.c.h.b16 %v497
    %v1076 = vunpack.c.l.b16 %v498
    %v1077 = vunpack.c.h.b16 %v498
    %v1078 = vunpack.c.l.b16 %v499
    %v1079 = vunpack.c.h.b16 %v499
    %v1080 = vunpack.c.l.b16 %v500
    %v1081 = vunpack.c.h.b16 %v500
    %v1082 = vunpack.c.l.b16 %v501
    %v1083 = vunpack.c.h.b16 %v501
    %v1084 = vunpack.c.l.b16 %v502
    %v1085 = vunpack.c.h.b16 %v502
    %v1086 = vunpack.c.l.b16 %v503
    %v1087 = vunpack.c.h.b16 %v503
    %v1088 = vunpack.c.l.b16 %v504
    %v1089 = vunpack.c.h.b16 %v504
    %v1090 = vunpack.c.l.b16 %v505
    %v1091 = vunpack.c.h.b16 %v505
    %v1092 = vunpack.c.l.b16 %v506
    %v1093 = vunpack.c.h.b16 %v506
    %v1094 = vunpack.c.l.b16 %v507
    %v1095 = vunpack.c.h.b16 %v507
    %v1096 = vunpack.c.l.b16 %v508
    %v1097 = vunpack.c.h.b16 %v508
    %v1098 = vunpack.c.l.b16 %v509
    %v1099 = vunpack.c.h.b16 %v509
    %v1100 = vunpack.c.l.b16 %v510
    %v1101 = vunpack.c.h.b16 %v510
    %v1102 = vunpack.c.l.b16 %v511
    %v1103 = vunpack.c.h.b16 %v511
    %v1104 = vunpack.c.l.b16 %v512
    %v1105 = vunpack.c.h.b16 %v512
    %v1106 = vunpack.c.l.b16 %v513
    %v1107 = vunpack.c.h.b16 %v513
    %v1108 = vunpack.c.l.b16 %v514
    %v1109 = vunpack.c.h.b16 %v514
    %v1110 = vunpack.c.l.b16 %v515
    %v1111 = vunpack.c.h.b16 %v515
    %v1112 = vunpack.c.l.b16 %v516
    %v1113 = vunpack.c.h.b16 %v516
    %v1114 = vunpack.c.l.b16 %v517
    %v1115 = vunpack.c.h.b16 %v517
    %v1116 = vunpack.c.l.b16 %v518
    %v1117 = vunpack.c.h.b16 %v518
    %v1118 = vunpack.c.l.b16 %v519
    %v1119 = vunpack.c.h.b16 %v519
    %v1120 = vunpack.c.l.b16 %v520
    %v1121 = vunpack.c.h.b16 %v520
    %v1122 = vunpack.c.l.b16 %v521
    %v1123 = vunpack.c.h.b16 %v521
    %v1124 = vunpack.c.l.b16 %v522
    %v1125 = vunpack.c.h.b16 %v522
    %v1126 = vunpack.c.l.b16 %v523
    %v1127 = vunpack.c.h.b16 %v523
    %v1128 = vunpack.c.l.b16 %v524
    %v1129 = vunpack.c.h.b16 %v524
    %v1130 = vunpack.c.l.b16 %v525
    %v1131 = vunpack.c.h.b16 %v525
    %v1132 = vunpack.c.l.b16 %v526
    %v1133 = vunpack.c.h.b16 %v526
    %v1134 = vunpack.c.l.b16 %v527
    %v1135 = vunpack.c.h.b16 %v527
    %v1136 = vunpack.c.l.b16 %v528
    %v1137 = vunpack.c.h.b16 %v528
    %v1138 = vunpack.c.l.b16 %v529
    %v1139 = vunpack.c.h.b16 %v529
    %v1140 = vpack.c.b16 %v752, %v748
    %v1141 = vpack.c.b16 %v753, %v749
    %v1142 = vpack.c.b16 %v754, %v750
    %v1143 = vpack.c.b16 %v755, %v751
    %v1144 = vpack.c.b16 %v760, %v756
    %v1145 = vpack.c.b16 %v761, %v757
    %v1146 = vpack.c.b16 %v762, %v758
    %v1147 = vpack.c.b16 %v763, %v759
    %v1148 = vpack.c.b16 %v768, %v764
    %v1149 = vpack.c.b16 %v769, %v765
    %v1150 = vpack.c.b16 %v770, %v766
    %v1151 = vpack.c.b16 %v771, %v767
    %v1152 = vpack.c.b16 %v776, %v772
    %v1153 = vpack.c.b16 %v777, %v773
    %v1154 = vpack.c.b16 %v778, %v774
    %v1155 = vpack.c.b16 %v779, %v775
    %v1156 = vpack.c.b16 %v784, %v780
    %v1157 = vpack.c.b16 %v785, %v781
    %v1158 = vpack.c.b16 %v786, %v782
    %v1159 = vpack.c.b16 %v787, %v783
    %v1160 = vpack.c.b16 %v792, %v788
    %v1161 = vpack.c.b16 %v793, %v789
    %v1162 = vpack.c.b16 %v794, %v790
    %v1163 = vpack.c.b16 %v795, %v791
    %v1164 = vpack.c.b16 %v800, %v796
    %v1165 = vpack.c.b16 %v801, %v797
    %v1166 = vpack.c.b16 %v802, %v798
    %v1167 = vpack.c.b16 %v803, %v799
    %v1168 = vpack.c.b16 %v808, %v804
    %v1169 = vpack.c.b16 %v809, %v805
    %v1170 = vpack.c.b16 %v810, %v806
    %v1171 = vpack.c.b16 %v811, %v807
    %v1172 = vpack.c.b16 %v816, %v812
    %v1173 = vpack.c.b16 %v817, %v813
    %v1174 = vpack.c.b16 %v818, %v814
    %v1175 = vpack.c.b16 %v819, %v815
    %v1176 = vpack.c.b16 %v824, %v820
    %v1177 = vpack.c.b16 %v825, %v821
    %v1178 = vpack.c.b16 %v826, %v822
    %v1179 = vpack.c.b16 %v827, %v823
    %v1180 = vpack.c.b16 %v832, %v828
    %v1181 = vpack.c.b16 %v833, %v829
    %v1182 = vpack.c.b16 %v834, %v830
    %v1183 = vpack.c.b16 %v835, %v831
    %v1184 = vpack.c.b16 %v840, %v836
    %v1185 = vpack.c.b16 %v841, %v837
    %v1186 = vpack.c.b16 %v842, %v838
    %v1187 = vpack.c.b16 %v843, %v839
    %v1188 = vpack.c.b16 %v848, %v844
    %v1189 = vpack.c.b16 %v849, %v845
    %v1190 = vpack.c.b16 %v850, %v846
    %v1191 = vpack.c.b16 %v851, %v847
    %v1192 = vpack.c.b16 %v856, %v852
    %v1193 = vpack.c.b16 %v857, %v853
    %v1194 = vpack.c.b16 %v858, %v854
    %v1195 = vpack.c.b16 %v859, %v855
    %v1196 = vpack.c.b16 %v864, %v860
    %v1197 = vpack.c.b16 %v865, %v861
    %v1198 = vpack.c.b16 %v866, %v862
    %v1199 = vpack.c.b16 %v867, %v863
    %v1200 = vpack.c.b16 %v872, %v868
    %v1201 = vpack.c.b16 %v873, %v869
    %v1202 = vpack.c.b16 %v874, %v870
    %v1203 = vpack.c.b16 %v875, %v871
    %v1204 = vpack.c.b16 %v880, %v876
    %v1205 = vpack.c.b16 %v881, %v877
    %v1206 = vpack.c.b16 %v882, %v878
    %v1207 = vpack.c.b16 %v883, %v879
    %v1208 = vpack.c.b16 %v888, %v884
    %v1209 = vpack.c.b16 %v889, %v885
    %v1210 = vpack.c.b16 %v890, %v886
    %v1211 = vpack.c.b16 %v891, %v887
    %v1212 = vpack.c.b16 %v896, %v892
    %v1213 = vpack.c.b16 %v897, %v893
    %v1214 = vpack.c.b16 %v898, %v894
    %v1215 = vpack.c.b16 %v899, %v895
    %v1216 = vpack.c.b16 %v904, %v900
    %v1217 = vpack.c.b16 %v905, %v901
    %v1218 = vpack.c.b16 %v906, %v902
    %v1219 = vpack.c.b16 %v907, %v903
    %v1220 = vpack.c.b16 %v912, %v908
    %v1221 = vpack.c.b16 %v913, %v909
    %v1222 = vpack.c.b16 %v914, %v910
    %v1223 = vpack.c.b16 %v915, %v911
    %v1224 = vpack.c.b16 %v920, %v916
    %v1225 = vpack.c.b16 %v921, %v917
    %v1226 = vpack.c.b16 %v922, %v918
    %v1227 = vpack.c.b16 %v923, %v919
    %v1228 = vpack.c.b16 %v928, %v924
    %v1229 = vpack.c.b16 %v929, %v925
    %v1230 = vpack.c.b16 %v930, %v926
    %v1231 = vpack.c.b16 %v931, %v927
    %v1232 = vpack.c.b16 %v936, %v932
    %v1233 = vpack.c.b16 %v937, %v933
    %v1234 = vpack.c.b16 %v938, %v934
    %v1235 = vpack.c.b16 %v939, %v935
    %v1236 = vpack.c.b16 %v944, %v940
    %v1237 = vpack.c.b16 %v945, %v941
    %v1238 = vpack.c.b16 %v946, %v942
    %v1239 = vpack.c.b16 %v947, %v943
    %v1240 = vpack.c.b16 %v952, %v948
    %v1241 = vpack.c.b16 %v953, %v949
    %v1242 = vpack.c.b16 %v954, %v950
    %v1243 = vpack.c.b16 %v955, %v951
    %v1244 = vpack.c.b16 %v960, %v956
    %v1245 = vpack.c.b16 %v961, %v957
    %v1246 = vpack.c.b16 %v962, %v958
    %v1247 = vpack.c.b16 %v963, %v959
    %v1248 = vpack.c.b16 %v968, %v964
    %v1249 = vpack.c.b16 %v969, %v965
    %v1250 = vpack.c.b16 %v970, %v966
    %v1251 = vpack.c.b16 %v971, %v967
    %v1252 = vpack.c.b16 %v976, %v972
    %v1253 = vpack.c.b16 %v977, %v973
    %v1254 = vpack.c.b16 %v978, %v974
    %v1255 = vpack.c.b16 %v979, %v975
    %v1256 = vpack.c.b16 %v984, %v980
    %v1257 = vpack.c.b16 %v985, %v981
    %v1258 = vpack.c.b16 %v986, %v982
    %v1259 = vpack.c.b16 %v987, %v983
    %v1260 = vpack.c.b16 %v992, %v988
    %v1261 = vpack.c.b16 %v993, %v989
    %v1262 = vpack.c.b16 %v994, %v990
    %v1263 = vpack.c.b16 %v995, %v991
    %v1264 = vpack.c.b16 %v1000, %v996
    %v1265 = vpack.c.b16 %v1001, %v997
    %v1266 = vpack.c.b16 %v1002, %v998
    %v1267 = vpack.c.b16 %v1003, %v999
    %v1268 = vpack.c.b16 %v1008, %v1004
    %v1269 = vpack.c.b16 %v1009, %v1005
    %v1270 = vpack.c.b16 %v1010, %v1006
    %v1271 = vpack.c.b16 %v1011, %v1007
    %v1272 = vpack.c.b16 %v1016, %v1012
    %v1273 = vpack.c.b16 %v1017, %v1013
    %v1274 = vpack.c.b16 %v1018, %v1014
    %v1275 = vpack.c.b16 %v1019, %v1015
    %v1276 = vpack.c.b16 %v1024, %v1020
    %v1277 = vpack.c.b16 %v1025, %v1021
    %v1278 = vpack.c.b16 %v1026, %v1022
    %v1279 = vpack.c.b16 %v1027, %v1023
    %v1280 = vpack.c.b16 %v1032, %v1028
    %v1281 = vpack.c.b16 %v1033, %v1029
    %v1282 = vpack.c.b16 %v1034, %v1030
    %v1283 = vpack.c.b16 %v1035, %v1031
    %v1284 = vpack.c.b16 %v1040, %v1036
    %v1285 = vpack.c.b16 %v1041, %v1037
    %v1286 = vpack.c.b16 %v1042, %v1038
    %v1287 = vpack.c.b16 %v1043, %v1039
    %v1288 = vpack.c.b16 %v1048, %v1044
    %v1289 = vpack.c.b16 %v1049, %v1045
    %v1290 = vpack.c.b16 %v1050, %v1046
    %v1291 = vpack.c.b16 %v1051, %v1047
    %v1292 = vpack.c.b16 %v1056, %v1052
    %v1293 = vpack.c.b16 %v1057, %v1053
    %v1294 = vpack.c.b16 %v1058, %v1054
    %v1295 = vpack.c.b16 %v1059, %v1055
    %v1296 = vpack.c.b16 %v1064, %v1060
    %v1297 = vpack.c.b16 %v1065, %v1061
    %v1298 = vpack.c.b16 %v1066, %v1062
    %v1299 = vpack.c.b16 %v1067, %v1063
    %v1300 = vpack.c.b16 %v1072, %v1068
    %v1301 = vpack.c.b16 %v1073, %v1069
    %v1302 = vpack.c.b16 %v1074, %v1070
    %v1303 = vpack.c.b16 %v1075, %v1071
    %v1304 = vpack.c.b16 %v1080, %v1076
    %v1305 = vpack.c.b16 %v1081, %v1077
    %v1306 = vpack.c.b16 %v1082, %v1078
    %v1307 = vpack.c.b16 %v1083, %v1079
    %v1308 = vpack.c.b16 %v1088, %v1084
    %v1309 = vpack.c.b16 %v1089, %v1085
    %v1310 = vpack.c.b16 %v1090, %v1086
    %v1311 = vpack.c.b16 %v1091, %v1087
    %v1312 = vpack.c.b16 %v1096, %v1092
    %v1313 = vpack.c.b16 %v1097, %v1093
    %v1314 = vpack.c.b16 %v1098, %v1094
    %v1315 = vpack.c.b16 %v1099, %v1095
    %v1316 = vpack.c.b16 %v1104, %v1100
    %v1317 = vpack.c.b16 %v1105, %v1101
    %v1318 = vpack.c.b16 %v1106, %v1102
    %v1319 = vpack.c.b16 %v1107, %v1103
    %v1320 = vpack.c.b16 %v1112, %v1108
    %v1321 = vpack.c.b16 %v1113, %v1109
    %v1322 = vpack.c.b16 %v1114, %v1110
    %v1323 = vpack.c.b16 %v1115, %v1111
    %v1324 = vpack.c.b16 %v1120, %v1116
    %v1325 = vpack.c.b16 %v1121, %v1117
    %v1326 = vpack.c.b16 %v1122, %v1118
    %v1327 = vpack.c.b16 %v1123, %v1119
    %v1328 = vpack.c.b16 %v1128, %v1124
    %v1329 = vpack.c.b16 %v1129, %v1125
    %v1330 = vpack.c.b16 %v1130, %v1126
    %v1331 = vpack.c.b16 %v1131, %v1127
    %v1332 = vpack.c.b16 %v1136, %v1132
    %v1333 = vpack.c.b16 %v1137, %v1133
    %v1334 = vpack.c.b16 %v1138, %v1134
    %v1335 = vpack.c.b16 %v1139, %v1135
    %vm1532 = vcmask 130048
    %v1534 = vsel %vm1532, %v333, 0
    %1536 = vmatprep.subr.bf16.mxu0 %v1141
    %1537 = vmatpush1.bf16.msra.mxu0 %v1140
    %1538 = vmatprep.subr.bf16.mxu0 %v1145
    %1539 = vmatpush1.bf16.msra.mxu0 %v1144
    %1540 = vmatprep.subr.bf16.mxu0 %v1149
    %1541 = vmatpush1.bf16.msra.mxu0 %v1148
    %1542 = vmatprep.subr.bf16.mxu0 %v1153
    %1543 = vmatpush1.bf16.msra.mxu0 %v1152
    %1544 = vmatprep.subr.bf16.mxu0 %v1157
    %1545 = vmatpush1.bf16.msra.mxu0 %v1156
    %1546 = vmatprep.subr.bf16.mxu0 %v1161
    %1547 = vmatpush1.bf16.msra.mxu0 %v1160
    %1548 = vmatprep.subr.bf16.mxu0 %v1165
    %1549 = vmatpush1.bf16.msra.mxu0 %v1164
    %1550 = vmatprep.subr.bf16.mxu0 %v1169
    %1551 = vmatpush1.bf16.msra.mxu0 %v1168
    %1552 = vmatprep.subr.bf16.mxu0 %v1173
    %1553 = vmatpush1.bf16.msra.mxu0 %v1172
    %1554 = vmatprep.subr.bf16.mxu0 %v1177
    %1555 = vmatpush1.bf16.msra.mxu0 %v1176
    %1556 = vmatprep.subr.bf16.mxu0 %v1181
    %1557 = vmatpush1.bf16.msra.mxu0 %v1180
    %1558 = vmatprep.subr.bf16.mxu0 %v1185
    %1559 = vmatpush1.bf16.msra.mxu0 %v1184
    %1560 = vmatprep.subr.bf16.mxu0 %v1189
    %1561 = vmatpush1.bf16.msra.mxu0 %v1188
    %1562 = vmatprep.subr.bf16.mxu0 %v1193
    %1563 = vmatpush1.bf16.msra.mxu0 %v1192
    %1564 = vmatprep.subr.bf16.mxu0 %v1197
    %1565 = vmatpush1.bf16.msra.mxu0 %v1196
    %1566 = vmatprep.subr.bf16.mxu0 %v1201
    %1567 = vmatpush1.bf16.msra.mxu0 %v1200
    %1568 = vmatprep.mubr.bf16.mxu0 %v328
    %1569 = vmatmul.mubr.bf16.gmra.mrb[0].mxu0 %v327
    %v1570 = vpop.f32.mrb[0].mxu0
    %v1571 = vadd.f32 %v535, %v1570
    %v1572 = vpop.f32.mrb[0].mxu0
    %v1573 = vadd.f32 %v539, %v1572
    %v1574 = vpop.f32.mrb[0].mxu0
    %v1575 = vpop.f32.mrb[0].mxu0
    %1576 = vdwg.mxu0
    %1577 = vmatprep.subr.bf16.mxu0 %v1205
    %1578 = vmatpush1.bf16.msra.mxu0 %v1204
    %1579 = vmatprep.subr.bf16.mxu0 %v1209
    %1580 = vmatpush1.bf16.msra.mxu0 %v1208
    %1581 = vmatprep.subr.bf16.mxu0 %v1213
    %1582 = vmatpush1.bf16.msra.mxu0 %v1212
    %1583 = vmatprep.subr.bf16.mxu0 %v1217
    %1584 = vmatpush1.bf16.msra.mxu0 %v1216
    %1585 = vmatprep.subr.bf16.mxu0 %v1221
    %1586 = vmatpush1.bf16.msra.mxu0 %v1220
    %1587 = vmatprep.subr.bf16.mxu0 %v1225
    %1588 = vmatpush1.bf16.msra.mxu0 %v1224
    %1589 = vmatprep.subr.bf16.mxu0 %v1229
    %1590 = vmatpush1.bf16.msra.mxu0 %v1228
    %1591 = vmatprep.subr.bf16.mxu0 %v1233
    %1592 = vmatpush1.bf16.msra.mxu0 %v1232
    %1593 = vmatprep.subr.bf16.mxu0 %v1237
    %1594 = vmatpush1.bf16.msra.mxu0 %v1236
    %1595 = vmatprep.subr.bf16.mxu0 %v1241
    %1596 = vmatpush1.bf16.msra.mxu0 %v1240
    %1597 = vmatprep.subr.bf16.mxu0 %v1245
    %1598 = vmatpush1.bf16.msra.mxu0 %v1244
    %1599 = vmatprep.subr.bf16.mxu0 %v1249
    %1600 = vmatpush1.bf16.msra.mxu0 %v1248
    %1601 = vmatprep.subr.bf16.mxu0 %v1253
    %1602 = vmatpush1.bf16.msra.mxu0 %v1252
    %1603 = vmatprep.subr.bf16.mxu0 %v1257
    %1604 = vmatpush1.bf16.msra.mxu0 %v1256
    %1605 = vmatprep.subr.bf16.mxu0 %v1261
    %1606 = vmatpush1.bf16.msra.mxu0 %v1260
    %1607 = vmatprep.subr.bf16.mxu0 %v1265
    %1608 = vmatpush1.bf16.msra.mxu0 %v1264
    %1609 = vmatprep.mubr.bf16.mxu0 %v330
    %1610 = vmatmul.mubr.bf16.gmra.mrb[0].mxu0 %v329
    %v1611 = vpop.f32.mrb[0].mxu0
    %v1612 = vadd.f32 %v1571, %v1611
    %v1613 = vpop.f32.mrb[0].mxu0
    %v1614 = vadd.f32 %v1573, %v1613
    %v1615 = vpop.f32.mrb[0].mxu0
    %v1616 = vpop.f32.mrb[0].mxu0
    %1617 = vdwg.mxu0
    %1618 = vmatprep.subr.bf16.mxu0 %v1269
    %1619 = vmatpush1.bf16.msra.mxu0 %v1268
    %1620 = vmatprep.subr.bf16.mxu0 %v1273
    %1621 = vmatpush1.bf16.msra.mxu0 %v1272
    %1622 = vmatprep.subr.bf16.mxu0 %v1277
    %1623 = vmatpush1.bf16.msra.mxu0 %v1276
    %1624 = vmatprep.subr.bf16.mxu0 %v1281
    %1625 = vmatpush1.bf16.msra.mxu0 %v1280
    %1626 = vmatprep.subr.bf16.mxu0 %v1285
    %1627 = vmatpush1.bf16.msra.mxu0 %v1284
    %1628 = vmatprep.subr.bf16.mxu0 %v1289
    %1629 = vmatpush1.bf16.msra.mxu0 %v1288
    %1630 = vmatprep.subr.bf16.mxu0 %v1293
    %1631 = vmatpush1.bf16.msra.mxu0 %v1292
    %1632 = vmatprep.subr.bf16.mxu0 %v1297
    %1633 = vmatpush1.bf16.msra.mxu0 %v1296
    %1634 = vmatprep.subr.bf16.mxu0 %v1301
    %1635 = vmatpush1.bf16.msra.mxu0 %v1300
    %1636 = vmatprep.subr.bf16.mxu0 %v1305
    %1637 = vmatpush1.bf16.msra.mxu0 %v1304
    %1638 = vmatprep.subr.bf16.mxu0 %v1309
    %1639 = vmatpush1.bf16.msra.mxu0 %v1308
    %1640 = vmatprep.subr.bf16.mxu0 %v1313
    %1641 = vmatpush1.bf16.msra.mxu0 %v1312
    %1642 = vmatprep.subr.bf16.mxu0 %v1317
    %1643 = vmatpush1.bf16.msra.mxu0 %v1316
    %1644 = vmatprep.subr.bf16.mxu0 %v1321
    %1645 = vmatpush1.bf16.msra.mxu0 %v1320
    %1646 = vmatprep.subr.bf16.mxu0 %v1325
    %1647 = vmatpush1.bf16.msra.mxu0 %v1324
    %1648 = vmatprep.subr.bf16.mxu0 %v1329
    %1649 = vmatpush1.bf16.msra.mxu0 %v1328
    %1650 = vmatprep.mubr.bf16.mxu0 %v332
    %1651 = vmatmul.mubr.bf16.gmra.mrb[0].mxu0 %v331
    %v1652 = vpop.f32.mrb[0].mxu0
    %v1653 = vadd.f32 %v1612, %v1652
    %v1654 = vpop.f32.mrb[0].mxu0
    %v1655 = vadd.f32 %v1614, %v1654
    %v1656 = vpop.f32.mrb[0].mxu0
    %v1657 = vpop.f32.mrb[0].mxu0
    %1658 = vdwg.mxu0
    %1659 = vmatprep.subr.bf16.mxu0 %v1333
    %1660 = vmatpush1.bf16.msra.mxu0 %v1332
    %1661 = vmatprep.subr.bf16.mxu0 0
    %1662 = vmatpush1.bf16.msra.mxu0 0
    %1663 = vmatprep.subr.bf16.mxu0 0
    %1664 = vmatpush1.bf16.msra.mxu0 0
    %1665 = vmatprep.subr.bf16.mxu0 0
    %1666 = vmatpush1.bf16.msra.mxu0 0
    %1667 = vmatprep.subr.bf16.mxu0 0
    %1668 = vmatpush1.bf16.msra.mxu0 0
    %1669 = vmatprep.subr.bf16.mxu0 0
    %1670 = vmatpush1.bf16.msra.mxu0 0
    %1671 = vmatprep.subr.bf16.mxu0 0
    %1672 = vmatpush1.bf16.msra.mxu0 0
    %1673 = vmatprep.subr.bf16.mxu0 0
    %1674 = vmatpush1.bf16.msra.mxu0 0
    %1675 = vmatprep.subr.bf16.mxu0 0
    %1676 = vmatpush1.bf16.msra.mxu0 0
    %1677 = vmatprep.subr.bf16.mxu0 0
    %1678 = vmatpush1.bf16.msra.mxu0 0
    %1679 = vmatprep.subr.bf16.mxu0 0
    %1680 = vmatpush1.bf16.msra.mxu0 0
    %1681 = vmatprep.subr.bf16.mxu0 0
    %1682 = vmatpush1.bf16.msra.mxu0 0
    %1683 = vmatprep.subr.bf16.mxu0 0
    %1684 = vmatpush1.bf16.msra.mxu0 0
    %1685 = vmatprep.subr.bf16.mxu0 0
    %1686 = vmatpush1.bf16.msra.mxu0 0
    %1687 = vmatprep.subr.bf16.mxu0 0
    %1688 = vmatpush1.bf16.msra.mxu0 0
    %1689 = vmatprep.subr.bf16.mxu0 0
    %1690 = vmatpush1.bf16.msra.mxu0 0
    %1691 = vmatprep.mubr.bf16.mxu0 0
    %1692 = vmatmul.mubr.bf16.gmra.mrb[0].mxu0 %v1534
    %v1693 = vpop.f32.mrb[0].mxu0
    %v1694 = vadd.f32 %v1653, %v1693
    %v1695 = vpop.f32.mrb[0].mxu0
    %v1696 = vadd.f32 %v1655, %v1695
    %v1697 = vpop.f32.mrb[0].mxu0
    %v1698 = vpop.f32.mrb[0].mxu0
    %1699 = vdwg.mxu0
    %1700 = vmatprep.subr.bf16.mxu0 %v1143
    %1701 = vmatpush1.bf16.msra.mxu0 %v1142
    %1702 = vmatprep.subr.bf16.mxu0 %v1147
    %1703 = vmatpush1.bf16.msra.mxu0 %v1146
    %1704 = vmatprep.subr.bf16.mxu0 %v1151
    %1705 = vmatpush1.bf16.msra.mxu0 %v1150
    %1706 = vmatprep.subr.bf16.mxu0 %v1155
    %1707 = vmatpush1.bf16.msra.mxu0 %v1154
    %1708 = vmatprep.subr.bf16.mxu0 %v1159
    %1709 = vmatpush1.bf16.msra.mxu0 %v1158
    %1710 = vmatprep.subr.bf16.mxu0 %v1163
    %1711 = vmatpush1.bf16.msra.mxu0 %v1162
    %1712 = vmatprep.subr.bf16.mxu0 %v1167
    %1713 = vmatpush1.bf16.msra.mxu0 %v1166
    %1714 = vmatprep.subr.bf16.mxu0 %v1171
    %1715 = vmatpush1.bf16.msra.mxu0 %v1170
    %1716 = vmatprep.subr.bf16.mxu0 %v1175
    %1717 = vmatpush1.bf16.msra.mxu0 %v1174
    %1718 = vmatprep.subr.bf16.mxu0 %v1179
    %1719 = vmatpush1.bf16.msra.mxu0 %v1178
    %1720 = vmatprep.subr.bf16.mxu0 %v1183
    %1721 = vmatpush1.bf16.msra.mxu0 %v1182
    %1722 = vmatprep.subr.bf16.mxu0 %v1187
    %1723 = vmatpush1.bf16.msra.mxu0 %v1186
    %1724 = vmatprep.subr.bf16.mxu0 %v1191
    %1725 = vmatpush1.bf16.msra.mxu0 %v1190
    %1726 = vmatprep.subr.bf16.mxu0 %v1195
    %1727 = vmatpush1.bf16.msra.mxu0 %v1194
    %1728 = vmatprep.subr.bf16.mxu0 %v1199
    %1729 = vmatpush1.bf16.msra.mxu0 %v1198
    %1730 = vmatprep.subr.bf16.mxu0 %v1203
    %1731 = vmatpush1.bf16.msra.mxu0 %v1202
    %1732 = vmatprep.mubr.bf16.mxu0 %v328
    %1733 = vmatmul.mubr.bf16.gmra.mrb[0].mxu0 %v327
    %v1734 = vpop.f32.mrb[0].mxu0
    %v1735 = vadd.f32 %v543, %v1734
    %v1736 = vpop.f32.mrb[0].mxu0
    %v1737 = vadd.f32 %v547, %v1736
    %v1738 = vpop.f32.mrb[0].mxu0
    %v1739 = vpop.f32.mrb[0].mxu0
    %1740 = vdwg.mxu0
    %1741 = vmatprep.subr.bf16.mxu0 %v1207
    %1742 = vmatpush1.bf16.msra.mxu0 %v1206
    %1743 = vmatprep.subr.bf16.mxu0 %v1211
    %1744 = vmatpush1.bf16.msra.mxu0 %v1210
    %1745 = vmatprep.subr.bf16.mxu0 %v1215
    %1746 = vmatpush1.bf16.msra.mxu0 %v1214
    %1747 = vmatprep.subr.bf16.mxu0 %v1219
    %1748 = vmatpush1.bf16.msra.mxu0 %v1218
    %1749 = vmatprep.subr.bf16.mxu0 %v1223
    %1750 = vmatpush1.bf16.msra.mxu0 %v1222
    %1751 = vmatprep.subr.bf16.mxu0 %v1227
    %1752 = vmatpush1.bf16.msra.mxu0 %v1226
    %1753 = vmatprep.subr.bf16.mxu0 %v1231
    %1754 = vmatpush1.bf16.msra.mxu0 %v1230
    %1755 = vmatprep.subr.bf16.mxu0 %v1235
    %1756 = vmatpush1.bf16.msra.mxu0 %v1234
    %1757 = vmatprep.subr.bf16.mxu0 %v1239
    %1758 = vmatpush1.bf16.msra.mxu0 %v1238
    %1759 = vmatprep.subr.bf16.mxu0 %v1243
    %1760 = vmatpush1.bf16.msra.mxu0 %v1242
    %1761 = vmatprep.subr.bf16.mxu0 %v1247
    %1762 = vmatpush1.bf16.msra.mxu0 %v1246
    %1763 = vmatprep.subr.bf16.mxu0 %v1251
    %1764 = vmatpush1.bf16.msra.mxu0 %v1250
    %1765 = vmatprep.subr.bf16.mxu0 %v1255
    %1766 = vmatpush1.bf16.msra.mxu0 %v1254
    %1767 = vmatprep.subr.bf16.mxu0 %v1259
    %1768 = vmatpush1.bf16.msra.mxu0 %v1258
    %1769 = vmatprep.subr.bf16.mxu0 %v1263
    %1770 = vmatpush1.bf16.msra.mxu0 %v1262
    %1771 = vmatprep.subr.bf16.mxu0 %v1267
    %1772 = vmatpush1.bf16.msra.mxu0 %v1266
    %1773 = vmatprep.mubr.bf16.mxu0 %v330
    %1774 = vmatmul.mubr.bf16.gmra.mrb[0].mxu0 %v329
    %v1775 = vpop.f32.mrb[0].mxu0
    %v1776 = vadd.f32 %v1735, %v1775
    %v1777 = vpop.f32.mrb[0].mxu0
    %v1778 = vadd.f32 %v1737, %v1777
    %v1779 = vpop.f32.mrb[0].mxu0
    %v1780 = vpop.f32.mrb[0].mxu0
    %1781 = vdwg.mxu0
    %1782 = vmatprep.subr.bf16.mxu0 %v1271
    %1783 = vmatpush1.bf16.msra.mxu0 %v1270
    %1784 = vmatprep.subr.bf16.mxu0 %v1275
    %1785 = vmatpush1.bf16.msra.mxu0 %v1274
    %1786 = vmatprep.subr.bf16.mxu0 %v1279
    %1787 = vmatpush1.bf16.msra.mxu0 %v1278
    %1788 = vmatprep.subr.bf16.mxu0 %v1283
    %1789 = vmatpush1.bf16.msra.mxu0 %v1282
    %1790 = vmatprep.subr.bf16.mxu0 %v1287
    %1791 = vmatpush1.bf16.msra.mxu0 %v1286
    %1792 = vmatprep.subr.bf16.mxu0 %v1291
    %1793 = vmatpush1.bf16.msra.mxu0 %v1290
    %1794 = vmatprep.subr.bf16.mxu0 %v1295
    %1795 = vmatpush1.bf16.msra.mxu0 %v1294
    %1796 = vmatprep.subr.bf16.mxu0 %v1299
    %1797 = vmatpush1.bf16.msra.mxu0 %v1298
    %1798 = vmatprep.subr.bf16.mxu0 %v1303
    %1799 = vmatpush1.bf16.msra.mxu0 %v1302
    %1800 = vmatprep.subr.bf16.mxu0 %v1307
    %1801 = vmatpush1.bf16.msra.mxu0 %v1306
    %1802 = vmatprep.subr.bf16.mxu0 %v1311
    %1803 = vmatpush1.bf16.msra.mxu0 %v1310
    %1804 = vmatprep.subr.bf16.mxu0 %v1315
    %1805 = vmatpush1.bf16.msra.mxu0 %v1314
    %1806 = vmatprep.subr.bf16.mxu0 %v1319
    %1807 = vmatpush1.bf16.msra.mxu0 %v1318
    %1808 = vmatprep.subr.bf16.mxu0 %v1323
    %1809 = vmatpush1.bf16.msra.mxu0 %v1322
    %1810 = vmatprep.subr.bf16.mxu0 %v1327
    %1811 = vmatpush1.bf16.msra.mxu0 %v1326
    %1812 = vmatprep.subr.bf16.mxu0 %v1331
    %1813 = vmatpush1.bf16.msra.mxu0 %v1330
    %1814 = vmatprep.mubr.bf16.mxu0 %v332
    %1815 = vmatmul.mubr.bf16.gmra.mrb[0].mxu0 %v331
    %v1816 = vpop.f32.mrb[0].mxu0
    %v1817 = vadd.f32 %v1776, %v1816
    %v1818 = vpop.f32.mrb[0].mxu0
    %v1819 = vadd.f32 %v1778, %v1818
    %v1820 = vpop.f32.mrb[0].mxu0
    %v1821 = vpop.f32.mrb[0].mxu0
    %1822 = vdwg.mxu0
    %1823 = vmatprep.subr.bf16.mxu0 %v1335
    %1824 = vmatpush1.bf16.msra.mxu0 %v1334
    %1825 = vmatprep.subr.bf16.mxu0 0
    %1826 = vmatpush1.bf16.msra.mxu0 0
    %1827 = vmatprep.subr.bf16.mxu0 0
    %1828 = vmatpush1.bf16.msra.mxu0 0
    %1829 = vmatprep.subr.bf16.mxu0 0
    %1830 = vmatpush1.bf16.msra.mxu0 0
    %1831 = vmatprep.subr.bf16.mxu0 0
    %1832 = vmatpush1.bf16.msra.mxu0 0
    %1833 = vmatprep.subr.bf16.mxu0 0
    %1834 = vmatpush1.bf16.msra.mxu0 0
    %1835 = vmatprep.subr.bf16.mxu0 0
    %1836 = vmatpush1.bf16.msra.mxu0 0
    %1837 = vmatprep.subr.bf16.mxu0 0
    %1838 = vmatpush1.bf16.msra.mxu0 0
    %1839 = vmatprep.subr.bf16.mxu0 0
    %1840 = vmatpush1.bf16.msra.mxu0 0
    %1841 = vmatprep.subr.bf16.mxu0 0
    %1842 = vmatpush1.bf16.msra.mxu0 0
    %1843 = vmatprep.subr.bf16.mxu0 0
    %1844 = vmatpush1.bf16.msra.mxu0 0
    %1845 = vmatprep.subr.bf16.mxu0 0
    %1846 = vmatpush1.bf16.msra.mxu0 0
    %1847 = vmatprep.subr.bf16.mxu0 0
    %1848 = vmatpush1.bf16.msra.mxu0 0
    %1849 = vmatprep.subr.bf16.mxu0 0
    %1850 = vmatpush1.bf16.msra.mxu0 0
    %1851 = vmatprep.subr.bf16.mxu0 0
    %1852 = vmatpush1.bf16.msra.mxu0 0
    %1853 = vmatprep.subr.bf16.mxu0 0
    %1854 = vmatpush1.bf16.msra.mxu0 0
    %1855 = vmatprep.mubr.bf16.mxu0 0
    %1856 = vmatmul.mubr.bf16.gmra.mrb[0].mxu0 %v1534
    %v1857 = vpop.f32.mrb[0].mxu0
    %v1858 = vadd.f32 %v1817, %v1857
    %v1859 = vpop.f32.mrb[0].mxu0
    %v1860 = vadd.f32 %v1819, %v1859
    %v1861 = vpop.f32.mrb[0].mxu0
    %v1862 = vpop.f32.mrb[0].mxu0
    %1863 = vdwg.mxu0
    %v1864 = vmax.f32 %v1694, 0.0
    %v1865 = vmax.f32 %v1696, 0.0
    %v1866 = vmax.f32 %v1858, 0.0
    %v1867 = vmax.f32 %v1860, 0.0
    %v1868 = vpack.c.bf16 %v1864, %v1864
    %v1869 = vpack.c.bf16 %v1865, %v1865
    %v1870 = vpack.c.bf16 %v1866, %v1866
    %v1871 = vpack.c.bf16 %v1867, %v1867
    %v1872 = vld [vmem:[#allocation10] sm:$0xff]
    %v1873 = vld [vmem:[#allocation10 + $0x8] sm:$0xff]
    %v1874 = vld [vmem:[#allocation10 + $0x10] sm:$0xff]
    %v1875 = vld [vmem:[#allocation10 + $0x18] sm:$0xff]
    %v1876 = vld [vmem:[#allocation10 + $0x20] sm:$0xff]
    %v1877 = vld [vmem:[#allocation10 + $0x28] sm:$0xff]
    %v1878 = vld [vmem:[#allocation10 + $0x30] sm:$0xff]
    %v1879 = vld [vmem:[#allocation10 + $0x38] sm:$0xff]
    %v1880 = vld [vmem:[#allocation10 + $0x40] sm:$0xff]
    %v1881 = vld [vmem:[#allocation10 + $0x48] sm:$0xff]
    %v1882 = vld [vmem:[#allocation10 + $0x50] sm:$0xff]
    %v1883 = vld [vmem:[#allocation10 + $0x58] sm:$0xff]
    %v1884 = vld [vmem:[#allocation10 + $0x60] sm:$0xff]
    %v1885 = vld [vmem:[#allocation10 + $0x68] sm:$0xff]
    %v1886 = vld [vmem:[#allocation10 + $0x70] sm:$0xff]
    %v1887 = vld [vmem:[#allocation10 + $0x78] sm:$0xff]
    %v1888 = vld [vmem:[#allocation10 + $0x80] sm:$0xff]
    %v1889 = vld [vmem:[#allocation10 + $0x88] sm:$0xff]
    %v1890 = vld [vmem:[#allocation10 + $0x90] sm:$0xff]
    %v1891 = vld [vmem:[#allocation10 + $0x98] sm:$0xff]
    %v1892 = vld [vmem:[#allocation10 + $0xa0] sm:$0xff]
    %v1893 = vld [vmem:[#allocation10 + $0xa8] sm:$0xff]
    %v1894 = vld [vmem:[#allocation10 + $0xb0] sm:$0xff]
    %v1895 = vld [vmem:[#allocation10 + $0xb8] sm:$0xff]
    %v1896 = vld [vmem:[#allocation10 + $0xc0] sm:$0xff]
    %v1897 = vld [vmem:[#allocation10 + $0xc8] sm:$0xff]
    %v1898 = vld [vmem:[#allocation10 + $0xd0] sm:$0xff]
    %v1899 = vld [vmem:[#allocation10 + $0xd8] sm:$0xff]
    %v1900 = vld [vmem:[#allocation10 + $0xe0] sm:$0xff]
    %v1901 = vld [vmem:[#allocation10 + $0xe8] sm:$0xff]
    %v1902 = vld [vmem:[#allocation10 + $0xf0] sm:$0xff]
    %v1903 = vld [vmem:[#allocation10 + $0xf8] sm:$0xff]
    %v1904 = vld [vmem:[#allocation10 + $0x100] sm:$0xff]
    %v1905 = vld [vmem:[#allocation10 + $0x108] sm:$0xff]
    %v1906 = vld [vmem:[#allocation10 + $0x110] sm:$0xff]
    %v1907 = vld [vmem:[#allocation10 + $0x118] sm:$0xff]
    %v1908 = vld [vmem:[#allocation10 + $0x120] sm:$0xff]
    %v1909 = vld [vmem:[#allocation10 + $0x128] sm:$0xff]
    %v1910 = vld [vmem:[#allocation10 + $0x130] sm:$0xff]
    %v1911 = vld [vmem:[#allocation10 + $0x138] sm:$0xff]
    %v1912 = vld [vmem:[#allocation10 + $0x140] sm:$0xff]
    %v1913 = vld [vmem:[#allocation10 + $0x148] sm:$0xff]
    %v1914 = vld [vmem:[#allocation10 + $0x150] sm:$0xff]
    %v1915 = vld [vmem:[#allocation10 + $0x158] sm:$0xff]
    %v1916 = vld [vmem:[#allocation10 + $0x160] sm:$0xff]
    %v1917 = vld [vmem:[#allocation10 + $0x168] sm:$0xff]
    %v1918 = vld [vmem:[#allocation10 + $0x170] sm:$0xff]
    %v1919 = vld [vmem:[#allocation10 + $0x178] sm:$0xff]
    %v1920 = vld [vmem:[#allocation10 + $0x180] sm:$0xff]
    %v1921 = vld [vmem:[#allocation10 + $0x188] sm:$0xff]
    %v1922 = vld [vmem:[#allocation10 + $0x190] sm:$0xff]
    %v1923 = vld [vmem:[#allocation10 + $0x198] sm:$0xff]
    %v1924 = vld [vmem:[#allocation10 + $0x1a0] sm:$0xff]
    %v1925 = vld [vmem:[#allocation10 + $0x1a8] sm:$0xff]
    %v1926 = vld [vmem:[#allocation10 + $0x1b0] sm:$0xff]
    %v1927 = vld [vmem:[#allocation10 + $0x1b8] sm:$0xff]
    %v1928 = vld [vmem:[#allocation10 + $0x1c0] sm:$0xff]
    %v1929 = vld [vmem:[#allocation10 + $0x1c8] sm:$0xff]
    %v1930 = vld [vmem:[#allocation10 + $0x1d0] sm:$0xff]
    %v1931 = vld [vmem:[#allocation10 + $0x1d8] sm:$0xff]
    %v1932 = vld [vmem:[#allocation10 + $0x1e0] sm:$0xff]
    %v1933 = vld [vmem:[#allocation10 + $0x1e8] sm:$0xff]
    %v1934 = vld [vmem:[#allocation10 + $0x1f0] sm:$0xff]
    %v1935 = vld [vmem:[#allocation10 + $0x1f8] sm:$0xff]
    %v1936 = vld [vmem:[#allocation11] sm:$0x3]
    %v1938 = vlaneseq
    %v1939 = vshrl.u32 %v1938, 7
    %v1940 = vsub.s32 0, %v1939
    %v1941 = vrot.slane %v1936, %v1940
    %v1942 = vlaneseq
    %v1943 = vshrl.u32 %v1942, 7
    %v1944 = vsub.s32 1, %v1943
    %v1945 = vrot.slane %v1936, %v1944
    %v2012 = vunpack.c.l.b16 %v1872
    %v2013 = vunpack.c.h.b16 %v1872
    %v2014 = vunpack.c.l.b16 %v1873
    %v2015 = vunpack.c.h.b16 %v1873
    %v2016 = vunpack.c.l.b16 %v1874
    %v2017 = vunpack.c.h.b16 %v1874
    %v2018 = vunpack.c.l.b16 %v1875
    %v2019 = vunpack.c.h.b16 %v1875
    %v2020 = vunpack.c.l.b16 %v1876
    %v2021 = vunpack.c.h.b16 %v1876
    %v2022 = vunpack.c.l.b16 %v1877
    %v2023 = vunpack.c.h.b16 %v1877
    %v2024 = vunpack.c.l.b16 %v1878
    %v2025 = vunpack.c.h.b16 %v1878
    %v2026 = vunpack.c.l.b16 %v1879
    %v2027 = vunpack.c.h.b16 %v1879
    %v2028 = vunpack.c.l.b16 %v1880
    %v2029 = vunpack.c.h.b16 %v1880
    %v2030 = vunpack.c.l.b16 %v1881
    %v2031 = vunpack.c.h.b16 %v1881
    %v2032 = vunpack.c.l.b16 %v1882
    %v2033 = vunpack.c.h.b16 %v1882
    %v2034 = vunpack.c.l.b16 %v1883
    %v2035 = vunpack.c.h.b16 %v1883
    %v2036 = vunpack.c.l.b16 %v1884
    %v2037 = vunpack.c.h.b16 %v1884
    %v2038 = vunpack.c.l.b16 %v1885
    %v2039 = vunpack.c.h.b16 %v1885
    %v2040 = vunpack.c.l.b16 %v1886
    %v2041 = vunpack.c.h.b16 %v1886
    %v2042 = vunpack.c.l.b16 %v1887
    %v2043 = vunpack.c.h.b16 %v1887
    %v2044 = vunpack.c.l.b16 %v1888
    %v2045 = vunpack.c.h.b16 %v1888
    %v2046 = vunpack.c.l.b16 %v1889
    %v2047 = vunpack.c.h.b16 %v1889
    %v2048 = vunpack.c.l.b16 %v1890
    %v2049 = vunpack.c.h.b16 %v1890
    %v2050 = vunpack.c.l.b16 %v1891
    %v2051 = vunpack.c.h.b16 %v1891
    %v2052 = vunpack.c.l.b16 %v1892
    %v2053 = vunpack.c.h.b16 %v1892
    %v2054 = vunpack.c.l.b16 %v1893
    %v2055 = vunpack.c.h.b16 %v1893
    %v2056 = vunpack.c.l.b16 %v1894
    %v2057 = vunpack.c.h.b16 %v1894
    %v2058 = vunpack.c.l.b16 %v1895
    %v2059 = vunpack.c.h.b16 %v1895
    %v2060 = vunpack.c.l.b16 %v1896
    %v2061 = vunpack.c.h.b16 %v1896
    %v2062 = vunpack.c.l.b16 %v1897
    %v2063 = vunpack.c.h.b16 %v1897
    %v2064 = vunpack.c.l.b16 %v1898
    %v2065 = vunpack.c.h.b16 %v1898
    %v2066 = vunpack.c.l.b16 %v1899
    %v2067 = vunpack.c.h.b16 %v1899
    %v2068 = vunpack.c.l.b16 %v1900
    %v2069 = vunpack.c.h.b16 %v1900
    %v2070 = vunpack.c.l.b16 %v1901
    %v2071 = vunpack.c.h.b16 %v1901
    %v2072 = vunpack.c.l.b16 %v1902
    %v2073 = vunpack.c.h.b16 %v1902
    %v2074 = vunpack.c.l.b16 %v1903
    %v2075 = vunpack.c.h.b16 %v1903
    %v2076 = vunpack.c.l.b16 %v1904
    %v2077 = vunpack.c.h.b16 %v1904
    %v2078 = vunpack.c.l.b16 %v1905
    %v2079 = vunpack.c.h.b16 %v1905
    %v2080 = vunpack.c.l.b16 %v1906
    %v2081 = vunpack.c.h.b16 %v1906
    %v2082 = vunpack.c.l.b16 %v1907
    %v2083 = vunpack.c.h.b16 %v1907
    %v2084 = vunpack.c.l.b16 %v1908
    %v2085 = vunpack.c.h.b16 %v1908
    %v2086 = vunpack.c.l.b16 %v1909
    %v2087 = vunpack.c.h.b16 %v1909
    %v2088 = vunpack.c.l.b16 %v1910
    %v2089 = vunpack.c.h.b16 %v1910
    %v2090 = vunpack.c.l.b16 %v1911
    %v2091 = vunpack.c.h.b16 %v1911
    %v2092 = vunpack.c.l.b16 %v1912
    %v2093 = vunpack.c.h.b16 %v1912
    %v2094 = vunpack.c.l.b16 %v1913
    %v2095 = vunpack.c.h.b16 %v1913
    %v2096 = vunpack.c.l.b16 %v1914
    %v2097 = vunpack.c.h.b16 %v1914
    %v2098 = vunpack.c.l.b16 %v1915
    %v2099 = vunpack.c.h.b16 %v1915
    %v2100 = vunpack.c.l.b16 %v1916
    %v2101 = vunpack.c.h.b16 %v1916
    %v2102 = vunpack.c.l.b16 %v1917
    %v2103 = vunpack.c.h.b16 %v1917
    %v2104 = vunpack.c.l.b16 %v1918
    %v2105 = vunpack.c.h.b16 %v1918
    %v2106 = vunpack.c.l.b16 %v1919
    %v2107 = vunpack.c.h.b16 %v1919
    %v2108 = vunpack.c.l.b16 %v1920
    %v2109 = vunpack.c.h.b16 %v1920
    %v2110 = vunpack.c.l.b16 %v1921
    %v2111 = vunpack.c.h.b16 %v1921
    %v2112 = vunpack.c.l.b16 %v1922
    %v2113 = vunpack.c.h.b16 %v1922
    %v2114 = vunpack.c.l.b16 %v1923
    %v2115 = vunpack.c.h.b16 %v1923
    %v2116 = vunpack.c.l.b16 %v1924
    %v2117 = vunpack.c.h.b16 %v1924
    %v2118 = vunpack.c.l.b16 %v1925
    %v2119 = vunpack.c.h.b16 %v1925
    %v2120 = vunpack.c.l.b16 %v1926
    %v2121 = vunpack.c.h.b16 %v1926
    %v2122 = vunpack.c.l.b16 %v1927
    %v2123 = vunpack.c.h.b16 %v1927
    %v2124 = vunpack.c.l.b16 %v1928
    %v2125 = vunpack.c.h.b16 %v1928
    %v2126 = vunpack.c.l.b16 %v1929
    %v2127 = vunpack.c.h.b16 %v1929
    %v2128 = vunpack.c.l.b16 %v1930
    %v2129 = vunpack.c.h.b16 %v1930
    %v2130 = vunpack.c.l.b16 %v1931
    %v2131 = vunpack.c.h.b16 %v1931
    %v2132 = vunpack.c.l.b16 %v1932
    %v2133 = vunpack.c.h.b16 %v1932
    %v2134 = vunpack.c.l.b16 %v1933
    %v2135 = vunpack.c.h.b16 %v1933
    %v2136 = vunpack.c.l.b16 %v1934
    %v2137 = vunpack.c.h.b16 %v1934
    %v2138 = vunpack.c.l.b16 %v1935
    %v2139 = vunpack.c.h.b16 %v1935
    %v2140 = vpack.c.b16 %v2014, %v2012
    %v2141 = vpack.c.b16 %v2015, %v2013
    %v2142 = vpack.c.b16 %v2018, %v2016
    %v2143 = vpack.c.b16 %v2019, %v2017
    %v2144 = vpack.c.b16 %v2022, %v2020
    %v2145 = vpack.c.b16 %v2023, %v2021
    %v2146 = vpack.c.b16 %v2026, %v2024
    %v2147 = vpack.c.b16 %v2027, %v2025
    %v2148 = vpack.c.b16 %v2030, %v2028
    %v2149 = vpack.c.b16 %v2031, %v2029
    %v2150 = vpack.c.b16 %v2034, %v2032
    %v2151 = vpack.c.b16 %v2035, %v2033
    %v2152 = vpack.c.b16 %v2038, %v2036
    %v2153 = vpack.c.b16 %v2039, %v2037
    %v2154 = vpack.c.b16 %v2042, %v2040
    %v2155 = vpack.c.b16 %v2043, %v2041
    %v2156 = vpack.c.b16 %v2046, %v2044
    %v2157 = vpack.c.b16 %v2047, %v2045
    %v2158 = vpack.c.b16 %v2050, %v2048
    %v2159 = vpack.c.b16 %v2051, %v2049
    %v2160 = vpack.c.b16 %v2054, %v2052
    %v2161 = vpack.c.b16 %v2055, %v2053
    %v2162 = vpack.c.b16 %v2058, %v2056
    %v2163 = vpack.c.b16 %v2059, %v2057
    %v2164 = vpack.c.b16 %v2062, %v2060
    %v2165 = vpack.c.b16 %v2063, %v2061
    %v2166 = vpack.c.b16 %v2066, %v2064
    %v2167 = vpack.c.b16 %v2067, %v2065
    %v2168 = vpack.c.b16 %v2070, %v2068
    %v2169 = vpack.c.b16 %v2071, %v2069
    %v2170 = vpack.c.b16 %v2074, %v2072
    %v2171 = vpack.c.b16 %v2075, %v2073
    %v2172 = vpack.c.b16 %v2078, %v2076
    %v2173 = vpack.c.b16 %v2079, %v2077
    %v2174 = vpack.c.b16 %v2082, %v2080
    %v2175 = vpack.c.b16 %v2083, %v2081
    %v2176 = vpack.c.b16 %v2086, %v2084
    %v2177 = vpack.c.b16 %v2087, %v2085
    %v2178 = vpack.c.b16 %v2090, %v2088
    %v2179 = vpack.c.b16 %v2091, %v2089
    %v2180 = vpack.c.b16 %v2094, %v2092
    %v2181 = vpack.c.b16 %v2095, %v2093
    %v2182 = vpack.c.b16 %v2098, %v2096
    %v2183 = vpack.c.b16 %v2099, %v2097
    %v2184 = vpack.c.b16 %v2102, %v2100
    %v2185 = vpack.c.b16 %v2103, %v2101
    %v2186 = vpack.c.b16 %v2106, %v2104
    %v2187 = vpack.c.b16 %v2107, %v2105
    %v2188 = vpack.c.b16 %v2110, %v2108
    %v2189 = vpack.c.b16 %v2111, %v2109
    %v2190 = vpack.c.b16 %v2114, %v2112
    %v2191 = vpack.c.b16 %v2115, %v2113
    %v2192 = vpack.c.b16 %v2118, %v2116
    %v2193 = vpack.c.b16 %v2119, %v2117
    %v2194 = vpack.c.b16 %v2122, %v2120
    %v2195 = vpack.c.b16 %v2123, %v2121
    %v2196 = vpack.c.b16 %v2126, %v2124
    %v2197 = vpack.c.b16 %v2127, %v2125
    %v2198 = vpack.c.b16 %v2130, %v2128
    %v2199 = vpack.c.b16 %v2131, %v2129
    %v2200 = vpack.c.b16 %v2134, %v2132
    %v2201 = vpack.c.b16 %v2135, %v2133
    %v2202 = vpack.c.b16 %v2138, %v2136
    %v2203 = vpack.c.b16 %v2139, %v2137
    %2268 = vmatprep.subr.bf16.mxu0 %v2141
    %2269 = vmatpush1.bf16.msra.mxu0 %v2140
    %2270 = vmatprep.subr.bf16.mxu0 %v2143
    %2271 = vmatpush1.bf16.msra.mxu0 %v2142
    %2272 = vmatprep.subr.bf16.mxu0 %v2145
    %2273 = vmatpush1.bf16.msra.mxu0 %v2144
    %2274 = vmatprep.subr.bf16.mxu0 %v2147
    %2275 = vmatpush1.bf16.msra.mxu0 %v2146
    %2276 = vmatprep.subr.bf16.mxu0 %v2149
    %2277 = vmatpush1.bf16.msra.mxu0 %v2148
    %2278 = vmatprep.subr.bf16.mxu0 %v2151
    %2279 = vmatpush1.bf16.msra.mxu0 %v2150
    %2280 = vmatprep.subr.bf16.mxu0 %v2153
    %2281 = vmatpush1.bf16.msra.mxu0 %v2152
    %2282 = vmatprep.subr.bf16.mxu0 %v2155
    %2283 = vmatpush1.bf16.msra.mxu0 %v2154
    %2284 = vmatprep.subr.bf16.mxu0 %v2157
    %2285 = vmatpush1.bf16.msra.mxu0 %v2156
    %2286 = vmatprep.subr.bf16.mxu0 %v2159
    %2287 = vmatpush1.bf16.msra.mxu0 %v2158
    %2288 = vmatprep.subr.bf16.mxu0 %v2161
    %2289 = vmatpush1.bf16.msra.mxu0 %v2160
    %2290 = vmatprep.subr.bf16.mxu0 %v2163
    %2291 = vmatpush1.bf16.msra.mxu0 %v2162
    %2292 = vmatprep.subr.bf16.mxu0 %v2165
    %2293 = vmatpush1.bf16.msra.mxu0 %v2164
    %2294 = vmatprep.subr.bf16.mxu0 %v2167
    %2295 = vmatpush1.bf16.msra.mxu0 %v2166
    %2296 = vmatprep.subr.bf16.mxu0 %v2169
    %2297 = vmatpush1.bf16.msra.mxu0 %v2168
    %2298 = vmatprep.subr.bf16.mxu0 %v2171
    %2299 = vmatpush1.bf16.msra.mxu0 %v2170
    %2300 = vmatprep.mubr.bf16.mxu0 %v1869
    %2301 = vmatmul.mubr.bf16.gmra.mrb[0].mxu0 %v1868
    %v2302 = vpop.f32.mrb[0].mxu0
    %v2303 = vadd.f32 %v1941, %v2302
    %v2304 = vpop.f32.mrb[0].mxu0
    %v2305 = vadd.f32 %v1945, %v2304
    %v2306 = vpop.f32.mrb[0].mxu0
    %v2307 = vpop.f32.mrb[0].mxu0
    %2308 = vdwg.mxu0
    %2309 = vmatprep.subr.bf16.mxu0 %v2173
    %2310 = vmatpush1.bf16.msra.mxu0 %v2172
    %2311 = vmatprep.subr.bf16.mxu0 %v2175
    %2312 = vmatpush1.bf16.msra.mxu0 %v2174
    %2313 = vmatprep.subr.bf16.mxu0 %v2177
    %2314 = vmatpush1.bf16.msra.mxu0 %v2176
    %2315 = vmatprep.subr.bf16.mxu0 %v2179
    %2316 = vmatpush1.bf16.msra.mxu0 %v2178
    %2317 = vmatprep.subr.bf16.mxu0 %v2181
    %2318 = vmatpush1.bf16.msra.mxu0 %v2180
    %2319 = vmatprep.subr.bf16.mxu0 %v2183
    %2320 = vmatpush1.bf16.msra.mxu0 %v2182
    %2321 = vmatprep.subr.bf16.mxu0 %v2185
    %2322 = vmatpush1.bf16.msra.mxu0 %v2184
    %2323 = vmatprep.subr.bf16.mxu0 %v2187
    %2324 = vmatpush1.bf16.msra.mxu0 %v2186
    %2325 = vmatprep.subr.bf16.mxu0 %v2189
    %2326 = vmatpush1.bf16.msra.mxu0 %v2188
    %2327 = vmatprep.subr.bf16.mxu0 %v2191
    %2328 = vmatpush1.bf16.msra.mxu0 %v2190
    %2329 = vmatprep.subr.bf16.mxu0 %v2193
    %2330 = vmatpush1.bf16.msra.mxu0 %v2192
    %2331 = vmatprep.subr.bf16.mxu0 %v2195
    %2332 = vmatpush1.bf16.msra.mxu0 %v2194
    %2333 = vmatprep.subr.bf16.mxu0 %v2197
    %2334 = vmatpush1.bf16.msra.mxu0 %v2196
    %2335 = vmatprep.subr.bf16.mxu0 %v2199
    %2336 = vmatpush1.bf16.msra.mxu0 %v2198
    %2337 = vmatprep.subr.bf16.mxu0 %v2201
    %2338 = vmatpush1.bf16.msra.mxu0 %v2200
    %2339 = vmatprep.subr.bf16.mxu0 %v2203
    %2340 = vmatpush1.bf16.msra.mxu0 %v2202
    %2341 = vmatprep.mubr.bf16.mxu0 %v1871
    %2342 = vmatmul.mubr.bf16.gmra.mrb[0].mxu0 %v1870
    %v2343 = vpop.f32.mrb[0].mxu0
    %v2344 = vadd.f32 %v2303, %v2343
    %v2345 = vpop.f32.mrb[0].mxu0
    %v2346 = vadd.f32 %v2305, %v2345
    %v2347 = vpop.f32.mrb[0].mxu0
    %v2348 = vpop.f32.mrb[0].mxu0
    %2349 = vdwg.mxu0
    %v2350 = vmax.f32 %v2344, 0.0
    %v2351 = vmax.f32 %v2346, 0.0
    %v2352 = vpack.c.bf16 %v2350, %v2350
    %v2353 = vpack.c.bf16 %v2351, %v2351
    %v2354 = vld [vmem:[#allocation13] sm:$0xf]
    %v2355 = vld [vmem:[#allocation13 + $0x4] sm:$0xf]
    %v2356 = vld [vmem:[#allocation13 + $0x8] sm:$0xf]
    %v2357 = vld [vmem:[#allocation13 + $0xc] sm:$0xf]
    %v2358 = vld [vmem:[#allocation13 + $0x10] sm:$0xf]
    %v2359 = vld [vmem:[#allocation13 + $0x14] sm:$0xf]
    %v2360 = vld [vmem:[#allocation13 + $0x18] sm:$0xf]
    %v2361 = vld [vmem:[#allocation13 + $0x1c] sm:$0xf]
    %v2362 = vld [vmem:[#allocation13 + $0x20] sm:$0xf]
    %v2363 = vld [vmem:[#allocation13 + $0x24] sm:$0xf]
    %v2364 = vld [vmem:[#allocation13 + $0x28] sm:$0xf]
    %v2365 = vld [vmem:[#allocation13 + $0x2c] sm:$0xf]
    %v2366 = vld [vmem:[#allocation13 + $0x30] sm:$0xf]
    %v2367 = vld [vmem:[#allocation13 + $0x34] sm:$0xf]
    %v2368 = vld [vmem:[#allocation13 + $0x38] sm:$0xf]
    %v2369 = vld [vmem:[#allocation13 + $0x3c] sm:$0xf]
    %v2370 = vld [vmem:[#allocation13 + $0x40] sm:$0xf]
    %v2371 = vld [vmem:[#allocation13 + $0x44] sm:$0xf]
    %v2372 = vld [vmem:[#allocation13 + $0x48] sm:$0xf]
    %v2373 = vld [vmem:[#allocation13 + $0x4c] sm:$0xf]
    %v2374 = vld [vmem:[#allocation13 + $0x50] sm:$0xf]
    %v2375 = vld [vmem:[#allocation13 + $0x54] sm:$0xf]
    %v2376 = vld [vmem:[#allocation13 + $0x58] sm:$0xf]
    %v2377 = vld [vmem:[#allocation13 + $0x5c] sm:$0xf]
    %v2378 = vld [vmem:[#allocation13 + $0x60] sm:$0xf]
    %v2379 = vld [vmem:[#allocation13 + $0x64] sm:$0xf]
    %v2380 = vld [vmem:[#allocation13 + $0x68] sm:$0xf]
    %v2381 = vld [vmem:[#allocation13 + $0x6c] sm:$0xf]
    %v2382 = vld [vmem:[#allocation13 + $0x70] sm:$0xf]
    %v2383 = vld [vmem:[#allocation13 + $0x74] sm:$0xf]
    %v2384 = vld [vmem:[#allocation13 + $0x78] sm:$0xf]
    %v2385 = vld [vmem:[#allocation13 + $0x7c] sm:$0xf]
    %v2386 = vld [vmem:[#allocation14] sm:$0x1]
    %v2388 = vlaneseq
    %v2389 = vshrl.u32 %v2388, 7
    %v2390 = vsub.s32 0, %v2389
    %v2391 = vrot.slane %v2386, %v2390
    %v2425 = vunpack.c.l.b16 %v2354
    %v2426 = vunpack.c.l.b16 %v2355
    %v2427 = vunpack.c.l.b16 %v2356
    %v2428 = vunpack.c.l.b16 %v2357
    %v2429 = vunpack.c.l.b16 %v2358
    %v2430 = vunpack.c.l.b16 %v2359
    %v2431 = vunpack.c.l.b16 %v2360
    %v2432 = vunpack.c.l.b16 %v2361
    %v2433 = vunpack.c.l.b16 %v2362
    %v2434 = vunpack.c.l.b16 %v2363
    %v2435 = vunpack.c.l.b16 %v2364
    %v2436 = vunpack.c.l.b16 %v2365
    %v2437 = vunpack.c.l.b16 %v2366
    %v2438 = vunpack.c.l.b16 %v2367
    %v2439 = vunpack.c.l.b16 %v2368
    %v2440 = vunpack.c.l.b16 %v2369
    %v2441 = vunpack.c.l.b16 %v2370
    %v2442 = vunpack.c.l.b16 %v2371
    %v2443 = vunpack.c.l.b16 %v2372
    %v2444 = vunpack.c.l.b16 %v2373
    %v2445 = vunpack.c.l.b16 %v2374
    %v2446 = vunpack.c.l.b16 %v2375
    %v2447 = vunpack.c.l.b16 %v2376
    %v2448 = vunpack.c.l.b16 %v2377
    %v2449 = vunpack.c.l.b16 %v2378
    %v2450 = vunpack.c.l.b16 %v2379
    %v2451 = vunpack.c.l.b16 %v2380
    %v2452 = vunpack.c.l.b16 %v2381
    %v2453 = vunpack.c.l.b16 %v2382
    %v2454 = vunpack.c.l.b16 %v2383
    %v2455 = vunpack.c.l.b16 %v2384
    %v2456 = vunpack.c.l.b16 %v2385
    %v2457 = vpack.c.b16 %v2426, %v2425
    %v2458 = vpack.c.b16 %v2428, %v2427
    %v2459 = vpack.c.b16 %v2430, %v2429
    %v2460 = vpack.c.b16 %v2432, %v2431
    %v2461 = vpack.c.b16 %v2434, %v2433
    %v2462 = vpack.c.b16 %v2436, %v2435
    %v2463 = vpack.c.b16 %v2438, %v2437
    %v2464 = vpack.c.b16 %v2440, %v2439
    %v2465 = vpack.c.b16 %v2442, %v2441
    %v2466 = vpack.c.b16 %v2444, %v2443
    %v2467 = vpack.c.b16 %v2446, %v2445
    %v2468 = vpack.c.b16 %v2448, %v2447
    %v2469 = vpack.c.b16 %v2450, %v2449
    %v2470 = vpack.c.b16 %v2452, %v2451
    %v2471 = vpack.c.b16 %v2454, %v2453
    %v2472 = vpack.c.b16 %v2456, %v2455
    %2489 = vmatprep.subr.bf16.mxu0 0
    %2490 = vmatpush1.bf16.msra.mxu0 %v2457
    %2491 = vmatprep.subr.bf16.mxu0 0
    %2492 = vmatpush1.bf16.msra.mxu0 %v2458
    %2493 = vmatprep.subr.bf16.mxu0 0
    %2494 = vmatpush1.bf16.msra.mxu0 %v2459
    %2495 = vmatprep.subr.bf16.mxu0 0
    %2496 = vmatpush1.bf16.msra.mxu0 %v2460
    %2497 = vmatprep.subr.bf16.mxu0 0
    %2498 = vmatpush1.bf16.msra.mxu0 %v2461
    %2499 = vmatprep.subr.bf16.mxu0 0
    %2500 = vmatpush1.bf16.msra.mxu0 %v2462
    %2501 = vmatprep.subr.bf16.mxu0 0
    %2502 = vmatpush1.bf16.msra.mxu0 %v2463
    %2503 = vmatprep.subr.bf16.mxu0 0
    %2504 = vmatpush1.bf16.msra.mxu0 %v2464
    %2505 = vmatprep.subr.bf16.mxu0 0
    %2506 = vmatpush1.bf16.msra.mxu0 %v2465
    %2507 = vmatprep.subr.bf16.mxu0 0
    %2508 = vmatpush1.bf16.msra.mxu0 %v2466
    %2509 = vmatprep.subr.bf16.mxu0 0
    %2510 = vmatpush1.bf16.msra.mxu0 %v2467
    %2511 = vmatprep.subr.bf16.mxu0 0
    %2512 = vmatpush1.bf16.msra.mxu0 %v2468
    %2513 = vmatprep.subr.bf16.mxu0 0
    %2514 = vmatpush1.bf16.msra.mxu0 %v2469
    %2515 = vmatprep.subr.bf16.mxu0 0
    %2516 = vmatpush1.bf16.msra.mxu0 %v2470
    %2517 = vmatprep.subr.bf16.mxu0 0
    %2518 = vmatpush1.bf16.msra.mxu0 %v2471
    %2519 = vmatprep.subr.bf16.mxu0 0
    %2520 = vmatpush1.bf16.msra.mxu0 %v2472
    %2521 = vmatprep.mubr.bf16.mxu0 %v2353
    %2522 = vmatmul.mubr.bf16.gmra.mrb[0].mxu0 %v2352
    %v2523 = vpop.f32.mrb[0].mxu0
    %v2524 = vadd.f32 %v2391, %v2523
    %v2525 = vpop.f32.mrb[0].mxu0
    %v2526 = vpop.f32.mrb[0].mxu0
    %v2527 = vpop.f32.mrb[0].mxu0
    %2528 = vdwg.mxu0
    %v2529 = vld [vmem:[#allocation16] sm:$0xff]
    %v2530 = vld [vmem:[#allocation16 + $0x8] sm:$0xff]
    %v2531 = vld [vmem:[#allocation16 + $0x10] sm:$0xff]
    %v2532 = vld [vmem:[#allocation16 + $0x18] sm:$0xff]
    %v2533 = vld [vmem:[#allocation16 + $0x20] sm:$0xff]
    %v2534 = vld [vmem:[#allocation16 + $0x28] sm:$0xff]
    %v2535 = vld [vmem:[#allocation16 + $0x30] sm:$0xff]
    %v2536 = vld [vmem:[#allocation16 + $0x38] sm:$0xff]
    %v2537 = vld [vmem:[#allocation16 + $0x40] sm:$0xff]
    %v2538 = vld [vmem:[#allocation16 + $0x48] sm:$0xff]
    %v2539 = vld [vmem:[#allocation16 + $0x50] sm:$0xff]
    %v2540 = vld [vmem:[#allocation16 + $0x58] sm:$0xff]
    %v2541 = vld [vmem:[#allocation16 + $0x60] sm:$0xff]
    %v2542 = vld [vmem:[#allocation16 + $0x68] sm:$0xff]
    %v2543 = vld [vmem:[#allocation16 + $0x70] sm:$0xff]
    %v2544 = vld [vmem:[#allocation16 + $0x78] sm:$0xff]
    %v2545 = vld [vmem:[#allocation16 + $0x80] sm:$0xff]
    %v2546 = vld [vmem:[#allocation16 + $0x88] sm:$0xff]
    %v2547 = vld [vmem:[#allocation16 + $0x90] sm:$0xff]
    %v2548 = vld [vmem:[#allocation16 + $0x98] sm:$0xff]
    %v2549 = vld [vmem:[#allocation16 + $0xa0] sm:$0xff]
    %v2550 = vld [vmem:[#allocation16 + $0xa8] sm:$0xff]
    %v2551 = vld [vmem:[#allocation16 + $0xb0] sm:$0xff]
    %v2552 = vld [vmem:[#allocation16 + $0xb8] sm:$0xff]
    %v2553 = vld [vmem:[#allocation16 + $0xc0] sm:$0xff]
    %v2554 = vld [vmem:[#allocation16 + $0xc8] sm:$0xff]
    %v2555 = vld [vmem:[#allocation16 + $0xd0] sm:$0xff]
    %v2556 = vld [vmem:[#allocation16 + $0xd8] sm:$0xff]
    %v2557 = vld [vmem:[#allocation16 + $0xe0] sm:$0xff]
    %v2558 = vld [vmem:[#allocation16 + $0xe8] sm:$0xff]
    %v2559 = vld [vmem:[#allocation16 + $0xf0] sm:$0xff]
    %v2560 = vld [vmem:[#allocation16 + $0xf8] sm:$0xff]
    %v2561 = vld [vmem:[#allocation16 + $0x100] sm:$0xff]
    %v2562 = vld [vmem:[#allocation16 + $0x108] sm:$0xff]
    %v2563 = vld [vmem:[#allocation16 + $0x110] sm:$0xff]
    %v2564 = vld [vmem:[#allocation16 + $0x118] sm:$0xff]
    %v2565 = vld [vmem:[#allocation16 + $0x120] sm:$0xff]
    %v2566 = vld [vmem:[#allocation16 + $0x128] sm:$0xff]
    %v2567 = vld [vmem:[#allocation16 + $0x130] sm:$0xff]
    %v2568 = vld [vmem:[#allocation16 + $0x138] sm:$0xff]
    %v2569 = vld [vmem:[#allocation16 + $0x140] sm:$0xff]
    %v2570 = vld [vmem:[#allocation16 + $0x148] sm:$0xff]
    %v2571 = vld [vmem:[#allocation16 + $0x150] sm:$0xff]
    %v2572 = vld [vmem:[#allocation16 + $0x158] sm:$0xff]
    %v2573 = vld [vmem:[#allocation16 + $0x160] sm:$0xff]
    %v2574 = vld [vmem:[#allocation16 + $0x168] sm:$0xff]
    %v2575 = vld [vmem:[#allocation16 + $0x170] sm:$0xff]
    %v2576 = vld [vmem:[#allocation16 + $0x178] sm:$0xff]
    %v2577 = vld [vmem:[#allocation16 + $0x180] sm:$0xff]
    %v2578 = vld [vmem:[#allocation16 + $0x188] sm:$0xff]
    %v2579 = vld [vmem:[#allocation16 + $0x190] sm:$0xff]
    %v2580 = vld [vmem:[#allocation16 + $0x198] sm:$0xff]
    %v2581 = vld [vmem:[#allocation16 + $0x1a0] sm:$0xff]
    %v2582 = vld [vmem:[#allocation16 + $0x1a8] sm:$0xff]
    %v2583 = vld [vmem:[#allocation16 + $0x1b0] sm:$0xff]
    %v2584 = vld [vmem:[#allocation16 + $0x1b8] sm:$0xff]
    %v2585 = vld [vmem:[#allocation16 + $0x1c0] sm:$0xff]
    %v2586 = vld [vmem:[#allocation16 + $0x1c8] sm:$0xff]
    %v2587 = vld [vmem:[#allocation16 + $0x1d0] sm:$0xff]
    %v2588 = vld [vmem:[#allocation16 + $0x1d8] sm:$0xff]
    %v2589 = vld [vmem:[#allocation16 + $0x1e0] sm:$0xff]
    %v2590 = vld [vmem:[#allocation16 + $0x1e8] sm:$0xff]
    %v2591 = vld [vmem:[#allocation16 + $0x1f0] sm:$0xff]
    %v2592 = vld [vmem:[#allocation16 + $0x1f8] sm:$0xff]
    %v2593 = vld [vmem:[#allocation16 + $0x200] sm:$0xff]
    %v2594 = vld [vmem:[#allocation16 + $0x208] sm:$0xff]
    %v2595 = vld [vmem:[#allocation16 + $0x210] sm:$0xff]
    %v2596 = vld [vmem:[#allocation16 + $0x218] sm:$0xff]
    %v2597 = vld [vmem:[#allocation16 + $0x220] sm:$0xff]
    %v2598 = vld [vmem:[#allocation16 + $0x228] sm:$0xff]
    %v2599 = vld [vmem:[#allocation16 + $0x230] sm:$0xff]
    %v2600 = vld [vmem:[#allocation16 + $0x238] sm:$0xff]
    %v2601 = vld [vmem:[#allocation16 + $0x240] sm:$0xff]
    %v2602 = vld [vmem:[#allocation16 + $0x248] sm:$0xff]
    %v2603 = vld [vmem:[#allocation16 + $0x250] sm:$0xff]
    %v2604 = vld [vmem:[#allocation16 + $0x258] sm:$0xff]
    %v2605 = vld [vmem:[#allocation16 + $0x260] sm:$0xff]
    %v2606 = vld [vmem:[#allocation16 + $0x268] sm:$0xff]
    %v2607 = vld [vmem:[#allocation16 + $0x270] sm:$0xff]
    %v2608 = vld [vmem:[#allocation16 + $0x278] sm:$0xff]
    %v2609 = vld [vmem:[#allocation16 + $0x280] sm:$0xff]
    %v2610 = vld [vmem:[#allocation16 + $0x288] sm:$0xff]
    %v2611 = vld [vmem:[#allocation16 + $0x290] sm:$0xff]
    %v2612 = vld [vmem:[#allocation16 + $0x298] sm:$0xff]
    %v2613 = vld [vmem:[#allocation16 + $0x2a0] sm:$0xff]
    %v2614 = vld [vmem:[#allocation16 + $0x2a8] sm:$0xff]
    %v2615 = vld [vmem:[#allocation16 + $0x2b0] sm:$0xff]
    %v2616 = vld [vmem:[#allocation16 + $0x2b8] sm:$0xff]
    %v2617 = vld [vmem:[#allocation16 + $0x2c0] sm:$0xff]
    %v2618 = vld [vmem:[#allocation16 + $0x2c8] sm:$0xff]
    %v2619 = vld [vmem:[#allocation16 + $0x2d0] sm:$0xff]
    %v2620 = vld [vmem:[#allocation16 + $0x2d8] sm:$0xff]
    %v2621 = vld [vmem:[#allocation16 + $0x2e0] sm:$0xff]
    %v2622 = vld [vmem:[#allocation16 + $0x2e8] sm:$0xff]
    %v2623 = vld [vmem:[#allocation16 + $0x2f0] sm:$0xff]
    %v2624 = vld [vmem:[#allocation16 + $0x2f8] sm:$0xff]
    %v2625 = vld [vmem:[#allocation16 + $0x300] sm:$0xff]
    %v2626 = vld [vmem:[#allocation16 + $0x308] sm:$0xff]
    %v2627 = vld [vmem:[#allocation16 + $0x310] sm:$0xff]
    %v2628 = vld [vmem:[#allocation16 + $0x318] sm:$0xff]
    %v2629 = vld [vmem:[#allocation16 + $0x320] sm:$0xff]
    %v2630 = vld [vmem:[#allocation16 + $0x328] sm:$0xff]
    %v2631 = vld [vmem:[#allocation16 + $0x330] sm:$0xff]
    %v2632 = vld [vmem:[#allocation16 + $0x338] sm:$0xff]
    %v2633 = vld [vmem:[#allocation16 + $0x340] sm:$0xff]
    %v2634 = vld [vmem:[#allocation16 + $0x348] sm:$0xff]
    %v2635 = vld [vmem:[#allocation16 + $0x350] sm:$0xff]
    %v2636 = vld [vmem:[#allocation16 + $0x358] sm:$0xff]
    %v2637 = vld [vmem:[#allocation16 + $0x360] sm:$0xff]
    %v2638 = vld [vmem:[#allocation16 + $0x368] sm:$0xff]
    %v2639 = vld [vmem:[#allocation16 + $0x370] sm:$0xff]
    %v2640 = vld [vmem:[#allocation16 + $0x378] sm:$0xff]
    %v2641 = vld [vmem:[#allocation16 + $0x380] sm:$0xff]
    %v2642 = vld [vmem:[#allocation16 + $0x388] sm:$0xff]
    %v2643 = vld [vmem:[#allocation16 + $0x390] sm:$0xff]
    %v2644 = vld [vmem:[#allocation16 + $0x398] sm:$0xff]
    %v2645 = vld [vmem:[#allocation16 + $0x3a0] sm:$0xff]
    %v2646 = vld [vmem:[#allocation16 + $0x3a8] sm:$0xff]
    %v2647 = vld [vmem:[#allocation16 + $0x3b0] sm:$0xff]
    %v2648 = vld [vmem:[#allocation16 + $0x3b8] sm:$0xff]
    %v2649 = vld [vmem:[#allocation16 + $0x3c0] sm:$0xff]
    %v2650 = vld [vmem:[#allocation16 + $0x3c8] sm:$0xff]
    %v2651 = vld [vmem:[#allocation16 + $0x3d0] sm:$0xff]
    %v2652 = vld [vmem:[#allocation16 + $0x3d8] sm:$0xff]
    %v2653 = vld [vmem:[#allocation16 + $0x3e0] sm:$0xff]
    %v2654 = vld [vmem:[#allocation16 + $0x3e8] sm:$0xff]
    %v2655 = vld [vmem:[#allocation16 + $0x3f0] sm:$0xff]
    %v2656 = vld [vmem:[#allocation16 + $0x3f8] sm:$0xff]
    %v2657 = vld [vmem:[#allocation16 + $0x400] sm:$0xff]
    %v2658 = vld [vmem:[#allocation16 + $0x408] sm:$0xff]
    %v2659 = vld [vmem:[#allocation16 + $0x410] sm:$0xff]
    %v2660 = vld [vmem:[#allocation16 + $0x418] sm:$0xff]
    %v2661 = vld [vmem:[#allocation16 + $0x420] sm:$0xff]
    %v2662 = vld [vmem:[#allocation16 + $0x428] sm:$0xff]
    %v2663 = vld [vmem:[#allocation16 + $0x430] sm:$0xff]
    %v2664 = vld [vmem:[#allocation16 + $0x438] sm:$0xff]
    %v2665 = vld [vmem:[#allocation16 + $0x440] sm:$0xff]
    %v2666 = vld [vmem:[#allocation16 + $0x448] sm:$0xff]
    %v2667 = vld [vmem:[#allocation16 + $0x450] sm:$0xff]
    %v2668 = vld [vmem:[#allocation16 + $0x458] sm:$0xff]
    %v2669 = vld [vmem:[#allocation16 + $0x460] sm:$0xff]
    %v2670 = vld [vmem:[#allocation16 + $0x468] sm:$0xff]
    %v2671 = vld [vmem:[#allocation16 + $0x470] sm:$0xff]
    %v2672 = vld [vmem:[#allocation16 + $0x478] sm:$0xff]
    %v2673 = vld [vmem:[#allocation16 + $0x480] sm:$0xff]
    %v2674 = vld [vmem:[#allocation16 + $0x488] sm:$0xff]
    %v2675 = vld [vmem:[#allocation16 + $0x490] sm:$0xff]
    %v2676 = vld [vmem:[#allocation16 + $0x498] sm:$0xff]
    %v2677 = vld [vmem:[#allocation16 + $0x4a0] sm:$0xff]
    %v2678 = vld [vmem:[#allocation16 + $0x4a8] sm:$0xff]
    %v2679 = vld [vmem:[#allocation16 + $0x4b0] sm:$0xff]
    %v2680 = vld [vmem:[#allocation16 + $0x4b8] sm:$0xff]
    %v2681 = vld [vmem:[#allocation16 + $0x4c0] sm:$0xff]
    %v2682 = vld [vmem:[#allocation16 + $0x4c8] sm:$0xff]
    %v2683 = vld [vmem:[#allocation16 + $0x4d0] sm:$0xff]
    %v2684 = vld [vmem:[#allocation16 + $0x4d8] sm:$0xff]
    %v2685 = vld [vmem:[#allocation16 + $0x4e0] sm:$0xff]
    %v2686 = vld [vmem:[#allocation16 + $0x4e8] sm:$0xff]
    %v2687 = vld [vmem:[#allocation16 + $0x4f0] sm:$0xff]
    %v2688 = vld [vmem:[#allocation16 + $0x4f8] sm:$0xff]
    %v2689 = vld [vmem:[#allocation16 + $0x500] sm:$0xff]
    %v2690 = vld [vmem:[#allocation16 + $0x508] sm:$0xff]
    %v2691 = vld [vmem:[#allocation16 + $0x510] sm:$0xff]
    %v2692 = vld [vmem:[#allocation16 + $0x518] sm:$0xff]
    %v2693 = vld [vmem:[#allocation16 + $0x520] sm:$0xff]
    %v2694 = vld [vmem:[#allocation16 + $0x528] sm:$0xff]
    %v2695 = vld [vmem:[#allocation16 + $0x530] sm:$0xff]
    %v2696 = vld [vmem:[#allocation16 + $0x538] sm:$0xff]
    %v2697 = vld [vmem:[#allocation16 + $0x540] sm:$0xff]
    %v2698 = vld [vmem:[#allocation16 + $0x548] sm:$0xff]
    %v2699 = vld [vmem:[#allocation16 + $0x550] sm:$0xff]
    %v2700 = vld [vmem:[#allocation16 + $0x558] sm:$0xff]
    %v2701 = vld [vmem:[#allocation16 + $0x560] sm:$0xff]
    %v2702 = vld [vmem:[#allocation16 + $0x568] sm:$0xff]
    %v2703 = vld [vmem:[#allocation16 + $0x570] sm:$0xff]
    %v2704 = vld [vmem:[#allocation16 + $0x578] sm:$0xff]
    %v2705 = vld [vmem:[#allocation16 + $0x580] sm:$0xff]
    %v2706 = vld [vmem:[#allocation16 + $0x588] sm:$0xff]
    %v2707 = vld [vmem:[#allocation16 + $0x590] sm:$0xff]
    %v2708 = vld [vmem:[#allocation16 + $0x598] sm:$0xff]
    %v2709 = vld [vmem:[#allocation16 + $0x5a0] sm:$0xff]
    %v2710 = vld [vmem:[#allocation16 + $0x5a8] sm:$0xff]
    %v2711 = vld [vmem:[#allocation16 + $0x5b0] sm:$0xff]
    %v2712 = vld [vmem:[#allocation16 + $0x5b8] sm:$0xff]
    %v2713 = vld [vmem:[#allocation16 + $0x5c0] sm:$0xff]
    %v2714 = vld [vmem:[#allocation16 + $0x5c8] sm:$0xff]
    %v2715 = vld [vmem:[#allocation16 + $0x5d0] sm:$0xff]
    %v2716 = vld [vmem:[#allocation16 + $0x5d8] sm:$0xff]
    %v2717 = vld [vmem:[#allocation16 + $0x5e0] sm:$0xff]
    %v2718 = vld [vmem:[#allocation16 + $0x5e8] sm:$0xff]
    %v2719 = vld [vmem:[#allocation16 + $0x5f0] sm:$0xff]
    %v2720 = vld [vmem:[#allocation16 + $0x5f8] sm:$0xff]
    %v2721 = vld [vmem:[#allocation16 + $0x600] sm:$0xff]
    %v2722 = vld [vmem:[#allocation16 + $0x608] sm:$0xff]
    %v2723 = vld [vmem:[#allocation16 + $0x610] sm:$0xff]
    %v2724 = vld [vmem:[#allocation16 + $0x618] sm:$0xff]
    %v2725 = vld [vmem:[#allocation17] sm:$0xf]
    %v2727 = vlaneseq
    %v2728 = vshrl.u32 %v2727, 7
    %v2729 = vsub.s32 0, %v2728
    %v2730 = vrot.slane %v2725, %v2729
    %v2731 = vlaneseq
    %v2732 = vshrl.u32 %v2731, 7
    %v2733 = vsub.s32 1, %v2732
    %v2734 = vrot.slane %v2725, %v2733
    %v2735 = vlaneseq
    %v2736 = vshrl.u32 %v2735, 7
    %v2737 = vsub.s32 2, %v2736
    %v2738 = vrot.slane %v2725, %v2737
    %v2739 = vlaneseq
    %v2740 = vshrl.u32 %v2739, 7
    %v2741 = vsub.s32 3, %v2740
    %v2742 = vrot.slane %v2725, %v2741
    %v2943 = vunpack.c.l.b16 %v2529
    %v2944 = vunpack.c.h.b16 %v2529
    %v2945 = vunpack.c.l.b16 %v2530
    %v2946 = vunpack.c.h.b16 %v2530
    %v2947 = vunpack.c.l.b16 %v2531
    %v2948 = vunpack.c.h.b16 %v2531
    %v2949 = vunpack.c.l.b16 %v2532
    %v2950 = vunpack.c.h.b16 %v2532
    %v2951 = vunpack.c.l.b16 %v2533
    %v2952 = vunpack.c.h.b16 %v2533
    %v2953 = vunpack.c.l.b16 %v2534
    %v2954 = vunpack.c.h.b16 %v2534
    %v2955 = vunpack.c.l.b16 %v2535
    %v2956 = vunpack.c.h.b16 %v2535
    %v2957 = vunpack.c.l.b16 %v2536
    %v2958 = vunpack.c.h.b16 %v2536
    %v2959 = vunpack.c.l.b16 %v2537
    %v2960 = vunpack.c.h.b16 %v2537
    %v2961 = vunpack.c.l.b16 %v2538
    %v2962 = vunpack.c.h.b16 %v2538
    %v2963 = vunpack.c.l.b16 %v2539
    %v2964 = vunpack.c.h.b16 %v2539
    %v2965 = vunpack.c.l.b16 %v2540
    %v2966 = vunpack.c.h.b16 %v2540
    %v2967 = vunpack.c.l.b16 %v2541
    %v2968 = vunpack.c.h.b16 %v2541
    %v2969 = vunpack.c.l.b16 %v2542
    %v2970 = vunpack.c.h.b16 %v2542
    %v2971 = vunpack.c.l.b16 %v2543
    %v2972 = vunpack.c.h.b16 %v2543
    %v2973 = vunpack.c.l.b16 %v2544
    %v2974 = vunpack.c.h.b16 %v2544
    %v2975 = vunpack.c.l.b16 %v2545
    %v2976 = vunpack.c.h.b16 %v2545
    %v2977 = vunpack.c.l.b16 %v2546
    %v2978 = vunpack.c.h.b16 %v2546
    %v2979 = vunpack.c.l.b16 %v2547
    %v2980 = vunpack.c.h.b16 %v2547
    %v2981 = vunpack.c.l.b16 %v2548
    %v2982 = vunpack.c.h.b16 %v2548
    %v2983 = vunpack.c.l.b16 %v2549
    %v2984 = vunpack.c.h.b16 %v2549
    %v2985 = vunpack.c.l.b16 %v2550
    %v2986 = vunpack.c.h.b16 %v2550
    %v2987 = vunpack.c.l.b16 %v2551
    %v2988 = vunpack.c.h.b16 %v2551
    %v2989 = vunpack.c.l.b16 %v2552
    %v2990 = vunpack.c.h.b16 %v2552
    %v2991 = vunpack.c.l.b16 %v2553
    %v2992 = vunpack.c.h.b16 %v2553
    %v2993 = vunpack.c.l.b16 %v2554
    %v2994 = vunpack.c.h.b16 %v2554
    %v2995 = vunpack.c.l.b16 %v2555
    %v2996 = vunpack.c.h.b16 %v2555
    %v2997 = vunpack.c.l.b16 %v2556
    %v2998 = vunpack.c.h.b16 %v2556
    %v2999 = vunpack.c.l.b16 %v2557
    %v3000 = vunpack.c.h.b16 %v2557
    %v3001 = vunpack.c.l.b16 %v2558
    %v3002 = vunpack.c.h.b16 %v2558
    %v3003 = vunpack.c.l.b16 %v2559
    %v3004 = vunpack.c.h.b16 %v2559
    %v3005 = vunpack.c.l.b16 %v2560
    %v3006 = vunpack.c.h.b16 %v2560
    %v3007 = vunpack.c.l.b16 %v2561
    %v3008 = vunpack.c.h.b16 %v2561
    %v3009 = vunpack.c.l.b16 %v2562
    %v3010 = vunpack.c.h.b16 %v2562
    %v3011 = vunpack.c.l.b16 %v2563
    %v3012 = vunpack.c.h.b16 %v2563
    %v3013 = vunpack.c.l.b16 %v2564
    %v3014 = vunpack.c.h.b16 %v2564
    %v3015 = vunpack.c.l.b16 %v2565
    %v3016 = vunpack.c.h.b16 %v2565
    %v3017 = vunpack.c.l.b16 %v2566
    %v3018 = vunpack.c.h.b16 %v2566
    %v3019 = vunpack.c.l.b16 %v2567
    %v3020 = vunpack.c.h.b16 %v2567
    %v3021 = vunpack.c.l.b16 %v2568
    %v3022 = vunpack.c.h.b16 %v2568
    %v3023 = vunpack.c.l.b16 %v2569
    %v3024 = vunpack.c.h.b16 %v2569
    %v3025 = vunpack.c.l.b16 %v2570
    %v3026 = vunpack.c.h.b16 %v2570
    %v3027 = vunpack.c.l.b16 %v2571
    %v3028 = vunpack.c.h.b16 %v2571
    %v3029 = vunpack.c.l.b16 %v2572
    %v3030 = vunpack.c.h.b16 %v2572
    %v3031 = vunpack.c.l.b16 %v2573
    %v3032 = vunpack.c.h.b16 %v2573
    %v3033 = vunpack.c.l.b16 %v2574
    %v3034 = vunpack.c.h.b16 %v2574
    %v3035 = vunpack.c.l.b16 %v2575
    %v3036 = vunpack.c.h.b16 %v2575
    %v3037 = vunpack.c.l.b16 %v2576
    %v3038 = vunpack.c.h.b16 %v2576
    %v3039 = vunpack.c.l.b16 %v2577
    %v3040 = vunpack.c.h.b16 %v2577
    %v3041 = vunpack.c.l.b16 %v2578
    %v3042 = vunpack.c.h.b16 %v2578
    %v3043 = vunpack.c.l.b16 %v2579
    %v3044 = vunpack.c.h.b16 %v2579
    %v3045 = vunpack.c.l.b16 %v2580
    %v3046 = vunpack.c.h.b16 %v2580
    %v3047 = vunpack.c.l.b16 %v2581
    %v3048 = vunpack.c.h.b16 %v2581
    %v3049 = vunpack.c.l.b16 %v2582
    %v3050 = vunpack.c.h.b16 %v2582
    %v3051 = vunpack.c.l.b16 %v2583
    %v3052 = vunpack.c.h.b16 %v2583
    %v3053 = vunpack.c.l.b16 %v2584
    %v3054 = vunpack.c.h.b16 %v2584
    %v3055 = vunpack.c.l.b16 %v2585
    %v3056 = vunpack.c.h.b16 %v2585
    %v3057 = vunpack.c.l.b16 %v2586
    %v3058 = vunpack.c.h.b16 %v2586
    %v3059 = vunpack.c.l.b16 %v2587
    %v3060 = vunpack.c.h.b16 %v2587
    %v3061 = vunpack.c.l.b16 %v2588
    %v3062 = vunpack.c.h.b16 %v2588
    %v3063 = vunpack.c.l.b16 %v2589
    %v3064 = vunpack.c.h.b16 %v2589
    %v3065 = vunpack.c.l.b16 %v2590
    %v3066 = vunpack.c.h.b16 %v2590
    %v3067 = vunpack.c.l.b16 %v2591
    %v3068 = vunpack.c.h.b16 %v2591
    %v3069 = vunpack.c.l.b16 %v2592
    %v3070 = vunpack.c.h.b16 %v2592
    %v3071 = vunpack.c.l.b16 %v2593
    %v3072 = vunpack.c.h.b16 %v2593
    %v3073 = vunpack.c.l.b16 %v2594
    %v3074 = vunpack.c.h.b16 %v2594
    %v3075 = vunpack.c.l.b16 %v2595
    %v3076 = vunpack.c.h.b16 %v2595
    %v3077 = vunpack.c.l.b16 %v2596
    %v3078 = vunpack.c.h.b16 %v2596
    %v3079 = vunpack.c.l.b16 %v2597
    %v3080 = vunpack.c.h.b16 %v2597
    %v3081 = vunpack.c.l.b16 %v2598
    %v3082 = vunpack.c.h.b16 %v2598
    %v3083 = vunpack.c.l.b16 %v2599
    %v3084 = vunpack.c.h.b16 %v2599
    %v3085 = vunpack.c.l.b16 %v2600
    %v3086 = vunpack.c.h.b16 %v2600
    %v3087 = vunpack.c.l.b16 %v2601
    %v3088 = vunpack.c.h.b16 %v2601
    %v3089 = vunpack.c.l.b16 %v2602
    %v3090 = vunpack.c.h.b16 %v2602
    %v3091 = vunpack.c.l.b16 %v2603
    %v3092 = vunpack.c.h.b16 %v2603
    %v3093 = vunpack.c.l.b16 %v2604
    %v3094 = vunpack.c.h.b16 %v2604
    %v3095 = vunpack.c.l.b16 %v2605
    %v3096 = vunpack.c.h.b16 %v2605
    %v3097 = vunpack.c.l.b16 %v2606
    %v3098 = vunpack.c.h.b16 %v2606
    %v3099 = vunpack.c.l.b16 %v2607
    %v3100 = vunpack.c.h.b16 %v2607
    %v3101 = vunpack.c.l.b16 %v2608
    %v3102 = vunpack.c.h.b16 %v2608
    %v3103 = vunpack.c.l.b16 %v2609
    %v3104 = vunpack.c.h.b16 %v2609
    %v3105 = vunpack.c.l.b16 %v2610
    %v3106 = vunpack.c.h.b16 %v2610
    %v3107 = vunpack.c.l.b16 %v2611
    %v3108 = vunpack.c.h.b16 %v2611
    %v3109 = vunpack.c.l.b16 %v2612
    %v3110 = vunpack.c.h.b16 %v2612
    %v3111 = vunpack.c.l.b16 %v2613
    %v3112 = vunpack.c.h.b16 %v2613
    %v3113 = vunpack.c.l.b16 %v2614
    %v3114 = vunpack.c.h.b16 %v2614
    %v3115 = vunpack.c.l.b16 %v2615
    %v3116 = vunpack.c.h.b16 %v2615
    %v3117 = vunpack.c.l.b16 %v2616
    %v3118 = vunpack.c.h.b16 %v2616
    %v3119 = vunpack.c.l.b16 %v2617
    %v3120 = vunpack.c.h.b16 %v2617
    %v3121 = vunpack.c.l.b16 %v2618
    %v3122 = vunpack.c.h.b16 %v2618
    %v3123 = vunpack.c.l.b16 %v2619
    %v3124 = vunpack.c.h.b16 %v2619
    %v3125 = vunpack.c.l.b16 %v2620
    %v3126 = vunpack.c.h.b16 %v2620
    %v3127 = vunpack.c.l.b16 %v2621
    %v3128 = vunpack.c.h.b16 %v2621
    %v3129 = vunpack.c.l.b16 %v2622
    %v3130 = vunpack.c.h.b16 %v2622
    %v3131 = vunpack.c.l.b16 %v2623
    %v3132 = vunpack.c.h.b16 %v2623
    %v3133 = vunpack.c.l.b16 %v2624
    %v3134 = vunpack.c.h.b16 %v2624
    %v3135 = vunpack.c.l.b16 %v2625
    %v3136 = vunpack.c.h.b16 %v2625
    %v3137 = vunpack.c.l.b16 %v2626
    %v3138 = vunpack.c.h.b16 %v2626
    %v3139 = vunpack.c.l.b16 %v2627
    %v3140 = vunpack.c.h.b16 %v2627
    %v3141 = vunpack.c.l.b16 %v2628
    %v3142 = vunpack.c.h.b16 %v2628
    %v3143 = vunpack.c.l.b16 %v2629
    %v3144 = vunpack.c.h.b16 %v2629
    %v3145 = vunpack.c.l.b16 %v2630
    %v3146 = vunpack.c.h.b16 %v2630
    %v3147 = vunpack.c.l.b16 %v2631
    %v3148 = vunpack.c.h.b16 %v2631
    %v3149 = vunpack.c.l.b16 %v2632
    %v3150 = vunpack.c.h.b16 %v2632
    %v3151 = vunpack.c.l.b16 %v2633
    %v3152 = vunpack.c.h.b16 %v2633
    %v3153 = vunpack.c.l.b16 %v2634
    %v3154 = vunpack.c.h.b16 %v2634
    %v3155 = vunpack.c.l.b16 %v2635
    %v3156 = vunpack.c.h.b16 %v2635
    %v3157 = vunpack.c.l.b16 %v2636
    %v3158 = vunpack.c.h.b16 %v2636
    %v3159 = vunpack.c.l.b16 %v2637
    %v3160 = vunpack.c.h.b16 %v2637
    %v3161 = vunpack.c.l.b16 %v2638
    %v3162 = vunpack.c.h.b16 %v2638
    %v3163 = vunpack.c.l.b16 %v2639
    %v3164 = vunpack.c.h.b16 %v2639
    %v3165 = vunpack.c.l.b16 %v2640
    %v3166 = vunpack.c.h.b16 %v2640
    %v3167 = vunpack.c.l.b16 %v2641
    %v3168 = vunpack.c.h.b16 %v2641
    %v3169 = vunpack.c.l.b16 %v2642
    %v3170 = vunpack.c.h.b16 %v2642
    %v3171 = vunpack.c.l.b16 %v2643
    %v3172 = vunpack.c.h.b16 %v2643
    %v3173 = vunpack.c.l.b16 %v2644
    %v3174 = vunpack.c.h.b16 %v2644
    %v3175 = vunpack.c.l.b16 %v2645
    %v3176 = vunpack.c.h.b16 %v2645
    %v3177 = vunpack.c.l.b16 %v2646
    %v3178 = vunpack.c.h.b16 %v2646
    %v3179 = vunpack.c.l.b16 %v2647
    %v3180 = vunpack.c.h.b16 %v2647
    %v3181 = vunpack.c.l.b16 %v2648
    %v3182 = vunpack.c.h.b16 %v2648
    %v3183 = vunpack.c.l.b16 %v2649
    %v3184 = vunpack.c.h.b16 %v2649
    %v3185 = vunpack.c.l.b16 %v2650
    %v3186 = vunpack.c.h.b16 %v2650
    %v3187 = vunpack.c.l.b16 %v2651
    %v3188 = vunpack.c.h.b16 %v2651
    %v3189 = vunpack.c.l.b16 %v2652
    %v3190 = vunpack.c.h.b16 %v2652
    %v3191 = vunpack.c.l.b16 %v2653
    %v3192 = vunpack.c.h.b16 %v2653
    %v3193 = vunpack.c.l.b16 %v2654
    %v3194 = vunpack.c.h.b16 %v2654
    %v3195 = vunpack.c.l.b16 %v2655
    %v3196 = vunpack.c.h.b16 %v2655
    %v3197 = vunpack.c.l.b16 %v2656
    %v3198 = vunpack.c.h.b16 %v2656
    %v3199 = vunpack.c.l.b16 %v2657
    %v3200 = vunpack.c.h.b16 %v2657
    %v3201 = vunpack.c.l.b16 %v2658
    %v3202 = vunpack.c.h.b16 %v2658
    %v3203 = vunpack.c.l.b16 %v2659
    %v3204 = vunpack.c.h.b16 %v2659
    %v3205 = vunpack.c.l.b16 %v2660
    %v3206 = vunpack.c.h.b16 %v2660
    %v3207 = vunpack.c.l.b16 %v2661
    %v3208 = vunpack.c.h.b16 %v2661
    %v3209 = vunpack.c.l.b16 %v2662
    %v3210 = vunpack.c.h.b16 %v2662
    %v3211 = vunpack.c.l.b16 %v2663
    %v3212 = vunpack.c.h.b16 %v2663
    %v3213 = vunpack.c.l.b16 %v2664
    %v3214 = vunpack.c.h.b16 %v2664
    %v3215 = vunpack.c.l.b16 %v2665
    %v3216 = vunpack.c.h.b16 %v2665
    %v3217 = vunpack.c.l.b16 %v2666
    %v3218 = vunpack.c.h.b16 %v2666
    %v3219 = vunpack.c.l.b16 %v2667
    %v3220 = vunpack.c.h.b16 %v2667
    %v3221 = vunpack.c.l.b16 %v2668
    %v3222 = vunpack.c.h.b16 %v2668
    %v3223 = vunpack.c.l.b16 %v2669
    %v3224 = vunpack.c.h.b16 %v2669
    %v3225 = vunpack.c.l.b16 %v2670
    %v3226 = vunpack.c.h.b16 %v2670
    %v3227 = vunpack.c.l.b16 %v2671
    %v3228 = vunpack.c.h.b16 %v2671
    %v3229 = vunpack.c.l.b16 %v2672
    %v3230 = vunpack.c.h.b16 %v2672
    %v3231 = vunpack.c.l.b16 %v2673
    %v3232 = vunpack.c.h.b16 %v2673
    %v3233 = vunpack.c.l.b16 %v2674
    %v3234 = vunpack.c.h.b16 %v2674
    %v3235 = vunpack.c.l.b16 %v2675
    %v3236 = vunpack.c.h.b16 %v2675
    %v3237 = vunpack.c.l.b16 %v2676
    %v3238 = vunpack.c.h.b16 %v2676
    %v3239 = vunpack.c.l.b16 %v2677
    %v3240 = vunpack.c.h.b16 %v2677
    %v3241 = vunpack.c.l.b16 %v2678
    %v3242 = vunpack.c.h.b16 %v2678
    %v3243 = vunpack.c.l.b16 %v2679
    %v3244 = vunpack.c.h.b16 %v2679
    %v3245 = vunpack.c.l.b16 %v2680
    %v3246 = vunpack.c.h.b16 %v2680
    %v3247 = vunpack.c.l.b16 %v2681
    %v3248 = vunpack.c.h.b16 %v2681
    %v3249 = vunpack.c.l.b16 %v2682
    %v3250 = vunpack.c.h.b16 %v2682
    %v3251 = vunpack.c.l.b16 %v2683
    %v3252 = vunpack.c.h.b16 %v2683
    %v3253 = vunpack.c.l.b16 %v2684
    %v3254 = vunpack.c.h.b16 %v2684
    %v3255 = vunpack.c.l.b16 %v2685
    %v3256 = vunpack.c.h.b16 %v2685
    %v3257 = vunpack.c.l.b16 %v2686
    %v3258 = vunpack.c.h.b16 %v2686
    %v3259 = vunpack.c.l.b16 %v2687
    %v3260 = vunpack.c.h.b16 %v2687
    %v3261 = vunpack.c.l.b16 %v2688
    %v3262 = vunpack.c.h.b16 %v2688
    %v3263 = vunpack.c.l.b16 %v2689
    %v3264 = vunpack.c.h.b16 %v2689
    %v3265 = vunpack.c.l.b16 %v2690
    %v3266 = vunpack.c.h.b16 %v2690
    %v3267 = vunpack.c.l.b16 %v2691
    %v3268 = vunpack.c.h.b16 %v2691
    %v3269 = vunpack.c.l.b16 %v2692
    %v3270 = vunpack.c.h.b16 %v2692
    %v3271 = vunpack.c.l.b16 %v2693
    %v3272 = vunpack.c.h.b16 %v2693
    %v3273 = vunpack.c.l.b16 %v2694
    %v3274 = vunpack.c.h.b16 %v2694
    %v3275 = vunpack.c.l.b16 %v2695
    %v3276 = vunpack.c.h.b16 %v2695
    %v3277 = vunpack.c.l.b16 %v2696
    %v3278 = vunpack.c.h.b16 %v2696
    %v3279 = vunpack.c.l.b16 %v2697
    %v3280 = vunpack.c.h.b16 %v2697
    %v3281 = vunpack.c.l.b16 %v2698
    %v3282 = vunpack.c.h.b16 %v2698
    %v3283 = vunpack.c.l.b16 %v2699
    %v3284 = vunpack.c.h.b16 %v2699
    %v3285 = vunpack.c.l.b16 %v2700
    %v3286 = vunpack.c.h.b16 %v2700
    %v3287 = vunpack.c.l.b16 %v2701
    %v3288 = vunpack.c.h.b16 %v2701
    %v3289 = vunpack.c.l.b16 %v2702
    %v3290 = vunpack.c.h.b16 %v2702
    %v3291 = vunpack.c.l.b16 %v2703
    %v3292 = vunpack.c.h.b16 %v2703
    %v3293 = vunpack.c.l.b16 %v2704
    %v3294 = vunpack.c.h.b16 %v2704
    %v3295 = vunpack.c.l.b16 %v2705
    %v3296 = vunpack.c.h.b16 %v2705
    %v3297 = vunpack.c.l.b16 %v2706
    %v3298 = vunpack.c.h.b16 %v2706
    %v3299 = vunpack.c.l.b16 %v2707
    %v3300 = vunpack.c.h.b16 %v2707
    %v3301 = vunpack.c.l.b16 %v2708
    %v3302 = vunpack.c.h.b16 %v2708
    %v3303 = vunpack.c.l.b16 %v2709
    %v3304 = vunpack.c.h.b16 %v2709
    %v3305 = vunpack.c.l.b16 %v2710
    %v3306 = vunpack.c.h.b16 %v2710
    %v3307 = vunpack.c.l.b16 %v2711
    %v3308 = vunpack.c.h.b16 %v2711
    %v3309 = vunpack.c.l.b16 %v2712
    %v3310 = vunpack.c.h.b16 %v2712
    %v3311 = vunpack.c.l.b16 %v2713
    %v3312 = vunpack.c.h.b16 %v2713
    %v3313 = vunpack.c.l.b16 %v2714
    %v3314 = vunpack.c.h.b16 %v2714
    %v3315 = vunpack.c.l.b16 %v2715
    %v3316 = vunpack.c.h.b16 %v2715
    %v3317 = vunpack.c.l.b16 %v2716
    %v3318 = vunpack.c.h.b16 %v2716
    %v3319 = vunpack.c.l.b16 %v2717
    %v3320 = vunpack.c.h.b16 %v2717
    %v3321 = vunpack.c.l.b16 %v2718
    %v3322 = vunpack.c.h.b16 %v2718
    %v3323 = vunpack.c.l.b16 %v2719
    %v3324 = vunpack.c.h.b16 %v2719
    %v3325 = vunpack.c.l.b16 %v2720
    %v3326 = vunpack.c.h.b16 %v2720
    %v3327 = vunpack.c.l.b16 %v2721
    %v3328 = vunpack.c.h.b16 %v2721
    %v3329 = vunpack.c.l.b16 %v2722
    %v3330 = vunpack.c.h.b16 %v2722
    %v3331 = vunpack.c.l.b16 %v2723
    %v3332 = vunpack.c.h.b16 %v2723
    %v3333 = vunpack.c.l.b16 %v2724
    %v3334 = vunpack.c.h.b16 %v2724
    %v3335 = vpack.c.b16 %v2947, %v2943
    %v3336 = vpack.c.b16 %v2948, %v2944
    %v3337 = vpack.c.b16 %v2949, %v2945
    %v3338 = vpack.c.b16 %v2950, %v2946
    %v3339 = vpack.c.b16 %v2955, %v2951
    %v3340 = vpack.c.b16 %v2956, %v2952
    %v3341 = vpack.c.b16 %v2957, %v2953
    %v3342 = vpack.c.b16 %v2958, %v2954
    %v3343 = vpack.c.b16 %v2963, %v2959
    %v3344 = vpack.c.b16 %v2964, %v2960
    %v3345 = vpack.c.b16 %v2965, %v2961
    %v3346 = vpack.c.b16 %v2966, %v2962
    %v3347 = vpack.c.b16 %v2971, %v2967
    %v3348 = vpack.c.b16 %v2972, %v2968
    %v3349 = vpack.c.b16 %v2973, %v2969
    %v3350 = vpack.c.b16 %v2974, %v2970
    %v3351 = vpack.c.b16 %v2979, %v2975
    %v3352 = vpack.c.b16 %v2980, %v2976
    %v3353 = vpack.c.b16 %v2981, %v2977
    %v3354 = vpack.c.b16 %v2982, %v2978
    %v3355 = vpack.c.b16 %v2987, %v2983
    %v3356 = vpack.c.b16 %v2988, %v2984
    %v3357 = vpack.c.b16 %v2989, %v2985
    %v3358 = vpack.c.b16 %v2990, %v2986
    %v3359 = vpack.c.b16 %v2995, %v2991
    %v3360 = vpack.c.b16 %v2996, %v2992
    %v3361 = vpack.c.b16 %v2997, %v2993
    %v3362 = vpack.c.b16 %v2998, %v2994
    %v3363 = vpack.c.b16 %v3003, %v2999
    %v3364 = vpack.c.b16 %v3004, %v3000
    %v3365 = vpack.c.b16 %v3005, %v3001
    %v3366 = vpack.c.b16 %v3006, %v3002
    %v3367 = vpack.c.b16 %v3011, %v3007
    %v3368 = vpack.c.b16 %v3012, %v3008
    %v3369 = vpack.c.b16 %v3013, %v3009
    %v3370 = vpack.c.b16 %v3014, %v3010
    %v3371 = vpack.c.b16 %v3019, %v3015
    %v3372 = vpack.c.b16 %v3020, %v3016
    %v3373 = vpack.c.b16 %v3021, %v3017
    %v3374 = vpack.c.b16 %v3022, %v3018
    %v3375 = vpack.c.b16 %v3027, %v3023
    %v3376 = vpack.c.b16 %v3028, %v3024
    %v3377 = vpack.c.b16 %v3029, %v3025
    %v3378 = vpack.c.b16 %v3030, %v3026
    %v3379 = vpack.c.b16 %v3035, %v3031
    %v3380 = vpack.c.b16 %v3036, %v3032
    %v3381 = vpack.c.b16 %v3037, %v3033
    %v3382 = vpack.c.b16 %v3038, %v3034
    %v3383 = vpack.c.b16 %v3043, %v3039
    %v3384 = vpack.c.b16 %v3044, %v3040
    %v3385 = vpack.c.b16 %v3045, %v3041
    %v3386 = vpack.c.b16 %v3046, %v3042
    %v3387 = vpack.c.b16 %v3051, %v3047
    %v3388 = vpack.c.b16 %v3052, %v3048
    %v3389 = vpack.c.b16 %v3053, %v3049
    %v3390 = vpack.c.b16 %v3054, %v3050
    %v3391 = vpack.c.b16 %v3059, %v3055
    %v3392 = vpack.c.b16 %v3060, %v3056
    %v3393 = vpack.c.b16 %v3061, %v3057
    %v3394 = vpack.c.b16 %v3062, %v3058
    %v3395 = vpack.c.b16 %v3067, %v3063
    %v3396 = vpack.c.b16 %v3068, %v3064
    %v3397 = vpack.c.b16 %v3069, %v3065
    %v3398 = vpack.c.b16 %v3070, %v3066
    %v3399 = vpack.c.b16 %v3075, %v3071
    %v3400 = vpack.c.b16 %v3076, %v3072
    %v3401 = vpack.c.b16 %v3077, %v3073
    %v3402 = vpack.c.b16 %v3078, %v3074
    %v3403 = vpack.c.b16 %v3083, %v3079
    %v3404 = vpack.c.b16 %v3084, %v3080
    %v3405 = vpack.c.b16 %v3085, %v3081
    %v3406 = vpack.c.b16 %v3086, %v3082
    %v3407 = vpack.c.b16 %v3091, %v3087
    %v3408 = vpack.c.b16 %v3092, %v3088
    %v3409 = vpack.c.b16 %v3093, %v3089
    %v3410 = vpack.c.b16 %v3094, %v3090
    %v3411 = vpack.c.b16 %v3099, %v3095
    %v3412 = vpack.c.b16 %v3100, %v3096
    %v3413 = vpack.c.b16 %v3101, %v3097
    %v3414 = vpack.c.b16 %v3102, %v3098
    %v3415 = vpack.c.b16 %v3107, %v3103
    %v3416 = vpack.c.b16 %v3108, %v3104
    %v3417 = vpack.c.b16 %v3109, %v3105
    %v3418 = vpack.c.b16 %v3110, %v3106
    %v3419 = vpack.c.b16 %v3115, %v3111
    %v3420 = vpack.c.b16 %v3116, %v3112
    %v3421 = vpack.c.b16 %v3117, %v3113
    %v3422 = vpack.c.b16 %v3118, %v3114
    %v3423 = vpack.c.b16 %v3123, %v3119
    %v3424 = vpack.c.b16 %v3124, %v3120
    %v3425 = vpack.c.b16 %v3125, %v3121
    %v3426 = vpack.c.b16 %v3126, %v3122
    %v3427 = vpack.c.b16 %v3131, %v3127
    %v3428 = vpack.c.b16 %v3132, %v3128
    %v3429 = vpack.c.b16 %v3133, %v3129
    %v3430 = vpack.c.b16 %v3134, %v3130
    %v3431 = vpack.c.b16 %v3139, %v3135
    %v3432 = vpack.c.b16 %v3140, %v3136
    %v3433 = vpack.c.b16 %v3141, %v3137
    %v3434 = vpack.c.b16 %v3142, %v3138
    %v3435 = vpack.c.b16 %v3147, %v3143
    %v3436 = vpack.c.b16 %v3148, %v3144
    %v3437 = vpack.c.b16 %v3149, %v3145
    %v3438 = vpack.c.b16 %v3150, %v3146
    %v3439 = vpack.c.b16 %v3155, %v3151
    %v3440 = vpack.c.b16 %v3156, %v3152
    %v3441 = vpack.c.b16 %v3157, %v3153
    %v3442 = vpack.c.b16 %v3158, %v3154
    %v3443 = vpack.c.b16 %v3163, %v3159
    %v3444 = vpack.c.b16 %v3164, %v3160
    %v3445 = vpack.c.b16 %v3165, %v3161
    %v3446 = vpack.c.b16 %v3166, %v3162
    %v3447 = vpack.c.b16 %v3171, %v3167
    %v3448 = vpack.c.b16 %v3172, %v3168
    %v3449 = vpack.c.b16 %v3173, %v3169
    %v3450 = vpack.c.b16 %v3174, %v3170
    %v3451 = vpack.c.b16 %v3179, %v3175
    %v3452 = vpack.c.b16 %v3180, %v3176
    %v3453 = vpack.c.b16 %v3181, %v3177
    %v3454 = vpack.c.b16 %v3182, %v3178
    %v3455 = vpack.c.b16 %v3187, %v3183
    %v3456 = vpack.c.b16 %v3188, %v3184
    %v3457 = vpack.c.b16 %v3189, %v3185
    %v3458 = vpack.c.b16 %v3190, %v3186
    %v3459 = vpack.c.b16 %v3195, %v3191
    %v3460 = vpack.c.b16 %v3196, %v3192
    %v3461 = vpack.c.b16 %v3197, %v3193
    %v3462 = vpack.c.b16 %v3198, %v3194
    %v3463 = vpack.c.b16 %v3203, %v3199
    %v3464 = vpack.c.b16 %v3204, %v3200
    %v3465 = vpack.c.b16 %v3205, %v3201
    %v3466 = vpack.c.b16 %v3206, %v3202
    %v3467 = vpack.c.b16 %v3211, %v3207
    %v3468 = vpack.c.b16 %v3212, %v3208
    %v3469 = vpack.c.b16 %v3213, %v3209
    %v3470 = vpack.c.b16 %v3214, %v3210
    %v3471 = vpack.c.b16 %v3219, %v3215
    %v3472 = vpack.c.b16 %v3220, %v3216
    %v3473 = vpack.c.b16 %v3221, %v3217
    %v3474 = vpack.c.b16 %v3222, %v3218
    %v3475 = vpack.c.b16 %v3227, %v3223
    %v3476 = vpack.c.b16 %v3228, %v3224
    %v3477 = vpack.c.b16 %v3229, %v3225
    %v3478 = vpack.c.b16 %v3230, %v3226
    %v3479 = vpack.c.b16 %v3235, %v3231
    %v3480 = vpack.c.b16 %v3236, %v3232
    %v3481 = vpack.c.b16 %v3237, %v3233
    %v3482 = vpack.c.b16 %v3238, %v3234
    %v3483 = vpack.c.b16 %v3243, %v3239
    %v3484 = vpack.c.b16 %v3244, %v3240
    %v3485 = vpack.c.b16 %v3245, %v3241
    %v3486 = vpack.c.b16 %v3246, %v3242
    %v3487 = vpack.c.b16 %v3251, %v3247
    %v3488 = vpack.c.b16 %v3252, %v3248
    %v3489 = vpack.c.b16 %v3253, %v3249
    %v3490 = vpack.c.b16 %v3254, %v3250
    %v3491 = vpack.c.b16 %v3259, %v3255
    %v3492 = vpack.c.b16 %v3260, %v3256
    %v3493 = vpack.c.b16 %v3261, %v3257
    %v3494 = vpack.c.b16 %v3262, %v3258
    %v3495 = vpack.c.b16 %v3267, %v3263
    %v3496 = vpack.c.b16 %v3268, %v3264
    %v3497 = vpack.c.b16 %v3269, %v3265
    %v3498 = vpack.c.b16 %v3270, %v3266
    %v3499 = vpack.c.b16 %v3275, %v3271
    %v3500 = vpack.c.b16 %v3276, %v3272
    %v3501 = vpack.c.b16 %v3277, %v3273
    %v3502 = vpack.c.b16 %v3278, %v3274
    %v3503 = vpack.c.b16 %v3283, %v3279
    %v3504 = vpack.c.b16 %v3284, %v3280
    %v3505 = vpack.c.b16 %v3285, %v3281
    %v3506 = vpack.c.b16 %v3286, %v3282
    %v3507 = vpack.c.b16 %v3291, %v3287
    %v3508 = vpack.c.b16 %v3292, %v3288
    %v3509 = vpack.c.b16 %v3293, %v3289
    %v3510 = vpack.c.b16 %v3294, %v3290
    %v3511 = vpack.c.b16 %v3299, %v3295
    %v3512 = vpack.c.b16 %v3300, %v3296
    %v3513 = vpack.c.b16 %v3301, %v3297
    %v3514 = vpack.c.b16 %v3302, %v3298
    %v3515 = vpack.c.b16 %v3307, %v3303
    %v3516 = vpack.c.b16 %v3308, %v3304
    %v3517 = vpack.c.b16 %v3309, %v3305
    %v3518 = vpack.c.b16 %v3310, %v3306
    %v3519 = vpack.c.b16 %v3315, %v3311
    %v3520 = vpack.c.b16 %v3316, %v3312
    %v3521 = vpack.c.b16 %v3317, %v3313
    %v3522 = vpack.c.b16 %v3318, %v3314
    %v3523 = vpack.c.b16 %v3323, %v3319
    %v3524 = vpack.c.b16 %v3324, %v3320
    %v3525 = vpack.c.b16 %v3325, %v3321
    %v3526 = vpack.c.b16 %v3326, %v3322
    %v3527 = vpack.c.b16 %v3331, %v3327
    %v3528 = vpack.c.b16 %v3332, %v3328
    %v3529 = vpack.c.b16 %v3333, %v3329
    %v3530 = vpack.c.b16 %v3334, %v3330
    %3727 = vmatprep.subr.bf16.mxu0 %v3336
    %3728 = vmatpush1.bf16.msra.mxu0 %v3335
    %3729 = vmatprep.subr.bf16.mxu0 %v3340
    %3730 = vmatpush1.bf16.msra.mxu0 %v3339
    %3731 = vmatprep.subr.bf16.mxu0 %v3344
    %3732 = vmatpush1.bf16.msra.mxu0 %v3343
    %3733 = vmatprep.subr.bf16.mxu0 %v3348
    %3734 = vmatpush1.bf16.msra.mxu0 %v3347
    %3735 = vmatprep.subr.bf16.mxu0 %v3352
    %3736 = vmatpush1.bf16.msra.mxu0 %v3351
    %3737 = vmatprep.subr.bf16.mxu0 %v3356
    %3738 = vmatpush1.bf16.msra.mxu0 %v3355
    %3739 = vmatprep.subr.bf16.mxu0 %v3360
    %3740 = vmatpush1.bf16.msra.mxu0 %v3359
    %3741 = vmatprep.subr.bf16.mxu0 %v3364
    %3742 = vmatpush1.bf16.msra.mxu0 %v3363
    %3743 = vmatprep.subr.bf16.mxu0 %v3368
    %3744 = vmatpush1.bf16.msra.mxu0 %v3367
    %3745 = vmatprep.subr.bf16.mxu0 %v3372
    %3746 = vmatpush1.bf16.msra.mxu0 %v3371
    %3747 = vmatprep.subr.bf16.mxu0 %v3376
    %3748 = vmatpush1.bf16.msra.mxu0 %v3375
    %3749 = vmatprep.subr.bf16.mxu0 %v3380
    %3750 = vmatpush1.bf16.msra.mxu0 %v3379
    %3751 = vmatprep.subr.bf16.mxu0 %v3384
    %3752 = vmatpush1.bf16.msra.mxu0 %v3383
    %3753 = vmatprep.subr.bf16.mxu0 %v3388
    %3754 = vmatpush1.bf16.msra.mxu0 %v3387
    %3755 = vmatprep.subr.bf16.mxu0 %v3392
    %3756 = vmatpush1.bf16.msra.mxu0 %v3391
    %3757 = vmatprep.subr.bf16.mxu0 %v3396
    %3758 = vmatpush1.bf16.msra.mxu0 %v3395
    %3759 = vmatprep.mubr.bf16.mxu0 %v328
    %3760 = vmatmul.mubr.bf16.gmra.mrb[0].mxu0 %v327
    %v3761 = vpop.f32.mrb[0].mxu0
    %v3762 = vadd.f32 %v2730, %v3761
    %v3763 = vpop.f32.mrb[0].mxu0
    %v3764 = vadd.f32 %v2734, %v3763
    %v3765 = vpop.f32.mrb[0].mxu0
    %v3766 = vpop.f32.mrb[0].mxu0
    %3767 = vdwg.mxu0
    %3768 = vmatprep.subr.bf16.mxu0 %v3400
    %3769 = vmatpush1.bf16.msra.mxu0 %v3399
    %3770 = vmatprep.subr.bf16.mxu0 %v3404
    %3771 = vmatpush1.bf16.msra.mxu0 %v3403
    %3772 = vmatprep.subr.bf16.mxu0 %v3408
    %3773 = vmatpush1.bf16.msra.mxu0 %v3407
    %3774 = vmatprep.subr.bf16.mxu0 %v3412
    %3775 = vmatpush1.bf16.msra.mxu0 %v3411
    %3776 = vmatprep.subr.bf16.mxu0 %v3416
    %3777 = vmatpush1.bf16.msra.mxu0 %v3415
    %3778 = vmatprep.subr.bf16.mxu0 %v3420
    %3779 = vmatpush1.bf16.msra.mxu0 %v3419
    %3780 = vmatprep.subr.bf16.mxu0 %v3424
    %3781 = vmatpush1.bf16.msra.mxu0 %v3423
    %3782 = vmatprep.subr.bf16.mxu0 %v3428
    %3783 = vmatpush1.bf16.msra.mxu0 %v3427
    %3784 = vmatprep.subr.bf16.mxu0 %v3432
    %3785 = vmatpush1.bf16.msra.mxu0 %v3431
    %3786 = vmatprep.subr.bf16.mxu0 %v3436
    %3787 = vmatpush1.bf16.msra.mxu0 %v3435
    %3788 = vmatprep.subr.bf16.mxu0 %v3440
    %3789 = vmatpush1.bf16.msra.mxu0 %v3439
    %3790 = vmatprep.subr.bf16.mxu0 %v3444
    %3791 = vmatpush1.bf16.msra.mxu0 %v3443
    %3792 = vmatprep.subr.bf16.mxu0 %v3448
    %3793 = vmatpush1.bf16.msra.mxu0 %v3447
    %3794 = vmatprep.subr.bf16.mxu0 %v3452
    %3795 = vmatpush1.bf16.msra.mxu0 %v3451
    %3796 = vmatprep.subr.bf16.mxu0 %v3456
    %3797 = vmatpush1.bf16.msra.mxu0 %v3455
    %3798 = vmatprep.subr.bf16.mxu0 %v3460
    %3799 = vmatpush1.bf16.msra.mxu0 %v3459
    %3800 = vmatprep.mubr.bf16.mxu0 %v330
    %3801 = vmatmul.mubr.bf16.gmra.mrb[0].mxu0 %v329
    %v3802 = vpop.f32.mrb[0].mxu0
    %v3803 = vadd.f32 %v3762, %v3802
    %v3804 = vpop.f32.mrb[0].mxu0
    %v3805 = vadd.f32 %v3764, %v3804
    %v3806 = vpop.f32.mrb[0].mxu0
    %v3807 = vpop.f32.mrb[0].mxu0
    %3808 = vdwg.mxu0
    %3809 = vmatprep.subr.bf16.mxu0 %v3464
    %3810 = vmatpush1.bf16.msra.mxu0 %v3463
    %3811 = vmatprep.subr.bf16.mxu0 %v3468
    %3812 = vmatpush1.bf16.msra.mxu0 %v3467
    %3813 = vmatprep.subr.bf16.mxu0 %v3472
    %3814 = vmatpush1.bf16.msra.mxu0 %v3471
    %3815 = vmatprep.subr.bf16.mxu0 %v3476
    %3816 = vmatpush1.bf16.msra.mxu0 %v3475
    %3817 = vmatprep.subr.bf16.mxu0 %v3480
    %3818 = vmatpush1.bf16.msra.mxu0 %v3479
    %3819 = vmatprep.subr.bf16.mxu0 %v3484
    %3820 = vmatpush1.bf16.msra.mxu0 %v3483
    %3821 = vmatprep.subr.bf16.mxu0 %v3488
    %3822 = vmatpush1.bf16.msra.mxu0 %v3487
    %3823 = vmatprep.subr.bf16.mxu0 %v3492
    %3824 = vmatpush1.bf16.msra.mxu0 %v3491
    %3825 = vmatprep.subr.bf16.mxu0 %v3496
    %3826 = vmatpush1.bf16.msra.mxu0 %v3495
    %3827 = vmatprep.subr.bf16.mxu0 %v3500
    %3828 = vmatpush1.bf16.msra.mxu0 %v3499
    %3829 = vmatprep.subr.bf16.mxu0 %v3504
    %3830 = vmatpush1.bf16.msra.mxu0 %v3503
    %3831 = vmatprep.subr.bf16.mxu0 %v3508
    %3832 = vmatpush1.bf16.msra.mxu0 %v3507
    %3833 = vmatprep.subr.bf16.mxu0 %v3512
    %3834 = vmatpush1.bf16.msra.mxu0 %v3511
    %3835 = vmatprep.subr.bf16.mxu0 %v3516
    %3836 = vmatpush1.bf16.msra.mxu0 %v3515
    %3837 = vmatprep.subr.bf16.mxu0 %v3520
    %3838 = vmatpush1.bf16.msra.mxu0 %v3519
    %3839 = vmatprep.subr.bf16.mxu0 %v3524
    %3840 = vmatpush1.bf16.msra.mxu0 %v3523
    %3841 = vmatprep.mubr.bf16.mxu0 %v332
    %3842 = vmatmul.mubr.bf16.gmra.mrb[0].mxu0 %v331
    %v3843 = vpop.f32.mrb[0].mxu0
    %v3844 = vadd.f32 %v3803, %v3843
    %v3845 = vpop.f32.mrb[0].mxu0
    %v3846 = vadd.f32 %v3805, %v3845
    %v3847 = vpop.f32.mrb[0].mxu0
    %v3848 = vpop.f32.mrb[0].mxu0
    %3849 = vdwg.mxu0
    %3850 = vmatprep.subr.bf16.mxu0 %v3528
    %3851 = vmatpush1.bf16.msra.mxu0 %v3527
    %3852 = vmatprep.subr.bf16.mxu0 0
    %3853 = vmatpush1.bf16.msra.mxu0 0
    %3854 = vmatprep.subr.bf16.mxu0 0
    %3855 = vmatpush1.bf16.msra.mxu0 0
    %3856 = vmatprep.subr.bf16.mxu0 0
    %3857 = vmatpush1.bf16.msra.mxu0 0
    %3858 = vmatprep.subr.bf16.mxu0 0
    %3859 = vmatpush1.bf16.msra.mxu0 0
    %3860 = vmatprep.subr.bf16.mxu0 0
    %3861 = vmatpush1.bf16.msra.mxu0 0
    %3862 = vmatprep.subr.bf16.mxu0 0
    %3863 = vmatpush1.bf16.msra.mxu0 0
    %3864 = vmatprep.subr.bf16.mxu0 0
    %3865 = vmatpush1.bf16.msra.mxu0 0
    %3866 = vmatprep.subr.bf16.mxu0 0
    %3867 = vmatpush1.bf16.msra.mxu0 0
    %3868 = vmatprep.subr.bf16.mxu0 0
    %3869 = vmatpush1.bf16.msra.mxu0 0
    %3870 = vmatprep.subr.bf16.mxu0 0
    %3871 = vmatpush1.bf16.msra.mxu0 0
    %3872 = vmatprep.subr.bf16.mxu0 0
    %3873 = vmatpush1.bf16.msra.mxu0 0
    %3874 = vmatprep.subr.bf16.mxu0 0
    %3875 = vmatpush1.bf16.msra.mxu0 0
    %3876 = vmatprep.subr.bf16.mxu0 0
    %3877 = vmatpush1.bf16.msra.mxu0 0
    %3878 = vmatprep.subr.bf16.mxu0 0
    %3879 = vmatpush1.bf16.msra.mxu0 0
    %3880 = vmatprep.subr.bf16.mxu0 0
    %3881 = vmatpush1.bf16.msra.mxu0 0
    %3882 = vmatprep.mubr.bf16.mxu0 0
    %3883 = vmatmul.mubr.bf16.gmra.mrb[0].mxu0 %v1534
    %v3884 = vpop.f32.mrb[0].mxu0
    %v3885 = vadd.f32 %v3844, %v3884
    %v3886 = vpop.f32.mrb[0].mxu0
    %v3887 = vadd.f32 %v3846, %v3886
    %v3888 = vpop.f32.mrb[0].mxu0
    %v3889 = vpop.f32.mrb[0].mxu0
    %3890 = vdwg.mxu0
    %3891 = vmatprep.subr.bf16.mxu0 %v3338
    %3892 = vmatpush1.bf16.msra.mxu0 %v3337
    %3893 = vmatprep.subr.bf16.mxu0 %v3342
    %3894 = vmatpush1.bf16.msra.mxu0 %v3341
    %3895 = vmatprep.subr.bf16.mxu0 %v3346
    %3896 = vmatpush1.bf16.msra.mxu0 %v3345
    %3897 = vmatprep.subr.bf16.mxu0 %v3350
    %3898 = vmatpush1.bf16.msra.mxu0 %v3349
    %3899 = vmatprep.subr.bf16.mxu0 %v3354
    %3900 = vmatpush1.bf16.msra.mxu0 %v3353
    %3901 = vmatprep.subr.bf16.mxu0 %v3358
    %3902 = vmatpush1.bf16.msra.mxu0 %v3357
    %3903 = vmatprep.subr.bf16.mxu0 %v3362
    %3904 = vmatpush1.bf16.msra.mxu0 %v3361
    %3905 = vmatprep.subr.bf16.mxu0 %v3366
    %3906 = vmatpush1.bf16.msra.mxu0 %v3365
    %3907 = vmatprep.subr.bf16.mxu0 %v3370
    %3908 = vmatpush1.bf16.msra.mxu0 %v3369
    %3909 = vmatprep.subr.bf16.mxu0 %v3374
    %3910 = vmatpush1.bf16.msra.mxu0 %v3373
    %3911 = vmatprep.subr.bf16.mxu0 %v3378
    %3912 = vmatpush1.bf16.msra.mxu0 %v3377
    %3913 = vmatprep.subr.bf16.mxu0 %v3382
    %3914 = vmatpush1.bf16.msra.mxu0 %v3381
    %3915 = vmatprep.subr.bf16.mxu0 %v3386
    %3916 = vmatpush1.bf16.msra.mxu0 %v3385
    %3917 = vmatprep.subr.bf16.mxu0 %v3390
    %3918 = vmatpush1.bf16.msra.mxu0 %v3389
    %3919 = vmatprep.subr.bf16.mxu0 %v3394
    %3920 = vmatpush1.bf16.msra.mxu0 %v3393
    %3921 = vmatprep.subr.bf16.mxu0 %v3398
    %3922 = vmatpush1.bf16.msra.mxu0 %v3397
    %3923 = vmatprep.mubr.bf16.mxu0 %v328
    %3924 = vmatmul.mubr.bf16.gmra.mrb[0].mxu0 %v327
    %v3925 = vpop.f32.mrb[0].mxu0
    %v3926 = vadd.f32 %v2738, %v3925
    %v3927 = vpop.f32.mrb[0].mxu0
    %v3928 = vadd.f32 %v2742, %v3927
    %v3929 = vpop.f32.mrb[0].mxu0
    %v3930 = vpop.f32.mrb[0].mxu0
    %3931 = vdwg.mxu0
    %3932 = vmatprep.subr.bf16.mxu0 %v3402
    %3933 = vmatpush1.bf16.msra.mxu0 %v3401
    %3934 = vmatprep.subr.bf16.mxu0 %v3406
    %3935 = vmatpush1.bf16.msra.mxu0 %v3405
    %3936 = vmatprep.subr.bf16.mxu0 %v3410
    %3937 = vmatpush1.bf16.msra.mxu0 %v3409
    %3938 = vmatprep.subr.bf16.mxu0 %v3414
    %3939 = vmatpush1.bf16.msra.mxu0 %v3413
    %3940 = vmatprep.subr.bf16.mxu0 %v3418
    %3941 = vmatpush1.bf16.msra.mxu0 %v3417
    %3942 = vmatprep.subr.bf16.mxu0 %v3422
    %3943 = vmatpush1.bf16.msra.mxu0 %v3421
    %3944 = vmatprep.subr.bf16.mxu0 %v3426
    %3945 = vmatpush1.bf16.msra.mxu0 %v3425
    %3946 = vmatprep.subr.bf16.mxu0 %v3430
    %3947 = vmatpush1.bf16.msra.mxu0 %v3429
    %3948 = vmatprep.subr.bf16.mxu0 %v3434
    %3949 = vmatpush1.bf16.msra.mxu0 %v3433
    %3950 = vmatprep.subr.bf16.mxu0 %v3438
    %3951 = vmatpush1.bf16.msra.mxu0 %v3437
    %3952 = vmatprep.subr.bf16.mxu0 %v3442
    %3953 = vmatpush1.bf16.msra.mxu0 %v3441
    %3954 = vmatprep.subr.bf16.mxu0 %v3446
    %3955 = vmatpush1.bf16.msra.mxu0 %v3445
    %3956 = vmatprep.subr.bf16.mxu0 %v3450
    %3957 = vmatpush1.bf16.msra.mxu0 %v3449
    %3958 = vmatprep.subr.bf16.mxu0 %v3454
    %3959 = vmatpush1.bf16.msra.mxu0 %v3453
    %3960 = vmatprep.subr.bf16.mxu0 %v3458
    %3961 = vmatpush1.bf16.msra.mxu0 %v3457
    %3962 = vmatprep.subr.bf16.mxu0 %v3462
    %3963 = vmatpush1.bf16.msra.mxu0 %v3461
    %3964 = vmatprep.mubr.bf16.mxu0 %v330
    %3965 = vmatmul.mubr.bf16.gmra.mrb[0].mxu0 %v329
    %v3966 = vpop.f32.mrb[0].mxu0
    %v3967 = vadd.f32 %v3926, %v3966
    %v3968 = vpop.f32.mrb[0].mxu0
    %v3969 = vadd.f32 %v3928, %v3968
    %v3970 = vpop.f32.mrb[0].mxu0
    %v3971 = vpop.f32.mrb[0].mxu0
    %3972 = vdwg.mxu0
    %3973 = vmatprep.subr.bf16.mxu0 %v3466
    %3974 = vmatpush1.bf16.msra.mxu0 %v3465
    %3975 = vmatprep.subr.bf16.mxu0 %v3470
    %3976 = vmatpush1.bf16.msra.mxu0 %v3469
    %3977 = vmatprep.subr.bf16.mxu0 %v3474
    %3978 = vmatpush1.bf16.msra.mxu0 %v3473
    %3979 = vmatprep.subr.bf16.mxu0 %v3478
    %3980 = vmatpush1.bf16.msra.mxu0 %v3477
    %3981 = vmatprep.subr.bf16.mxu0 %v3482
    %3982 = vmatpush1.bf16.msra.mxu0 %v3481
    %3983 = vmatprep.subr.bf16.mxu0 %v3486
    %3984 = vmatpush1.bf16.msra.mxu0 %v3485
    %3985 = vmatprep.subr.bf16.mxu0 %v3490
    %3986 = vmatpush1.bf16.msra.mxu0 %v3489
    %3987 = vmatprep.subr.bf16.mxu0 %v3494
    %3988 = vmatpush1.bf16.msra.mxu0 %v3493
    %3989 = vmatprep.subr.bf16.mxu0 %v3498
    %3990 = vmatpush1.bf16.msra.mxu0 %v3497
    %3991 = vmatprep.subr.bf16.mxu0 %v3502
    %3992 = vmatpush1.bf16.msra.mxu0 %v3501
    %3993 = vmatprep.subr.bf16.mxu0 %v3506
    %3994 = vmatpush1.bf16.msra.mxu0 %v3505
    %3995 = vmatprep.subr.bf16.mxu0 %v3510
    %3996 = vmatpush1.bf16.msra.mxu0 %v3509
    %3997 = vmatprep.subr.bf16.mxu0 %v3514
    %3998 = vmatpush1.bf16.msra.mxu0 %v3513
    %3999 = vmatprep.subr.bf16.mxu0 %v3518
    %4000 = vmatpush1.bf16.msra.mxu0 %v3517
    %4001 = vmatprep.subr.bf16.mxu0 %v3522
    %4002 = vmatpush1.bf16.msra.mxu0 %v3521
    %4003 = vmatprep.subr.bf16.mxu0 %v3526
    %4004 = vmatpush1.bf16.msra.mxu0 %v3525
    %4005 = vmatprep.mubr.bf16.mxu0 %v332
    %4006 = vmatmul.mubr.bf16.gmra.mrb[0].mxu0 %v331
    %v4007 = vpop.f32.mrb[0].mxu0
    %v4008 = vadd.f32 %v3967, %v4007
    %v4009 = vpop.f32.mrb[0].mxu0
    %v4010 = vadd.f32 %v3969, %v4009
    %v4011 = vpop.f32.mrb[0].mxu0
    %v4012 = vpop.f32.mrb[0].mxu0
    %4013 = vdwg.mxu0
    %4014 = vmatprep.subr.bf16.mxu0 %v3530
    %4015 = vmatpush1.bf16.msra.mxu0 %v3529
    %4016 = vmatprep.subr.bf16.mxu0 0
    %4017 = vmatpush1.bf16.msra.mxu0 0
    %4018 = vmatprep.subr.bf16.mxu0 0
    %4019 = vmatpush1.bf16.msra.mxu0 0
    %4020 = vmatprep.subr.bf16.mxu0 0
    %4021 = vmatpush1.bf16.msra.mxu0 0
    %4022 = vmatprep.subr.bf16.mxu0 0
    %4023 = vmatpush1.bf16.msra.mxu0 0
    %4024 = vmatprep.subr.bf16.mxu0 0
    %4025 = vmatpush1.bf16.msra.mxu0 0
    %4026 = vmatprep.subr.bf16.mxu0 0
    %4027 = vmatpush1.bf16.msra.mxu0 0
    %4028 = vmatprep.subr.bf16.mxu0 0
    %4029 = vmatpush1.bf16.msra.mxu0 0
    %4030 = vmatprep.subr.bf16.mxu0 0
    %4031 = vmatpush1.bf16.msra.mxu0 0
    %4032 = vmatprep.subr.bf16.mxu0 0
    %4033 = vmatpush1.bf16.msra.mxu0 0
    %4034 = vmatprep.subr.bf16.mxu0 0
    %4035 = vmatpush1.bf16.msra.mxu0 0
    %4036 = vmatprep.subr.bf16.mxu0 0
    %4037 = vmatpush1.bf16.msra.mxu0 0
    %4038 = vmatprep.subr.bf16.mxu0 0
    %4039 = vmatpush1.bf16.msra.mxu0 0
    %4040 = vmatprep.subr.bf16.mxu0 0
    %4041 = vmatpush1.bf16.msra.mxu0 0
    %4042 = vmatprep.subr.bf16.mxu0 0
    %4043 = vmatpush1.bf16.msra.mxu0 0
    %4044 = vmatprep.subr.bf16.mxu0 0
    %4045 = vmatpush1.bf16.msra.mxu0 0
    %4046 = vmatprep.mubr.bf16.mxu0 0
    %4047 = vmatmul.mubr.bf16.gmra.mrb[0].mxu0 %v1534
    %v4048 = vpop.f32.mrb[0].mxu0
    %v4049 = vadd.f32 %v4008, %v4048
    %v4050 = vpop.f32.mrb[0].mxu0
    %v4051 = vadd.f32 %v4010, %v4050
    %v4052 = vpop.f32.mrb[0].mxu0
    %v4053 = vpop.f32.mrb[0].mxu0
    %4054 = vdwg.mxu0
    %v4055 = vmax.f32 %v3885, 0.0
    %v4056 = vmax.f32 %v3887, 0.0
    %v4057 = vmax.f32 %v4049, 0.0
    %v4058 = vmax.f32 %v4051, 0.0
    %v4059 = vpack.c.bf16 %v4055, %v4055
    %v4060 = vpack.c.bf16 %v4056, %v4056
    %v4061 = vpack.c.bf16 %v4057, %v4057
    %v4062 = vpack.c.bf16 %v4058, %v4058
    %v4063 = vld [vmem:[#allocation19] sm:$0xff]
    %v4064 = vld [vmem:[#allocation19 + $0x8] sm:$0xff]
    %v4065 = vld [vmem:[#allocation19 + $0x10] sm:$0xff]
    %v4066 = vld [vmem:[#allocation19 + $0x18] sm:$0xff]
    %v4067 = vld [vmem:[#allocation19 + $0x20] sm:$0xff]
    %v4068 = vld [vmem:[#allocation19 + $0x28] sm:$0xff]
    %v4069 = vld [vmem:[#allocation19 + $0x30] sm:$0xff]
    %v4070 = vld [vmem:[#allocation19 + $0x38] sm:$0xff]
    %v4071 = vld [vmem:[#allocation19 + $0x40] sm:$0xff]
    %v4072 = vld [vmem:[#allocation19 + $0x48] sm:$0xff]
    %v4073 = vld [vmem:[#allocation19 + $0x50] sm:$0xff]
    %v4074 = vld [vmem:[#allocation19 + $0x58] sm:$0xff]
    %v4075 = vld [vmem:[#allocation19 + $0x60] sm:$0xff]
    %v4076 = vld [vmem:[#allocation19 + $0x68] sm:$0xff]
    %v4077 = vld [vmem:[#allocation19 + $0x70] sm:$0xff]
    %v4078 = vld [vmem:[#allocation19 + $0x78] sm:$0xff]
    %v4079 = vld [vmem:[#allocation19 + $0x80] sm:$0xff]
    %v4080 = vld [vmem:[#allocation19 + $0x88] sm:$0xff]
    %v4081 = vld [vmem:[#allocation19 + $0x90] sm:$0xff]
    %v4082 = vld [vmem:[#allocation19 + $0x98] sm:$0xff]
    %v4083 = vld [vmem:[#allocation19 + $0xa0] sm:$0xff]
    %v4084 = vld [vmem:[#allocation19 + $0xa8] sm:$0xff]
    %v4085 = vld [vmem:[#allocation19 + $0xb0] sm:$0xff]
    %v4086 = vld [vmem:[#allocation19 + $0xb8] sm:$0xff]
    %v4087 = vld [vmem:[#allocation19 + $0xc0] sm:$0xff]
    %v4088 = vld [vmem:[#allocation19 + $0xc8] sm:$0xff]
    %v4089 = vld [vmem:[#allocation19 + $0xd0] sm:$0xff]
    %v4090 = vld [vmem:[#allocation19 + $0xd8] sm:$0xff]
    %v4091 = vld [vmem:[#allocation19 + $0xe0] sm:$0xff]
    %v4092 = vld [vmem:[#allocation19 + $0xe8] sm:$0xff]
    %v4093 = vld [vmem:[#allocation19 + $0xf0] sm:$0xff]
    %v4094 = vld [vmem:[#allocation19 + $0xf8] sm:$0xff]
    %v4095 = vld [vmem:[#allocation19 + $0x100] sm:$0xff]
    %v4096 = vld [vmem:[#allocation19 + $0x108] sm:$0xff]
    %v4097 = vld [vmem:[#allocation19 + $0x110] sm:$0xff]
    %v4098 = vld [vmem:[#allocation19 + $0x118] sm:$0xff]
    %v4099 = vld [vmem:[#allocation19 + $0x120] sm:$0xff]
    %v4100 = vld [vmem:[#allocation19 + $0x128] sm:$0xff]
    %v4101 = vld [vmem:[#allocation19 + $0x130] sm:$0xff]
    %v4102 = vld [vmem:[#allocation19 + $0x138] sm:$0xff]
    %v4103 = vld [vmem:[#allocation19 + $0x140] sm:$0xff]
    %v4104 = vld [vmem:[#allocation19 + $0x148] sm:$0xff]
    %v4105 = vld [vmem:[#allocation19 + $0x150] sm:$0xff]
    %v4106 = vld [vmem:[#allocation19 + $0x158] sm:$0xff]
    %v4107 = vld [vmem:[#allocation19 + $0x160] sm:$0xff]
    %v4108 = vld [vmem:[#allocation19 + $0x168] sm:$0xff]
    %v4109 = vld [vmem:[#allocation19 + $0x170] sm:$0xff]
    %v4110 = vld [vmem:[#allocation19 + $0x178] sm:$0xff]
    %v4111 = vld [vmem:[#allocation19 + $0x180] sm:$0xff]
    %v4112 = vld [vmem:[#allocation19 + $0x188] sm:$0xff]
    %v4113 = vld [vmem:[#allocation19 + $0x190] sm:$0xff]
    %v4114 = vld [vmem:[#allocation19 + $0x198] sm:$0xff]
    %v4115 = vld [vmem:[#allocation19 + $0x1a0] sm:$0xff]
    %v4116 = vld [vmem:[#allocation19 + $0x1a8] sm:$0xff]
    %v4117 = vld [vmem:[#allocation19 + $0x1b0] sm:$0xff]
    %v4118 = vld [vmem:[#allocation19 + $0x1b8] sm:$0xff]
    %v4119 = vld [vmem:[#allocation19 + $0x1c0] sm:$0xff]
    %v4120 = vld [vmem:[#allocation19 + $0x1c8] sm:$0xff]
    %v4121 = vld [vmem:[#allocation19 + $0x1d0] sm:$0xff]
    %v4122 = vld [vmem:[#allocation19 + $0x1d8] sm:$0xff]
    %v4123 = vld [vmem:[#allocation19 + $0x1e0] sm:$0xff]
    %v4124 = vld [vmem:[#allocation19 + $0x1e8] sm:$0xff]
    %v4125 = vld [vmem:[#allocation19 + $0x1f0] sm:$0xff]
    %v4126 = vld [vmem:[#allocation19 + $0x1f8] sm:$0xff]
    %v4127 = vld [vmem:[#allocation20] sm:$0x3]
    %v4129 = vlaneseq
    %v4130 = vshrl.u32 %v4129, 7
    %v4131 = vsub.s32 0, %v4130
    %v4132 = vrot.slane %v4127, %v4131
    %v4133 = vlaneseq
    %v4134 = vshrl.u32 %v4133, 7
    %v4135 = vsub.s32 1, %v4134
    %v4136 = vrot.slane %v4127, %v4135
    %v4203 = vunpack.c.l.b16 %v4063
    %v4204 = vunpack.c.h.b16 %v4063
    %v4205 = vunpack.c.l.b16 %v4064
    %v4206 = vunpack.c.h.b16 %v4064
    %v4207 = vunpack.c.l.b16 %v4065
    %v4208 = vunpack.c.h.b16 %v4065
    %v4209 = vunpack.c.l.b16 %v4066
    %v4210 = vunpack.c.h.b16 %v4066
    %v4211 = vunpack.c.l.b16 %v4067
    %v4212 = vunpack.c.h.b16 %v4067
    %v4213 = vunpack.c.l.b16 %v4068
    %v4214 = vunpack.c.h.b16 %v4068
    %v4215 = vunpack.c.l.b16 %v4069
    %v4216 = vunpack.c.h.b16 %v4069
    %v4217 = vunpack.c.l.b16 %v4070
    %v4218 = vunpack.c.h.b16 %v4070
    %v4219 = vunpack.c.l.b16 %v4071
    %v4220 = vunpack.c.h.b16 %v4071
    %v4221 = vunpack.c.l.b16 %v4072
    %v4222 = vunpack.c.h.b16 %v4072
    %v4223 = vunpack.c.l.b16 %v4073
    %v4224 = vunpack.c.h.b16 %v4073
    %v4225 = vunpack.c.l.b16 %v4074
    %v4226 = vunpack.c.h.b16 %v4074
    %v4227 = vunpack.c.l.b16 %v4075
    %v4228 = vunpack.c.h.b16 %v4075
    %v4229 = vunpack.c.l.b16 %v4076
    %v4230 = vunpack.c.h.b16 %v4076
    %v4231 = vunpack.c.l.b16 %v4077
    %v4232 = vunpack.c.h.b16 %v4077
    %v4233 = vunpack.c.l.b16 %v4078
    %v4234 = vunpack.c.h.b16 %v4078
    %v4235 = vunpack.c.l.b16 %v4079
    %v4236 = vunpack.c.h.b16 %v4079
    %v4237 = vunpack.c.l.b16 %v4080
    %v4238 = vunpack.c.h.b16 %v4080
    %v4239 = vunpack.c.l.b16 %v4081
    %v4240 = vunpack.c.h.b16 %v4081
    %v4241 = vunpack.c.l.b16 %v4082
    %v4242 = vunpack.c.h.b16 %v4082
    %v4243 = vunpack.c.l.b16 %v4083
    %v4244 = vunpack.c.h.b16 %v4083
    %v4245 = vunpack.c.l.b16 %v4084
    %v4246 = vunpack.c.h.b16 %v4084
    %v4247 = vunpack.c.l.b16 %v4085
    %v4248 = vunpack.c.h.b16 %v4085
    %v4249 = vunpack.c.l.b16 %v4086
    %v4250 = vunpack.c.h.b16 %v4086
    %v4251 = vunpack.c.l.b16 %v4087
    %v4252 = vunpack.c.h.b16 %v4087
    %v4253 = vunpack.c.l.b16 %v4088
    %v4254 = vunpack.c.h.b16 %v4088
    %v4255 = vunpack.c.l.b16 %v4089
    %v4256 = vunpack.c.h.b16 %v4089
    %v4257 = vunpack.c.l.b16 %v4090
    %v4258 = vunpack.c.h.b16 %v4090
    %v4259 = vunpack.c.l.b16 %v4091
    %v4260 = vunpack.c.h.b16 %v4091
    %v4261 = vunpack.c.l.b16 %v4092
    %v4262 = vunpack.c.h.b16 %v4092
    %v4263 = vunpack.c.l.b16 %v4093
    %v4264 = vunpack.c.h.b16 %v4093
    %v4265 = vunpack.c.l.b16 %v4094
    %v4266 = vunpack.c.h.b16 %v4094
    %v4267 = vunpack.c.l.b16 %v4095
    %v4268 = vunpack.c.h.b16 %v4095
    %v4269 = vunpack.c.l.b16 %v4096
    %v4270 = vunpack.c.h.b16 %v4096
    %v4271 = vunpack.c.l.b16 %v4097
    %v4272 = vunpack.c.h.b16 %v4097
    %v4273 = vunpack.c.l.b16 %v4098
    %v4274 = vunpack.c.h.b16 %v4098
    %v4275 = vunpack.c.l.b16 %v4099
    %v4276 = vunpack.c.h.b16 %v4099
    %v4277 = vunpack.c.l.b16 %v4100
    %v4278 = vunpack.c.h.b16 %v4100
    %v4279 = vunpack.c.l.b16 %v4101
    %v4280 = vunpack.c.h.b16 %v4101
    %v4281 = vunpack.c.l.b16 %v4102
    %v4282 = vunpack.c.h.b16 %v4102
    %v4283 = vunpack.c.l.b16 %v4103
    %v4284 = vunpack.c.h.b16 %v4103
    %v4285 = vunpack.c.l.b16 %v4104
    %v4286 = vunpack.c.h.b16 %v4104
    %v4287 = vunpack.c.l.b16 %v4105
    %v4288 = vunpack.c.h.b16 %v4105
    %v4289 = vunpack.c.l.b16 %v4106
    %v4290 = vunpack.c.h.b16 %v4106
    %v4291 = vunpack.c.l.b16 %v4107
    %v4292 = vunpack.c.h.b16 %v4107
    %v4293 = vunpack.c.l.b16 %v4108
    %v4294 = vunpack.c.h.b16 %v4108
    %v4295 = vunpack.c.l.b16 %v4109
    %v4296 = vunpack.c.h.b16 %v4109
    %v4297 = vunpack.c.l.b16 %v4110
    %v4298 = vunpack.c.h.b16 %v4110
    %v4299 = vunpack.c.l.b16 %v4111
    %v4300 = vunpack.c.h.b16 %v4111
    %v4301 = vunpack.c.l.b16 %v4112
    %v4302 = vunpack.c.h.b16 %v4112
    %v4303 = vunpack.c.l.b16 %v4113
    %v4304 = vunpack.c.h.b16 %v4113
    %v4305 = vunpack.c.l.b16 %v4114
    %v4306 = vunpack.c.h.b16 %v4114
    %v4307 = vunpack.c.l.b16 %v4115
    %v4308 = vunpack.c.h.b16 %v4115
    %v4309 = vunpack.c.l.b16 %v4116
    %v4310 = vunpack.c.h.b16 %v4116
    %v4311 = vunpack.c.l.b16 %v4117
    %v4312 = vunpack.c.h.b16 %v4117
    %v4313 = vunpack.c.l.b16 %v4118
    %v4314 = vunpack.c.h.b16 %v4118
    %v4315 = vunpack.c.l.b16 %v4119
    %v4316 = vunpack.c.h.b16 %v4119
    %v4317 = vunpack.c.l.b16 %v4120
    %v4318 = vunpack.c.h.b16 %v4120
    %v4319 = vunpack.c.l.b16 %v4121
    %v4320 = vunpack.c.h.b16 %v4121
    %v4321 = vunpack.c.l.b16 %v4122
    %v4322 = vunpack.c.h.b16 %v4122
    %v4323 = vunpack.c.l.b16 %v4123
    %v4324 = vunpack.c.h.b16 %v4123
    %v4325 = vunpack.c.l.b16 %v4124
    %v4326 = vunpack.c.h.b16 %v4124
    %v4327 = vunpack.c.l.b16 %v4125
    %v4328 = vunpack.c.h.b16 %v4125
    %v4329 = vunpack.c.l.b16 %v4126
    %v4330 = vunpack.c.h.b16 %v4126
    %v4331 = vpack.c.b16 %v4205, %v4203
    %v4332 = vpack.c.b16 %v4206, %v4204
    %v4333 = vpack.c.b16 %v4209, %v4207
    %v4334 = vpack.c.b16 %v4210, %v4208
    %v4335 = vpack.c.b16 %v4213, %v4211
    %v4336 = vpack.c.b16 %v4214, %v4212
    %v4337 = vpack.c.b16 %v4217, %v4215
    %v4338 = vpack.c.b16 %v4218, %v4216
    %v4339 = vpack.c.b16 %v4221, %v4219
    %v4340 = vpack.c.b16 %v4222, %v4220
    %v4341 = vpack.c.b16 %v4225, %v4223
    %v4342 = vpack.c.b16 %v4226, %v4224
    %v4343 = vpack.c.b16 %v4229, %v4227
    %v4344 = vpack.c.b16 %v4230, %v4228
    %v4345 = vpack.c.b16 %v4233, %v4231
    %v4346 = vpack.c.b16 %v4234, %v4232
    %v4347 = vpack.c.b16 %v4237, %v4235
    %v4348 = vpack.c.b16 %v4238, %v4236
    %v4349 = vpack.c.b16 %v4241, %v4239
    %v4350 = vpack.c.b16 %v4242, %v4240
    %v4351 = vpack.c.b16 %v4245, %v4243
    %v4352 = vpack.c.b16 %v4246, %v4244
    %v4353 = vpack.c.b16 %v4249, %v4247
    %v4354 = vpack.c.b16 %v4250, %v4248
    %v4355 = vpack.c.b16 %v4253, %v4251
    %v4356 = vpack.c.b16 %v4254, %v4252
    %v4357 = vpack.c.b16 %v4257, %v4255
    %v4358 = vpack.c.b16 %v4258, %v4256
    %v4359 = vpack.c.b16 %v4261, %v4259
    %v4360 = vpack.c.b16 %v4262, %v4260
    %v4361 = vpack.c.b16 %v4265, %v4263
    %v4362 = vpack.c.b16 %v4266, %v4264
    %v4363 = vpack.c.b16 %v4269, %v4267
    %v4364 = vpack.c.b16 %v4270, %v4268
    %v4365 = vpack.c.b16 %v4273, %v4271
    %v4366 = vpack.c.b16 %v4274, %v4272
    %v4367 = vpack.c.b16 %v4277, %v4275
    %v4368 = vpack.c.b16 %v4278, %v4276
    %v4369 = vpack.c.b16 %v4281, %v4279
    %v4370 = vpack.c.b16 %v4282, %v4280
    %v4371 = vpack.c.b16 %v4285, %v4283
    %v4372 = vpack.c.b16 %v4286, %v4284
    %v4373 = vpack.c.b16 %v4289, %v4287
    %v4374 = vpack.c.b16 %v4290, %v4288
    %v4375 = vpack.c.b16 %v4293, %v4291
    %v4376 = vpack.c.b16 %v4294, %v4292
    %v4377 = vpack.c.b16 %v4297, %v4295
    %v4378 = vpack.c.b16 %v4298, %v4296
    %v4379 = vpack.c.b16 %v4301, %v4299
    %v4380 = vpack.c.b16 %v4302, %v4300
    %v4381 = vpack.c.b16 %v4305, %v4303
    %v4382 = vpack.c.b16 %v4306, %v4304
    %v4383 = vpack.c.b16 %v4309, %v4307
    %v4384 = vpack.c.b16 %v4310, %v4308
    %v4385 = vpack.c.b16 %v4313, %v4311
    %v4386 = vpack.c.b16 %v4314, %v4312
    %v4387 = vpack.c.b16 %v4317, %v4315
    %v4388 = vpack.c.b16 %v4318, %v4316
    %v4389 = vpack.c.b16 %v4321, %v4319
    %v4390 = vpack.c.b16 %v4322, %v4320
    %v4391 = vpack.c.b16 %v4325, %v4323
    %v4392 = vpack.c.b16 %v4326, %v4324
    %v4393 = vpack.c.b16 %v4329, %v4327
    %v4394 = vpack.c.b16 %v4330, %v4328
    %4459 = vmatprep.subr.bf16.mxu0 %v4332
    %4460 = vmatpush1.bf16.msra.mxu0 %v4331
    %4461 = vmatprep.subr.bf16.mxu0 %v4334
    %4462 = vmatpush1.bf16.msra.mxu0 %v4333
    %4463 = vmatprep.subr.bf16.mxu0 %v4336
    %4464 = vmatpush1.bf16.msra.mxu0 %v4335
    %4465 = vmatprep.subr.bf16.mxu0 %v4338
    %4466 = vmatpush1.bf16.msra.mxu0 %v4337
    %4467 = vmatprep.subr.bf16.mxu0 %v4340
    %4468 = vmatpush1.bf16.msra.mxu0 %v4339
    %4469 = vmatprep.subr.bf16.mxu0 %v4342
    %4470 = vmatpush1.bf16.msra.mxu0 %v4341
    %4471 = vmatprep.subr.bf16.mxu0 %v4344
    %4472 = vmatpush1.bf16.msra.mxu0 %v4343
    %4473 = vmatprep.subr.bf16.mxu0 %v4346
    %4474 = vmatpush1.bf16.msra.mxu0 %v4345
    %4475 = vmatprep.subr.bf16.mxu0 %v4348
    %4476 = vmatpush1.bf16.msra.mxu0 %v4347
    %4477 = vmatprep.subr.bf16.mxu0 %v4350
    %4478 = vmatpush1.bf16.msra.mxu0 %v4349
    %4479 = vmatprep.subr.bf16.mxu0 %v4352
    %4480 = vmatpush1.bf16.msra.mxu0 %v4351
    %4481 = vmatprep.subr.bf16.mxu0 %v4354
    %4482 = vmatpush1.bf16.msra.mxu0 %v4353
    %4483 = vmatprep.subr.bf16.mxu0 %v4356
    %4484 = vmatpush1.bf16.msra.mxu0 %v4355
    %4485 = vmatprep.subr.bf16.mxu0 %v4358
    %4486 = vmatpush1.bf16.msra.mxu0 %v4357
    %4487 = vmatprep.subr.bf16.mxu0 %v4360
    %4488 = vmatpush1.bf16.msra.mxu0 %v4359
    %4489 = vmatprep.subr.bf16.mxu0 %v4362
    %4490 = vmatpush1.bf16.msra.mxu0 %v4361
    %4491 = vmatprep.mubr.bf16.mxu0 %v4060
    %4492 = vmatmul.mubr.bf16.gmra.mrb[0].mxu0 %v4059
    %v4493 = vpop.f32.mrb[0].mxu0
    %v4494 = vadd.f32 %v4132, %v4493
    %v4495 = vpop.f32.mrb[0].mxu0
    %v4496 = vadd.f32 %v4136, %v4495
    %v4497 = vpop.f32.mrb[0].mxu0
    %v4498 = vpop.f32.mrb[0].mxu0
    %4499 = vdwg.mxu0
    %4500 = vmatprep.subr.bf16.mxu0 %v4364
    %4501 = vmatpush1.bf16.msra.mxu0 %v4363
    %4502 = vmatprep.subr.bf16.mxu0 %v4366
    %4503 = vmatpush1.bf16.msra.mxu0 %v4365
    %4504 = vmatprep.subr.bf16.mxu0 %v4368
    %4505 = vmatpush1.bf16.msra.mxu0 %v4367
    %4506 = vmatprep.subr.bf16.mxu0 %v4370
    %4507 = vmatpush1.bf16.msra.mxu0 %v4369
    %4508 = vmatprep.subr.bf16.mxu0 %v4372
    %4509 = vmatpush1.bf16.msra.mxu0 %v4371
    %4510 = vmatprep.subr.bf16.mxu0 %v4374
    %4511 = vmatpush1.bf16.msra.mxu0 %v4373
    %4512 = vmatprep.subr.bf16.mxu0 %v4376
    %4513 = vmatpush1.bf16.msra.mxu0 %v4375
    %4514 = vmatprep.subr.bf16.mxu0 %v4378
    %4515 = vmatpush1.bf16.msra.mxu0 %v4377
    %4516 = vmatprep.subr.bf16.mxu0 %v4380
    %4517 = vmatpush1.bf16.msra.mxu0 %v4379
    %4518 = vmatprep.subr.bf16.mxu0 %v4382
    %4519 = vmatpush1.bf16.msra.mxu0 %v4381
    %4520 = vmatprep.subr.bf16.mxu0 %v4384
    %4521 = vmatpush1.bf16.msra.mxu0 %v4383
    %4522 = vmatprep.subr.bf16.mxu0 %v4386
    %4523 = vmatpush1.bf16.msra.mxu0 %v4385
    %4524 = vmatprep.subr.bf16.mxu0 %v4388
    %4525 = vmatpush1.bf16.msra.mxu0 %v4387
    %4526 = vmatprep.subr.bf16.mxu0 %v4390
    %4527 = vmatpush1.bf16.msra.mxu0 %v4389
    %4528 = vmatprep.subr.bf16.mxu0 %v4392
    %4529 = vmatpush1.bf16.msra.mxu0 %v4391
    %4530 = vmatprep.subr.bf16.mxu0 %v4394
    %4531 = vmatpush1.bf16.msra.mxu0 %v4393
    %4532 = vmatprep.mubr.bf16.mxu0 %v4062
    %4533 = vmatmul.mubr.bf16.gmra.mrb[0].mxu0 %v4061
    %v4534 = vpop.f32.mrb[0].mxu0
    %v4535 = vadd.f32 %v4494, %v4534
    %v4536 = vpop.f32.mrb[0].mxu0
    %v4537 = vadd.f32 %v4496, %v4536
    %v4538 = vpop.f32.mrb[0].mxu0
    %v4539 = vpop.f32.mrb[0].mxu0
    %4540 = vdwg.mxu0
    %v4541 = vmax.f32 %v4535, 0.0
    %v4542 = vmax.f32 %v4537, 0.0
    %v4543 = vpack.c.bf16 %v4541, %v4541
    %v4544 = vpack.c.bf16 %v4542, %v4542
    %v4545 = vld [vmem:[#allocation22] sm:$0xf]
    %v4546 = vld [vmem:[#allocation22 + $0x4] sm:$0xf]
    %v4547 = vld [vmem:[#allocation22 + $0x8] sm:$0xf]
    %v4548 = vld [vmem:[#allocation22 + $0xc] sm:$0xf]
    %v4549 = vld [vmem:[#allocation22 + $0x10] sm:$0xf]
    %v4550 = vld [vmem:[#allocation22 + $0x14] sm:$0xf]
    %v4551 = vld [vmem:[#allocation22 + $0x18] sm:$0xf]
    %v4552 = vld [vmem:[#allocation22 + $0x1c] sm:$0xf]
    %v4553 = vld [vmem:[#allocation22 + $0x20] sm:$0xf]
    %v4554 = vld [vmem:[#allocation22 + $0x24] sm:$0xf]
    %v4555 = vld [vmem:[#allocation22 + $0x28] sm:$0xf]
    %v4556 = vld [vmem:[#allocation22 + $0x2c] sm:$0xf]
    %v4557 = vld [vmem:[#allocation22 + $0x30] sm:$0xf]
    %v4558 = vld [vmem:[#allocation22 + $0x34] sm:$0xf]
    %v4559 = vld [vmem:[#allocation22 + $0x38] sm:$0xf]
    %v4560 = vld [vmem:[#allocation22 + $0x3c] sm:$0xf]
    %v4561 = vld [vmem:[#allocation22 + $0x40] sm:$0xf]
    %v4562 = vld [vmem:[#allocation22 + $0x44] sm:$0xf]
    %v4563 = vld [vmem:[#allocation22 + $0x48] sm:$0xf]
    %v4564 = vld [vmem:[#allocation22 + $0x4c] sm:$0xf]
    %v4565 = vld [vmem:[#allocation22 + $0x50] sm:$0xf]
    %v4566 = vld [vmem:[#allocation22 + $0x54] sm:$0xf]
    %v4567 = vld [vmem:[#allocation22 + $0x58] sm:$0xf]
    %v4568 = vld [vmem:[#allocation22 + $0x5c] sm:$0xf]
    %v4569 = vld [vmem:[#allocation22 + $0x60] sm:$0xf]
    %v4570 = vld [vmem:[#allocation22 + $0x64] sm:$0xf]
    %v4571 = vld [vmem:[#allocation22 + $0x68] sm:$0xf]
    %v4572 = vld [vmem:[#allocation22 + $0x6c] sm:$0xf]
    %v4573 = vld [vmem:[#allocation22 + $0x70] sm:$0xf]
    %v4574 = vld [vmem:[#allocation22 + $0x74] sm:$0xf]
    %v4575 = vld [vmem:[#allocation22 + $0x78] sm:$0xf]
    %v4576 = vld [vmem:[#allocation22 + $0x7c] sm:$0xf]
    %v4577 = vld [vmem:[#allocation23] sm:$0x1]
    %v4579 = vlaneseq
    %v4580 = vshrl.u32 %v4579, 7
    %v4581 = vsub.s32 0, %v4580
    %v4582 = vrot.slane %v4577, %v4581
    %v4616 = vunpack.c.l.b16 %v4545
    %v4617 = vunpack.c.l.b16 %v4546
    %v4618 = vunpack.c.l.b16 %v4547
    %v4619 = vunpack.c.l.b16 %v4548
    %v4620 = vunpack.c.l.b16 %v4549
    %v4621 = vunpack.c.l.b16 %v4550
    %v4622 = vunpack.c.l.b16 %v4551
    %v4623 = vunpack.c.l.b16 %v4552
    %v4624 = vunpack.c.l.b16 %v4553
    %v4625 = vunpack.c.l.b16 %v4554
    %v4626 = vunpack.c.l.b16 %v4555
    %v4627 = vunpack.c.l.b16 %v4556
    %v4628 = vunpack.c.l.b16 %v4557
    %v4629 = vunpack.c.l.b16 %v4558
    %v4630 = vunpack.c.l.b16 %v4559
    %v4631 = vunpack.c.l.b16 %v4560
    %v4632 = vunpack.c.l.b16 %v4561
    %v4633 = vunpack.c.l.b16 %v4562
    %v4634 = vunpack.c.l.b16 %v4563
    %v4635 = vunpack.c.l.b16 %v4564
    %v4636 = vunpack.c.l.b16 %v4565
    %v4637 = vunpack.c.l.b16 %v4566
    %v4638 = vunpack.c.l.b16 %v4567
    %v4639 = vunpack.c.l.b16 %v4568
    %v4640 = vunpack.c.l.b16 %v4569
    %v4641 = vunpack.c.l.b16 %v4570
    %v4642 = vunpack.c.l.b16 %v4571
    %v4643 = vunpack.c.l.b16 %v4572
    %v4644 = vunpack.c.l.b16 %v4573
    %v4645 = vunpack.c.l.b16 %v4574
    %v4646 = vunpack.c.l.b16 %v4575
    %v4647 = vunpack.c.l.b16 %v4576
    %v4648 = vpack.c.b16 %v4617, %v4616
    %v4649 = vpack.c.b16 %v4619, %v4618
    %v4650 = vpack.c.b16 %v4621, %v4620
    %v4651 = vpack.c.b16 %v4623, %v4622
    %v4652 = vpack.c.b16 %v4625, %v4624
    %v4653 = vpack.c.b16 %v4627, %v4626
    %v4654 = vpack.c.b16 %v4629, %v4628
    %v4655 = vpack.c.b16 %v4631, %v4630
    %v4656 = vpack.c.b16 %v4633, %v4632
    %v4657 = vpack.c.b16 %v4635, %v4634
    %v4658 = vpack.c.b16 %v4637, %v4636
    %v4659 = vpack.c.b16 %v4639, %v4638
    %v4660 = vpack.c.b16 %v4641, %v4640
    %v4661 = vpack.c.b16 %v4643, %v4642
    %v4662 = vpack.c.b16 %v4645, %v4644
    %v4663 = vpack.c.b16 %v4647, %v4646
    %4680 = vmatprep.subr.bf16.mxu0 0
    %4681 = vmatpush1.bf16.msra.mxu0 %v4648
    %4682 = vmatprep.subr.bf16.mxu0 0
    %4683 = vmatpush1.bf16.msra.mxu0 %v4649
    %4684 = vmatprep.subr.bf16.mxu0 0
    %4685 = vmatpush1.bf16.msra.mxu0 %v4650
    %4686 = vmatprep.subr.bf16.mxu0 0
    %4687 = vmatpush1.bf16.msra.mxu0 %v4651
    %4688 = vmatprep.subr.bf16.mxu0 0
    %4689 = vmatpush1.bf16.msra.mxu0 %v4652
    %4690 = vmatprep.subr.bf16.mxu0 0
    %4691 = vmatpush1.bf16.msra.mxu0 %v4653
    %4692 = vmatprep.subr.bf16.mxu0 0
    %4693 = vmatpush1.bf16.msra.mxu0 %v4654
    %4694 = vmatprep.subr.bf16.mxu0 0
    %4695 = vmatpush1.bf16.msra.mxu0 %v4655
    %4696 = vmatprep.subr.bf16.mxu0 0
    %4697 = vmatpush1.bf16.msra.mxu0 %v4656
    %4698 = vmatprep.subr.bf16.mxu0 0
    %4699 = vmatpush1.bf16.msra.mxu0 %v4657
    %4700 = vmatprep.subr.bf16.mxu0 0
    %4701 = vmatpush1.bf16.msra.mxu0 %v4658
    %4702 = vmatprep.subr.bf16.mxu0 0
    %4703 = vmatpush1.bf16.msra.mxu0 %v4659
    %4704 = vmatprep.subr.bf16.mxu0 0
    %4705 = vmatpush1.bf16.msra.mxu0 %v4660
    %4706 = vmatprep.subr.bf16.mxu0 0
    %4707 = vmatpush1.bf16.msra.mxu0 %v4661
    %4708 = vmatprep.subr.bf16.mxu0 0
    %4709 = vmatpush1.bf16.msra.mxu0 %v4662
    %4710 = vmatprep.subr.bf16.mxu0 0
    %4711 = vmatpush1.bf16.msra.mxu0 %v4663
    %4712 = vmatprep.mubr.bf16.mxu0 %v4544
    %4713 = vmatmul.mubr.bf16.gmra.mrb[0].mxu0 %v4543
    %v4714 = vpop.f32.mrb[0].mxu0
    %v4715 = vadd.f32 %v4582, %v4714
    %v4716 = vpop.f32.mrb[0].mxu0
    %v4717 = vpop.f32.mrb[0].mxu0
    %v4718 = vpop.f32.mrb[0].mxu0
    %4719 = vdwg.mxu0
    %v4720 = vmax.f32 %v4715, 0.0
    %vm4721 = vcmp.ne.f32.partialorder %v4715, %v4715
    %v4722 = vadd.f32 %v4715, 0.0
    %v4723 = vand.u32 2147483647, %v4715
    %v4724 = vsub.f32 0.0, %v4723
    %v4725 = vmul.f32 %v4724, 1.442695
    %v4726 = vpow.pop %v4725
    %v4727 = vadd.f32 %v4726, 1.0
    %v4728 = vlog2.pop %v4727
    %v4729 = vmul.f32 %v4728, 0.6931472
    %v4730 = vmul.f32 -0.5, %v4726
    %v4731 = vadd.f32 %v4730, 1.0
    %v4732 = vmul.f32 %v4731, %v4726
    %v4733 = vand.u32 2147483647, %v4726
    %vm4734 = vcmp.lt.f32.partialorder %v4733, 0.0004427343
    %v4735 = vsel %vm4734, %v4732, %v4729
    %v4736 = vadd.f32 %v4720, %v4735
    %v4737 = vsel %vm4721, %v4722, %v4736
    %v4738 = vld [vmem:[#allocation5] sm:$0xff]
    %v4739 = vrsqrt.pop %v4737
    %v4740 = vmul.f32 %v4737, %v4739
    %vm4741 = vcmp.eq.f32.partialorder %v4737, inf
    %v4742 = vsel %vm4741, %v4737, %v4740
    %vm4743 = vcmp.eq.f32.partialorder %v4737, 0.0
    %v4744 = vand.u32 %v4737, 2147483648
    %v4745 = vsel %vm4743, %v4744, %v4742
    %v4746 = vmul.f32 %v4738, %v4745
    %v4747 = vadd.f32 %v2524, %v4746
    %v4748 = vpack.c.bf16 %v4747, %v4747
    %v4749 = vld [vmem:[#allocation25] sm:$0xff]
    %v4750 = vld [vmem:[#allocation25 + $0x8] sm:$0xff]
    %v4751 = vld [vmem:[#allocation25 + $0x10] sm:$0xff]
    %v4752 = vld [vmem:[#allocation25 + $0x18] sm:$0xff]
    %v4753 = vld [vmem:[#allocation25 + $0x20] sm:$0xff]
    %v4754 = vld [vmem:[#allocation25 + $0x28] sm:$0xff]
    %v4755 = vld [vmem:[#allocation25 + $0x30] sm:$0xff]
    %v4756 = vld [vmem:[#allocation25 + $0x38] sm:$0xff]
    %v4757 = vld [vmem:[#allocation25 + $0x40] sm:$0xff]
    %v4758 = vld [vmem:[#allocation25 + $0x48] sm:$0xff]
    %v4759 = vld [vmem:[#allocation25 + $0x50] sm:$0xff]
    %v4760 = vld [vmem:[#allocation25 + $0x58] sm:$0xff]
    %v4761 = vld [vmem:[#allocation25 + $0x60] sm:$0xff]
    %v4762 = vld [vmem:[#allocation25 + $0x68] sm:$0xff]
    %v4763 = vld [vmem:[#allocation25 + $0x70] sm:$0xff]
    %v4764 = vld [vmem:[#allocation25 + $0x78] sm:$0xff]
    %v4765 = vld [vmem:[#allocation26] sm:$0x3]
    %v4767 = vlaneseq
    %v4768 = vshrl.u32 %v4767, 7
    %v4769 = vsub.s32 0, %v4768
    %v4770 = vrot.slane %v4765, %v4769
    %v4771 = vlaneseq
    %v4772 = vshrl.u32 %v4771, 7
    %v4773 = vsub.s32 1, %v4772
    %v4774 = vrot.slane %v4765, %v4773
    %v4793 = vunpack.c.l.b16 %v4749
    %v4794 = vunpack.c.h.b16 %v4749
    %v4795 = vunpack.c.l.b16 %v4750
    %v4796 = vunpack.c.h.b16 %v4750
    %v4797 = vunpack.c.l.b16 %v4751
    %v4798 = vunpack.c.h.b16 %v4751
    %v4799 = vunpack.c.l.b16 %v4752
    %v4800 = vunpack.c.h.b16 %v4752
    %v4801 = vunpack.c.l.b16 %v4753
    %v4802 = vunpack.c.h.b16 %v4753
    %v4803 = vunpack.c.l.b16 %v4754
    %v4804 = vunpack.c.h.b16 %v4754
    %v4805 = vunpack.c.l.b16 %v4755
    %v4806 = vunpack.c.h.b16 %v4755
    %v4807 = vunpack.c.l.b16 %v4756
    %v4808 = vunpack.c.h.b16 %v4756
    %v4809 = vunpack.c.l.b16 %v4757
    %v4810 = vunpack.c.h.b16 %v4757
    %v4811 = vunpack.c.l.b16 %v4758
    %v4812 = vunpack.c.h.b16 %v4758
    %v4813 = vunpack.c.l.b16 %v4759
    %v4814 = vunpack.c.h.b16 %v4759
    %v4815 = vunpack.c.l.b16 %v4760
    %v4816 = vunpack.c.h.b16 %v4760
    %v4817 = vunpack.c.l.b16 %v4761
    %v4818 = vunpack.c.h.b16 %v4761
    %v4819 = vunpack.c.l.b16 %v4762
    %v4820 = vunpack.c.h.b16 %v4762
    %v4821 = vunpack.c.l.b16 %v4763
    %v4822 = vunpack.c.h.b16 %v4763
    %v4823 = vunpack.c.l.b16 %v4764
    %v4824 = vunpack.c.h.b16 %v4764
    %v4825 = vpack.c.b16 %v4795, %v4793
    %v4826 = vpack.c.b16 %v4796, %v4794
    %v4827 = vpack.c.b16 %v4799, %v4797
    %v4828 = vpack.c.b16 %v4800, %v4798
    %v4829 = vpack.c.b16 %v4803, %v4801
    %v4830 = vpack.c.b16 %v4804, %v4802
    %v4831 = vpack.c.b16 %v4807, %v4805
    %v4832 = vpack.c.b16 %v4808, %v4806
    %v4833 = vpack.c.b16 %v4811, %v4809
    %v4834 = vpack.c.b16 %v4812, %v4810
    %v4835 = vpack.c.b16 %v4815, %v4813
    %v4836 = vpack.c.b16 %v4816, %v4814
    %v4837 = vpack.c.b16 %v4819, %v4817
    %v4838 = vpack.c.b16 %v4820, %v4818
    %v4839 = vpack.c.b16 %v4823, %v4821
    %v4840 = vpack.c.b16 %v4824, %v4822
    %4857 = vmatprep.subr.bf16.mxu0 %v4826
    %4858 = vmatpush1.bf16.msra.mxu0 %v4825
    %4859 = vmatprep.subr.bf16.mxu0 %v4828
    %4860 = vmatpush1.bf16.msra.mxu0 %v4827
    %4861 = vmatprep.subr.bf16.mxu0 %v4830
    %4862 = vmatpush1.bf16.msra.mxu0 %v4829
    %4863 = vmatprep.subr.bf16.mxu0 %v4832
    %4864 = vmatpush1.bf16.msra.mxu0 %v4831
    %4865 = vmatprep.subr.bf16.mxu0 %v4834
    %4866 = vmatpush1.bf16.msra.mxu0 %v4833
    %4867 = vmatprep.subr.bf16.mxu0 %v4836
    %4868 = vmatpush1.bf16.msra.mxu0 %v4835
    %4869 = vmatprep.subr.bf16.mxu0 %v4838
    %4870 = vmatpush1.bf16.msra.mxu0 %v4837
    %4871 = vmatprep.subr.bf16.mxu0 %v4840
    %4872 = vmatpush1.bf16.msra.mxu0 %v4839
    %4873 = vmatprep.subr.bf16.mxu0 0
    %4874 = vmatpush1.bf16.msra.mxu0 0
    %4875 = vmatprep.subr.bf16.mxu0 0
    %4876 = vmatpush1.bf16.msra.mxu0 0
    %4877 = vmatprep.subr.bf16.mxu0 0
    %4878 = vmatpush1.bf16.msra.mxu0 0
    %4879 = vmatprep.subr.bf16.mxu0 0
    %4880 = vmatpush1.bf16.msra.mxu0 0
    %4881 = vmatprep.subr.bf16.mxu0 0
    %4882 = vmatpush1.bf16.msra.mxu0 0
    %4883 = vmatprep.subr.bf16.mxu0 0
    %4884 = vmatpush1.bf16.msra.mxu0 0
    %4885 = vmatprep.subr.bf16.mxu0 0
    %4886 = vmatpush1.bf16.msra.mxu0 0
    %4887 = vmatprep.subr.bf16.mxu0 0
    %4888 = vmatpush1.bf16.msra.mxu0 0
    %4889 = vmatprep.mubr.bf16.mxu0 0
    %4890 = vmatmul.mubr.bf16.gmra.mrb[0].mxu0 %v4748
    %v4891 = vpop.f32.mrb[0].mxu0
    %v4892 = vadd.f32 %v4770, %v4891
    %v4893 = vpop.f32.mrb[0].mxu0
    %v4894 = vadd.f32 %v4774, %v4893
    %v4895 = vpop.f32.mrb[0].mxu0
    %v4896 = vpop.f32.mrb[0].mxu0
    %4897 = vdwg.mxu0
    %v4898 = vmax.f32 %v4892, 0.0
    %v4899 = vmax.f32 %v4894, 0.0
    %v4900 = vpack.c.bf16 %v4898, %v4898
    %v4901 = vpack.c.bf16 %v4899, %v4899
    %v4902 = vld [vmem:[#allocation28] sm:$0xff]
    %v4903 = vld [vmem:[#allocation28 + $0x8] sm:$0xff]
    %v4904 = vld [vmem:[#allocation28 + $0x10] sm:$0xff]
    %v4905 = vld [vmem:[#allocation28 + $0x18] sm:$0xff]
    %v4906 = vld [vmem:[#allocation28 + $0x20] sm:$0xff]
    %v4907 = vld [vmem:[#allocation28 + $0x28] sm:$0xff]
    %v4908 = vld [vmem:[#allocation28 + $0x30] sm:$0xff]
    %v4909 = vld [vmem:[#allocation28 + $0x38] sm:$0xff]
    %v4910 = vld [vmem:[#allocation28 + $0x40] sm:$0xff]
    %v4911 = vld [vmem:[#allocation28 + $0x48] sm:$0xff]
    %v4912 = vld [vmem:[#allocation28 + $0x50] sm:$0xff]
    %v4913 = vld [vmem:[#allocation28 + $0x58] sm:$0xff]
    %v4914 = vld [vmem:[#allocation28 + $0x60] sm:$0xff]
    %v4915 = vld [vmem:[#allocation28 + $0x68] sm:$0xff]
    %v4916 = vld [vmem:[#allocation28 + $0x70] sm:$0xff]
    %v4917 = vld [vmem:[#allocation28 + $0x78] sm:$0xff]
    %v4918 = vld [vmem:[#allocation28 + $0x80] sm:$0xff]
    %v4919 = vld [vmem:[#allocation28 + $0x88] sm:$0xff]
    %v4920 = vld [vmem:[#allocation28 + $0x90] sm:$0xff]
    %v4921 = vld [vmem:[#allocation28 + $0x98] sm:$0xff]
    %v4922 = vld [vmem:[#allocation28 + $0xa0] sm:$0xff]
    %v4923 = vld [vmem:[#allocation28 + $0xa8] sm:$0xff]
    %v4924 = vld [vmem:[#allocation28 + $0xb0] sm:$0xff]
    %v4925 = vld [vmem:[#allocation28 + $0xb8] sm:$0xff]
    %v4926 = vld [vmem:[#allocation28 + $0xc0] sm:$0xff]
    %v4927 = vld [vmem:[#allocation28 + $0xc8] sm:$0xff]
    %v4928 = vld [vmem:[#allocation28 + $0xd0] sm:$0xff]
    %v4929 = vld [vmem:[#allocation28 + $0xd8] sm:$0xff]
    %v4930 = vld [vmem:[#allocation28 + $0xe0] sm:$0xff]
    %v4931 = vld [vmem:[#allocation28 + $0xe8] sm:$0xff]
    %v4932 = vld [vmem:[#allocation28 + $0xf0] sm:$0xff]
    %v4933 = vld [vmem:[#allocation28 + $0xf8] sm:$0xff]
    %v4934 = vld [vmem:[#allocation28 + $0x100] sm:$0xff]
    %v4935 = vld [vmem:[#allocation28 + $0x108] sm:$0xff]
    %v4936 = vld [vmem:[#allocation28 + $0x110] sm:$0xff]
    %v4937 = vld [vmem:[#allocation28 + $0x118] sm:$0xff]
    %v4938 = vld [vmem:[#allocation28 + $0x120] sm:$0xff]
    %v4939 = vld [vmem:[#allocation28 + $0x128] sm:$0xff]
    %v4940 = vld [vmem:[#allocation28 + $0x130] sm:$0xff]
    %v4941 = vld [vmem:[#allocation28 + $0x138] sm:$0xff]
    %v4942 = vld [vmem:[#allocation28 + $0x140] sm:$0xff]
    %v4943 = vld [vmem:[#allocation28 + $0x148] sm:$0xff]
    %v4944 = vld [vmem:[#allocation28 + $0x150] sm:$0xff]
    %v4945 = vld [vmem:[#allocation28 + $0x158] sm:$0xff]
    %v4946 = vld [vmem:[#allocation28 + $0x160] sm:$0xff]
    %v4947 = vld [vmem:[#allocation28 + $0x168] sm:$0xff]
    %v4948 = vld [vmem:[#allocation28 + $0x170] sm:$0xff]
    %v4949 = vld [vmem:[#allocation28 + $0x178] sm:$0xff]
    %v4950 = vld [vmem:[#allocation28 + $0x180] sm:$0xff]
    %v4951 = vld [vmem:[#allocation28 + $0x188] sm:$0xff]
    %v4952 = vld [vmem:[#allocation28 + $0x190] sm:$0xff]
    %v4953 = vld [vmem:[#allocation28 + $0x198] sm:$0xff]
    %v4954 = vld [vmem:[#allocation28 + $0x1a0] sm:$0xff]
    %v4955 = vld [vmem:[#allocation28 + $0x1a8] sm:$0xff]
    %v4956 = vld [vmem:[#allocation28 + $0x1b0] sm:$0xff]
    %v4957 = vld [vmem:[#allocation28 + $0x1b8] sm:$0xff]
    %v4958 = vld [vmem:[#allocation28 + $0x1c0] sm:$0xff]
    %v4959 = vld [vmem:[#allocation28 + $0x1c8] sm:$0xff]
    %v4960 = vld [vmem:[#allocation28 + $0x1d0] sm:$0xff]
    %v4961 = vld [vmem:[#allocation28 + $0x1d8] sm:$0xff]
    %v4962 = vld [vmem:[#allocation28 + $0x1e0] sm:$0xff]
    %v4963 = vld [vmem:[#allocation28 + $0x1e8] sm:$0xff]
    %v4964 = vld [vmem:[#allocation28 + $0x1f0] sm:$0xff]
    %v4965 = vld [vmem:[#allocation28 + $0x1f8] sm:$0xff]
    %v4966 = vld [vmem:[#allocation29] sm:$0xf]
    %v4968 = vlaneseq
    %v4969 = vshrl.u32 %v4968, 7
    %v4970 = vsub.s32 0, %v4969
    %v4971 = vrot.slane %v4966, %v4970
    %v4972 = vlaneseq
    %v4973 = vshrl.u32 %v4972, 7
    %v4974 = vsub.s32 1, %v4973
    %v4975 = vrot.slane %v4966, %v4974
    %v4976 = vlaneseq
    %v4977 = vshrl.u32 %v4976, 7
    %v4978 = vsub.s32 2, %v4977
    %v4979 = vrot.slane %v4966, %v4978
    %v4980 = vlaneseq
    %v4981 = vshrl.u32 %v4980, 7
    %v4982 = vsub.s32 3, %v4981
    %v4983 = vrot.slane %v4966, %v4982
    %v5052 = vunpack.c.l.b16 %v4902
    %v5053 = vunpack.c.h.b16 %v4902
    %v5054 = vunpack.c.l.b16 %v4903
    %v5055 = vunpack.c.h.b16 %v4903
    %v5056 = vunpack.c.l.b16 %v4904
    %v5057 = vunpack.c.h.b16 %v4904
    %v5058 = vunpack.c.l.b16 %v4905
    %v5059 = vunpack.c.h.b16 %v4905
    %v5060 = vunpack.c.l.b16 %v4906
    %v5061 = vunpack.c.h.b16 %v4906
    %v5062 = vunpack.c.l.b16 %v4907
    %v5063 = vunpack.c.h.b16 %v4907
    %v5064 = vunpack.c.l.b16 %v4908
    %v5065 = vunpack.c.h.b16 %v4908
    %v5066 = vunpack.c.l.b16 %v4909
    %v5067 = vunpack.c.h.b16 %v4909
    %v5068 = vunpack.c.l.b16 %v4910
    %v5069 = vunpack.c.h.b16 %v4910
    %v5070 = vunpack.c.l.b16 %v4911
    %v5071 = vunpack.c.h.b16 %v4911
    %v5072 = vunpack.c.l.b16 %v4912
    %v5073 = vunpack.c.h.b16 %v4912
    %v5074 = vunpack.c.l.b16 %v4913
    %v5075 = vunpack.c.h.b16 %v4913
    %v5076 = vunpack.c.l.b16 %v4914
    %v5077 = vunpack.c.h.b16 %v4914
    %v5078 = vunpack.c.l.b16 %v4915
    %v5079 = vunpack.c.h.b16 %v4915
    %v5080 = vunpack.c.l.b16 %v4916
    %v5081 = vunpack.c.h.b16 %v4916
    %v5082 = vunpack.c.l.b16 %v4917
    %v5083 = vunpack.c.h.b16 %v4917
    %v5084 = vunpack.c.l.b16 %v4918
    %v5085 = vunpack.c.h.b16 %v4918
    %v5086 = vunpack.c.l.b16 %v4919
    %v5087 = vunpack.c.h.b16 %v4919
    %v5088 = vunpack.c.l.b16 %v4920
    %v5089 = vunpack.c.h.b16 %v4920
    %v5090 = vunpack.c.l.b16 %v4921
    %v5091 = vunpack.c.h.b16 %v4921
    %v5092 = vunpack.c.l.b16 %v4922
    %v5093 = vunpack.c.h.b16 %v4922
    %v5094 = vunpack.c.l.b16 %v4923
    %v5095 = vunpack.c.h.b16 %v4923
    %v5096 = vunpack.c.l.b16 %v4924
    %v5097 = vunpack.c.h.b16 %v4924
    %v5098 = vunpack.c.l.b16 %v4925
    %v5099 = vunpack.c.h.b16 %v4925
    %v5100 = vunpack.c.l.b16 %v4926
    %v5101 = vunpack.c.h.b16 %v4926
    %v5102 = vunpack.c.l.b16 %v4927
    %v5103 = vunpack.c.h.b16 %v4927
    %v5104 = vunpack.c.l.b16 %v4928
    %v5105 = vunpack.c.h.b16 %v4928
    %v5106 = vunpack.c.l.b16 %v4929
    %v5107 = vunpack.c.h.b16 %v4929
    %v5108 = vunpack.c.l.b16 %v4930
    %v5109 = vunpack.c.h.b16 %v4930
    %v5110 = vunpack.c.l.b16 %v4931
    %v5111 = vunpack.c.h.b16 %v4931
    %v5112 = vunpack.c.l.b16 %v4932
    %v5113 = vunpack.c.h.b16 %v4932
    %v5114 = vunpack.c.l.b16 %v4933
    %v5115 = vunpack.c.h.b16 %v4933
    %v5116 = vunpack.c.l.b16 %v4934
    %v5117 = vunpack.c.h.b16 %v4934
    %v5118 = vunpack.c.l.b16 %v4935
    %v5119 = vunpack.c.h.b16 %v4935
    %v5120 = vunpack.c.l.b16 %v4936
    %v5121 = vunpack.c.h.b16 %v4936
    %v5122 = vunpack.c.l.b16 %v4937
    %v5123 = vunpack.c.h.b16 %v4937
    %v5124 = vunpack.c.l.b16 %v4938
    %v5125 = vunpack.c.h.b16 %v4938
    %v5126 = vunpack.c.l.b16 %v4939
    %v5127 = vunpack.c.h.b16 %v4939
    %v5128 = vunpack.c.l.b16 %v4940
    %v5129 = vunpack.c.h.b16 %v4940
    %v5130 = vunpack.c.l.b16 %v4941
    %v5131 = vunpack.c.h.b16 %v4941
    %v5132 = vunpack.c.l.b16 %v4942
    %v5133 = vunpack.c.h.b16 %v4942
    %v5134 = vunpack.c.l.b16 %v4943
    %v5135 = vunpack.c.h.b16 %v4943
    %v5136 = vunpack.c.l.b16 %v4944
    %v5137 = vunpack.c.h.b16 %v4944
    %v5138 = vunpack.c.l.b16 %v4945
    %v5139 = vunpack.c.h.b16 %v4945
    %v5140 = vunpack.c.l.b16 %v4946
    %v5141 = vunpack.c.h.b16 %v4946
    %v5142 = vunpack.c.l.b16 %v4947
    %v5143 = vunpack.c.h.b16 %v4947
    %v5144 = vunpack.c.l.b16 %v4948
    %v5145 = vunpack.c.h.b16 %v4948
    %v5146 = vunpack.c.l.b16 %v4949
    %v5147 = vunpack.c.h.b16 %v4949
    %v5148 = vunpack.c.l.b16 %v4950
    %v5149 = vunpack.c.h.b16 %v4950
    %v5150 = vunpack.c.l.b16 %v4951
    %v5151 = vunpack.c.h.b16 %v4951
    %v5152 = vunpack.c.l.b16 %v4952
    %v5153 = vunpack.c.h.b16 %v4952
    %v5154 = vunpack.c.l.b16 %v4953
    %v5155 = vunpack.c.h.b16 %v4953
    %v5156 = vunpack.c.l.b16 %v4954
    %v5157 = vunpack.c.h.b16 %v4954
    %v5158 = vunpack.c.l.b16 %v4955
    %v5159 = vunpack.c.h.b16 %v4955
    %v5160 = vunpack.c.l.b16 %v4956
    %v5161 = vunpack.c.h.b16 %v4956
    %v5162 = vunpack.c.l.b16 %v4957
    %v5163 = vunpack.c.h.b16 %v4957
    %v5164 = vunpack.c.l.b16 %v4958
    %v5165 = vunpack.c.h.b16 %v4958
    %v5166 = vunpack.c.l.b16 %v4959
    %v5167 = vunpack.c.h.b16 %v4959
    %v5168 = vunpack.c.l.b16 %v4960
    %v5169 = vunpack.c.h.b16 %v4960
    %v5170 = vunpack.c.l.b16 %v4961
    %v5171 = vunpack.c.h.b16 %v4961
    %v5172 = vunpack.c.l.b16 %v4962
    %v5173 = vunpack.c.h.b16 %v4962
    %v5174 = vunpack.c.l.b16 %v4963
    %v5175 = vunpack.c.h.b16 %v4963
    %v5176 = vunpack.c.l.b16 %v4964
    %v5177 = vunpack.c.h.b16 %v4964
    %v5178 = vunpack.c.l.b16 %v4965
    %v5179 = vunpack.c.h.b16 %v4965
    %v5180 = vpack.c.b16 %v5056, %v5052
    %v5181 = vpack.c.b16 %v5057, %v5053
    %v5182 = vpack.c.b16 %v5058, %v5054
    %v5183 = vpack.c.b16 %v5059, %v5055
    %v5184 = vpack.c.b16 %v5064, %v5060
    %v5185 = vpack.c.b16 %v5065, %v5061
    %v5186 = vpack.c.b16 %v5066, %v5062
    %v5187 = vpack.c.b16 %v5067, %v5063
    %v5188 = vpack.c.b16 %v5072, %v5068
    %v5189 = vpack.c.b16 %v5073, %v5069
    %v5190 = vpack.c.b16 %v5074, %v5070
    %v5191 = vpack.c.b16 %v5075, %v5071
    %v5192 = vpack.c.b16 %v5080, %v5076
    %v5193 = vpack.c.b16 %v5081, %v5077
    %v5194 = vpack.c.b16 %v5082, %v5078
    %v5195 = vpack.c.b16 %v5083, %v5079
    %v5196 = vpack.c.b16 %v5088, %v5084
    %v5197 = vpack.c.b16 %v5089, %v5085
    %v5198 = vpack.c.b16 %v5090, %v5086
    %v5199 = vpack.c.b16 %v5091, %v5087
    %v5200 = vpack.c.b16 %v5096, %v5092
    %v5201 = vpack.c.b16 %v5097, %v5093
    %v5202 = vpack.c.b16 %v5098, %v5094
    %v5203 = vpack.c.b16 %v5099, %v5095
    %v5204 = vpack.c.b16 %v5104, %v5100
    %v5205 = vpack.c.b16 %v5105, %v5101
    %v5206 = vpack.c.b16 %v5106, %v5102
    %v5207 = vpack.c.b16 %v5107, %v5103
    %v5208 = vpack.c.b16 %v5112, %v5108
    %v5209 = vpack.c.b16 %v5113, %v5109
    %v5210 = vpack.c.b16 %v5114, %v5110
    %v5211 = vpack.c.b16 %v5115, %v5111
    %v5212 = vpack.c.b16 %v5120, %v5116
    %v5213 = vpack.c.b16 %v5121, %v5117
    %v5214 = vpack.c.b16 %v5122, %v5118
    %v5215 = vpack.c.b16 %v5123, %v5119
    %v5216 = vpack.c.b16 %v5128, %v5124
    %v5217 = vpack.c.b16 %v5129, %v5125
    %v5218 = vpack.c.b16 %v5130, %v5126
    %v5219 = vpack.c.b16 %v5131, %v5127
    %v5220 = vpack.c.b16 %v5136, %v5132
    %v5221 = vpack.c.b16 %v5137, %v5133
    %v5222 = vpack.c.b16 %v5138, %v5134
    %v5223 = vpack.c.b16 %v5139, %v5135
    %v5224 = vpack.c.b16 %v5144, %v5140
    %v5225 = vpack.c.b16 %v5145, %v5141
    %v5226 = vpack.c.b16 %v5146, %v5142
    %v5227 = vpack.c.b16 %v5147, %v5143
    %v5228 = vpack.c.b16 %v5152, %v5148
    %v5229 = vpack.c.b16 %v5153, %v5149
    %v5230 = vpack.c.b16 %v5154, %v5150
    %v5231 = vpack.c.b16 %v5155, %v5151
    %v5232 = vpack.c.b16 %v5160, %v5156
    %v5233 = vpack.c.b16 %v5161, %v5157
    %v5234 = vpack.c.b16 %v5162, %v5158
    %v5235 = vpack.c.b16 %v5163, %v5159
    %v5236 = vpack.c.b16 %v5168, %v5164
    %v5237 = vpack.c.b16 %v5169, %v5165
    %v5238 = vpack.c.b16 %v5170, %v5166
    %v5239 = vpack.c.b16 %v5171, %v5167
    %v5240 = vpack.c.b16 %v5176, %v5172
    %v5241 = vpack.c.b16 %v5177, %v5173
    %v5242 = vpack.c.b16 %v5178, %v5174
    %v5243 = vpack.c.b16 %v5179, %v5175
    %5308 = vmatprep.subr.bf16.mxu0 %v5181
    %5309 = vmatpush1.bf16.msra.mxu0 %v5180
    %5310 = vmatprep.subr.bf16.mxu0 %v5185
    %5311 = vmatpush1.bf16.msra.mxu0 %v5184
    %5312 = vmatprep.subr.bf16.mxu0 %v5189
    %5313 = vmatpush1.bf16.msra.mxu0 %v5188
    %5314 = vmatprep.subr.bf16.mxu0 %v5193
    %5315 = vmatpush1.bf16.msra.mxu0 %v5192
    %5316 = vmatprep.subr.bf16.mxu0 %v5197
    %5317 = vmatpush1.bf16.msra.mxu0 %v5196
    %5318 = vmatprep.subr.bf16.mxu0 %v5201
    %5319 = vmatpush1.bf16.msra.mxu0 %v5200
    %5320 = vmatprep.subr.bf16.mxu0 %v5205
    %5321 = vmatpush1.bf16.msra.mxu0 %v5204
    %5322 = vmatprep.subr.bf16.mxu0 %v5209
    %5323 = vmatpush1.bf16.msra.mxu0 %v5208
    %5324 = vmatprep.subr.bf16.mxu0 %v5213
    %5325 = vmatpush1.bf16.msra.mxu0 %v5212
    %5326 = vmatprep.subr.bf16.mxu0 %v5217
    %5327 = vmatpush1.bf16.msra.mxu0 %v5216
    %5328 = vmatprep.subr.bf16.mxu0 %v5221
    %5329 = vmatpush1.bf16.msra.mxu0 %v5220
    %5330 = vmatprep.subr.bf16.mxu0 %v5225
    %5331 = vmatpush1.bf16.msra.mxu0 %v5224
    %5332 = vmatprep.subr.bf16.mxu0 %v5229
    %5333 = vmatpush1.bf16.msra.mxu0 %v5228
    %5334 = vmatprep.subr.bf16.mxu0 %v5233
    %5335 = vmatpush1.bf16.msra.mxu0 %v5232
    %5336 = vmatprep.subr.bf16.mxu0 %v5237
    %5337 = vmatpush1.bf16.msra.mxu0 %v5236
    %5338 = vmatprep.subr.bf16.mxu0 %v5241
    %5339 = vmatpush1.bf16.msra.mxu0 %v5240
    %5340 = vmatprep.mubr.bf16.mxu0 %v4901
    %5341 = vmatmul.mubr.bf16.gmra.mrb[0].mxu0 %v4900
    %v5342 = vpop.f32.mrb[0].mxu0
    %v5343 = vadd.f32 %v4971, %v5342
    %v5344 = vpop.f32.mrb[0].mxu0
    %v5345 = vadd.f32 %v4975, %v5344
    %v5346 = vpop.f32.mrb[0].mxu0
    %v5347 = vpop.f32.mrb[0].mxu0
    %5348 = vdwg.mxu0
    %5349 = vmatprep.subr.bf16.mxu0 %v5183
    %5350 = vmatpush1.bf16.msra.mxu0 %v5182
    %5351 = vmatprep.subr.bf16.mxu0 %v5187
    %5352 = vmatpush1.bf16.msra.mxu0 %v5186
    %5353 = vmatprep.subr.bf16.mxu0 %v5191
    %5354 = vmatpush1.bf16.msra.mxu0 %v5190
    %5355 = vmatprep.subr.bf16.mxu0 %v5195
    %5356 = vmatpush1.bf16.msra.mxu0 %v5194
    %5357 = vmatprep.subr.bf16.mxu0 %v5199
    %5358 = vmatpush1.bf16.msra.mxu0 %v5198
    %5359 = vmatprep.subr.bf16.mxu0 %v5203
    %5360 = vmatpush1.bf16.msra.mxu0 %v5202
    %5361 = vmatprep.subr.bf16.mxu0 %v5207
    %5362 = vmatpush1.bf16.msra.mxu0 %v5206
    %5363 = vmatprep.subr.bf16.mxu0 %v5211
    %5364 = vmatpush1.bf16.msra.mxu0 %v5210
    %5365 = vmatprep.subr.bf16.mxu0 %v5215
    %5366 = vmatpush1.bf16.msra.mxu0 %v5214
    %5367 = vmatprep.subr.bf16.mxu0 %v5219
    %5368 = vmatpush1.bf16.msra.mxu0 %v5218
    %5369 = vmatprep.subr.bf16.mxu0 %v5223
    %5370 = vmatpush1.bf16.msra.mxu0 %v5222
    %5371 = vmatprep.subr.bf16.mxu0 %v5227
    %5372 = vmatpush1.bf16.msra.mxu0 %v5226
    %5373 = vmatprep.subr.bf16.mxu0 %v5231
    %5374 = vmatpush1.bf16.msra.mxu0 %v5230
    %5375 = vmatprep.subr.bf16.mxu0 %v5235
    %5376 = vmatpush1.bf16.msra.mxu0 %v5234
    %5377 = vmatprep.subr.bf16.mxu0 %v5239
    %5378 = vmatpush1.bf16.msra.mxu0 %v5238
    %5379 = vmatprep.subr.bf16.mxu0 %v5243
    %5380 = vmatpush1.bf16.msra.mxu0 %v5242
    %5381 = vmatprep.mubr.bf16.mxu0 %v4901
    %5382 = vmatmul.mubr.bf16.gmra.mrb[0].mxu0 %v4900
    %v5383 = vpop.f32.mrb[0].mxu0
    %v5384 = vadd.f32 %v4979, %v5383
    %v5385 = vpop.f32.mrb[0].mxu0
    %v5386 = vadd.f32 %v4983, %v5385
    %v5387 = vpop.f32.mrb[0].mxu0
    %v5388 = vpop.f32.mrb[0].mxu0
    %5389 = vdwg.mxu0
    %v5390 = vmax.f32 %v5343, 0.0
    %v5391 = vmax.f32 %v5345, 0.0
    %v5392 = vmax.f32 %v5384, 0.0
    %v5393 = vmax.f32 %v5386, 0.0
    %v5394 = vpack.c.bf16 %v5390, %v5390
    %v5395 = vpack.c.bf16 %v5391, %v5391
    %v5396 = vpack.c.bf16 %v5392, %v5392
    %v5397 = vpack.c.bf16 %v5393, %v5393
    %v5398 = vld [vmem:[#allocation31] sm:$0xff]
    %v5399 = vld [vmem:[#allocation31 + $0x8] sm:$0xff]
    %v5400 = vld [vmem:[#allocation31 + $0x10] sm:$0xff]
    %v5401 = vld [vmem:[#allocation31 + $0x18] sm:$0xf]
    %v5402 = vld [vmem:[#allocation31 + $0x1c] sm:$0xff]
    %v5403 = vld [vmem:[#allocation31 + $0x24] sm:$0xff]
    %v5404 = vld [vmem:[#allocation31 + $0x2c] sm:$0xff]
    %v5405 = vld [vmem:[#allocation31 + $0x34] sm:$0xf]
    %v5406 = vld [vmem:[#allocation31 + $0x38] sm:$0xff]
    %v5407 = vld [vmem:[#allocation31 + $0x40] sm:$0xff]
    %v5408 = vld [vmem:[#allocation31 + $0x48] sm:$0xff]
    %v5409 = vld [vmem:[#allocation31 + $0x50] sm:$0xf]
    %v5410 = vld [vmem:[#allocation31 + $0x54] sm:$0xff]
    %v5411 = vld [vmem:[#allocation31 + $0x5c] sm:$0xff]
    %v5412 = vld [vmem:[#allocation31 + $0x64] sm:$0xff]
    %v5413 = vld [vmem:[#allocation31 + $0x6c] sm:$0xf]
    %v5414 = vld [vmem:[#allocation31 + $0x70] sm:$0xff]
    %v5415 = vld [vmem:[#allocation31 + $0x78] sm:$0xff]
    %v5416 = vld [vmem:[#allocation31 + $0x80] sm:$0xff]
    %v5417 = vld [vmem:[#allocation31 + $0x88] sm:$0xf]
    %v5418 = vld [vmem:[#allocation31 + $0x8c] sm:$0xff]
    %v5419 = vld [vmem:[#allocation31 + $0x94] sm:$0xff]
    %v5420 = vld [vmem:[#allocation31 + $0x9c] sm:$0xff]
    %v5421 = vld [vmem:[#allocation31 + $0xa4] sm:$0xf]
    %v5422 = vld [vmem:[#allocation31 + $0xa8] sm:$0xff]
    %v5423 = vld [vmem:[#allocation31 + $0xb0] sm:$0xff]
    %v5424 = vld [vmem:[#allocation31 + $0xb8] sm:$0xff]
    %v5425 = vld [vmem:[#allocation31 + $0xc0] sm:$0xf]
    %v5426 = vld [vmem:[#allocation31 + $0xc4] sm:$0xff]
    %v5427 = vld [vmem:[#allocation31 + $0xcc] sm:$0xff]
    %v5428 = vld [vmem:[#allocation31 + $0xd4] sm:$0xff]
    %v5429 = vld [vmem:[#allocation31 + $0xdc] sm:$0xf]
    %v5430 = vld [vmem:[#allocation31 + $0xe0] sm:$0xff]
    %v5431 = vld [vmem:[#allocation31 + $0xe8] sm:$0xff]
    %v5432 = vld [vmem:[#allocation31 + $0xf0] sm:$0xff]
    %v5433 = vld [vmem:[#allocation31 + $0xf8] sm:$0xf]
    %v5434 = vld [vmem:[#allocation31 + $0xfc] sm:$0xff]
    %v5435 = vld [vmem:[#allocation31 + $0x104] sm:$0xff]
    %v5436 = vld [vmem:[#allocation31 + $0x10c] sm:$0xff]
    %v5437 = vld [vmem:[#allocation31 + $0x114] sm:$0xf]
    %v5438 = vld [vmem:[#allocation31 + $0x118] sm:$0xff]
    %v5439 = vld [vmem:[#allocation31 + $0x120] sm:$0xff]
    %v5440 = vld [vmem:[#allocation31 + $0x128] sm:$0xff]
    %v5441 = vld [vmem:[#allocation31 + $0x130] sm:$0xf]
    %v5442 = vld [vmem:[#allocation31 + $0x134] sm:$0xff]
    %v5443 = vld [vmem:[#allocation31 + $0x13c] sm:$0xff]
    %v5444 = vld [vmem:[#allocation31 + $0x144] sm:$0xff]
    %v5445 = vld [vmem:[#allocation31 + $0x14c] sm:$0xf]
    %v5446 = vld [vmem:[#allocation31 + $0x150] sm:$0xff]
    %v5447 = vld [vmem:[#allocation31 + $0x158] sm:$0xff]
    %v5448 = vld [vmem:[#allocation31 + $0x160] sm:$0xff]
    %v5449 = vld [vmem:[#allocation31 + $0x168] sm:$0xf]
    %v5450 = vld [vmem:[#allocation31 + $0x16c] sm:$0xff]
    %v5451 = vld [vmem:[#allocation31 + $0x174] sm:$0xff]
    %v5452 = vld [vmem:[#allocation31 + $0x17c] sm:$0xff]
    %v5453 = vld [vmem:[#allocation31 + $0x184] sm:$0xf]
    %v5454 = vld [vmem:[#allocation31 + $0x188] sm:$0xff]
    %v5455 = vld [vmem:[#allocation31 + $0x190] sm:$0xff]
    %v5456 = vld [vmem:[#allocation31 + $0x198] sm:$0xff]
    %v5457 = vld [vmem:[#allocation31 + $0x1a0] sm:$0xf]
    %v5458 = vld [vmem:[#allocation31 + $0x1a4] sm:$0xff]
    %v5459 = vld [vmem:[#allocation31 + $0x1ac] sm:$0xff]
    %v5460 = vld [vmem:[#allocation31 + $0x1b4] sm:$0xff]
    %v5461 = vld [vmem:[#allocation31 + $0x1bc] sm:$0xf]
    %v5462 = vld [vmem:[#allocation31 + $0x1c0] sm:$0xff]
    %v5463 = vld [vmem:[#allocation31 + $0x1c8] sm:$0xff]
    %v5464 = vld [vmem:[#allocation31 + $0x1d0] sm:$0xff]
    %v5465 = vld [vmem:[#allocation31 + $0x1d8] sm:$0xf]
    %v5466 = vld [vmem:[#allocation31 + $0x1dc] sm:$0xff]
    %v5467 = vld [vmem:[#allocation31 + $0x1e4] sm:$0xff]
    %v5468 = vld [vmem:[#allocation31 + $0x1ec] sm:$0xff]
    %v5469 = vld [vmem:[#allocation31 + $0x1f4] sm:$0xf]
    %v5470 = vld [vmem:[#allocation31 + $0x1f8] sm:$0xff]
    %v5471 = vld [vmem:[#allocation31 + $0x200] sm:$0xff]
    %v5472 = vld [vmem:[#allocation31 + $0x208] sm:$0xff]
    %v5473 = vld [vmem:[#allocation31 + $0x210] sm:$0xf]
    %v5474 = vld [vmem:[#allocation31 + $0x214] sm:$0xff]
    %v5475 = vld [vmem:[#allocation31 + $0x21c] sm:$0xff]
    %v5476 = vld [vmem:[#allocation31 + $0x224] sm:$0xff]
    %v5477 = vld [vmem:[#allocation31 + $0x22c] sm:$0xf]
    %v5478 = vld [vmem:[#allocation31 + $0x230] sm:$0xff]
    %v5479 = vld [vmem:[#allocation31 + $0x238] sm:$0xff]
    %v5480 = vld [vmem:[#allocation31 + $0x240] sm:$0xff]
    %v5481 = vld [vmem:[#allocation31 + $0x248] sm:$0xf]
    %v5482 = vld [vmem:[#allocation31 + $0x24c] sm:$0xff]
    %v5483 = vld [vmem:[#allocation31 + $0x254] sm:$0xff]
    %v5484 = vld [vmem:[#allocation31 + $0x25c] sm:$0xff]
    %v5485 = vld [vmem:[#allocation31 + $0x264] sm:$0xf]
    %v5486 = vld [vmem:[#allocation31 + $0x268] sm:$0xff]
    %v5487 = vld [vmem:[#allocation31 + $0x270] sm:$0xff]
    %v5488 = vld [vmem:[#allocation31 + $0x278] sm:$0xff]
    %v5489 = vld [vmem:[#allocation31 + $0x280] sm:$0xf]
    %v5490 = vld [vmem:[#allocation31 + $0x284] sm:$0xff]
    %v5491 = vld [vmem:[#allocation31 + $0x28c] sm:$0xff]
    %v5492 = vld [vmem:[#allocation31 + $0x294] sm:$0xff]
    %v5493 = vld [vmem:[#allocation31 + $0x29c] sm:$0xf]
    %v5494 = vld [vmem:[#allocation31 + $0x2a0] sm:$0xff]
    %v5495 = vld [vmem:[#allocation31 + $0x2a8] sm:$0xff]
    %v5496 = vld [vmem:[#allocation31 + $0x2b0] sm:$0xff]
    %v5497 = vld [vmem:[#allocation31 + $0x2b8] sm:$0xf]
    %v5498 = vld [vmem:[#allocation31 + $0x2bc] sm:$0xff]
    %v5499 = vld [vmem:[#allocation31 + $0x2c4] sm:$0xff]
    %v5500 = vld [vmem:[#allocation31 + $0x2cc] sm:$0xff]
    %v5501 = vld [vmem:[#allocation31 + $0x2d4] sm:$0xf]
    %v5502 = vld [vmem:[#allocation31 + $0x2d8] sm:$0xff]
    %v5503 = vld [vmem:[#allocation31 + $0x2e0] sm:$0xff]
    %v5504 = vld [vmem:[#allocation31 + $0x2e8] sm:$0xff]
    %v5505 = vld [vmem:[#allocation31 + $0x2f0] sm:$0xf]
    %v5506 = vld [vmem:[#allocation31 + $0x2f4] sm:$0xff]
    %v5507 = vld [vmem:[#allocation31 + $0x2fc] sm:$0xff]
    %v5508 = vld [vmem:[#allocation31 + $0x304] sm:$0xff]
    %v5509 = vld [vmem:[#allocation31 + $0x30c] sm:$0xf]
    %v5510 = vld [vmem:[#allocation31 + $0x310] sm:$0xff]
    %v5511 = vld [vmem:[#allocation31 + $0x318] sm:$0xff]
    %v5512 = vld [vmem:[#allocation31 + $0x320] sm:$0xff]
    %v5513 = vld [vmem:[#allocation31 + $0x328] sm:$0xf]
    %v5514 = vld [vmem:[#allocation31 + $0x32c] sm:$0xff]
    %v5515 = vld [vmem:[#allocation31 + $0x334] sm:$0xff]
    %v5516 = vld [vmem:[#allocation31 + $0x33c] sm:$0xff]
    %v5517 = vld [vmem:[#allocation31 + $0x344] sm:$0xf]
    %v5518 = vld [vmem:[#allocation31 + $0x348] sm:$0xff]
    %v5519 = vld [vmem:[#allocation31 + $0x350] sm:$0xff]
    %v5520 = vld [vmem:[#allocation31 + $0x358] sm:$0xff]
    %v5521 = vld [vmem:[#allocation31 + $0x360] sm:$0xf]
    %v5522 = vld [vmem:[#allocation31 + $0x364] sm:$0xff]
    %v5523 = vld [vmem:[#allocation31 + $0x36c] sm:$0xff]
    %v5524 = vld [vmem:[#allocation31 + $0x374] sm:$0xff]
    %v5525 = vld [vmem:[#allocation31 + $0x37c] sm:$0xf]
    %v5526 = vld [vmem:[#allocation31 + $0x380] sm:$0xff]
    %v5527 = vld [vmem:[#allocation31 + $0x388] sm:$0xff]
    %v5528 = vld [vmem:[#allocation31 + $0x390] sm:$0xff]
    %v5529 = vld [vmem:[#allocation31 + $0x398] sm:$0xf]
    %v5530 = vld [vmem:[#allocation31 + $0x39c] sm:$0xff]
    %v5531 = vld [vmem:[#allocation31 + $0x3a4] sm:$0xff]
    %v5532 = vld [vmem:[#allocation31 + $0x3ac] sm:$0xff]
    %v5533 = vld [vmem:[#allocation31 + $0x3b4] sm:$0xf]
    %v5534 = vld [vmem:[#allocation31 + $0x3b8] sm:$0xff]
    %v5535 = vld [vmem:[#allocation31 + $0x3c0] sm:$0xff]
    %v5536 = vld [vmem:[#allocation31 + $0x3c8] sm:$0xff]
    %v5537 = vld [vmem:[#allocation31 + $0x3d0] sm:$0xf]
    %v5538 = vld [vmem:[#allocation31 + $0x3d4] sm:$0xff]
    %v5539 = vld [vmem:[#allocation31 + $0x3dc] sm:$0xff]
    %v5540 = vld [vmem:[#allocation31 + $0x3e4] sm:$0xff]
    %v5541 = vld [vmem:[#allocation31 + $0x3ec] sm:$0xf]
    %v5542 = vld [vmem:[#allocation31 + $0x3f0] sm:$0xff]
    %v5543 = vld [vmem:[#allocation31 + $0x3f8] sm:$0xff]
    %v5544 = vld [vmem:[#allocation31 + $0x400] sm:$0xff]
    %v5545 = vld [vmem:[#allocation31 + $0x408] sm:$0xf]
    %v5546 = vld [vmem:[#allocation31 + $0x40c] sm:$0xff]
    %v5547 = vld [vmem:[#allocation31 + $0x414] sm:$0xff]
    %v5548 = vld [vmem:[#allocation31 + $0x41c] sm:$0xff]
    %v5549 = vld [vmem:[#allocation31 + $0x424] sm:$0xf]
    %v5550 = vld [vmem:[#allocation31 + $0x428] sm:$0xff]
    %v5551 = vld [vmem:[#allocation31 + $0x430] sm:$0xff]
    %v5552 = vld [vmem:[#allocation31 + $0x438] sm:$0xff]
    %v5553 = vld [vmem:[#allocation31 + $0x440] sm:$0xf]
    %v5554 = vld [vmem:[#allocation31 + $0x444] sm:$0xff]
    %v5555 = vld [vmem:[#allocation31 + $0x44c] sm:$0xff]
    %v5556 = vld [vmem:[#allocation31 + $0x454] sm:$0xff]
    %v5557 = vld [vmem:[#allocation31 + $0x45c] sm:$0xf]
    %v5558 = vld [vmem:[#allocation31 + $0x460] sm:$0xff]
    %v5559 = vld [vmem:[#allocation31 + $0x468] sm:$0xff]
    %v5560 = vld [vmem:[#allocation31 + $0x470] sm:$0xff]
    %v5561 = vld [vmem:[#allocation31 + $0x478] sm:$0xf]
    %v5562 = vld [vmem:[#allocation31 + $0x47c] sm:$0xff]
    %v5563 = vld [vmem:[#allocation31 + $0x484] sm:$0xff]
    %v5564 = vld [vmem:[#allocation31 + $0x48c] sm:$0xff]
    %v5565 = vld [vmem:[#allocation31 + $0x494] sm:$0xf]
    %v5566 = vld [vmem:[#allocation31 + $0x498] sm:$0xff]
    %v5567 = vld [vmem:[#allocation31 + $0x4a0] sm:$0xff]
    %v5568 = vld [vmem:[#allocation31 + $0x4a8] sm:$0xff]
    %v5569 = vld [vmem:[#allocation31 + $0x4b0] sm:$0xf]
    %v5570 = vld [vmem:[#allocation31 + $0x4b4] sm:$0xff]
    %v5571 = vld [vmem:[#allocation31 + $0x4bc] sm:$0xff]
    %v5572 = vld [vmem:[#allocation31 + $0x4c4] sm:$0xff]
    %v5573 = vld [vmem:[#allocation31 + $0x4cc] sm:$0xf]
    %v5574 = vld [vmem:[#allocation31 + $0x4d0] sm:$0xff]
    %v5575 = vld [vmem:[#allocation31 + $0x4d8] sm:$0xff]
    %v5576 = vld [vmem:[#allocation31 + $0x4e0] sm:$0xff]
    %v5577 = vld [vmem:[#allocation31 + $0x4e8] sm:$0xf]
    %v5578 = vld [vmem:[#allocation31 + $0x4ec] sm:$0xff]
    %v5579 = vld [vmem:[#allocation31 + $0x4f4] sm:$0xff]
    %v5580 = vld [vmem:[#allocation31 + $0x4fc] sm:$0xff]
    %v5581 = vld [vmem:[#allocation31 + $0x504] sm:$0xf]
    %v5582 = vld [vmem:[#allocation31 + $0x508] sm:$0xff]
    %v5583 = vld [vmem:[#allocation31 + $0x510] sm:$0xff]
    %v5584 = vld [vmem:[#allocation31 + $0x518] sm:$0xff]
    %v5585 = vld [vmem:[#allocation31 + $0x520] sm:$0xf]
    %v5586 = vld [vmem:[#allocation31 + $0x524] sm:$0xff]
    %v5587 = vld [vmem:[#allocation31 + $0x52c] sm:$0xff]
    %v5588 = vld [vmem:[#allocation31 + $0x534] sm:$0xff]
    %v5589 = vld [vmem:[#allocation31 + $0x53c] sm:$0xf]
    %v5590 = vld [vmem:[#allocation31 + $0x540] sm:$0xff]
    %v5591 = vld [vmem:[#allocation31 + $0x548] sm:$0xff]
    %v5592 = vld [vmem:[#allocation31 + $0x550] sm:$0xff]
    %v5593 = vld [vmem:[#allocation31 + $0x558] sm:$0xf]
    %v5594 = vld [vmem:[#allocation31 + $0x55c] sm:$0xff]
    %v5595 = vld [vmem:[#allocation31 + $0x564] sm:$0xff]
    %v5596 = vld [vmem:[#allocation31 + $0x56c] sm:$0xff]
    %v5597 = vld [vmem:[#allocation31 + $0x574] sm:$0xf]
    %v5598 = vld [vmem:[#allocation31 + $0x578] sm:$0xff]
    %v5599 = vld [vmem:[#allocation31 + $0x580] sm:$0xff]
    %v5600 = vld [vmem:[#allocation31 + $0x588] sm:$0xff]
    %v5601 = vld [vmem:[#allocation31 + $0x590] sm:$0xf]
    %v5602 = vld [vmem:[#allocation31 + $0x594] sm:$0xff]
    %v5603 = vld [vmem:[#allocation31 + $0x59c] sm:$0xff]
    %v5604 = vld [vmem:[#allocation31 + $0x5a4] sm:$0xff]
    %v5605 = vld [vmem:[#allocation31 + $0x5ac] sm:$0xf]
    %v5606 = vld [vmem:[#allocation31 + $0x5b0] sm:$0xff]
    %v5607 = vld [vmem:[#allocation31 + $0x5b8] sm:$0xff]
    %v5608 = vld [vmem:[#allocation31 + $0x5c0] sm:$0xff]
    %v5609 = vld [vmem:[#allocation31 + $0x5c8] sm:$0xf]
    %v5610 = vld [vmem:[#allocation31 + $0x5cc] sm:$0xff]
    %v5611 = vld [vmem:[#allocation31 + $0x5d4] sm:$0xff]
    %v5612 = vld [vmem:[#allocation31 + $0x5dc] sm:$0xff]
    %v5613 = vld [vmem:[#allocation31 + $0x5e4] sm:$0xf]
    %v5614 = vld [vmem:[#allocation31 + $0x5e8] sm:$0xff]
    %v5615 = vld [vmem:[#allocation31 + $0x5f0] sm:$0xff]
    %v5616 = vld [vmem:[#allocation31 + $0x5f8] sm:$0xff]
    %v5617 = vld [vmem:[#allocation31 + $0x600] sm:$0xf]
    %v5618 = vld [vmem:[#allocation31 + $0x604] sm:$0xff]
    %v5619 = vld [vmem:[#allocation31 + $0x60c] sm:$0xff]
    %v5620 = vld [vmem:[#allocation31 + $0x614] sm:$0xff]
    %v5621 = vld [vmem:[#allocation31 + $0x61c] sm:$0xf]
    %v5622 = vld [vmem:[#allocation31 + $0x620] sm:$0xff]
    %v5623 = vld [vmem:[#allocation31 + $0x628] sm:$0xff]
    %v5624 = vld [vmem:[#allocation31 + $0x630] sm:$0xff]
    %v5625 = vld [vmem:[#allocation31 + $0x638] sm:$0xf]
    %v5626 = vld [vmem:[#allocation31 + $0x63c] sm:$0xff]
    %v5627 = vld [vmem:[#allocation31 + $0x644] sm:$0xff]
    %v5628 = vld [vmem:[#allocation31 + $0x64c] sm:$0xff]
    %v5629 = vld [vmem:[#allocation31 + $0x654] sm:$0xf]
    %v5630 = vld [vmem:[#allocation31 + $0x658] sm:$0xff]
    %v5631 = vld [vmem:[#allocation31 + $0x660] sm:$0xff]
    %v5632 = vld [vmem:[#allocation31 + $0x668] sm:$0xff]
    %v5633 = vld [vmem:[#allocation31 + $0x670] sm:$0xf]
    %v5634 = vld [vmem:[#allocation31 + $0x674] sm:$0xff]
    %v5635 = vld [vmem:[#allocation31 + $0x67c] sm:$0xff]
    %v5636 = vld [vmem:[#allocation31 + $0x684] sm:$0xff]
    %v5637 = vld [vmem:[#allocation31 + $0x68c] sm:$0xf]
    %v5638 = vld [vmem:[#allocation31 + $0x690] sm:$0xff]
    %v5639 = vld [vmem:[#allocation31 + $0x698] sm:$0xff]
    %v5640 = vld [vmem:[#allocation31 + $0x6a0] sm:$0xff]
    %v5641 = vld [vmem:[#allocation31 + $0x6a8] sm:$0xf]
    %v5642 = vld [vmem:[#allocation31 + $0x6ac] sm:$0xff]
    %v5643 = vld [vmem:[#allocation31 + $0x6b4] sm:$0xff]
    %v5644 = vld [vmem:[#allocation31 + $0x6bc] sm:$0xff]
    %v5645 = vld [vmem:[#allocation31 + $0x6c4] sm:$0xf]
    %v5646 = vld [vmem:[#allocation31 + $0x6c8] sm:$0xff]
    %v5647 = vld [vmem:[#allocation31 + $0x6d0] sm:$0xff]
    %v5648 = vld [vmem:[#allocation31 + $0x6d8] sm:$0xff]
    %v5649 = vld [vmem:[#allocation31 + $0x6e0] sm:$0xf]
    %v5650 = vld [vmem:[#allocation31 + $0x6e4] sm:$0xff]
    %v5651 = vld [vmem:[#allocation31 + $0x6ec] sm:$0xff]
    %v5652 = vld [vmem:[#allocation31 + $0x6f4] sm:$0xff]
    %v5653 = vld [vmem:[#allocation31 + $0x6fc] sm:$0xf]
    %v5654 = vld [vmem:[#allocation32] sm:$0x7f]
    %v5656 = vlaneseq
    %v5657 = vshrl.u32 %v5656, 7
    %v5658 = vsub.s32 0, %v5657
    %v5659 = vrot.slane %v5654, %v5658
    %v5660 = vlaneseq
    %v5661 = vshrl.u32 %v5660, 7
    %v5662 = vsub.s32 1, %v5661
    %v5663 = vrot.slane %v5654, %v5662
    %v5664 = vlaneseq
    %v5665 = vshrl.u32 %v5664, 7
    %v5666 = vsub.s32 2, %v5665
    %v5667 = vrot.slane %v5654, %v5666
    %v5668 = vlaneseq
    %v5669 = vshrl.u32 %v5668, 7
    %v5670 = vsub.s32 3, %v5669
    %v5671 = vrot.slane %v5654, %v5670
    %v5672 = vlaneseq
    %v5673 = vshrl.u32 %v5672, 7
    %v5674 = vsub.s32 4, %v5673
    %v5675 = vrot.slane %v5654, %v5674
    %v5676 = vlaneseq
    %v5677 = vshrl.u32 %v5676, 7
    %v5678 = vsub.s32 5, %v5677
    %v5679 = vrot.slane %v5654, %v5678
    %v5680 = vlaneseq
    %v5681 = vshrl.u32 %v5680, 7
    %v5682 = vsub.s32 6, %v5681
    %v5683 = vrot.slane %v5654, %v5682
    %v5947 = vunpack.c.l.b16 %v5398
    %v5948 = vunpack.c.h.b16 %v5398
    %v5949 = vunpack.c.l.b16 %v5399
    %v5950 = vunpack.c.h.b16 %v5399
    %v5951 = vunpack.c.l.b16 %v5400
    %v5952 = vunpack.c.h.b16 %v5400
    %v5953 = vunpack.c.l.b16 %v5401
    %v5954 = vunpack.c.l.b16 %v5402
    %v5955 = vunpack.c.h.b16 %v5402
    %v5956 = vunpack.c.l.b16 %v5403
    %v5957 = vunpack.c.h.b16 %v5403
    %v5958 = vunpack.c.l.b16 %v5404
    %v5959 = vunpack.c.h.b16 %v5404
    %v5960 = vunpack.c.l.b16 %v5405
    %v5961 = vunpack.c.l.b16 %v5406
    %v5962 = vunpack.c.h.b16 %v5406
    %v5963 = vunpack.c.l.b16 %v5407
    %v5964 = vunpack.c.h.b16 %v5407
    %v5965 = vunpack.c.l.b16 %v5408
    %v5966 = vunpack.c.h.b16 %v5408
    %v5967 = vunpack.c.l.b16 %v5409
    %v5968 = vunpack.c.l.b16 %v5410
    %v5969 = vunpack.c.h.b16 %v5410
    %v5970 = vunpack.c.l.b16 %v5411
    %v5971 = vunpack.c.h.b16 %v5411
    %v5972 = vunpack.c.l.b16 %v5412
    %v5973 = vunpack.c.h.b16 %v5412
    %v5974 = vunpack.c.l.b16 %v5413
    %v5975 = vunpack.c.l.b16 %v5414
    %v5976 = vunpack.c.h.b16 %v5414
    %v5977 = vunpack.c.l.b16 %v5415
    %v5978 = vunpack.c.h.b16 %v5415
    %v5979 = vunpack.c.l.b16 %v5416
    %v5980 = vunpack.c.h.b16 %v5416
    %v5981 = vunpack.c.l.b16 %v5417
    %v5982 = vunpack.c.l.b16 %v5418
    %v5983 = vunpack.c.h.b16 %v5418
    %v5984 = vunpack.c.l.b16 %v5419
    %v5985 = vunpack.c.h.b16 %v5419
    %v5986 = vunpack.c.l.b16 %v5420
    %v5987 = vunpack.c.h.b16 %v5420
    %v5988 = vunpack.c.l.b16 %v5421
    %v5989 = vunpack.c.l.b16 %v5422
    %v5990 = vunpack.c.h.b16 %v5422
    %v5991 = vunpack.c.l.b16 %v5423
    %v5992 = vunpack.c.h.b16 %v5423
    %v5993 = vunpack.c.l.b16 %v5424
    %v5994 = vunpack.c.h.b16 %v5424
    %v5995 = vunpack.c.l.b16 %v5425
    %v5996 = vunpack.c.l.b16 %v5426
    %v5997 = vunpack.c.h.b16 %v5426
    %v5998 = vunpack.c.l.b16 %v5427
    %v5999 = vunpack.c.h.b16 %v5427
    %v6000 = vunpack.c.l.b16 %v5428
    %v6001 = vunpack.c.h.b16 %v5428
    %v6002 = vunpack.c.l.b16 %v5429
    %v6003 = vunpack.c.l.b16 %v5430
    %v6004 = vunpack.c.h.b16 %v5430
    %v6005 = vunpack.c.l.b16 %v5431
    %v6006 = vunpack.c.h.b16 %v5431
    %v6007 = vunpack.c.l.b16 %v5432
    %v6008 = vunpack.c.h.b16 %v5432
    %v6009 = vunpack.c.l.b16 %v5433
    %v6010 = vunpack.c.l.b16 %v5434
    %v6011 = vunpack.c.h.b16 %v5434
    %v6012 = vunpack.c.l.b16 %v5435
    %v6013 = vunpack.c.h.b16 %v5435
    %v6014 = vunpack.c.l.b16 %v5436
    %v6015 = vunpack.c.h.b16 %v5436
    %v6016 = vunpack.c.l.b16 %v5437
    %v6017 = vunpack.c.l.b16 %v5438
    %v6018 = vunpack.c.h.b16 %v5438
    %v6019 = vunpack.c.l.b16 %v5439
    %v6020 = vunpack.c.h.b16 %v5439
    %v6021 = vunpack.c.l.b16 %v5440
    %v6022 = vunpack.c.h.b16 %v5440
    %v6023 = vunpack.c.l.b16 %v5441
    %v6024 = vunpack.c.l.b16 %v5442
    %v6025 = vunpack.c.h.b16 %v5442
    %v6026 = vunpack.c.l.b16 %v5443
    %v6027 = vunpack.c.h.b16 %v5443
    %v6028 = vunpack.c.l.b16 %v5444
    %v6029 = vunpack.c.h.b16 %v5444
    %v6030 = vunpack.c.l.b16 %v5445
    %v6031 = vunpack.c.l.b16 %v5446
    %v6032 = vunpack.c.h.b16 %v5446
    %v6033 = vunpack.c.l.b16 %v5447
    %v6034 = vunpack.c.h.b16 %v5447
    %v6035 = vunpack.c.l.b16 %v5448
    %v6036 = vunpack.c.h.b16 %v5448
    %v6037 = vunpack.c.l.b16 %v5449
    %v6038 = vunpack.c.l.b16 %v5450
    %v6039 = vunpack.c.h.b16 %v5450
    %v6040 = vunpack.c.l.b16 %v5451
    %v6041 = vunpack.c.h.b16 %v5451
    %v6042 = vunpack.c.l.b16 %v5452
    %v6043 = vunpack.c.h.b16 %v5452
    %v6044 = vunpack.c.l.b16 %v5453
    %v6045 = vunpack.c.l.b16 %v5454
    %v6046 = vunpack.c.h.b16 %v5454
    %v6047 = vunpack.c.l.b16 %v5455
    %v6048 = vunpack.c.h.b16 %v5455
    %v6049 = vunpack.c.l.b16 %v5456
    %v6050 = vunpack.c.h.b16 %v5456
    %v6051 = vunpack.c.l.b16 %v5457
    %v6052 = vunpack.c.l.b16 %v5458
    %v6053 = vunpack.c.h.b16 %v5458
    %v6054 = vunpack.c.l.b16 %v5459
    %v6055 = vunpack.c.h.b16 %v5459
    %v6056 = vunpack.c.l.b16 %v5460
    %v6057 = vunpack.c.h.b16 %v5460
    %v6058 = vunpack.c.l.b16 %v5461
    %v6059 = vunpack.c.l.b16 %v5462
    %v6060 = vunpack.c.h.b16 %v5462
    %v6061 = vunpack.c.l.b16 %v5463
    %v6062 = vunpack.c.h.b16 %v5463
    %v6063 = vunpack.c.l.b16 %v5464
    %v6064 = vunpack.c.h.b16 %v5464
    %v6065 = vunpack.c.l.b16 %v5465
    %v6066 = vunpack.c.l.b16 %v5466
    %v6067 = vunpack.c.h.b16 %v5466
    %v6068 = vunpack.c.l.b16 %v5467
    %v6069 = vunpack.c.h.b16 %v5467
    %v6070 = vunpack.c.l.b16 %v5468
    %v6071 = vunpack.c.h.b16 %v5468
    %v6072 = vunpack.c.l.b16 %v5469
    %v6073 = vunpack.c.l.b16 %v5470
    %v6074 = vunpack.c.h.b16 %v5470
    %v6075 = vunpack.c.l.b16 %v5471
    %v6076 = vunpack.c.h.b16 %v5471
    %v6077 = vunpack.c.l.b16 %v5472
    %v6078 = vunpack.c.h.b16 %v5472
    %v6079 = vunpack.c.l.b16 %v5473
    %v6080 = vunpack.c.l.b16 %v5474
    %v6081 = vunpack.c.h.b16 %v5474
    %v6082 = vunpack.c.l.b16 %v5475
    %v6083 = vunpack.c.h.b16 %v5475
    %v6084 = vunpack.c.l.b16 %v5476
    %v6085 = vunpack.c.h.b16 %v5476
    %v6086 = vunpack.c.l.b16 %v5477
    %v6087 = vunpack.c.l.b16 %v5478
    %v6088 = vunpack.c.h.b16 %v5478
    %v6089 = vunpack.c.l.b16 %v5479
    %v6090 = vunpack.c.h.b16 %v5479
    %v6091 = vunpack.c.l.b16 %v5480
    %v6092 = vunpack.c.h.b16 %v5480
    %v6093 = vunpack.c.l.b16 %v5481
    %v6094 = vunpack.c.l.b16 %v5482
    %v6095 = vunpack.c.h.b16 %v5482
    %v6096 = vunpack.c.l.b16 %v5483
    %v6097 = vunpack.c.h.b16 %v5483
    %v6098 = vunpack.c.l.b16 %v5484
    %v6099 = vunpack.c.h.b16 %v5484
    %v6100 = vunpack.c.l.b16 %v5485
    %v6101 = vunpack.c.l.b16 %v5486
    %v6102 = vunpack.c.h.b16 %v5486
    %v6103 = vunpack.c.l.b16 %v5487
    %v6104 = vunpack.c.h.b16 %v5487
    %v6105 = vunpack.c.l.b16 %v5488
    %v6106 = vunpack.c.h.b16 %v5488
    %v6107 = vunpack.c.l.b16 %v5489
    %v6108 = vunpack.c.l.b16 %v5490
    %v6109 = vunpack.c.h.b16 %v5490
    %v6110 = vunpack.c.l.b16 %v5491
    %v6111 = vunpack.c.h.b16 %v5491
    %v6112 = vunpack.c.l.b16 %v5492
    %v6113 = vunpack.c.h.b16 %v5492
    %v6114 = vunpack.c.l.b16 %v5493
    %v6115 = vunpack.c.l.b16 %v5494
    %v6116 = vunpack.c.h.b16 %v5494
    %v6117 = vunpack.c.l.b16 %v5495
    %v6118 = vunpack.c.h.b16 %v5495
    %v6119 = vunpack.c.l.b16 %v5496
    %v6120 = vunpack.c.h.b16 %v5496
    %v6121 = vunpack.c.l.b16 %v5497
    %v6122 = vunpack.c.l.b16 %v5498
    %v6123 = vunpack.c.h.b16 %v5498
    %v6124 = vunpack.c.l.b16 %v5499
    %v6125 = vunpack.c.h.b16 %v5499
    %v6126 = vunpack.c.l.b16 %v5500
    %v6127 = vunpack.c.h.b16 %v5500
    %v6128 = vunpack.c.l.b16 %v5501
    %v6129 = vunpack.c.l.b16 %v5502
    %v6130 = vunpack.c.h.b16 %v5502
    %v6131 = vunpack.c.l.b16 %v5503
    %v6132 = vunpack.c.h.b16 %v5503
    %v6133 = vunpack.c.l.b16 %v5504
    %v6134 = vunpack.c.h.b16 %v5504
    %v6135 = vunpack.c.l.b16 %v5505
    %v6136 = vunpack.c.l.b16 %v5506
    %v6137 = vunpack.c.h.b16 %v5506
    %v6138 = vunpack.c.l.b16 %v5507
    %v6139 = vunpack.c.h.b16 %v5507
    %v6140 = vunpack.c.l.b16 %v5508
    %v6141 = vunpack.c.h.b16 %v5508
    %v6142 = vunpack.c.l.b16 %v5509
    %v6143 = vunpack.c.l.b16 %v5510
    %v6144 = vunpack.c.h.b16 %v5510
    %v6145 = vunpack.c.l.b16 %v5511
    %v6146 = vunpack.c.h.b16 %v5511
    %v6147 = vunpack.c.l.b16 %v5512
    %v6148 = vunpack.c.h.b16 %v5512
    %v6149 = vunpack.c.l.b16 %v5513
    %v6150 = vunpack.c.l.b16 %v5514
    %v6151 = vunpack.c.h.b16 %v5514
    %v6152 = vunpack.c.l.b16 %v5515
    %v6153 = vunpack.c.h.b16 %v5515
    %v6154 = vunpack.c.l.b16 %v5516
    %v6155 = vunpack.c.h.b16 %v5516
    %v6156 = vunpack.c.l.b16 %v5517
    %v6157 = vunpack.c.l.b16 %v5518
    %v6158 = vunpack.c.h.b16 %v5518
    %v6159 = vunpack.c.l.b16 %v5519
    %v6160 = vunpack.c.h.b16 %v5519
    %v6161 = vunpack.c.l.b16 %v5520
    %v6162 = vunpack.c.h.b16 %v5520
    %v6163 = vunpack.c.l.b16 %v5521
    %v6164 = vunpack.c.l.b16 %v5522
    %v6165 = vunpack.c.h.b16 %v5522
    %v6166 = vunpack.c.l.b16 %v5523
    %v6167 = vunpack.c.h.b16 %v5523
    %v6168 = vunpack.c.l.b16 %v5524
    %v6169 = vunpack.c.h.b16 %v5524
    %v6170 = vunpack.c.l.b16 %v5525
    %v6171 = vunpack.c.l.b16 %v5526
    %v6172 = vunpack.c.h.b16 %v5526
    %v6173 = vunpack.c.l.b16 %v5527
    %v6174 = vunpack.c.h.b16 %v5527
    %v6175 = vunpack.c.l.b16 %v5528
    %v6176 = vunpack.c.h.b16 %v5528
    %v6177 = vunpack.c.l.b16 %v5529
    %v6178 = vunpack.c.l.b16 %v5530
    %v6179 = vunpack.c.h.b16 %v5530
    %v6180 = vunpack.c.l.b16 %v5531
    %v6181 = vunpack.c.h.b16 %v5531
    %v6182 = vunpack.c.l.b16 %v5532
    %v6183 = vunpack.c.h.b16 %v5532
    %v6184 = vunpack.c.l.b16 %v5533
    %v6185 = vunpack.c.l.b16 %v5534
    %v6186 = vunpack.c.h.b16 %v5534
    %v6187 = vunpack.c.l.b16 %v5535
    %v6188 = vunpack.c.h.b16 %v5535
    %v6189 = vunpack.c.l.b16 %v5536
    %v6190 = vunpack.c.h.b16 %v5536
    %v6191 = vunpack.c.l.b16 %v5537
    %v6192 = vunpack.c.l.b16 %v5538
    %v6193 = vunpack.c.h.b16 %v5538
    %v6194 = vunpack.c.l.b16 %v5539
    %v6195 = vunpack.c.h.b16 %v5539
    %v6196 = vunpack.c.l.b16 %v5540
    %v6197 = vunpack.c.h.b16 %v5540
    %v6198 = vunpack.c.l.b16 %v5541
    %v6199 = vunpack.c.l.b16 %v5542
    %v6200 = vunpack.c.h.b16 %v5542
    %v6201 = vunpack.c.l.b16 %v5543
    %v6202 = vunpack.c.h.b16 %v5543
    %v6203 = vunpack.c.l.b16 %v5544
    %v6204 = vunpack.c.h.b16 %v5544
    %v6205 = vunpack.c.l.b16 %v5545
    %v6206 = vunpack.c.l.b16 %v5546
    %v6207 = vunpack.c.h.b16 %v5546
    %v6208 = vunpack.c.l.b16 %v5547
    %v6209 = vunpack.c.h.b16 %v5547
    %v6210 = vunpack.c.l.b16 %v5548
    %v6211 = vunpack.c.h.b16 %v5548
    %v6212 = vunpack.c.l.b16 %v5549
    %v6213 = vunpack.c.l.b16 %v5550
    %v6214 = vunpack.c.h.b16 %v5550
    %v6215 = vunpack.c.l.b16 %v5551
    %v6216 = vunpack.c.h.b16 %v5551
    %v6217 = vunpack.c.l.b16 %v5552
    %v6218 = vunpack.c.h.b16 %v5552
    %v6219 = vunpack.c.l.b16 %v5553
    %v6220 = vunpack.c.l.b16 %v5554
    %v6221 = vunpack.c.h.b16 %v5554
    %v6222 = vunpack.c.l.b16 %v5555
    %v6223 = vunpack.c.h.b16 %v5555
    %v6224 = vunpack.c.l.b16 %v5556
    %v6225 = vunpack.c.h.b16 %v5556
    %v6226 = vunpack.c.l.b16 %v5557
    %v6227 = vunpack.c.l.b16 %v5558
    %v6228 = vunpack.c.h.b16 %v5558
    %v6229 = vunpack.c.l.b16 %v5559
    %v6230 = vunpack.c.h.b16 %v5559
    %v6231 = vunpack.c.l.b16 %v5560
    %v6232 = vunpack.c.h.b16 %v5560
    %v6233 = vunpack.c.l.b16 %v5561
    %v6234 = vunpack.c.l.b16 %v5562
    %v6235 = vunpack.c.h.b16 %v5562
    %v6236 = vunpack.c.l.b16 %v5563
    %v6237 = vunpack.c.h.b16 %v5563
    %v6238 = vunpack.c.l.b16 %v5564
    %v6239 = vunpack.c.h.b16 %v5564
    %v6240 = vunpack.c.l.b16 %v5565
    %v6241 = vunpack.c.l.b16 %v5566
    %v6242 = vunpack.c.h.b16 %v5566
    %v6243 = vunpack.c.l.b16 %v5567
    %v6244 = vunpack.c.h.b16 %v5567
    %v6245 = vunpack.c.l.b16 %v5568
    %v6246 = vunpack.c.h.b16 %v5568
    %v6247 = vunpack.c.l.b16 %v5569
    %v6248 = vunpack.c.l.b16 %v5570
    %v6249 = vunpack.c.h.b16 %v5570
    %v6250 = vunpack.c.l.b16 %v5571
    %v6251 = vunpack.c.h.b16 %v5571
    %v6252 = vunpack.c.l.b16 %v5572
    %v6253 = vunpack.c.h.b16 %v5572
    %v6254 = vunpack.c.l.b16 %v5573
    %v6255 = vunpack.c.l.b16 %v5574
    %v6256 = vunpack.c.h.b16 %v5574
    %v6257 = vunpack.c.l.b16 %v5575
    %v6258 = vunpack.c.h.b16 %v5575
    %v6259 = vunpack.c.l.b16 %v5576
    %v6260 = vunpack.c.h.b16 %v5576
    %v6261 = vunpack.c.l.b16 %v5577
    %v6262 = vunpack.c.l.b16 %v5578
    %v6263 = vunpack.c.h.b16 %v5578
    %v6264 = vunpack.c.l.b16 %v5579
    %v6265 = vunpack.c.h.b16 %v5579
    %v6266 = vunpack.c.l.b16 %v5580
    %v6267 = vunpack.c.h.b16 %v5580
    %v6268 = vunpack.c.l.b16 %v5581
    %v6269 = vunpack.c.l.b16 %v5582
    %v6270 = vunpack.c.h.b16 %v5582
    %v6271 = vunpack.c.l.b16 %v5583
    %v6272 = vunpack.c.h.b16 %v5583
    %v6273 = vunpack.c.l.b16 %v5584
    %v6274 = vunpack.c.h.b16 %v5584
    %v6275 = vunpack.c.l.b16 %v5585
    %v6276 = vunpack.c.l.b16 %v5586
    %v6277 = vunpack.c.h.b16 %v5586
    %v6278 = vunpack.c.l.b16 %v5587
    %v6279 = vunpack.c.h.b16 %v5587
    %v6280 = vunpack.c.l.b16 %v5588
    %v6281 = vunpack.c.h.b16 %v5588
    %v6282 = vunpack.c.l.b16 %v5589
    %v6283 = vunpack.c.l.b16 %v5590
    %v6284 = vunpack.c.h.b16 %v5590
    %v6285 = vunpack.c.l.b16 %v5591
    %v6286 = vunpack.c.h.b16 %v5591
    %v6287 = vunpack.c.l.b16 %v5592
    %v6288 = vunpack.c.h.b16 %v5592
    %v6289 = vunpack.c.l.b16 %v5593
    %v6290 = vunpack.c.l.b16 %v5594
    %v6291 = vunpack.c.h.b16 %v5594
    %v6292 = vunpack.c.l.b16 %v5595
    %v6293 = vunpack.c.h.b16 %v5595
    %v6294 = vunpack.c.l.b16 %v5596
    %v6295 = vunpack.c.h.b16 %v5596
    %v6296 = vunpack.c.l.b16 %v5597
    %v6297 = vunpack.c.l.b16 %v5598
    %v6298 = vunpack.c.h.b16 %v5598
    %v6299 = vunpack.c.l.b16 %v5599
    %v6300 = vunpack.c.h.b16 %v5599
    %v6301 = vunpack.c.l.b16 %v5600
    %v6302 = vunpack.c.h.b16 %v5600
    %v6303 = vunpack.c.l.b16 %v5601
    %v6304 = vunpack.c.l.b16 %v5602
    %v6305 = vunpack.c.h.b16 %v5602
    %v6306 = vunpack.c.l.b16 %v5603
    %v6307 = vunpack.c.h.b16 %v5603
    %v6308 = vunpack.c.l.b16 %v5604
    %v6309 = vunpack.c.h.b16 %v5604
    %v6310 = vunpack.c.l.b16 %v5605
    %v6311 = vunpack.c.l.b16 %v5606
    %v6312 = vunpack.c.h.b16 %v5606
    %v6313 = vunpack.c.l.b16 %v5607
    %v6314 = vunpack.c.h.b16 %v5607
    %v6315 = vunpack.c.l.b16 %v5608
    %v6316 = vunpack.c.h.b16 %v5608
    %v6317 = vunpack.c.l.b16 %v5609
    %v6318 = vunpack.c.l.b16 %v5610
    %v6319 = vunpack.c.h.b16 %v5610
    %v6320 = vunpack.c.l.b16 %v5611
    %v6321 = vunpack.c.h.b16 %v5611
    %v6322 = vunpack.c.l.b16 %v5612
    %v6323 = vunpack.c.h.b16 %v5612
    %v6324 = vunpack.c.l.b16 %v5613
    %v6325 = vunpack.c.l.b16 %v5614
    %v6326 = vunpack.c.h.b16 %v5614
    %v6327 = vunpack.c.l.b16 %v5615
    %v6328 = vunpack.c.h.b16 %v5615
    %v6329 = vunpack.c.l.b16 %v5616
    %v6330 = vunpack.c.h.b16 %v5616
    %v6331 = vunpack.c.l.b16 %v5617
    %v6332 = vunpack.c.l.b16 %v5618
    %v6333 = vunpack.c.h.b16 %v5618
    %v6334 = vunpack.c.l.b16 %v5619
    %v6335 = vunpack.c.h.b16 %v5619
    %v6336 = vunpack.c.l.b16 %v5620
    %v6337 = vunpack.c.h.b16 %v5620
    %v6338 = vunpack.c.l.b16 %v5621
    %v6339 = vunpack.c.l.b16 %v5622
    %v6340 = vunpack.c.h.b16 %v5622
    %v6341 = vunpack.c.l.b16 %v5623
    %v6342 = vunpack.c.h.b16 %v5623
    %v6343 = vunpack.c.l.b16 %v5624
    %v6344 = vunpack.c.h.b16 %v5624
    %v6345 = vunpack.c.l.b16 %v5625
    %v6346 = vunpack.c.l.b16 %v5626
    %v6347 = vunpack.c.h.b16 %v5626
    %v6348 = vunpack.c.l.b16 %v5627
    %v6349 = vunpack.c.h.b16 %v5627
    %v6350 = vunpack.c.l.b16 %v5628
    %v6351 = vunpack.c.h.b16 %v5628
    %v6352 = vunpack.c.l.b16 %v5629
    %v6353 = vunpack.c.l.b16 %v5630
    %v6354 = vunpack.c.h.b16 %v5630
    %v6355 = vunpack.c.l.b16 %v5631
    %v6356 = vunpack.c.h.b16 %v5631
    %v6357 = vunpack.c.l.b16 %v5632
    %v6358 = vunpack.c.h.b16 %v5632
    %v6359 = vunpack.c.l.b16 %v5633
    %v6360 = vunpack.c.l.b16 %v5634
    %v6361 = vunpack.c.h.b16 %v5634
    %v6362 = vunpack.c.l.b16 %v5635
    %v6363 = vunpack.c.h.b16 %v5635
    %v6364 = vunpack.c.l.b16 %v5636
    %v6365 = vunpack.c.h.b16 %v5636
    %v6366 = vunpack.c.l.b16 %v5637
    %v6367 = vunpack.c.l.b16 %v5638
    %v6368 = vunpack.c.h.b16 %v5638
    %v6369 = vunpack.c.l.b16 %v5639
    %v6370 = vunpack.c.h.b16 %v5639
    %v6371 = vunpack.c.l.b16 %v5640
    %v6372 = vunpack.c.h.b16 %v5640
    %v6373 = vunpack.c.l.b16 %v5641
    %v6374 = vunpack.c.l.b16 %v5642
    %v6375 = vunpack.c.h.b16 %v5642
    %v6376 = vunpack.c.l.b16 %v5643
    %v6377 = vunpack.c.h.b16 %v5643
    %v6378 = vunpack.c.l.b16 %v5644
    %v6379 = vunpack.c.h.b16 %v5644
    %v6380 = vunpack.c.l.b16 %v5645
    %v6381 = vunpack.c.l.b16 %v5646
    %v6382 = vunpack.c.h.b16 %v5646
    %v6383 = vunpack.c.l.b16 %v5647
    %v6384 = vunpack.c.h.b16 %v5647
    %v6385 = vunpack.c.l.b16 %v5648
    %v6386 = vunpack.c.h.b16 %v5648
    %v6387 = vunpack.c.l.b16 %v5649
    %v6388 = vunpack.c.l.b16 %v5650
    %v6389 = vunpack.c.h.b16 %v5650
    %v6390 = vunpack.c.l.b16 %v5651
    %v6391 = vunpack.c.h.b16 %v5651
    %v6392 = vunpack.c.l.b16 %v5652
    %v6393 = vunpack.c.h.b16 %v5652
    %v6394 = vunpack.c.l.b16 %v5653
    %v6395 = vpack.c.b16 %v5954, %v5947
    %v6396 = vpack.c.b16 %v5955, %v5948
    %v6397 = vpack.c.b16 %v5956, %v5949
    %v6398 = vpack.c.b16 %v5957, %v5950
    %v6399 = vpack.c.b16 %v5958, %v5951
    %v6400 = vpack.c.b16 %v5959, %v5952
    %v6401 = vpack.c.b16 %v5960, %v5953
    %v6402 = vpack.c.b16 %v5968, %v5961
    %v6403 = vpack.c.b16 %v5969, %v5962
    %v6404 = vpack.c.b16 %v5970, %v5963
    %v6405 = vpack.c.b16 %v5971, %v5964
    %v6406 = vpack.c.b16 %v5972, %v5965
    %v6407 = vpack.c.b16 %v5973, %v5966
    %v6408 = vpack.c.b16 %v5974, %v5967
    %v6409 = vpack.c.b16 %v5982, %v5975
    %v6410 = vpack.c.b16 %v5983, %v5976
    %v6411 = vpack.c.b16 %v5984, %v5977
    %v6412 = vpack.c.b16 %v5985, %v5978
    %v6413 = vpack.c.b16 %v5986, %v5979
    %v6414 = vpack.c.b16 %v5987, %v5980
    %v6415 = vpack.c.b16 %v5988, %v5981
    %v6416 = vpack.c.b16 %v5996, %v5989
    %v6417 = vpack.c.b16 %v5997, %v5990
    %v6418 = vpack.c.b16 %v5998, %v5991
    %v6419 = vpack.c.b16 %v5999, %v5992
    %v6420 = vpack.c.b16 %v6000, %v5993
    %v6421 = vpack.c.b16 %v6001, %v5994
    %v6422 = vpack.c.b16 %v6002, %v5995
    %v6423 = vpack.c.b16 %v6010, %v6003
    %v6424 = vpack.c.b16 %v6011, %v6004
    %v6425 = vpack.c.b16 %v6012, %v6005
    %v6426 = vpack.c.b16 %v6013, %v6006
    %v6427 = vpack.c.b16 %v6014, %v6007
    %v6428 = vpack.c.b16 %v6015, %v6008
    %v6429 = vpack.c.b16 %v6016, %v6009
    %v6430 = vpack.c.b16 %v6024, %v6017
    %v6431 = vpack.c.b16 %v6025, %v6018
    %v6432 = vpack.c.b16 %v6026, %v6019
    %v6433 = vpack.c.b16 %v6027, %v6020
    %v6434 = vpack.c.b16 %v6028, %v6021
    %v6435 = vpack.c.b16 %v6029, %v6022
    %v6436 = vpack.c.b16 %v6030, %v6023
    %v6437 = vpack.c.b16 %v6038, %v6031
    %v6438 = vpack.c.b16 %v6039, %v6032
    %v6439 = vpack.c.b16 %v6040, %v6033
    %v6440 = vpack.c.b16 %v6041, %v6034
    %v6441 = vpack.c.b16 %v6042, %v6035
    %v6442 = vpack.c.b16 %v6043, %v6036
    %v6443 = vpack.c.b16 %v6044, %v6037
    %v6444 = vpack.c.b16 %v6052, %v6045
    %v6445 = vpack.c.b16 %v6053, %v6046
    %v6446 = vpack.c.b16 %v6054, %v6047
    %v6447 = vpack.c.b16 %v6055, %v6048
    %v6448 = vpack.c.b16 %v6056, %v6049
    %v6449 = vpack.c.b16 %v6057, %v6050
    %v6450 = vpack.c.b16 %v6058, %v6051
    %v6451 = vpack.c.b16 %v6066, %v6059
    %v6452 = vpack.c.b16 %v6067, %v6060
    %v6453 = vpack.c.b16 %v6068, %v6061
    %v6454 = vpack.c.b16 %v6069, %v6062
    %v6455 = vpack.c.b16 %v6070, %v6063
    %v6456 = vpack.c.b16 %v6071, %v6064
    %v6457 = vpack.c.b16 %v6072, %v6065
    %v6458 = vpack.c.b16 %v6080, %v6073
    %v6459 = vpack.c.b16 %v6081, %v6074
    %v6460 = vpack.c.b16 %v6082, %v6075
    %v6461 = vpack.c.b16 %v6083, %v6076
    %v6462 = vpack.c.b16 %v6084, %v6077
    %v6463 = vpack.c.b16 %v6085, %v6078
    %v6464 = vpack.c.b16 %v6086, %v6079
    %v6465 = vpack.c.b16 %v6094, %v6087
    %v6466 = vpack.c.b16 %v6095, %v6088
    %v6467 = vpack.c.b16 %v6096, %v6089
    %v6468 = vpack.c.b16 %v6097, %v6090
    %v6469 = vpack.c.b16 %v6098, %v6091
    %v6470 = vpack.c.b16 %v6099, %v6092
    %v6471 = vpack.c.b16 %v6100, %v6093
    %v6472 = vpack.c.b16 %v6108, %v6101
    %v6473 = vpack.c.b16 %v6109, %v6102
    %v6474 = vpack.c.b16 %v6110, %v6103
    %v6475 = vpack.c.b16 %v6111, %v6104
    %v6476 = vpack.c.b16 %v6112, %v6105
    %v6477 = vpack.c.b16 %v6113, %v6106
    %v6478 = vpack.c.b16 %v6114, %v6107
    %v6479 = vpack.c.b16 %v6122, %v6115
    %v6480 = vpack.c.b16 %v6123, %v6116
    %v6481 = vpack.c.b16 %v6124, %v6117
    %v6482 = vpack.c.b16 %v6125, %v6118
    %v6483 = vpack.c.b16 %v6126, %v6119
    %v6484 = vpack.c.b16 %v6127, %v6120
    %v6485 = vpack.c.b16 %v6128, %v6121
    %v6486 = vpack.c.b16 %v6136, %v6129
    %v6487 = vpack.c.b16 %v6137, %v6130
    %v6488 = vpack.c.b16 %v6138, %v6131
    %v6489 = vpack.c.b16 %v6139, %v6132
    %v6490 = vpack.c.b16 %v6140, %v6133
    %v6491 = vpack.c.b16 %v6141, %v6134
    %v6492 = vpack.c.b16 %v6142, %v6135
    %v6493 = vpack.c.b16 %v6150, %v6143
    %v6494 = vpack.c.b16 %v6151, %v6144
    %v6495 = vpack.c.b16 %v6152, %v6145
    %v6496 = vpack.c.b16 %v6153, %v6146
    %v6497 = vpack.c.b16 %v6154, %v6147
    %v6498 = vpack.c.b16 %v6155, %v6148
    %v6499 = vpack.c.b16 %v6156, %v6149
    %v6500 = vpack.c.b16 %v6164, %v6157
    %v6501 = vpack.c.b16 %v6165, %v6158
    %v6502 = vpack.c.b16 %v6166, %v6159
    %v6503 = vpack.c.b16 %v6167, %v6160
    %v6504 = vpack.c.b16 %v6168, %v6161
    %v6505 = vpack.c.b16 %v6169, %v6162
    %v6506 = vpack.c.b16 %v6170, %v6163
    %v6507 = vpack.c.b16 %v6178, %v6171
    %v6508 = vpack.c.b16 %v6179, %v6172
    %v6509 = vpack.c.b16 %v6180, %v6173
    %v6510 = vpack.c.b16 %v6181, %v6174
    %v6511 = vpack.c.b16 %v6182, %v6175
    %v6512 = vpack.c.b16 %v6183, %v6176
    %v6513 = vpack.c.b16 %v6184, %v6177
    %v6514 = vpack.c.b16 %v6192, %v6185
    %v6515 = vpack.c.b16 %v6193, %v6186
    %v6516 = vpack.c.b16 %v6194, %v6187
    %v6517 = vpack.c.b16 %v6195, %v6188
    %v6518 = vpack.c.b16 %v6196, %v6189
    %v6519 = vpack.c.b16 %v6197, %v6190
    %v6520 = vpack.c.b16 %v6198, %v6191
    %v6521 = vpack.c.b16 %v6206, %v6199
    %v6522 = vpack.c.b16 %v6207, %v6200
    %v6523 = vpack.c.b16 %v6208, %v6201
    %v6524 = vpack.c.b16 %v6209, %v6202
    %v6525 = vpack.c.b16 %v6210, %v6203
    %v6526 = vpack.c.b16 %v6211, %v6204
    %v6527 = vpack.c.b16 %v6212, %v6205
    %v6528 = vpack.c.b16 %v6220, %v6213
    %v6529 = vpack.c.b16 %v6221, %v6214
    %v6530 = vpack.c.b16 %v6222, %v6215
    %v6531 = vpack.c.b16 %v6223, %v6216
    %v6532 = vpack.c.b16 %v6224, %v6217
    %v6533 = vpack.c.b16 %v6225, %v6218
    %v6534 = vpack.c.b16 %v6226, %v6219
    %v6535 = vpack.c.b16 %v6234, %v6227
    %v6536 = vpack.c.b16 %v6235, %v6228
    %v6537 = vpack.c.b16 %v6236, %v6229
    %v6538 = vpack.c.b16 %v6237, %v6230
    %v6539 = vpack.c.b16 %v6238, %v6231
    %v6540 = vpack.c.b16 %v6239, %v6232
    %v6541 = vpack.c.b16 %v6240, %v6233
    %v6542 = vpack.c.b16 %v6248, %v6241
    %v6543 = vpack.c.b16 %v6249, %v6242
    %v6544 = vpack.c.b16 %v6250, %v6243
    %v6545 = vpack.c.b16 %v6251, %v6244
    %v6546 = vpack.c.b16 %v6252, %v6245
    %v6547 = vpack.c.b16 %v6253, %v6246
    %v6548 = vpack.c.b16 %v6254, %v6247
    %v6549 = vpack.c.b16 %v6262, %v6255
    %v6550 = vpack.c.b16 %v6263, %v6256
    %v6551 = vpack.c.b16 %v6264, %v6257
    %v6552 = vpack.c.b16 %v6265, %v6258
    %v6553 = vpack.c.b16 %v6266, %v6259
    %v6554 = vpack.c.b16 %v6267, %v6260
    %v6555 = vpack.c.b16 %v6268, %v6261
    %v6556 = vpack.c.b16 %v6276, %v6269
    %v6557 = vpack.c.b16 %v6277, %v6270
    %v6558 = vpack.c.b16 %v6278, %v6271
    %v6559 = vpack.c.b16 %v6279, %v6272
    %v6560 = vpack.c.b16 %v6280, %v6273
    %v6561 = vpack.c.b16 %v6281, %v6274
    %v6562 = vpack.c.b16 %v6282, %v6275
    %v6563 = vpack.c.b16 %v6290, %v6283
    %v6564 = vpack.c.b16 %v6291, %v6284
    %v6565 = vpack.c.b16 %v6292, %v6285
    %v6566 = vpack.c.b16 %v6293, %v6286
    %v6567 = vpack.c.b16 %v6294, %v6287
    %v6568 = vpack.c.b16 %v6295, %v6288
    %v6569 = vpack.c.b16 %v6296, %v6289
    %v6570 = vpack.c.b16 %v6304, %v6297
    %v6571 = vpack.c.b16 %v6305, %v6298
    %v6572 = vpack.c.b16 %v6306, %v6299
    %v6573 = vpack.c.b16 %v6307, %v6300
    %v6574 = vpack.c.b16 %v6308, %v6301
    %v6575 = vpack.c.b16 %v6309, %v6302
    %v6576 = vpack.c.b16 %v6310, %v6303
    %v6577 = vpack.c.b16 %v6318, %v6311
    %v6578 = vpack.c.b16 %v6319, %v6312
    %v6579 = vpack.c.b16 %v6320, %v6313
    %v6580 = vpack.c.b16 %v6321, %v6314
    %v6581 = vpack.c.b16 %v6322, %v6315
    %v6582 = vpack.c.b16 %v6323, %v6316
    %v6583 = vpack.c.b16 %v6324, %v6317
    %v6584 = vpack.c.b16 %v6332, %v6325
    %v6585 = vpack.c.b16 %v6333, %v6326
    %v6586 = vpack.c.b16 %v6334, %v6327
    %v6587 = vpack.c.b16 %v6335, %v6328
    %v6588 = vpack.c.b16 %v6336, %v6329
    %v6589 = vpack.c.b16 %v6337, %v6330
    %v6590 = vpack.c.b16 %v6338, %v6331
    %v6591 = vpack.c.b16 %v6346, %v6339
    %v6592 = vpack.c.b16 %v6347, %v6340
    %v6593 = vpack.c.b16 %v6348, %v6341
    %v6594 = vpack.c.b16 %v6349, %v6342
    %v6595 = vpack.c.b16 %v6350, %v6343
    %v6596 = vpack.c.b16 %v6351, %v6344
    %v6597 = vpack.c.b16 %v6352, %v6345
    %v6598 = vpack.c.b16 %v6360, %v6353
    %v6599 = vpack.c.b16 %v6361, %v6354
    %v6600 = vpack.c.b16 %v6362, %v6355
    %v6601 = vpack.c.b16 %v6363, %v6356
    %v6602 = vpack.c.b16 %v6364, %v6357
    %v6603 = vpack.c.b16 %v6365, %v6358
    %v6604 = vpack.c.b16 %v6366, %v6359
    %v6605 = vpack.c.b16 %v6374, %v6367
    %v6606 = vpack.c.b16 %v6375, %v6368
    %v6607 = vpack.c.b16 %v6376, %v6369
    %v6608 = vpack.c.b16 %v6377, %v6370
    %v6609 = vpack.c.b16 %v6378, %v6371
    %v6610 = vpack.c.b16 %v6379, %v6372
    %v6611 = vpack.c.b16 %v6380, %v6373
    %v6612 = vpack.c.b16 %v6388, %v6381
    %v6613 = vpack.c.b16 %v6389, %v6382
    %v6614 = vpack.c.b16 %v6390, %v6383
    %v6615 = vpack.c.b16 %v6391, %v6384
    %v6616 = vpack.c.b16 %v6392, %v6385
    %v6617 = vpack.c.b16 %v6393, %v6386
    %v6618 = vpack.c.b16 %v6394, %v6387
    %6843 = vmatprep.subr.bf16.mxu0 %v6396
    %6844 = vmatpush1.bf16.msra.mxu0 %v6395
    %6845 = vmatprep.subr.bf16.mxu0 %v6403
    %6846 = vmatpush1.bf16.msra.mxu0 %v6402
    %6847 = vmatprep.subr.bf16.mxu0 %v6410
    %6848 = vmatpush1.bf16.msra.mxu0 %v6409
    %6849 = vmatprep.subr.bf16.mxu0 %v6417
    %6850 = vmatpush1.bf16.msra.mxu0 %v6416
    %6851 = vmatprep.subr.bf16.mxu0 %v6424
    %6852 = vmatpush1.bf16.msra.mxu0 %v6423
    %6853 = vmatprep.subr.bf16.mxu0 %v6431
    %6854 = vmatpush1.bf16.msra.mxu0 %v6430
    %6855 = vmatprep.subr.bf16.mxu0 %v6438
    %6856 = vmatpush1.bf16.msra.mxu0 %v6437
    %6857 = vmatprep.subr.bf16.mxu0 %v6445
    %6858 = vmatpush1.bf16.msra.mxu0 %v6444
    %6859 = vmatprep.subr.bf16.mxu0 %v6452
    %6860 = vmatpush1.bf16.msra.mxu0 %v6451
    %6861 = vmatprep.subr.bf16.mxu0 %v6459
    %6862 = vmatpush1.bf16.msra.mxu0 %v6458
    %6863 = vmatprep.subr.bf16.mxu0 %v6466
    %6864 = vmatpush1.bf16.msra.mxu0 %v6465
    %6865 = vmatprep.subr.bf16.mxu0 %v6473
    %6866 = vmatpush1.bf16.msra.mxu0 %v6472
    %6867 = vmatprep.subr.bf16.mxu0 %v6480
    %6868 = vmatpush1.bf16.msra.mxu0 %v6479
    %6869 = vmatprep.subr.bf16.mxu0 %v6487
    %6870 = vmatpush1.bf16.msra.mxu0 %v6486
    %6871 = vmatprep.subr.bf16.mxu0 %v6494
    %6872 = vmatpush1.bf16.msra.mxu0 %v6493
    %6873 = vmatprep.subr.bf16.mxu0 %v6501
    %6874 = vmatpush1.bf16.msra.mxu0 %v6500
    %6875 = vmatprep.mubr.bf16.mxu0 %v5395
    %6876 = vmatmul.mubr.bf16.gmra.mrb[0].mxu0 %v5394
    %v6877 = vpop.f32.mrb[0].mxu0
    %v6878 = vadd.f32 %v5659, %v6877
    %v6879 = vpop.f32.mrb[0].mxu0
    %v6880 = vadd.f32 %v5663, %v6879
    %v6881 = vpop.f32.mrb[0].mxu0
    %v6882 = vpop.f32.mrb[0].mxu0
    %6883 = vdwg.mxu0
    %6884 = vmatprep.subr.bf16.mxu0 %v6508
    %6885 = vmatpush1.bf16.msra.mxu0 %v6507
    %6886 = vmatprep.subr.bf16.mxu0 %v6515
    %6887 = vmatpush1.bf16.msra.mxu0 %v6514
    %6888 = vmatprep.subr.bf16.mxu0 %v6522
    %6889 = vmatpush1.bf16.msra.mxu0 %v6521
    %6890 = vmatprep.subr.bf16.mxu0 %v6529
    %6891 = vmatpush1.bf16.msra.mxu0 %v6528
    %6892 = vmatprep.subr.bf16.mxu0 %v6536
    %6893 = vmatpush1.bf16.msra.mxu0 %v6535
    %6894 = vmatprep.subr.bf16.mxu0 %v6543
    %6895 = vmatpush1.bf16.msra.mxu0 %v6542
    %6896 = vmatprep.subr.bf16.mxu0 %v6550
    %6897 = vmatpush1.bf16.msra.mxu0 %v6549
    %6898 = vmatprep.subr.bf16.mxu0 %v6557
    %6899 = vmatpush1.bf16.msra.mxu0 %v6556
    %6900 = vmatprep.subr.bf16.mxu0 %v6564
    %6901 = vmatpush1.bf16.msra.mxu0 %v6563
    %6902 = vmatprep.subr.bf16.mxu0 %v6571
    %6903 = vmatpush1.bf16.msra.mxu0 %v6570
    %6904 = vmatprep.subr.bf16.mxu0 %v6578
    %6905 = vmatpush1.bf16.msra.mxu0 %v6577
    %6906 = vmatprep.subr.bf16.mxu0 %v6585
    %6907 = vmatpush1.bf16.msra.mxu0 %v6584
    %6908 = vmatprep.subr.bf16.mxu0 %v6592
    %6909 = vmatpush1.bf16.msra.mxu0 %v6591
    %6910 = vmatprep.subr.bf16.mxu0 %v6599
    %6911 = vmatpush1.bf16.msra.mxu0 %v6598
    %6912 = vmatprep.subr.bf16.mxu0 %v6606
    %6913 = vmatpush1.bf16.msra.mxu0 %v6605
    %6914 = vmatprep.subr.bf16.mxu0 %v6613
    %6915 = vmatpush1.bf16.msra.mxu0 %v6612
    %6916 = vmatprep.mubr.bf16.mxu0 %v5397
    %6917 = vmatmul.mubr.bf16.gmra.mrb[0].mxu0 %v5396
    %v6918 = vpop.f32.mrb[0].mxu0
    %v6919 = vadd.f32 %v6878, %v6918
    %v6920 = vpop.f32.mrb[0].mxu0
    %v6921 = vadd.f32 %v6880, %v6920
    %v6922 = vpop.f32.mrb[0].mxu0
    %v6923 = vpop.f32.mrb[0].mxu0
    %6924 = vdwg.mxu0
    %6925 = vmatprep.subr.bf16.mxu0 %v6398
    %6926 = vmatpush1.bf16.msra.mxu0 %v6397
    %6927 = vmatprep.subr.bf16.mxu0 %v6405
    %6928 = vmatpush1.bf16.msra.mxu0 %v6404
    %6929 = vmatprep.subr.bf16.mxu0 %v6412
    %6930 = vmatpush1.bf16.msra.mxu0 %v6411
    %6931 = vmatprep.subr.bf16.mxu0 %v6419
    %6932 = vmatpush1.bf16.msra.mxu0 %v6418
    %6933 = vmatprep.subr.bf16.mxu0 %v6426
    %6934 = vmatpush1.bf16.msra.mxu0 %v6425
    %6935 = vmatprep.subr.bf16.mxu0 %v6433
    %6936 = vmatpush1.bf16.msra.mxu0 %v6432
    %6937 = vmatprep.subr.bf16.mxu0 %v6440
    %6938 = vmatpush1.bf16.msra.mxu0 %v6439
    %6939 = vmatprep.subr.bf16.mxu0 %v6447
    %6940 = vmatpush1.bf16.msra.mxu0 %v6446
    %6941 = vmatprep.subr.bf16.mxu0 %v6454
    %6942 = vmatpush1.bf16.msra.mxu0 %v6453
    %6943 = vmatprep.subr.bf16.mxu0 %v6461
    %6944 = vmatpush1.bf16.msra.mxu0 %v6460
    %6945 = vmatprep.subr.bf16.mxu0 %v6468
    %6946 = vmatpush1.bf16.msra.mxu0 %v6467
    %6947 = vmatprep.subr.bf16.mxu0 %v6475
    %6948 = vmatpush1.bf16.msra.mxu0 %v6474
    %6949 = vmatprep.subr.bf16.mxu0 %v6482
    %6950 = vmatpush1.bf16.msra.mxu0 %v6481
    %6951 = vmatprep.subr.bf16.mxu0 %v6489
    %6952 = vmatpush1.bf16.msra.mxu0 %v6488
    %6953 = vmatprep.subr.bf16.mxu0 %v6496
    %6954 = vmatpush1.bf16.msra.mxu0 %v6495
    %6955 = vmatprep.subr.bf16.mxu0 %v6503
    %6956 = vmatpush1.bf16.msra.mxu0 %v6502
    %6957 = vmatprep.mubr.bf16.mxu0 %v5395
    %6958 = vmatmul.mubr.bf16.gmra.mrb[0].mxu0 %v5394
    %v6959 = vpop.f32.mrb[0].mxu0
    %v6960 = vadd.f32 %v5667, %v6959
    %v6961 = vpop.f32.mrb[0].mxu0
    %v6962 = vadd.f32 %v5671, %v6961
    %v6963 = vpop.f32.mrb[0].mxu0
    %v6964 = vpop.f32.mrb[0].mxu0
    %6965 = vdwg.mxu0
    %6966 = vmatprep.subr.bf16.mxu0 %v6510
    %6967 = vmatpush1.bf16.msra.mxu0 %v6509
    %6968 = vmatprep.subr.bf16.mxu0 %v6517
    %6969 = vmatpush1.bf16.msra.mxu0 %v6516
    %6970 = vmatprep.subr.bf16.mxu0 %v6524
    %6971 = vmatpush1.bf16.msra.mxu0 %v6523
    %6972 = vmatprep.subr.bf16.mxu0 %v6531
    %6973 = vmatpush1.bf16.msra.mxu0 %v6530
    %6974 = vmatprep.subr.bf16.mxu0 %v6538
    %6975 = vmatpush1.bf16.msra.mxu0 %v6537
    %6976 = vmatprep.subr.bf16.mxu0 %v6545
    %6977 = vmatpush1.bf16.msra.mxu0 %v6544
    %6978 = vmatprep.subr.bf16.mxu0 %v6552
    %6979 = vmatpush1.bf16.msra.mxu0 %v6551
    %6980 = vmatprep.subr.bf16.mxu0 %v6559
    %6981 = vmatpush1.bf16.msra.mxu0 %v6558
    %6982 = vmatprep.subr.bf16.mxu0 %v6566
    %6983 = vmatpush1.bf16.msra.mxu0 %v6565
    %6984 = vmatprep.subr.bf16.mxu0 %v6573
    %6985 = vmatpush1.bf16.msra.mxu0 %v6572
    %6986 = vmatprep.subr.bf16.mxu0 %v6580
    %6987 = vmatpush1.bf16.msra.mxu0 %v6579
    %6988 = vmatprep.subr.bf16.mxu0 %v6587
    %6989 = vmatpush1.bf16.msra.mxu0 %v6586
    %6990 = vmatprep.subr.bf16.mxu0 %v6594
    %6991 = vmatpush1.bf16.msra.mxu0 %v6593
    %6992 = vmatprep.subr.bf16.mxu0 %v6601
    %6993 = vmatpush1.bf16.msra.mxu0 %v6600
    %6994 = vmatprep.subr.bf16.mxu0 %v6608
    %6995 = vmatpush1.bf16.msra.mxu0 %v6607
    %6996 = vmatprep.subr.bf16.mxu0 %v6615
    %6997 = vmatpush1.bf16.msra.mxu0 %v6614
    %6998 = vmatprep.mubr.bf16.mxu0 %v5397
    %6999 = vmatmul.mubr.bf16.gmra.mrb[0].mxu0 %v5396
    %v7000 = vpop.f32.mrb[0].mxu0
    %v7001 = vadd.f32 %v6960, %v7000
    %v7002 = vpop.f32.mrb[0].mxu0
    %v7003 = vadd.f32 %v6962, %v7002
    %v7004 = vpop.f32.mrb[0].mxu0
    %v7005 = vpop.f32.mrb[0].mxu0
    %7006 = vdwg.mxu0
    %7007 = vmatprep.subr.bf16.mxu0 %v6400
    %7008 = vmatpush1.bf16.msra.mxu0 %v6399
    %7009 = vmatprep.subr.bf16.mxu0 %v6407
    %7010 = vmatpush1.bf16.msra.mxu0 %v6406
    %7011 = vmatprep.subr.bf16.mxu0 %v6414
    %7012 = vmatpush1.bf16.msra.mxu0 %v6413
    %7013 = vmatprep.subr.bf16.mxu0 %v6421
    %7014 = vmatpush1.bf16.msra.mxu0 %v6420
    %7015 = vmatprep.subr.bf16.mxu0 %v6428
    %7016 = vmatpush1.bf16.msra.mxu0 %v6427
    %7017 = vmatprep.subr.bf16.mxu0 %v6435
    %7018 = vmatpush1.bf16.msra.mxu0 %v6434
    %7019 = vmatprep.subr.bf16.mxu0 %v6442
    %7020 = vmatpush1.bf16.msra.mxu0 %v6441
    %7021 = vmatprep.subr.bf16.mxu0 %v6449
    %7022 = vmatpush1.bf16.msra.mxu0 %v6448
    %7023 = vmatprep.subr.bf16.mxu0 %v6456
    %7024 = vmatpush1.bf16.msra.mxu0 %v6455
    %7025 = vmatprep.subr.bf16.mxu0 %v6463
    %7026 = vmatpush1.bf16.msra.mxu0 %v6462
    %7027 = vmatprep.subr.bf16.mxu0 %v6470
    %7028 = vmatpush1.bf16.msra.mxu0 %v6469
    %7029 = vmatprep.subr.bf16.mxu0 %v6477
    %7030 = vmatpush1.bf16.msra.mxu0 %v6476
    %7031 = vmatprep.subr.bf16.mxu0 %v6484
    %7032 = vmatpush1.bf16.msra.mxu0 %v6483
    %7033 = vmatprep.subr.bf16.mxu0 %v6491
    %7034 = vmatpush1.bf16.msra.mxu0 %v6490
    %7035 = vmatprep.subr.bf16.mxu0 %v6498
    %7036 = vmatpush1.bf16.msra.mxu0 %v6497
    %7037 = vmatprep.subr.bf16.mxu0 %v6505
    %7038 = vmatpush1.bf16.msra.mxu0 %v6504
    %7039 = vmatprep.mubr.bf16.mxu0 %v5395
    %7040 = vmatmul.mubr.bf16.gmra.mrb[0].mxu0 %v5394
    %v7041 = vpop.f32.mrb[0].mxu0
    %v7042 = vadd.f32 %v5675, %v7041
    %v7043 = vpop.f32.mrb[0].mxu0
    %v7044 = vadd.f32 %v5679, %v7043
    %v7045 = vpop.f32.mrb[0].mxu0
    %v7046 = vpop.f32.mrb[0].mxu0
    %7047 = vdwg.mxu0
    %7048 = vmatprep.subr.bf16.mxu0 %v6512
    %7049 = vmatpush1.bf16.msra.mxu0 %v6511
    %7050 = vmatprep.subr.bf16.mxu0 %v6519
    %7051 = vmatpush1.bf16.msra.mxu0 %v6518
    %7052 = vmatprep.subr.bf16.mxu0 %v6526
    %7053 = vmatpush1.bf16.msra.mxu0 %v6525
    %7054 = vmatprep.subr.bf16.mxu0 %v6533
    %7055 = vmatpush1.bf16.msra.mxu0 %v6532
    %7056 = vmatprep.subr.bf16.mxu0 %v6540
    %7057 = vmatpush1.bf16.msra.mxu0 %v6539
    %7058 = vmatprep.subr.bf16.mxu0 %v6547
    %7059 = vmatpush1.bf16.msra.mxu0 %v6546
    %7060 = vmatprep.subr.bf16.mxu0 %v6554
    %7061 = vmatpush1.bf16.msra.mxu0 %v6553
    %7062 = vmatprep.subr.bf16.mxu0 %v6561
    %7063 = vmatpush1.bf16.msra.mxu0 %v6560
    %7064 = vmatprep.subr.bf16.mxu0 %v6568
    %7065 = vmatpush1.bf16.msra.mxu0 %v6567
    %7066 = vmatprep.subr.bf16.mxu0 %v6575
    %7067 = vmatpush1.bf16.msra.mxu0 %v6574
    %7068 = vmatprep.subr.bf16.mxu0 %v6582
    %7069 = vmatpush1.bf16.msra.mxu0 %v6581
    %7070 = vmatprep.subr.bf16.mxu0 %v6589
    %7071 = vmatpush1.bf16.msra.mxu0 %v6588
    %7072 = vmatprep.subr.bf16.mxu0 %v6596
    %7073 = vmatpush1.bf16.msra.mxu0 %v6595
    %7074 = vmatprep.subr.bf16.mxu0 %v6603
    %7075 = vmatpush1.bf16.msra.mxu0 %v6602
    %7076 = vmatprep.subr.bf16.mxu0 %v6610
    %7077 = vmatpush1.bf16.msra.mxu0 %v6609
    %7078 = vmatprep.subr.bf16.mxu0 %v6617
    %7079 = vmatpush1.bf16.msra.mxu0 %v6616
    %7080 = vmatprep.mubr.bf16.mxu0 %v5397
    %7081 = vmatmul.mubr.bf16.gmra.mrb[0].mxu0 %v5396
    %v7082 = vpop.f32.mrb[0].mxu0
    %v7083 = vadd.f32 %v7042, %v7082
    %v7084 = vpop.f32.mrb[0].mxu0
    %v7085 = vadd.f32 %v7044, %v7084
    %v7086 = vpop.f32.mrb[0].mxu0
    %v7087 = vpop.f32.mrb[0].mxu0
    %7088 = vdwg.mxu0
    %7089 = vmatprep.subr.bf16.mxu0 0
    %7090 = vmatpush1.bf16.msra.mxu0 %v6401
    %7091 = vmatprep.subr.bf16.mxu0 0
    %7092 = vmatpush1.bf16.msra.mxu0 %v6408
    %7093 = vmatprep.subr.bf16.mxu0 0
    %7094 = vmatpush1.bf16.msra.mxu0 %v6415
    %7095 = vmatprep.subr.bf16.mxu0 0
    %7096 = vmatpush1.bf16.msra.mxu0 %v6422
    %7097 = vmatprep.subr.bf16.mxu0 0
    %7098 = vmatpush1.bf16.msra.mxu0 %v6429
    %7099 = vmatprep.subr.bf16.mxu0 0
    %7100 = vmatpush1.bf16.msra.mxu0 %v6436
    %7101 = vmatprep.subr.bf16.mxu0 0
    %7102 = vmatpush1.bf16.msra.mxu0 %v6443
    %7103 = vmatprep.subr.bf16.mxu0 0
    %7104 = vmatpush1.bf16.msra.mxu0 %v6450
    %7105 = vmatprep.subr.bf16.mxu0 0
    %7106 = vmatpush1.bf16.msra.mxu0 %v6457
    %7107 = vmatprep.subr.bf16.mxu0 0
    %7108 = vmatpush1.bf16.msra.mxu0 %v6464
    %7109 = vmatprep.subr.bf16.mxu0 0
    %7110 = vmatpush1.bf16.msra.mxu0 %v6471
    %7111 = vmatprep.subr.bf16.mxu0 0
    %7112 = vmatpush1.bf16.msra.mxu0 %v6478
    %7113 = vmatprep.subr.bf16.mxu0 0
    %7114 = vmatpush1.bf16.msra.mxu0 %v6485
    %7115 = vmatprep.subr.bf16.mxu0 0
    %7116 = vmatpush1.bf16.msra.mxu0 %v6492
    %7117 = vmatprep.subr.bf16.mxu0 0
    %7118 = vmatpush1.bf16.msra.mxu0 %v6499
    %7119 = vmatprep.subr.bf16.mxu0 0
    %7120 = vmatpush1.bf16.msra.mxu0 %v6506
    %7121 = vmatprep.mubr.bf16.mxu0 %v5395
    %7122 = vmatmul.mubr.bf16.gmra.mrb[0].mxu0 %v5394
    %v7123 = vpop.f32.mrb[0].mxu0
    %v7124 = vadd.f32 %v5683, %v7123
    %v7125 = vpop.f32.mrb[0].mxu0
    %v7126 = vpop.f32.mrb[0].mxu0
    %v7127 = vpop.f32.mrb[0].mxu0
    %7128 = vdwg.mxu0
    %7129 = vmatprep.subr.bf16.mxu0 0
    %7130 = vmatpush1.bf16.msra.mxu0 %v6513
    %7131 = vmatprep.subr.bf16.mxu0 0
    %7132 = vmatpush1.bf16.msra.mxu0 %v6520
    %7133 = vmatprep.subr.bf16.mxu0 0
    %7134 = vmatpush1.bf16.msra.mxu0 %v6527
    %7135 = vmatprep.subr.bf16.mxu0 0
    %7136 = vmatpush1.bf16.msra.mxu0 %v6534
    %7137 = vmatprep.subr.bf16.mxu0 0
    %7138 = vmatpush1.bf16.msra.mxu0 %v6541
    %7139 = vmatprep.subr.bf16.mxu0 0
    %7140 = vmatpush1.bf16.msra.mxu0 %v6548
    %7141 = vmatprep.subr.bf16.mxu0 0
    %7142 = vmatpush1.bf16.msra.mxu0 %v6555
    %7143 = vmatprep.subr.bf16.mxu0 0
    %7144 = vmatpush1.bf16.msra.mxu0 %v6562
    %7145 = vmatprep.subr.bf16.mxu0 0
    %7146 = vmatpush1.bf16.msra.mxu0 %v6569
    %7147 = vmatprep.subr.bf16.mxu0 0
    %7148 = vmatpush1.bf16.msra.mxu0 %v6576
    %7149 = vmatprep.subr.bf16.mxu0 0
    %7150 = vmatpush1.bf16.msra.mxu0 %v6583
    %7151 = vmatprep.subr.bf16.mxu0 0
    %7152 = vmatpush1.bf16.msra.mxu0 %v6590
    %7153 = vmatprep.subr.bf16.mxu0 0
    %7154 = vmatpush1.bf16.msra.mxu0 %v6597
    %7155 = vmatprep.subr.bf16.mxu0 0
    %7156 = vmatpush1.bf16.msra.mxu0 %v6604
    %7157 = vmatprep.subr.bf16.mxu0 0
    %7158 = vmatpush1.bf16.msra.mxu0 %v6611
    %7159 = vmatprep.subr.bf16.mxu0 0
    %7160 = vmatpush1.bf16.msra.mxu0 %v6618
    %7161 = vmatprep.mubr.bf16.mxu0 %v5397
    %7162 = vmatmul.mubr.bf16.gmra.mrb[0].mxu0 %v5396
    %v7163 = vpop.f32.mrb[0].mxu0
    %v7164 = vadd.f32 %v7124, %v7163
    %v7165 = vpop.f32.mrb[0].mxu0
    %v7166 = vpop.f32.mrb[0].mxu0
    %v7167 = vpop.f32.mrb[0].mxu0
    %7168 = vdwg.mxu0
    %v7169 = vxor.u32 %v6919, 2147483648
    %v7170 = vxor.u32 %v6921, 2147483648
    %v7171 = vxor.u32 %v7001, 2147483648
    %v7172 = vxor.u32 %v7003, 2147483648
    %v7173 = vxor.u32 %v7083, 2147483648
    %v7174 = vxor.u32 %v7085, 2147483648
    %v7175 = vxor.u32 %v7164, 2147483648
    %v7176 = vmul.f32 %v7169, 1.442695
    %v7177 = vpow.pop %v7176
    %v7178 = vmul.f32 %v7170, 1.442695
    %v7179 = vpow.pop %v7178
    %v7180 = vmul.f32 %v7171, 1.442695
    %v7181 = vpow.pop %v7180
    %v7182 = vmul.f32 %v7172, 1.442695
    %v7183 = vpow.pop %v7182
    %v7184 = vmul.f32 %v7173, 1.442695
    %v7185 = vpow.pop %v7184
    %v7186 = vmul.f32 %v7174, 1.442695
    %v7187 = vpow.pop %v7186
    %v7188 = vmul.f32 %v7175, 1.442695
    %v7189 = vpow.pop %v7188
    %v7190 = vadd.f32 %v7177, 1.0
    %v7191 = vadd.f32 %v7179, 1.0
    %v7192 = vadd.f32 %v7181, 1.0
    %v7193 = vadd.f32 %v7183, 1.0
    %v7194 = vadd.f32 %v7185, 1.0
    %v7195 = vadd.f32 %v7187, 1.0
    %v7196 = vadd.f32 %v7189, 1.0
    %v7197 = vrcp.pop %v7190
    %v7198 = vmul.f32 1.0, %v7197
    %v7199 = vrcp.pop %v7191
    %v7200 = vmul.f32 1.0, %v7199
    %v7201 = vrcp.pop %v7192
    %v7202 = vmul.f32 1.0, %v7201
    %v7203 = vrcp.pop %v7193
    %v7204 = vmul.f32 1.0, %v7203
    %v7205 = vrcp.pop %v7194
    %v7206 = vmul.f32 1.0, %v7205
    %v7207 = vrcp.pop %v7195
    %v7208 = vmul.f32 1.0, %v7207
    %v7209 = vrcp.pop %v7196
    %v7210 = vmul.f32 1.0, %v7209
    %7211 = vst [vmem:[#allocation34] sm:$0xff] %v7198
    %7212 = vst [vmem:[#allocation34 + $0x8] sm:$0xff] %v7200
    %7213 = vst [vmem:[#allocation34 + $0x10] sm:$0xff] %v7202
    %7214 = vst [vmem:[#allocation34 + $0x18] sm:$0xff] %v7204
    %7215 = vst [vmem:[#allocation34 + $0x20] sm:$0xff] %v7206
    %7216 = vst [vmem:[#allocation34 + $0x28] sm:$0xff] %v7208
    %7217 = vst.msk [vmem:[#allocation34 + $0x30] sm:$0xff] %vm1532, %v7210
    %7218 = vst [vmem:[#allocation35] sm:$0xff] %v2524
    %7219 = vst [vmem:[#allocation37] sm:$0xff] %v4737
    // Predicated region
    $region162: #{tpu_custom_call.1} parent=1 // pred_check
      _
    $region163: #{tpu_custom_call.1} parent=1 // pred_check_branch
      %7221 = sbr.rel (0) target = $region165
    $region164: #{tpu_custom_call.1} parent=1 // pred_region
      %s7223 = ssub.s32 896, 896
      %7224 = vsyncadd [#allocation4], %s7223
      %s7226 = sshll.u32 [#allocation34], 4
      %s7227 = int_to_ptr.vmem [resolvable:$true] %s7226
      %7229 = dma.vmem_to_hbm [thread:$0]  %s7227, 896, %s20, [#allocation4]
    $region165: #{tpu_custom_call.1} parent=1 // pred_fallthru
      _
    // Predicated region
    $region166: #{tpu_custom_call.1} parent=1 // pred_check
      _
    $region167: #{tpu_custom_call.1} parent=1 // pred_check_branch
      %7231 = sbr.rel (0) target = $region169
    $region168: #{tpu_custom_call.1} parent=1 // pred_region
      %s7233 = ssub.s32 128, 128
      %7234 = vsyncadd [#allocation36], %s7233
      %s7236 = sshll.u32 [#allocation35], 4
      %s7237 = int_to_ptr.vmem [resolvable:$true] %s7236
      %7239 = dma.vmem_to_hbm [thread:$0]  %s7237, 128, %s21, [#allocation36]
    $region169: #{tpu_custom_call.1} parent=1 // pred_fallthru
      _
    // Predicated region
    $region170: #{tpu_custom_call.1} parent=1 // pred_check
      _
    $region171: #{tpu_custom_call.1} parent=1 // pred_check_branch
      %7241 = sbr.rel (0) target = $region173
    $region172: #{tpu_custom_call.1} parent=1 // pred_region
      %s7243 = ssub.s32 128, 128
      %7244 = vsyncadd [#allocation36], %s7243
      %s7246 = sshll.u32 [#allocation37], 4
      %s7247 = int_to_ptr.vmem [resolvable:$true] %s7246
      %7249 = dma.vmem_to_hbm [thread:$0]  %s7247, 128, %s22, [#allocation36]
    $region173: #{tpu_custom_call.1} parent=1 // pred_fallthru
      _
    // Predicated region
    $region174: #{tpu_custom_call.1} parent=1 // pred_check
      _
    $region175: #{tpu_custom_call.1} parent=1 // pred_check_branch
      %7251 = sbr.rel (0) target = $region177
    $region176: #{tpu_custom_call.1} parent=1 // pred_region
      %7252 = dma.done [#allocation4], 896
    $region177: #{tpu_custom_call.1} parent=1 // pred_fallthru
      _
    // Predicated region
    $region178: #{tpu_custom_call.1} parent=1 // pred_check
      _
    $region179: #{tpu_custom_call.1} parent=1 // pred_check_branch
      %7254 = sbr.rel (0) target = $region181
    $region180: #{tpu_custom_call.1} parent=1 // pred_region
      %7255 = dma.done [#allocation36], 128
    $region181: #{tpu_custom_call.1} parent=1 // pred_fallthru
      _
    // Predicated region
    $region182: #{tpu_custom_call.1} parent=1 // pred_check
      _
    $region183: #{tpu_custom_call.1} parent=1 // pred_check_branch
      %7257 = sbr.rel (0) target = $region185
    $region184: #{tpu_custom_call.1} parent=1 // pred_region
      %7258 = dma.done [#allocation36], 128
    $region185: #{tpu_custom_call.1} parent=1 // pred_fallthru
      _
    %7259 = vsyncpa [#allocation3], 1
    %7260 = vsyncpa [#allocation6], 1
    %7261 = vsyncpa [#allocation9], 1
    %7262 = vsyncpa [#allocation12], 1
    %7263 = vsyncpa [#allocation15], 1
    %7264 = vsyncpa [#allocation18], 1
    %7265 = vsyncpa [#allocation21], 1
    %7266 = vsyncpa [#allocation24], 1
    %7267 = vsyncpa [#allocation27], 1
    %7268 = vsyncpa [#allocation30], 1
    %7269 = vsyncpa [#allocation33], 1
    %7270 = vsyncpa [#allocation4], 1
    %7271 = vsyncpa [#allocation36], 1

</llo_original>
